<compile_context>
chip_gen: v7x
topology: tpu7x:2x2x1
jax: 0.10.0
libtpu: 0.0.40
codegen_flags: <defaults>
</compile_context>

<pallas_src>
import functools

import jax
import jax.numpy as jnp
import numpy as np
from jax.experimental import pallas as pl
from jax.experimental.pallas import tpu as pltpu


# --------------------------------------------------------------------------
# Host-side helpers (numpy, trace-time constants only)
# --------------------------------------------------------------------------
def _interp_matrix(n_in, n_out):
    """PyTorch bilinear align_corners=True interpolation matrix (n_out, n_in)."""
    if n_in == 1:
        return np.ones((n_out, 1), np.float32)
    src = np.arange(n_out, dtype=np.float64) * (n_in - 1) / (n_out - 1)
    i0 = np.clip(np.floor(src).astype(np.int64), 0, n_in - 2)
    frac = (src - i0).astype(np.float32)
    m = np.zeros((n_out, n_in), np.float32)
    m[np.arange(n_out), i0] = 1.0 - frac
    m[np.arange(n_out), i0 + 1] += frac
    return m


def _flat_interior_idx(h, w):
    """Flat indices of the interior pixels of an (h+2, w+2) padded-flat grid."""
    wp = w + 2
    return ((np.arange(h) + 1)[:, None] * wp + (np.arange(w) + 1)[None, :]).reshape(-1)


def _border_mask(h, w):
    """(1, (h+2)*(w+2)) f32 mask: 1 at interior pixels, 0 on the zero border."""
    m = np.zeros((h + 2, w + 2), np.float32)
    m[1:-1, 1:-1] = 1.0
    return m.reshape(1, -1)


def _upsample8_operator(h, w):
    """(S_lo, S_hi) operator: padded-flat (h, w) -> padded-flat (8h, 8w),
    bilinear x8 with align_corners=True; output border rows stay exactly 0."""
    ho, wo = 8 * h, 8 * w
    uh = _interp_matrix(h, ho)            # (ho, h)
    uw = _interp_matrix(w, wo)            # (wo, w)
    core = np.einsum("oh,qw->hwoq", uh, uw).reshape(h * w, ho * wo)
    g = np.zeros(((h + 2) * (w + 2), (ho + 2) * (wo + 2)), np.float32)
    g[np.ix_(_flat_interior_idx(h, w), _flat_interior_idx(ho, wo))] = core
    return g


def _conv_taps(w_oihw):
    """(Cout, Cin, 3, 3) -> (9, Cout, Cin), tap index = kh*3 + kw."""
    co, ci = w_oihw.shape[0], w_oihw.shape[1]
    return jnp.transpose(w_oihw, (2, 3, 0, 1)).reshape(9, co, ci)


def _pad_flat(x_nchw):
    """NCHW -> padded-flat (N, C, (H+2)*(W+2)) with a zero border."""
    n, c, h, w = x_nchw.shape
    xp = jnp.pad(x_nchw, ((0, 0), (0, 0), (1, 1), (1, 1)))
    return xp.reshape(n, c, (h + 2) * (w + 2))


# --------------------------------------------------------------------------
# In-kernel 3x3 conv: 9 shifted-lane-slice matmuls on a zero-extended scratch
# --------------------------------------------------------------------------
def _conv3x3_acc(sc_ref, w_ref, pad, wp, s):
    """sc_ref: (Cin, pad + s + pad) VMEM scratch holding the padded-flat image
    in columns [pad, pad + s) and zeros elsewhere (row width = wp).
    w_ref: (9, Cout, Cin). Returns (Cout, s) f32 accumulator (no bias; border
    columns hold garbage and must be masked by the caller)."""
    cout = w_ref.shape[1]
    acc = jnp.zeros((cout, s), jnp.float32)
    for kh in range(3):
        for kw in range(3):
            d = (kh - 1) * wp + (kw - 1)
            acc = acc + jnp.dot(
                w_ref[kh * 3 + kw],
                sc_ref[:, pad + d: pad + d + s],
                preferred_element_type=jnp.float32,
            )
    return acc


# --------------------------------------------------------------------------
# Kernel 1: conv1_dep + conv1_rgb fused via block-diagonal weights
# --------------------------------------------------------------------------
def _dual_conv_kernel(x_ref, w_ref, b_ref, m_ref, o_ref, sc_ref, *, wp, pad):
    s = o_ref.shape[2]
    sc_ref[...] = jnp.zeros(sc_ref.shape, sc_ref.dtype)
    sc_ref[:, pad:pad + s] = x_ref[0]
    acc = _conv3x3_acc(sc_ref, w_ref, pad, wp, s)
    o_ref[0] = (acc + b_ref[...]) * m_ref[...]


# --------------------------------------------------------------------------
# Kernel 2: bilinear x8 upsample (one matmul) + layer_ful2 conv
# --------------------------------------------------------------------------
def _upsample_conv_kernel(x_ref, g_ref, w_ref, b_ref, m_ref, o_ref, sc_ref, *,
                          wp, pad):
    s = o_ref.shape[2]
    sc_ref[...] = jnp.zeros(sc_ref.shape, sc_ref.dtype)
    # mm_cat2 = cat([up(x_dep), up(x_rgb)]) lives only in VMEM (never in HBM).
    up = jnp.dot(x_ref[0], g_ref[...], preferred_element_type=jnp.float32)
    sc_ref[:, pad:pad + s] = up
    acc = _conv3x3_acc(sc_ref, w_ref, pad, wp, s)
    o_ref[0] = (acc + b_ref[...]) * m_ref[...]


# --------------------------------------------------------------------------
# Kernel 3: out_dim conv + sigmoid(./T) + BCEWithLogits + mean (fused)
# --------------------------------------------------------------------------
def _conv_bce_kernel(h_ref, at_ref, w_ref, b_ref, m_ref, o_ref, sc_ref, acc_ref,
                     *, wp, pad, inv_t, inv_count):
    s = h_ref.shape[2]
    sc_ref[...] = jnp.zeros(sc_ref.shape, sc_ref.dtype)
    sc_ref[:, pad:pad + s] = h_ref[0]
    cim = _conv3x3_acc(sc_ref, w_ref, pad, wp, s) + b_ref[...]

    p_s = 1.0 / (1.0 + jnp.exp(-cim * inv_t))          # logits fed to BCEWithLogits
    p_t = 1.0 / (1.0 + jnp.exp(-at_ref[0] * inv_t))    # targets
    # BCEWithLogits(x=p_s, t=p_t) with x = sigmoid(.) in (0,1): max(x,0)=x and
    # |x|=x, so the stable form reduces to x*(1-t) + log(1+exp(-x)).
    # exp(-x) >= e^-1, so plain log(1 + .) is already exact here (no log1p needed).
    l = (p_s * (1.0 - p_t) + jnp.log(1.0 + jnp.exp(-p_s))) * m_ref[...]

    @pl.when(pl.program_id(0) == 0)
    def _init():
        acc_ref[0, 0] = 0.0

    acc_ref[0, 0] = acc_ref[0, 0] + jnp.sum(l) * inv_count

    @pl.when(pl.program_id(0) == pl.num_programs(0) - 1)
    def _finalize():
        o_ref[0, 0] = acc_ref[0, 0]


# --------------------------------------------------------------------------
# DistillKLml forward
# --------------------------------------------------------------------------
def distill_kl_ml_forward(params, rgb, dep, at, T):
    n, in_c, ih, iw = rgb.shape
    out_c = params["w_rgb"].shape[0]
    oh, ow = 8 * ih, 8 * iw
    assert dep.shape == rgb.shape
    assert at.shape == (n, out_c, oh, ow)

    c2i, c2o = 2 * in_c, 2 * out_c
    wp1, s1 = iw + 2, (ih + 2) * (iw + 2)
    wp2, s2 = ow + 2, (oh + 2) * (ow + 2)
    pad1, pad2 = wp1 + 1, wp2 + 1
    f32 = jnp.float32

    # ---- trace-time constants ------------------------------------------
    g_up = jnp.asarray(_upsample8_operator(ih, iw))      # (s1, s2)
    mask1 = jnp.asarray(_border_mask(ih, iw))            # (1, s1)
    mask2 = jnp.asarray(_border_mask(oh, ow))            # (1, s2)

    # block-diagonal fusion of conv1_dep / conv1_rgb over cat([dep, rgb], dim=1)
    w1 = jnp.zeros((9, c2o, c2i), f32)
    w1 = w1.at[:, :out_c, :in_c].set(_conv_taps(params["w_dep"]))
    w1 = w1.at[:, out_c:, in_c:].set(_conv_taps(params["w_rgb"]))
    b1 = jnp.concatenate([params["b_dep"], params["b_rgb"]]).reshape(c2o, 1)

    w_ful2 = _conv_taps(params["w_ful2"])                # (9, out_c, c2o)
    b_ful2 = params["b_ful2"].reshape(out_c, 1)
    w_out = _conv_taps(params["w_out"])                  # (9, out_c, out_c)
    b_out = params["b_out"].reshape(out_c, 1)

    # ---- HBM-side layouts (cheap pads on the small inputs + `at` only) ---
    x_cat = _pad_flat(jnp.concatenate([dep, rgb], axis=1))   # (n, c2i, s1)
    at_pf = _pad_flat(at)                                    # (n, out_c, s2)

    # ---- K1: fused conv1_dep + conv1_rgb --------------------------------
    x12 = pl.pallas_call(
        functools.partial(_dual_conv_kernel, wp=wp1, pad=pad1),
        out_shape=jax.ShapeDtypeStruct((n, c2o, s1), f32),
        grid=(n,),
        in_specs=[
            pl.BlockSpec((1, c2i, s1), lambda i: (i, 0, 0)),
            pl.BlockSpec((9, c2o, c2i), lambda i: (0, 0, 0)),
            pl.BlockSpec((c2o, 1), lambda i: (0, 0)),
            pl.BlockSpec((1, s1), lambda i: (0, 0)),
        ],
        out_specs=pl.BlockSpec((1, c2o, s1), lambda i: (i, 0, 0)),
        scratch_shapes=[pltpu.VMEM((c2i, s1 + 2 * pad1), f32)],
        compiler_params=pltpu.CompilerParams(dimension_semantics=("parallel",)),
    )(x_cat, w1, b1, mask1)

    # ---- K2: upsample x8 + layer_ful2 (mm_cat2 never round-trips HBM) ----
    h_act = pl.pallas_call(
        functools.partial(_upsample_conv_kernel, wp=wp2, pad=pad2),
        out_shape=jax.ShapeDtypeStruct((n, out_c, s2), f32),
        grid=(n,),
        in_specs=[
            pl.BlockSpec((1, c2o, s1), lambda i: (i, 0, 0)),
            pl.BlockSpec((s1, s2), lambda i: (0, 0)),
            pl.BlockSpec((9, out_c, c2o), lambda i: (0, 0, 0)),
            pl.BlockSpec((out_c, 1), lambda i: (0, 0)),
            pl.BlockSpec((1, s2), lambda i: (0, 0)),
        ],
        out_specs=pl.BlockSpec((1, out_c, s2), lambda i: (i, 0, 0)),
        scratch_shapes=[pltpu.VMEM((c2o, s2 + 2 * pad2), f32)],
        compiler_params=pltpu.CompilerParams(dimension_semantics=("parallel",)),
    )(x12, g_up, w_ful2, b_ful2, mask2)

    # ---- K3: out_dim conv + sigmoid/T + BCEWithLogits + mean (scalar) ----
    inv_count = 1.0 / float(n * out_c * oh * ow)
    loss = pl.pallas_call(
        functools.partial(_conv_bce_kernel, wp=wp2, pad=pad2,
                          inv_t=1.0 / float(T), inv_count=inv_count),
        out_shape=jax.ShapeDtypeStruct((1, 1), f32),
        grid=(n,),
        in_specs=[
            pl.BlockSpec((1, out_c, s2), lambda i: (i, 0, 0)),
            pl.BlockSpec((1, out_c, s2), lambda i: (i, 0, 0)),
            pl.BlockSpec((9, out_c, out_c), lambda i: (0, 0, 0)),
            pl.BlockSpec((out_c, 1), lambda i: (0, 0)),
            pl.BlockSpec((1, s2), lambda i: (0, 0)),
        ],
        out_specs=pl.BlockSpec((1, 1), lambda i: (0, 0),
                               memory_space=pltpu.MemorySpace.SMEM),
        scratch_shapes=[
            pltpu.VMEM((out_c, s2 + 2 * pad2), f32),
            pltpu.SMEM((1, 1), f32),
        ],
        compiler_params=pltpu.CompilerParams(dimension_semantics=("arbitrary",)),
    )(h_act, at_pf, w_out, b_out, mask2)

    return loss[0, 0]


# --------------------------------------------------------------------------
# Parameter init (PyTorch Conv2d default-style uniform init)
# --------------------------------------------------------------------------
def init_params(key, in_dim, out_dim):
    ks = jax.random.split(key, 8)

    def conv_init(kw, kb, cout, cin):
        fan_in = float(cin * 9)
        bound = 1.0 / (fan_in ** 0.5)
        w = jax.random.uniform(kw, (cout, cin, 3, 3), jnp.float32, -bound, bound)
        b = jax.random.uniform(kb, (cout,), jnp.float32, -bound, bound)
        return w, b

    w_rgb, b_rgb = conv_init(ks[0], ks[1], out_dim, in_dim)
    w_dep, b_dep = conv_init(ks[2], ks[3], out_dim, in_dim)
    w_ful2, b_ful2 = conv_init(ks[4], ks[5], out_dim, 2 * out_dim)
    w_out, b_out = conv_init(ks[6], ks[7], out_dim, out_dim)
    return dict(
        w_rgb=w_rgb, b_rgb=b_rgb,
        w_dep=w_dep, b_dep=b_dep,
        w_ful2=w_ful2, b_ful2=b_ful2,
        w_out=w_out, b_out=b_out,
    )


if __name__ == "__main__":
    T = 4.0
    N, in_dim, out_dim, H, W = 2, 4, 4, 4, 4   # upsampled spatial = 32 x 32

    key = jax.random.PRNGKey(0)
    k_params, k_rgb, k_dep, k_at = jax.random.split(key, 4)

    params = init_params(k_params, in_dim, out_dim)
    rgb = jax.random.normal(k_rgb, (N, in_dim, H, W), jnp.float32)
    dep = jax.random.normal(k_dep, (N, in_dim, H, W), jnp.float32)
    at = jax.random.normal(k_at, (N, out_dim, 8 * H, 8 * W), jnp.float32)

    fwd = jax.jit(functools.partial(distill_kl_ml_forward, T=T))
    loss = fwd(params, rgb, dep, at)
    jax.block_until_ready(loss)
    assert loss.shape == () or loss.size == 1
    print("KERNEL_OK")
</pallas_src>

<mosaic_0001>
module attributes {stable_mosaic.version = 11 : i64} {
  func.func @_dual_conv_kernel(%arg0: i32, %arg1: memref<1x8x36xf32, #tpu.memory_space<vmem>>, %arg2: memref<9x8x8xf32, #tpu.memory_space<vmem>>, %arg3: memref<8x1xf32, #tpu.memory_space<vmem>>, %arg4: memref<1x36xf32, #tpu.memory_space<vmem>>, %arg5: memref<1x8x36xf32, #tpu.memory_space<vmem>>, %arg6: memref<8x50xf32, #tpu.memory_space<vmem>>) attributes {dimension_semantics = [#tpu.dimension_semantics<parallel>], iteration_bounds = array<i64: 2>, scalar_prefetch = 0 : i64, scratch_operands = 1 : i64, tpu.core_type = #tpu.core_type<tc>, window_params = [{transform_indices = @transform_0, window_bounds = array<i64: 1, 8, 36>}, {pipeline_mode = #tpu.pipeline_mode<synchronous>, transform_indices = @transform_1, window_bounds = array<i64: 9, 8, 8>}, {pipeline_mode = #tpu.pipeline_mode<synchronous>, transform_indices = @transform_2, window_bounds = array<i64: 8, 1>}, {pipeline_mode = #tpu.pipeline_mode<synchronous>, transform_indices = @transform_3, window_bounds = array<i64: 1, 36>}, {transform_indices = @transform_4, window_bounds = array<i64: 1, 8, 36>}]} {
    %cst = arith.constant 0.000000e+00 : f32
    %0 = vector.broadcast %cst : f32 to vector<8x50xf32>
    %c0 = arith.constant 0 : index
    %c0_0 = arith.constant 0 : index
    %1 = vector.load %arg6[%c0, %c0_0] : memref<8x50xf32, #tpu.memory_space<vmem>>, vector<8x50xf32>
    tpu.vector_store %arg6[%c0, %c0_0], %0 {strides = array<i32>} : memref<8x50xf32, #tpu.memory_space<vmem>>, vector<8x50xf32>,
    %c0_1 = arith.constant 0 : index
    %c0_2 = arith.constant 0 : index
    %c0_3 = arith.constant 0 : index
    %2 = vector.load %arg1[%c0_1, %c0_2, %c0_3] : memref<1x8x36xf32, #tpu.memory_space<vmem>>, vector<1x8x36xf32>
    %3 = vector.shape_cast %2 : vector<1x8x36xf32> to vector<8x36xf32>
    %c0_4 = arith.constant 0 : index
    %c7 = arith.constant 7 : index
    %4 = vector.load %arg6[%c0_4, %c7] : memref<8x50xf32, #tpu.memory_space<vmem>>, vector<8x36xf32>
    tpu.vector_store %arg6[%c0_4, %c7], %3 {strides = array<i32>} : memref<8x50xf32, #tpu.memory_space<vmem>>, vector<8x36xf32>,
    %cst_5 = arith.constant 0.000000e+00 : f32
    %5 = vector.broadcast %cst_5 : f32 to vector<8x36xf32>
    %c0_6 = arith.constant 0 : index
    %c0_7 = arith.constant 0 : index
    %c0_8 = arith.constant 0 : index
    %6 = vector.load %arg2[%c0_6, %c0_7, %c0_8] : memref<9x8x8xf32, #tpu.memory_space<vmem>>, vector<1x8x8xf32>
    %7 = vector.shape_cast %6 : vector<1x8x8xf32> to vector<8x8xf32>
    %c0_9 = arith.constant 0 : index
    %c0_10 = arith.constant 0 : index
    %8 = vector.load %arg6[%c0_9, %c0_10] : memref<8x50xf32, #tpu.memory_space<vmem>>, vector<8x36xf32>
    %cst_11 = arith.constant dense<0.000000e+00> : vector<8x36xf32>
    %9 = tpu.matmul %7, %8, %cst_11 {dimension_numbers = #tpu.dot_dimension_numbers<[1], [0], [0], [1], [0, 0, 1, 1], [], []>} : vector<8x8xf32>, vector<8x36xf32>, vector<8x36xf32> -> vector<8x36xf32>
    %10 = arith.addf %5, %9 : vector<8x36xf32>
    %c1 = arith.constant 1 : index
    %c0_12 = arith.constant 0 : index
    %c0_13 = arith.constant 0 : index
    %11 = vector.load %arg2[%c1, %c0_12, %c0_13] : memref<9x8x8xf32, #tpu.memory_space<vmem>>, vector<1x8x8xf32>
    %12 = vector.shape_cast %11 : vector<1x8x8xf32> to vector<8x8xf32>
    %c0_14 = arith.constant 0 : index
    %c1_15 = arith.constant 1 : index
    %13 = vector.load %arg6[%c0_14, %c1_15] : memref<8x50xf32, #tpu.memory_space<vmem>>, vector<8x36xf32>
    %cst_16 = arith.constant dense<0.000000e+00> : vector<8x36xf32>
    %14 = tpu.matmul %12, %13, %cst_16 {dimension_numbers = #tpu.dot_dimension_numbers<[1], [0], [0], [1], [0, 0, 1, 1], [], []>} : vector<8x8xf32>, vector<8x36xf32>, vector<8x36xf32> -> vector<8x36xf32>
    %15 = arith.addf %10, %14 : vector<8x36xf32>
    %c2 = arith.constant 2 : index
    %c0_17 = arith.constant 0 : index
    %c0_18 = arith.constant 0 : index
    %16 = vector.load %arg2[%c2, %c0_17, %c0_18] : memref<9x8x8xf32, #tpu.memory_space<vmem>>, vector<1x8x8xf32>
    %17 = vector.shape_cast %16 : vector<1x8x8xf32> to vector<8x8xf32>
    %c0_19 = arith.constant 0 : index
    %c2_20 = arith.constant 2 : index
    %18 = vector.load %arg6[%c0_19, %c2_20] : memref<8x50xf32, #tpu.memory_space<vmem>>, vector<8x36xf32>
    %cst_21 = arith.constant dense<0.000000e+00> : vector<8x36xf32>
    %19 = tpu.matmul %17, %18, %cst_21 {dimension_numbers = #tpu.dot_dimension_numbers<[1], [0], [0], [1], [0, 0, 1, 1], [], []>} : vector<8x8xf32>, vector<8x36xf32>, vector<8x36xf32> -> vector<8x36xf32>
    %20 = arith.addf %15, %19 : vector<8x36xf32>
    %c3 = arith.constant 3 : index
    %c0_22 = arith.constant 0 : index
    %c0_23 = arith.constant 0 : index
    %21 = vector.load %arg2[%c3, %c0_22, %c0_23] : memref<9x8x8xf32, #tpu.memory_space<vmem>>, vector<1x8x8xf32>
    %22 = vector.shape_cast %21 : vector<1x8x8xf32> to vector<8x8xf32>
    %c0_24 = arith.constant 0 : index
    %c6 = arith.constant 6 : index
    %23 = vector.load %arg6[%c0_24, %c6] : memref<8x50xf32, #tpu.memory_space<vmem>>, vector<8x36xf32>
    %cst_25 = arith.constant dense<0.000000e+00> : vector<8x36xf32>
    %24 = tpu.matmul %22, %23, %cst_25 {dimension_numbers = #tpu.dot_dimension_numbers<[1], [0], [0], [1], [0, 0, 1, 1], [], []>} : vector<8x8xf32>, vector<8x36xf32>, vector<8x36xf32> -> vector<8x36xf32>
    %25 = arith.addf %20, %24 : vector<8x36xf32>
    %c4 = arith.constant 4 : index
    %c0_26 = arith.constant 0 : index
    %c0_27 = arith.constant 0 : index
    %26 = vector.load %arg2[%c4, %c0_26, %c0_27] : memref<9x8x8xf32, #tpu.memory_space<vmem>>, vector<1x8x8xf32>
    %27 = vector.shape_cast %26 : vector<1x8x8xf32> to vector<8x8xf32>
    %c0_28 = arith.constant 0 : index
    %c7_29 = arith.constant 7 : index
    %28 = vector.load %arg6[%c0_28, %c7_29] : memref<8x50xf32, #tpu.memory_space<vmem>>, vector<8x36xf32>
    %cst_30 = arith.constant dense<0.000000e+00> : vector<8x36xf32>
    %29 = tpu.matmul %27, %28, %cst_30 {dimension_numbers = #tpu.dot_dimension_numbers<[1], [0], [0], [1], [0, 0, 1, 1], [], []>} : vector<8x8xf32>, vector<8x36xf32>, vector<8x36xf32> -> vector<8x36xf32>
    %30 = arith.addf %25, %29 : vector<8x36xf32>
    %c5 = arith.constant 5 : index
    %c0_31 = arith.constant 0 : index
    %c0_32 = arith.constant 0 : index
    %31 = vector.load %arg2[%c5, %c0_31, %c0_32] : memref<9x8x8xf32, #tpu.memory_space<vmem>>, vector<1x8x8xf32>
    %32 = vector.shape_cast %31 : vector<1x8x8xf32> to vector<8x8xf32>
    %c0_33 = arith.constant 0 : index
    %c8 = arith.constant 8 : index
    %33 = vector.load %arg6[%c0_33, %c8] : memref<8x50xf32, #tpu.memory_space<vmem>>, vector<8x36xf32>
    %cst_34 = arith.constant dense<0.000000e+00> : vector<8x36xf32>
    %34 = tpu.matmul %32, %33, %cst_34 {dimension_numbers = #tpu.dot_dimension_numbers<[1], [0], [0], [1], [0, 0, 1, 1], [], []>} : vector<8x8xf32>, vector<8x36xf32>, vector<8x36xf32> -> vector<8x36xf32>
    %35 = arith.addf %30, %34 : vector<8x36xf32>
    %c6_35 = arith.constant 6 : index
    %c0_36 = arith.constant 0 : index
    %c0_37 = arith.constant 0 : index
    %36 = vector.load %arg2[%c6_35, %c0_36, %c0_37] : memref<9x8x8xf32, #tpu.memory_space<vmem>>, vector<1x8x8xf32>
    %37 = vector.shape_cast %36 : vector<1x8x8xf32> to vector<8x8xf32>
    %c0_38 = arith.constant 0 : index
    %c12 = arith.constant 12 : index
    %38 = vector.load %arg6[%c0_38, %c12] : memref<8x50xf32, #tpu.memory_space<vmem>>, vector<8x36xf32>
    %cst_39 = arith.constant dense<0.000000e+00> : vector<8x36xf32>
    %39 = tpu.matmul %37, %38, %cst_39 {dimension_numbers = #tpu.dot_dimension_numbers<[1], [0], [0], [1], [0, 0, 1, 1], [], []>} : vector<8x8xf32>, vector<8x36xf32>, vector<8x36xf32> -> vector<8x36xf32>
    %40 = arith.addf %35, %39 : vector<8x36xf32>
    %c7_40 = arith.constant 7 : index
    %c0_41 = arith.constant 0 : index
    %c0_42 = arith.constant 0 : index
    %41 = vector.load %arg2[%c7_40, %c0_41, %c0_42] : memref<9x8x8xf32, #tpu.memory_space<vmem>>, vector<1x8x8xf32>
    %42 = vector.shape_cast %41 : vector<1x8x8xf32> to vector<8x8xf32>
    %c0_43 = arith.constant 0 : index
    %c13 = arith.constant 13 : index
    %43 = vector.load %arg6[%c0_43, %c13] : memref<8x50xf32, #tpu.memory_space<vmem>>, vector<8x36xf32>
    %cst_44 = arith.constant dense<0.000000e+00> : vector<8x36xf32>
    %44 = tpu.matmul %42, %43, %cst_44 {dimension_numbers = #tpu.dot_dimension_numbers<[1], [0], [0], [1], [0, 0, 1, 1], [], []>} : vector<8x8xf32>, vector<8x36xf32>, vector<8x36xf32> -> vector<8x36xf32>
    %45 = arith.addf %40, %44 : vector<8x36xf32>
    %c8_45 = arith.constant 8 : index
    %c0_46 = arith.constant 0 : index
    %c0_47 = arith.constant 0 : index
    %46 = vector.load %arg2[%c8_45, %c0_46, %c0_47] : memref<9x8x8xf32, #tpu.memory_space<vmem>>, vector<1x8x8xf32>
    %47 = vector.shape_cast %46 : vector<1x8x8xf32> to vector<8x8xf32>
    %c0_48 = arith.constant 0 : index
    %c14 = arith.constant 14 : index
    %48 = vector.load %arg6[%c0_48, %c14] : memref<8x50xf32, #tpu.memory_space<vmem>>, vector<8x36xf32>
    %cst_49 = arith.constant dense<0.000000e+00> : vector<8x36xf32>
    %49 = tpu.matmul %47, %48, %cst_49 {dimension_numbers = #tpu.dot_dimension_numbers<[1], [0], [0], [1], [0, 0, 1, 1], [], []>} : vector<8x8xf32>, vector<8x36xf32>, vector<8x36xf32> -> vector<8x36xf32>
    %50 = arith.addf %45, %49 : vector<8x36xf32>
    %c0_50 = arith.constant 0 : index
    %c0_51 = arith.constant 0 : index
    %51 = vector.load %arg3[%c0_50, %c0_51] : memref<8x1xf32, #tpu.memory_space<vmem>>, vector<8x1xf32>
    %52 = vector.broadcast %51 : vector<8x1xf32> to vector<8x36xf32>
    %53 = arith.addf %50, %52 : vector<8x36xf32>
    %c0_52 = arith.constant 0 : index
    %c0_53 = arith.constant 0 : index
    %54 = vector.load %arg4[%c0_52, %c0_53] : memref<1x36xf32, #tpu.memory_space<vmem>>, vector<1x36xf32>
    %55 = vector.broadcast %54 : vector<1x36xf32> to vector<8x36xf32>
    %56 = arith.mulf %53, %55 : vector<8x36xf32>
    %c0_54 = arith.constant 0 : index
    %c0_55 = arith.constant 0 : index
    %c0_56 = arith.constant 0 : index
    %57 = vector.load %arg5[%c0_54, %c0_55, %c0_56] : memref<1x8x36xf32, #tpu.memory_space<vmem>>, vector<1x8x36xf32>
    %58 = vector.shape_cast %57 : vector<1x8x36xf32> to vector<8x36xf32>
    %59 = vector.shape_cast %56 : vector<8x36xf32> to vector<1x8x36xf32>
    tpu.vector_store %arg5[%c0_54, %c0_55, %c0_56], %59 {strides = array<i32>} : memref<1x8x36xf32, #tpu.memory_space<vmem>>, vector<1x8x36xf32>,
    return
  }
  func.func @transform_0(%arg0: i32) -> (i32, i32, i32) {
    %c0_i32 = arith.constant 0 : i32
    %c0_i32_0 = arith.constant 0 : i32
    %c0_i32_1 = arith.constant 0 : i32
    return %arg0, %c0_i32, %c0_i32_0 : i32, i32, i32
  }
  func.func @transform_1(%arg0: i32) -> (i32, i32, i32) {
    %c0_i32 = arith.constant 0 : i32
    %c0_i32_0 = arith.constant 0 : i32
    %c0_i32_1 = arith.constant 0 : i32
    %c0_i32_2 = arith.constant 0 : i32
    return %c0_i32, %c0_i32_0, %c0_i32_1 : i32, i32, i32
  }
  func.func @transform_2(%arg0: i32) -> (i32, i32) {
    %c0_i32 = arith.constant 0 : i32
    %c0_i32_0 = arith.constant 0 : i32
    %c0_i32_1 = arith.constant 0 : i32
    return %c0_i32, %c0_i32_0 : i32, i32
  }
  func.func @transform_3(%arg0: i32) -> (i32, i32) {
    %c0_i32 = arith.constant 0 : i32
    %c0_i32_0 = arith.constant 0 : i32
    %c0_i32_1 = arith.constant 0 : i32
    return %c0_i32, %c0_i32_0 : i32, i32
  }
  func.func @transform_4(%arg0: i32) -> (i32, i32, i32) {
    %c0_i32 = arith.constant 0 : i32
    %c0_i32_0 = arith.constant 0 : i32
    %c0_i32_1 = arith.constant 0 : i32
    return %arg0, %c0_i32, %c0_i32_0 : i32, i32, i32
  }
}

module attributes {stable_mosaic.version = 11 : i64} {
  func.func @_conv_bce_kernel(%arg0: i32, %arg1: memref<1x4x1156xf32, #tpu.memory_space<vmem>>, %arg2: memref<1x4x1156xf32, #tpu.memory_space<vmem>>, %arg3: memref<9x4x4xf32, #tpu.memory_space<vmem>>, %arg4: memref<4x1xf32, #tpu.memory_space<vmem>>, %arg5: memref<1x1156xf32, #tpu.memory_space<vmem>>, %arg6: memref<1x1xf32, #tpu.memory_space<smem>>, %arg7: memref<4x1226xf32, #tpu.memory_space<vmem>>, %arg8: memref<1x1xf32, #tpu.memory_space<smem>>) attributes {dimension_semantics = [#tpu.dimension_semantics<arbitrary>], iteration_bounds = array<i64: 2>, scalar_prefetch = 0 : i64, scratch_operands = 2 : i64, tpu.core_type = #tpu.core_type<tc>, window_params = [{transform_indices = @transform_0, window_bounds = array<i64: 1, 4, 1156>}, {transform_indices = @transform_1, window_bounds = array<i64: 1, 4, 1156>}, {pipeline_mode = #tpu.pipeline_mode<synchronous>, transform_indices = @transform_2, window_bounds = array<i64: 9, 4, 4>}, {pipeline_mode = #tpu.pipeline_mode<synchronous>, transform_indices = @transform_3, window_bounds = array<i64: 4, 1>}, {pipeline_mode = #tpu.pipeline_mode<synchronous>, transform_indices = @transform_4, window_bounds = array<i64: 1, 1156>}, {transform_indices = @transform_5, window_bounds = array<i64: 1, 1>}]} {
    %cst = arith.constant 0.000000e+00 : f32
    %0 = vector.broadcast %cst : f32 to vector<4x1226xf32>
    %c0 = arith.constant 0 : index
    %c0_0 = arith.constant 0 : index
    %1 = vector.load %arg7[%c0, %c0_0] : memref<4x1226xf32, #tpu.memory_space<vmem>>, vector<4x1226xf32>
    tpu.vector_store %arg7[%c0, %c0_0], %0 {strides = array<i32>} : memref<4x1226xf32, #tpu.memory_space<vmem>>, vector<4x1226xf32>,
    %c0_1 = arith.constant 0 : index
    %c0_2 = arith.constant 0 : index
    %c0_3 = arith.constant 0 : index
    %2 = vector.load %arg1[%c0_1, %c0_2, %c0_3] : memref<1x4x1156xf32, #tpu.memory_space<vmem>>, vector<1x4x1156xf32>
    %3 = vector.shape_cast %2 : vector<1x4x1156xf32> to vector<4x1156xf32>
    %c0_4 = arith.constant 0 : index
    %c35 = arith.constant 35 : index
    %4 = vector.load %arg7[%c0_4, %c35] : memref<4x1226xf32, #tpu.memory_space<vmem>>, vector<4x1156xf32>
    tpu.vector_store %arg7[%c0_4, %c35], %3 {strides = array<i32>} : memref<4x1226xf32, #tpu.memory_space<vmem>>, vector<4x1156xf32>,
    %cst_5 = arith.constant 0.000000e+00 : f32
    %5 = vector.broadcast %cst_5 : f32 to vector<4x1156xf32>
    %c0_6 = arith.constant 0 : index
    %c0_7 = arith.constant 0 : index
    %c0_8 = arith.constant 0 : index
    %6 = vector.load %arg3[%c0_6, %c0_7, %c0_8] : memref<9x4x4xf32, #tpu.memory_space<vmem>>, vector<1x4x4xf32>
    %7 = vector.shape_cast %6 : vector<1x4x4xf32> to vector<4x4xf32>
    %c0_9 = arith.constant 0 : index
    %c0_10 = arith.constant 0 : index
    %8 = vector.load %arg7[%c0_9, %c0_10] : memref<4x1226xf32, #tpu.memory_space<vmem>>, vector<4x1156xf32>
    %cst_11 = arith.constant dense<0.000000e+00> : vector<4x1156xf32>
    %9 = tpu.matmul %7, %8, %cst_11 {dimension_numbers = #tpu.dot_dimension_numbers<[1], [0], [0], [1], [0, 0, 1, 1], [], []>} : vector<4x4xf32>, vector<4x1156xf32>, vector<4x1156xf32> -> vector<4x1156xf32>
    %10 = arith.addf %5, %9 : vector<4x1156xf32>
    %c1 = arith.constant 1 : index
    %c0_12 = arith.constant 0 : index
    %c0_13 = arith.constant 0 : index
    %11 = vector.load %arg3[%c1, %c0_12, %c0_13] : memref<9x4x4xf32, #tpu.memory_space<vmem>>, vector<1x4x4xf32>
    %12 = vector.shape_cast %11 : vector<1x4x4xf32> to vector<4x4xf32>
    %c0_14 = arith.constant 0 : index
    %c1_15 = arith.constant 1 : index
    %13 = vector.load %arg7[%c0_14, %c1_15] : memref<4x1226xf32, #tpu.memory_space<vmem>>, vector<4x1156xf32>
    %cst_16 = arith.constant dense<0.000000e+00> : vector<4x1156xf32>
    %14 = tpu.matmul %12, %13, %cst_16 {dimension_numbers = #tpu.dot_dimension_numbers<[1], [0], [0], [1], [0, 0, 1, 1], [], []>} : vector<4x4xf32>, vector<4x1156xf32>, vector<4x1156xf32> -> vector<4x1156xf32>
    %15 = arith.addf %10, %14 : vector<4x1156xf32>
    %c2 = arith.constant 2 : index
    %c0_17 = arith.constant 0 : index
    %c0_18 = arith.constant 0 : index
    %16 = vector.load %arg3[%c2, %c0_17, %c0_18] : memref<9x4x4xf32, #tpu.memory_space<vmem>>, vector<1x4x4xf32>
    %17 = vector.shape_cast %16 : vector<1x4x4xf32> to vector<4x4xf32>
    %c0_19 = arith.constant 0 : index
    %c2_20 = arith.constant 2 : index
    %18 = vector.load %arg7[%c0_19, %c2_20] : memref<4x1226xf32, #tpu.memory_space<vmem>>, vector<4x1156xf32>
    %cst_21 = arith.constant dense<0.000000e+00> : vector<4x1156xf32>
    %19 = tpu.matmul %17, %18, %cst_21 {dimension_numbers = #tpu.dot_dimension_numbers<[1], [0], [0], [1], [0, 0, 1, 1], [], []>} : vector<4x4xf32>, vector<4x1156xf32>, vector<4x1156xf32> -> vector<4x1156xf32>
    %20 = arith.addf %15, %19 : vector<4x1156xf32>
    %c3 = arith.constant 3 : index
    %c0_22 = arith.constant 0 : index
    %c0_23 = arith.constant 0 : index
    %21 = vector.load %arg3[%c3, %c0_22, %c0_23] : memref<9x4x4xf32, #tpu.memory_space<vmem>>, vector<1x4x4xf32>
    %22 = vector.shape_cast %21 : vector<1x4x4xf32> to vector<4x4xf32>
    %c0_24 = arith.constant 0 : index
    %c34 = arith.constant 34 : index
    %23 = vector.load %arg7[%c0_24, %c34] : memref<4x1226xf32, #tpu.memory_space<vmem>>, vector<4x1156xf32>
    %cst_25 = arith.constant dense<0.000000e+00> : vector<4x1156xf32>
    %24 = tpu.matmul %22, %23, %cst_25 {dimension_numbers = #tpu.dot_dimension_numbers<[1], [0], [0], [1], [0, 0, 1, 1], [], []>} : vector<4x4xf32>, vector<4x1156xf32>, vector<4x1156xf32> -> vector<4x1156xf32>
    %25 = arith.addf %20, %24 : vector<4x1156xf32>
    %c4 = arith.constant 4 : index
    %c0_26 = arith.constant 0 : index
    %c0_27 = arith.constant 0 : index
    %26 = vector.load %arg3[%c4, %c0_26, %c0_27] : memref<9x4x4xf32, #tpu.memory_space<vmem>>, vector<1x4x4xf32>
    %27 = vector.shape_cast %26 : vector<1x4x4xf32> to vector<4x4xf32>
    %c0_28 = arith.constant 0 : index
    %c35_29 = arith.constant 35 : index
    %28 = vector.load %arg7[%c0_28, %c35_29] : memref<4x1226xf32, #tpu.memory_space<vmem>>, vector<4x1156xf32>
    %cst_30 = arith.constant dense<0.000000e+00> : vector<4x1156xf32>
    %29 = tpu.matmul %27, %28, %cst_30 {dimension_numbers = #tpu.dot_dimension_numbers<[1], [0], [0], [1], [0, 0, 1, 1], [], []>} : vector<4x4xf32>, vector<4x1156xf32>, vector<4x1156xf32> -> vector<4x1156xf32>
    %30 = arith.addf %25, %29 : vector<4x1156xf32>
    %c5 = arith.constant 5 : index
    %c0_31 = arith.constant 0 : index
    %c0_32 = arith.constant 0 : index
    %31 = vector.load %arg3[%c5, %c0_31, %c0_32] : memref<9x4x4xf32, #tpu.memory_space<vmem>>, vector<1x4x4xf32>
    %32 = vector.shape_cast %31 : vector<1x4x4xf32> to vector<4x4xf32>
    %c0_33 = arith.constant 0 : index
    %c36 = arith.constant 36 : index
    %33 = vector.load %arg7[%c0_33, %c36] : memref<4x1226xf32, #tpu.memory_space<vmem>>, vector<4x1156xf32>
    %cst_34 = arith.constant dense<0.000000e+00> : vector<4x1156xf32>
    %34 = tpu.matmul %32, %33, %cst_34 {dimension_numbers = #tpu.dot_dimension_numbers<[1], [0], [0], [1], [0, 0, 1, 1], [], []>} : vector<4x4xf32>, vector<4x1156xf32>, vector<4x1156xf32> -> vector<4x1156xf32>
    %35 = arith.addf %30, %34 : vector<4x1156xf32>
    %c6 = arith.constant 6 : index
    %c0_35 = arith.constant 0 : index
    %c0_36 = arith.constant 0 : index
    %36 = vector.load %arg3[%c6, %c0_35, %c0_36] : memref<9x4x4xf32, #tpu.memory_space<vmem>>, vector<1x4x4xf32>
    %37 = vector.shape_cast %36 : vector<1x4x4xf32> to vector<4x4xf32>
    %c0_37 = arith.constant 0 : index
    %c68 = arith.constant 68 : index
    %38 = vector.load %arg7[%c0_37, %c68] : memref<4x1226xf32, #tpu.memory_space<vmem>>, vector<4x1156xf32>
    %cst_38 = arith.constant dense<0.000000e+00> : vector<4x1156xf32>
    %39 = tpu.matmul %37, %38, %cst_38 {dimension_numbers = #tpu.dot_dimension_numbers<[1], [0], [0], [1], [0, 0, 1, 1], [], []>} : vector<4x4xf32>, vector<4x1156xf32>, vector<4x1156xf32> -> vector<4x1156xf32>
    %40 = arith.addf %35, %39 : vector<4x1156xf32>
    %c7 = arith.constant 7 : index
    %c0_39 = arith.constant 0 : index
    %c0_40 = arith.constant 0 : index
    %41 = vector.load %arg3[%c7, %c0_39, %c0_40] : memref<9x4x4xf32, #tpu.memory_space<vmem>>, vector<1x4x4xf32>
    %42 = vector.shape_cast %41 : vector<1x4x4xf32> to vector<4x4xf32>
    %c0_41 = arith.constant 0 : index
    %c69 = arith.constant 69 : index
    %43 = vector.load %arg7[%c0_41, %c69] : memref<4x1226xf32, #tpu.memory_space<vmem>>, vector<4x1156xf32>
    %cst_42 = arith.constant dense<0.000000e+00> : vector<4x1156xf32>
    %44 = tpu.matmul %42, %43, %cst_42 {dimension_numbers = #tpu.dot_dimension_numbers<[1], [0], [0], [1], [0, 0, 1, 1], [], []>} : vector<4x4xf32>, vector<4x1156xf32>, vector<4x1156xf32> -> vector<4x1156xf32>
    %45 = arith.addf %40, %44 : vector<4x1156xf32>
    %c8 = arith.constant 8 : index
    %c0_43 = arith.constant 0 : index
    %c0_44 = arith.constant 0 : index
    %46 = vector.load %arg3[%c8, %c0_43, %c0_44] : memref<9x4x4xf32, #tpu.memory_space<vmem>>, vector<1x4x4xf32>
    %47 = vector.shape_cast %46 : vector<1x4x4xf32> to vector<4x4xf32>
    %c0_45 = arith.constant 0 : index
    %c70 = arith.constant 70 : index
    %48 = vector.load %arg7[%c0_45, %c70] : memref<4x1226xf32, #tpu.memory_space<vmem>>, vector<4x1156xf32>
    %cst_46 = arith.constant dense<0.000000e+00> : vector<4x1156xf32>
    %49 = tpu.matmul %47, %48, %cst_46 {dimension_numbers = #tpu.dot_dimension_numbers<[1], [0], [0], [1], [0, 0, 1, 1], [], []>} : vector<4x4xf32>, vector<4x1156xf32>, vector<4x1156xf32> -> vector<4x1156xf32>
    %50 = arith.addf %45, %49 : vector<4x1156xf32>
    %c0_47 = arith.constant 0 : index
    %c0_48 = arith.constant 0 : index
    %51 = vector.load %arg4[%c0_47, %c0_48] : memref<4x1xf32, #tpu.memory_space<vmem>>, vector<4x1xf32>
    %52 = vector.broadcast %51 : vector<4x1xf32> to vector<4x1156xf32>
    %53 = arith.addf %50, %52 : vector<4x1156xf32>
    %cst_49 = arith.constant 0.000000e+00 : f32
    %54 = vector.broadcast %cst_49 : f32 to vector<4x1156xf32>
    %55 = arith.subf %54, %53 : vector<4x1156xf32>
    %cst_50 = arith.constant 2.500000e-01 : f32
    %56 = vector.broadcast %cst_50 : f32 to vector<4x1156xf32>
    %57 = arith.mulf %55, %56 : vector<4x1156xf32>
    %58 = math.exp %57 : vector<4x1156xf32>
    %cst_51 = arith.constant 1.000000e+00 : f32
    %59 = vector.broadcast %cst_51 : f32 to vector<4x1156xf32>
    %60 = arith.addf %59, %58 : vector<4x1156xf32>
    %cst_52 = arith.constant 1.000000e+00 : f32
    %61 = vector.broadcast %cst_52 : f32 to vector<4x1156xf32>
    %62 = arith.divf %61, %60 : vector<4x1156xf32>
    %c0_53 = arith.constant 0 : index
    %c0_54 = arith.constant 0 : index
    %c0_55 = arith.constant 0 : index
    %63 = vector.load %arg2[%c0_53, %c0_54, %c0_55] : memref<1x4x1156xf32, #tpu.memory_space<vmem>>, vector<1x4x1156xf32>
    %64 = vector.shape_cast %63 : vector<1x4x1156xf32> to vector<4x1156xf32>
    %cst_56 = arith.constant 0.000000e+00 : f32
    %65 = vector.broadcast %cst_56 : f32 to vector<4x1156xf32>
    %66 = arith.subf %65, %64 : vector<4x1156xf32>
    %cst_57 = arith.constant 2.500000e-01 : f32
    %67 = vector.broadcast %cst_57 : f32 to vector<4x1156xf32>
    %68 = arith.mulf %66, %67 : vector<4x1156xf32>
    %69 = math.exp %68 : vector<4x1156xf32>
    %cst_58 = arith.constant 1.000000e+00 : f32
    %70 = vector.broadcast %cst_58 : f32 to vector<4x1156xf32>
    %71 = arith.addf %70, %69 : vector<4x1156xf32>
    %cst_59 = arith.constant 1.000000e+00 : f32
    %72 = vector.broadcast %cst_59 : f32 to vector<4x1156xf32>
    %73 = arith.divf %72, %71 : vector<4x1156xf32>
    %cst_60 = arith.constant 1.000000e+00 : f32
    %74 = vector.broadcast %cst_60 : f32 to vector<4x1156xf32>
    %75 = arith.subf %74, %73 : vector<4x1156xf32>
    %76 = arith.mulf %62, %75 : vector<4x1156xf32>
    %cst_61 = arith.constant 0.000000e+00 : f32
    %77 = vector.broadcast %cst_61 : f32 to vector<4x1156xf32>
    %78 = arith.subf %77, %62 : vector<4x1156xf32>
    %79 = math.exp %78 : vector<4x1156xf32>
    %cst_62 = arith.constant 1.000000e+00 : f32
    %80 = vector.broadcast %cst_62 : f32 to vector<4x1156xf32>
    %81 = arith.addf %80, %79 : vector<4x1156xf32>
    %82 = math.log %81 : vector<4x1156xf32>
    %83 = arith.addf %76, %82 : vector<4x1156xf32>
    %c0_63 = arith.constant 0 : index
    %c0_64 = arith.constant 0 : index
    %84 = vector.load %arg5[%c0_63, %c0_64] : memref<1x1156xf32, #tpu.memory_space<vmem>>, vector<1x1156xf32>
    %85 = vector.broadcast %84 : vector<1x1156xf32> to vector<4x1156xf32>
    %86 = arith.mulf %83, %85 : vector<4x1156xf32>
    %c0_i32 = arith.constant 0 : i32
    %87 = arith.cmpi eq, %arg0, %c0_i32 : i32
    %88 = arith.extui %87 : i1 to i32
    %c0_i32_65 = arith.constant 0 : i32
    %89 = arith.cmpi ne, %88, %c0_i32_65 : i32
    scf.if %89 {
      %cst_73 = arith.constant 0.000000e+00 : f32
      %c0_74 = arith.constant 0 : index
      %c0_75 = arith.constant 0 : index
      %101 = memref.load %arg8[%c0_74, %c0_75] : memref<1x1xf32, #tpu.memory_space<smem>>
      memref.store %cst_73, %arg8[%c0_74, %c0_75] : memref<1x1xf32, #tpu.memory_space<smem>>
    } else {
    }
    %c0_66 = arith.constant 0 : index
    %c0_67 = arith.constant 0 : index
    %90 = memref.load %arg8[%c0_66, %c0_67] : memref<1x1xf32, #tpu.memory_space<smem>>
    %91 = vector.shape_cast %86 : vector<4x1156xf32> to vector<1x4x1156xf32>
    %cst_68 = arith.constant dense<0.000000e+00> : vector<1xf32>
    %92 = vector.multi_reduction <add>, %91, %cst_68 [1, 2] : vector<1x4x1156xf32> to vector<1xf32>
    %93 = vector.shape_cast %92 : vector<1xf32> to vector<1x1x1xf32>
    %94 = vector.extract %93[0, 0, 0] : f32 from vector<1x1x1xf32>
    %cst_69 = arith.constant 1.22070313E-4 : f32
    %95 = arith.mulf %94, %cst_69 : f32
    %96 = arith.addf %90, %95 : f32
    %c0_70 = arith.constant 0 : index
    %c0_71 = arith.constant 0 : index
    %97 = memref.load %arg8[%c0_70, %c0_71] : memref<1x1xf32, #tpu.memory_space<smem>>
    memref.store %96, %arg8[%c0_70, %c0_71] : memref<1x1xf32, #tpu.memory_space<smem>>
    %c1_i32 = arith.constant 1 : i32
    %98 = arith.cmpi eq, %arg0, %c1_i32 : i32
    %99 = arith.extui %98 : i1 to i32
    %c0_i32_72 = arith.constant 0 : i32
    %100 = arith.cmpi ne, %99, %c0_i32_72 : i32
    scf.if %100 {
      %c0_73 = arith.constant 0 : index
      %c0_74 = arith.constant 0 : index
      %101 = memref.load %arg8[%c0_73, %c0_74] : memref<1x1xf32, #tpu.memory_space<smem>>
      %c0_75 = arith.constant 0 : index
      %c0_76 = arith.constant 0 : index
      %102 = memref.load %arg6[%c0_75, %c0_76] : memref<1x1xf32, #tpu.memory_space<smem>>
      memref.store %101, %arg6[%c0_75, %c0_76] : memref<1x1xf32, #tpu.memory_space<smem>>
    } else {
    }
    return
  }
  func.func @transform_0(%arg0: i32) -> (i32, i32, i32) {
    %c0_i32 = arith.constant 0 : i32
    %c0_i32_0 = arith.constant 0 : i32
    %c0_i32_1 = arith.constant 0 : i32
    return %arg0, %c0_i32, %c0_i32_0 : i32, i32, i32
  }
  func.func @transform_1(%arg0: i32) -> (i32, i32, i32) {
    %c0_i32 = arith.constant 0 : i32
    %c0_i32_0 = arith.constant 0 : i32
    %c0_i32_1 = arith.constant 0 : i32
    return %arg0, %c0_i32, %c0_i32_0 : i32, i32, i32
  }
  func.func @transform_2(%arg0: i32) -> (i32, i32, i32) {
    %c0_i32 = arith.constant 0 : i32
    %c0_i32_0 = arith.constant 0 : i32
    %c0_i32_1 = arith.constant 0 : i32
    %c0_i32_2 = arith.constant 0 : i32
    return %c0_i32, %c0_i32_0, %c0_i32_1 : i32, i32, i32
  }
  func.func @transform_3(%arg0: i32) -> (i32, i32) {
    %c0_i32 = arith.constant 0 : i32
    %c0_i32_0 = arith.constant 0 : i32
    %c0_i32_1 = arith.constant 0 : i32
    return %c0_i32, %c0_i32_0 : i32, i32
  }
  func.func @transform_4(%arg0: i32) -> (i32, i32) {
    %c0_i32 = arith.constant 0 : i32
    %c0_i32_0 = arith.constant 0 : i32
    %c0_i32_1 = arith.constant 0 : i32
    return %c0_i32, %c0_i32_0 : i32, i32
  }
  func.func @transform_5(%arg0: i32) -> (i32, i32) {
    %c0_i32 = arith.constant 0 : i32
    %c0_i32_0 = arith.constant 0 : i32
    %c0_i32_1 = arith.constant 0 : i32
    return %c0_i32, %c0_i32_0 : i32, i32
  }
}

module attributes {stable_mosaic.version = 11 : i64} {
  func.func @_upsample_conv_kernel(%arg0: i32, %arg1: memref<1x8x36xf32, #tpu.memory_space<vmem>>, %arg2: memref<36x1156xf32, #tpu.memory_space<vmem>>, %arg3: memref<9x4x8xf32, #tpu.memory_space<vmem>>, %arg4: memref<4x1xf32, #tpu.memory_space<vmem>>, %arg5: memref<1x1156xf32, #tpu.memory_space<vmem>>, %arg6: memref<1x4x1156xf32, #tpu.memory_space<vmem>>, %arg7: memref<8x1226xf32, #tpu.memory_space<vmem>>) attributes {dimension_semantics = [#tpu.dimension_semantics<parallel>], iteration_bounds = array<i64: 2>, scalar_prefetch = 0 : i64, scratch_operands = 1 : i64, tpu.core_type = #tpu.core_type<tc>, window_params = [{transform_indices = @transform_0, window_bounds = array<i64: 1, 8, 36>}, {pipeline_mode = #tpu.pipeline_mode<synchronous>, transform_indices = @transform_1, window_bounds = array<i64: 36, 1156>}, {pipeline_mode = #tpu.pipeline_mode<synchronous>, transform_indices = @transform_2, window_bounds = array<i64: 9, 4, 8>}, {pipeline_mode = #tpu.pipeline_mode<synchronous>, transform_indices = @transform_3, window_bounds = array<i64: 4, 1>}, {pipeline_mode = #tpu.pipeline_mode<synchronous>, transform_indices = @transform_4, window_bounds = array<i64: 1, 1156>}, {transform_indices = @transform_5, window_bounds = array<i64: 1, 4, 1156>}]} {
    %cst = arith.constant 0.000000e+00 : f32
    %0 = vector.broadcast %cst : f32 to vector<8x1226xf32>
    %c0 = arith.constant 0 : index
    %c0_0 = arith.constant 0 : index
    %1 = vector.load %arg7[%c0, %c0_0] : memref<8x1226xf32, #tpu.memory_space<vmem>>, vector<8x1226xf32>
    tpu.vector_store %arg7[%c0, %c0_0], %0 {strides = array<i32>} : memref<8x1226xf32, #tpu.memory_space<vmem>>, vector<8x1226xf32>,
    %c0_1 = arith.constant 0 : index
    %c0_2 = arith.constant 0 : index
    %c0_3 = arith.constant 0 : index
    %2 = vector.load %arg1[%c0_1, %c0_2, %c0_3] : memref<1x8x36xf32, #tpu.memory_space<vmem>>, vector<1x8x36xf32>
    %3 = vector.shape_cast %2 : vector<1x8x36xf32> to vector<8x36xf32>
    %c0_4 = arith.constant 0 : index
    %c0_5 = arith.constant 0 : index
    %4 = vector.load %arg2[%c0_4, %c0_5] : memref<36x1156xf32, #tpu.memory_space<vmem>>, vector<36x1156xf32>
    %cst_6 = arith.constant dense<0.000000e+00> : vector<8x1156xf32>
    %5 = tpu.matmul %3, %4, %cst_6 {dimension_numbers = #tpu.dot_dimension_numbers<[1], [0], [0], [1], [0, 0, 1, 1], [], []>} : vector<8x36xf32>, vector<36x1156xf32>, vector<8x1156xf32> -> vector<8x1156xf32>
    %c0_7 = arith.constant 0 : index
    %c35 = arith.constant 35 : index
    %6 = vector.load %arg7[%c0_7, %c35] : memref<8x1226xf32, #tpu.memory_space<vmem>>, vector<8x1156xf32>
    tpu.vector_store %arg7[%c0_7, %c35], %5 {strides = array<i32>} : memref<8x1226xf32, #tpu.memory_space<vmem>>, vector<8x1156xf32>,
    %cst_8 = arith.constant 0.000000e+00 : f32
    %7 = vector.broadcast %cst_8 : f32 to vector<4x1156xf32>
    %c0_9 = arith.constant 0 : index
    %c0_10 = arith.constant 0 : index
    %c0_11 = arith.constant 0 : index
    %8 = vector.load %arg3[%c0_9, %c0_10, %c0_11] : memref<9x4x8xf32, #tpu.memory_space<vmem>>, vector<1x4x8xf32>
    %9 = vector.shape_cast %8 : vector<1x4x8xf32> to vector<4x8xf32>
    %c0_12 = arith.constant 0 : index
    %c0_13 = arith.constant 0 : index
    %10 = vector.load %arg7[%c0_12, %c0_13] : memref<8x1226xf32, #tpu.memory_space<vmem>>, vector<8x1156xf32>
    %cst_14 = arith.constant dense<0.000000e+00> : vector<4x1156xf32>
    %11 = tpu.matmul %9, %10, %cst_14 {dimension_numbers = #tpu.dot_dimension_numbers<[1], [0], [0], [1], [0, 0, 1, 1], [], []>} : vector<4x8xf32>, vector<8x1156xf32>, vector<4x1156xf32> -> vector<4x1156xf32>
    %12 = arith.addf %7, %11 : vector<4x1156xf32>
    %c1 = arith.constant 1 : index
    %c0_15 = arith.constant 0 : index
    %c0_16 = arith.constant 0 : index
    %13 = vector.load %arg3[%c1, %c0_15, %c0_16] : memref<9x4x8xf32, #tpu.memory_space<vmem>>, vector<1x4x8xf32>
    %14 = vector.shape_cast %13 : vector<1x4x8xf32> to vector<4x8xf32>
    %c0_17 = arith.constant 0 : index
    %c1_18 = arith.constant 1 : index
    %15 = vector.load %arg7[%c0_17, %c1_18] : memref<8x1226xf32, #tpu.memory_space<vmem>>, vector<8x1156xf32>
    %cst_19 = arith.constant dense<0.000000e+00> : vector<4x1156xf32>
    %16 = tpu.matmul %14, %15, %cst_19 {dimension_numbers = #tpu.dot_dimension_numbers<[1], [0], [0], [1], [0, 0, 1, 1], [], []>} : vector<4x8xf32>, vector<8x1156xf32>, vector<4x1156xf32> -> vector<4x1156xf32>
    %17 = arith.addf %12, %16 : vector<4x1156xf32>
    %c2 = arith.constant 2 : index
    %c0_20 = arith.constant 0 : index
    %c0_21 = arith.constant 0 : index
    %18 = vector.load %arg3[%c2, %c0_20, %c0_21] : memref<9x4x8xf32, #tpu.memory_space<vmem>>, vector<1x4x8xf32>
    %19 = vector.shape_cast %18 : vector<1x4x8xf32> to vector<4x8xf32>
    %c0_22 = arith.constant 0 : index
    %c2_23 = arith.constant 2 : index
    %20 = vector.load %arg7[%c0_22, %c2_23] : memref<8x1226xf32, #tpu.memory_space<vmem>>, vector<8x1156xf32>
    %cst_24 = arith.constant dense<0.000000e+00> : vector<4x1156xf32>
    %21 = tpu.matmul %19, %20, %cst_24 {dimension_numbers = #tpu.dot_dimension_numbers<[1], [0], [0], [1], [0, 0, 1, 1], [], []>} : vector<4x8xf32>, vector<8x1156xf32>, vector<4x1156xf32> -> vector<4x1156xf32>
    %22 = arith.addf %17, %21 : vector<4x1156xf32>
    %c3 = arith.constant 3 : index
    %c0_25 = arith.constant 0 : index
    %c0_26 = arith.constant 0 : index
    %23 = vector.load %arg3[%c3, %c0_25, %c0_26] : memref<9x4x8xf32, #tpu.memory_space<vmem>>, vector<1x4x8xf32>
    %24 = vector.shape_cast %23 : vector<1x4x8xf32> to vector<4x8xf32>
    %c0_27 = arith.constant 0 : index
    %c34 = arith.constant 34 : index
    %25 = vector.load %arg7[%c0_27, %c34] : memref<8x1226xf32, #tpu.memory_space<vmem>>, vector<8x1156xf32>
    %cst_28 = arith.constant dense<0.000000e+00> : vector<4x1156xf32>
    %26 = tpu.matmul %24, %25, %cst_28 {dimension_numbers = #tpu.dot_dimension_numbers<[1], [0], [0], [1], [0, 0, 1, 1], [], []>} : vector<4x8xf32>, vector<8x1156xf32>, vector<4x1156xf32> -> vector<4x1156xf32>
    %27 = arith.addf %22, %26 : vector<4x1156xf32>
    %c4 = arith.constant 4 : index
    %c0_29 = arith.constant 0 : index
    %c0_30 = arith.constant 0 : index
    %28 = vector.load %arg3[%c4, %c0_29, %c0_30] : memref<9x4x8xf32, #tpu.memory_space<vmem>>, vector<1x4x8xf32>
    %29 = vector.shape_cast %28 : vector<1x4x8xf32> to vector<4x8xf32>
    %c0_31 = arith.constant 0 : index
    %c35_32 = arith.constant 35 : index
    %30 = vector.load %arg7[%c0_31, %c35_32] : memref<8x1226xf32, #tpu.memory_space<vmem>>, vector<8x1156xf32>
    %cst_33 = arith.constant dense<0.000000e+00> : vector<4x1156xf32>
    %31 = tpu.matmul %29, %30, %cst_33 {dimension_numbers = #tpu.dot_dimension_numbers<[1], [0], [0], [1], [0, 0, 1, 1], [], []>} : vector<4x8xf32>, vector<8x1156xf32>, vector<4x1156xf32> -> vector<4x1156xf32>
    %32 = arith.addf %27, %31 : vector<4x1156xf32>
    %c5 = arith.constant 5 : index
    %c0_34 = arith.constant 0 : index
    %c0_35 = arith.constant 0 : index
    %33 = vector.load %arg3[%c5, %c0_34, %c0_35] : memref<9x4x8xf32, #tpu.memory_space<vmem>>, vector<1x4x8xf32>
    %34 = vector.shape_cast %33 : vector<1x4x8xf32> to vector<4x8xf32>
    %c0_36 = arith.constant 0 : index
    %c36 = arith.constant 36 : index
    %35 = vector.load %arg7[%c0_36, %c36] : memref<8x1226xf32, #tpu.memory_space<vmem>>, vector<8x1156xf32>
    %cst_37 = arith.constant dense<0.000000e+00> : vector<4x1156xf32>
    %36 = tpu.matmul %34, %35, %cst_37 {dimension_numbers = #tpu.dot_dimension_numbers<[1], [0], [0], [1], [0, 0, 1, 1], [], []>} : vector<4x8xf32>, vector<8x1156xf32>, vector<4x1156xf32> -> vector<4x1156xf32>
    %37 = arith.addf %32, %36 : vector<4x1156xf32>
    %c6 = arith.constant 6 : index
    %c0_38 = arith.constant 0 : index
    %c0_39 = arith.constant 0 : index
    %38 = vector.load %arg3[%c6, %c0_38, %c0_39] : memref<9x4x8xf32, #tpu.memory_space<vmem>>, vector<1x4x8xf32>
    %39 = vector.shape_cast %38 : vector<1x4x8xf32> to vector<4x8xf32>
    %c0_40 = arith.constant 0 : index
    %c68 = arith.constant 68 : index
    %40 = vector.load %arg7[%c0_40, %c68] : memref<8x1226xf32, #tpu.memory_space<vmem>>, vector<8x1156xf32>
    %cst_41 = arith.constant dense<0.000000e+00> : vector<4x1156xf32>
    %41 = tpu.matmul %39, %40, %cst_41 {dimension_numbers = #tpu.dot_dimension_numbers<[1], [0], [0], [1], [0, 0, 1, 1], [], []>} : vector<4x8xf32>, vector<8x1156xf32>, vector<4x1156xf32> -> vector<4x1156xf32>
    %42 = arith.addf %37, %41 : vector<4x1156xf32>
    %c7 = arith.constant 7 : index
    %c0_42 = arith.constant 0 : index
    %c0_43 = arith.constant 0 : index
    %43 = vector.load %arg3[%c7, %c0_42, %c0_43] : memref<9x4x8xf32, #tpu.memory_space<vmem>>, vector<1x4x8xf32>
    %44 = vector.shape_cast %43 : vector<1x4x8xf32> to vector<4x8xf32>
    %c0_44 = arith.constant 0 : index
    %c69 = arith.constant 69 : index
    %45 = vector.load %arg7[%c0_44, %c69] : memref<8x1226xf32, #tpu.memory_space<vmem>>, vector<8x1156xf32>
    %cst_45 = arith.constant dense<0.000000e+00> : vector<4x1156xf32>
    %46 = tpu.matmul %44, %45, %cst_45 {dimension_numbers = #tpu.dot_dimension_numbers<[1], [0], [0], [1], [0, 0, 1, 1], [], []>} : vector<4x8xf32>, vector<8x1156xf32>, vector<4x1156xf32> -> vector<4x1156xf32>
    %47 = arith.addf %42, %46 : vector<4x1156xf32>
    %c8 = arith.constant 8 : index
    %c0_46 = arith.constant 0 : index
    %c0_47 = arith.constant 0 : index
    %48 = vector.load %arg3[%c8, %c0_46, %c0_47] : memref<9x4x8xf32, #tpu.memory_space<vmem>>, vector<1x4x8xf32>
    %49 = vector.shape_cast %48 : vector<1x4x8xf32> to vector<4x8xf32>
    %c0_48 = arith.constant 0 : index
    %c70 = arith.constant 70 : index
    %50 = vector.load %arg7[%c0_48, %c70] : memref<8x1226xf32, #tpu.memory_space<vmem>>, vector<8x1156xf32>
    %cst_49 = arith.constant dense<0.000000e+00> : vector<4x1156xf32>
    %51 = tpu.matmul %49, %50, %cst_49 {dimension_numbers = #tpu.dot_dimension_numbers<[1], [0], [0], [1], [0, 0, 1, 1], [], []>} : vector<4x8xf32>, vector<8x1156xf32>, vector<4x1156xf32> -> vector<4x1156xf32>
    %52 = arith.addf %47, %51 : vector<4x1156xf32>
    %c0_50 = arith.constant 0 : index
    %c0_51 = arith.constant 0 : index
    %53 = vector.load %arg4[%c0_50, %c0_51] : memref<4x1xf32, #tpu.memory_space<vmem>>, vector<4x1xf32>
    %54 = vector.broadcast %53 : vector<4x1xf32> to vector<4x1156xf32>
    %55 = arith.addf %52, %54 : vector<4x1156xf32>
    %c0_52 = arith.constant 0 : index
    %c0_53 = arith.constant 0 : index
    %56 = vector.load %arg5[%c0_52, %c0_53] : memref<1x1156xf32, #tpu.memory_space<vmem>>, vector<1x1156xf32>
    %57 = vector.broadcast %56 : vector<1x1156xf32> to vector<4x1156xf32>
    %58 = arith.mulf %55, %57 : vector<4x1156xf32>
    %c0_54 = arith.constant 0 : index
    %c0_55 = arith.constant 0 : index
    %c0_56 = arith.constant 0 : index
    %59 = vector.load %arg6[%c0_54, %c0_55, %c0_56] : memref<1x4x1156xf32, #tpu.memory_space<vmem>>, vector<1x4x1156xf32>
    %60 = vector.shape_cast %59 : vector<1x4x1156xf32> to vector<4x1156xf32>
    %61 = vector.shape_cast %58 : vector<4x1156xf32> to vector<1x4x1156xf32>
    tpu.vector_store %arg6[%c0_54, %c0_55, %c0_56], %61 {strides = array<i32>} : memref<1x4x1156xf32, #tpu.memory_space<vmem>>, vector<1x4x1156xf32>,
    return
  }
  func.func @transform_0(%arg0: i32) -> (i32, i32, i32) {
    %c0_i32 = arith.constant 0 : i32
    %c0_i32_0 = arith.constant 0 : i32
    %c0_i32_1 = arith.constant 0 : i32
    return %arg0, %c0_i32, %c0_i32_0 : i32, i32, i32
  }
  func.func @transform_1(%arg0: i32) -> (i32, i32) {
    %c0_i32 = arith.constant 0 : i32
    %c0_i32_0 = arith.constant 0 : i32
    %c0_i32_1 = arith.constant 0 : i32
    return %c0_i32, %c0_i32_0 : i32, i32
  }
  func.func @transform_2(%arg0: i32) -> (i32, i32, i32) {
    %c0_i32 = arith.constant 0 : i32
    %c0_i32_0 = arith.constant 0 : i32
    %c0_i32_1 = arith.constant 0 : i32
    %c0_i32_2 = arith.constant 0 : i32
    return %c0_i32, %c0_i32_0, %c0_i32_1 : i32, i32, i32
  }
  func.func @transform_3(%arg0: i32) -> (i32, i32) {
    %c0_i32 = arith.constant 0 : i32
    %c0_i32_0 = arith.constant 0 : i32
    %c0_i32_1 = arith.constant 0 : i32
    return %c0_i32, %c0_i32_0 : i32, i32
  }
  func.func @transform_4(%arg0: i32) -> (i32, i32) {
    %c0_i32 = arith.constant 0 : i32
    %c0_i32_0 = arith.constant 0 : i32
    %c0_i32_1 = arith.constant 0 : i32
    return %c0_i32, %c0_i32_0 : i32, i32
  }
  func.func @transform_5(%arg0: i32) -> (i32, i32, i32) {
    %c0_i32 = arith.constant 0 : i32
    %c0_i32_0 = arith.constant 0 : i32
    %c0_i32_1 = arith.constant 0 : i32
    return %arg0, %c0_i32, %c0_i32_0 : i32, i32, i32
  }
}

</mosaic_0001>

<llo_original>
// kernel: distill_kl_ml_forward.3
$region0: #{distill_kl_ml_forward.3}
  #allocation0 [shape = 'u32[]', space=smem, size = 0x4, offset = 0x4, fixed_abs, tag = 'smem constant byte address 0x4 - core index']
  #allocation1 [shape = 'u32[144,128]{1,0:T(1,128)}', space=vmem, size = 0x12000, scoped, tag = 'internal scratch']
  #allocation2 [shape = 'f32[8,50]{1,0:T(8,128)}', space=vmem, size = 0x1000, scoped, tag = 'scratch operand']
  %s0 = inlined_call_operand.vmem [shape: f32[2,8,36], index: 0, kind: input, shape index: {}]
  %s1 = inlined_call_operand.vmem [shape: f32[9,8,8], index: 1, kind: input, shape index: {}]
  %s2 = inlined_call_operand.vmem [shape: f32[8,1], index: 2, kind: input, shape index: {}]
  %s3 = inlined_call_operand.vmem [shape: f32[1,36], index: 3, kind: input, shape index: {}]
  %s4 = inlined_call_operand.vmem [shape: f32[2,8,36], index: 4, kind: output, shape index: {}]
  %s5 = sld [smem:[#allocation0]]
  $region49: #{distill_kl_ml_forward.3} parent=0
    _
  %s7 = ssub.s32 1, %s5
  %s8 = scalar_select 0, %s7, %s5
  loop: start=0, step=1, limit=4
  $region2: #{distill_kl_ml_forward.3} parent=0 // loop_pre_header
    _
  $region3: #{distill_kl_ml_forward.3} parent=0 // loop_header
    %s10 = sphi 0, %s14
    %p11 = scmp.ge.s32.totalorder %s10, 4
    %s20 = sphi 0, %s22
    %s23 = sphi 0, %s20
    %s24 = sphi 0, %s23
    %s40 = sphi 0, %s24
    %s44 = sphi 0, %s44
    %s46 = sphi 0, %s44
    %s47 = sphi 0, %s46
    %s61 = sphi 0, %s47
    %s65 = sphi 0, %s65
    %s67 = sphi 0, %s65
    %s68 = sphi 0, %s67
    %s82 = sphi 0, %s68
    %s86 = sphi 0, %s86
    %s88 = sphi 0, %s86
    %s89 = sphi 0, %s88
    %s103 = sphi 0, %s89
    %s109 = sphi 0, %s111
    %s112 = sphi 0, %s109
    %s113 = sphi 0, %s112
    %s129 = sphi 0, %s113
  $region4: #{distill_kl_ml_forward.3} parent=0 // loop_header_branch
    %13 = sbr.rel (%p11) target = $region8
  $region5: #{distill_kl_ml_forward.3} parent=0 // loop_body
    %s15 = ssub.s32 %s10, 1
    %s16 = ssub.s32 %s10, 2
    %s17 = sadd.s32 %s10, 1
    %s18 = ssub.s32 %s10, %s17
    %p19 = scmp.eq.s32.totalorder %s18, 0
    %s21 = sadd.s32 %s20, 1
    %s22 = scalar_select %p19, %s20, %s21
    %p25 = pneg %p19
    %p26 = scmp.eq.s32.totalorder %s10, 1
    %p27 = por %p25, %p26
    %p28 = scmp.ne.s32.totalorder %s20, %s23
    %p29 = scmp.eq.s32.totalorder %s10, 0
    %p30 = por %p28, %p29
    %p31 = scmp.ne.s32.totalorder %s20, %s23
    %p32 = scmp.eq.s32.totalorder %s15, 1
    %p33 = por %p31, %p32
    %p34 = scmp.ne.s32.totalorder %s23, %s24
    %p35 = scmp.eq.s32.totalorder %s15, 0
    %p36 = por %p34, %p35
    %p37 = scmp.ne.s32.totalorder %s23, %s24
    %p38 = scmp.eq.s32.totalorder %s16, 1
    %p39 = por %p37, %p38
    %p41 = scmp.ne.s32.totalorder %s24, %s40
    %p42 = scmp.eq.s32.totalorder %s16, 0
    %p43 = por %p41, %p42
    %s45 = sadd.s32 %s44, 1
    %p48 = scmp.eq.s32.totalorder %s10, 1
    %p49 = scmp.ne.s32.totalorder %s44, %s46
    %p50 = scmp.eq.s32.totalorder %s10, 0
    %p51 = por %p49, %p50
    %p52 = scmp.ne.s32.totalorder %s44, %s46
    %p53 = scmp.eq.s32.totalorder %s15, 1
    %p54 = por %p52, %p53
    %p55 = scmp.ne.s32.totalorder %s46, %s47
    %p56 = scmp.eq.s32.totalorder %s15, 0
    %p57 = por %p55, %p56
    %p58 = scmp.ne.s32.totalorder %s46, %s47
    %p59 = scmp.eq.s32.totalorder %s16, 1
    %p60 = por %p58, %p59
    %p62 = scmp.ne.s32.totalorder %s47, %s61
    %p63 = scmp.eq.s32.totalorder %s16, 0
    %p64 = por %p62, %p63
    %s66 = sadd.s32 %s65, 1
    %p69 = scmp.eq.s32.totalorder %s10, 1
    %p70 = scmp.ne.s32.totalorder %s65, %s67
    %p71 = scmp.eq.s32.totalorder %s10, 0
    %p72 = por %p70, %p71
    %p73 = scmp.ne.s32.totalorder %s65, %s67
    %p74 = scmp.eq.s32.totalorder %s15, 1
    %p75 = por %p73, %p74
    %p76 = scmp.ne.s32.totalorder %s67, %s68
    %p77 = scmp.eq.s32.totalorder %s15, 0
    %p78 = por %p76, %p77
    %p79 = scmp.ne.s32.totalorder %s67, %s68
    %p80 = scmp.eq.s32.totalorder %s16, 1
    %p81 = por %p79, %p80
    %p83 = scmp.ne.s32.totalorder %s68, %s82
    %p84 = scmp.eq.s32.totalorder %s16, 0
    %p85 = por %p83, %p84
    %s87 = sadd.s32 %s86, 1
    %p90 = scmp.eq.s32.totalorder %s10, 1
    %p91 = scmp.ne.s32.totalorder %s86, %s88
    %p92 = scmp.eq.s32.totalorder %s10, 0
    %p93 = por %p91, %p92
    %p94 = scmp.ne.s32.totalorder %s86, %s88
    %p95 = scmp.eq.s32.totalorder %s15, 1
    %p96 = por %p94, %p95
    %p97 = scmp.ne.s32.totalorder %s88, %s89
    %p98 = scmp.eq.s32.totalorder %s15, 0
    %p99 = por %p97, %p98
    %p100 = scmp.ne.s32.totalorder %s88, %s89
    %p101 = scmp.eq.s32.totalorder %s16, 1
    %p102 = por %p100, %p101
    %p104 = scmp.ne.s32.totalorder %s89, %s103
    %p105 = scmp.eq.s32.totalorder %s16, 0
    %p106 = por %p104, %p105
    %s107 = ssub.s32 %s10, %s17
    %p108 = scmp.eq.s32.totalorder %s107, 0
    %s110 = sadd.s32 %s109, 1
    %s111 = scalar_select %p108, %s109, %s110
    %p114 = pneg %p108
    %p115 = scmp.eq.s32.totalorder %s10, 1
    %p116 = por %p114, %p115
    %p117 = scmp.ne.s32.totalorder %s109, %s112
    %p118 = scmp.eq.s32.totalorder %s10, 0
    %p119 = por %p117, %p118
    %p120 = scmp.ne.s32.totalorder %s109, %s112
    %p121 = scmp.eq.s32.totalorder %s15, 1
    %p122 = por %p120, %p121
    %p123 = scmp.ne.s32.totalorder %s112, %s113
    %p124 = scmp.eq.s32.totalorder %s15, 0
    %p125 = por %p123, %p124
    %p126 = scmp.ne.s32.totalorder %s112, %s113
    %p127 = scmp.eq.s32.totalorder %s16, 1
    %p128 = por %p126, %p127
    %p130 = scmp.ne.s32.totalorder %s113, %s129
    %p131 = scmp.eq.s32.totalorder %s16, 0
    %p132 = por %p130, %p131
    %p133 = scmp.le.s32.totalorder 1, %s10
    %p134 = scmp.lt.s32.totalorder %s10, 3
    %p135 = pnand %p133, %p134
    %p136 = pneg %p135
    // Predicated region
    $region9: #{distill_kl_ml_forward.3} parent=5 // pred_check
      _
    $region10: #{distill_kl_ml_forward.3} parent=5 // pred_check_branch
      %138 = sbr.rel (%p135) target = $region12
    $region11: #{distill_kl_ml_forward.3} parent=5 // pred_region
      %s139 = ssub.s32 %s10, 1
      // Predicated region
      $region13: #{distill_kl_ml_forward.3} parent=11 // pred_check
        %p140 = pneg %p57
      $region14: #{distill_kl_ml_forward.3} parent=11 // pred_check_branch
        %142 = sbr.rel (%p140) target = $region16
      $region15: #{distill_kl_ml_forward.3} parent=11 // pred_region
        _
      $region16: #{distill_kl_ml_forward.3} parent=11 // pred_fallthru
        _
      // Predicated region
      $region17: #{distill_kl_ml_forward.3} parent=11 // pred_check
        %p143 = pneg %p78
      $region18: #{distill_kl_ml_forward.3} parent=11 // pred_check_branch
        %145 = sbr.rel (%p143) target = $region20
      $region19: #{distill_kl_ml_forward.3} parent=11 // pred_region
        _
      $region20: #{distill_kl_ml_forward.3} parent=11 // pred_fallthru
        _
      // Predicated region
      $region21: #{distill_kl_ml_forward.3} parent=11 // pred_check
        %p146 = pneg %p99
      $region22: #{distill_kl_ml_forward.3} parent=11 // pred_check_branch
        %148 = sbr.rel (%p146) target = $region24
      $region23: #{distill_kl_ml_forward.3} parent=11 // pred_region
        _
      $region24: #{distill_kl_ml_forward.3} parent=11 // pred_fallthru
        _
    $region12: #{distill_kl_ml_forward.3} parent=5 // pred_fallthru
      _
    %p149 = scmp.lt.s32.totalorder %s10, 2
    // Predicated region
    $region25: #{distill_kl_ml_forward.3} parent=5 // pred_check
      %p150 = pneg %p149
    $region26: #{distill_kl_ml_forward.3} parent=5 // pred_check_branch
      %152 = sbr.rel (%p150) target = $region28
    $region27: #{distill_kl_ml_forward.3} parent=5 // pred_region
      // Predicated region
      $region29: #{distill_kl_ml_forward.3} parent=27 // pred_check
        %p153 = pneg %p30
      $region30: #{distill_kl_ml_forward.3} parent=27 // pred_check_branch
        %155 = sbr.rel (%p153) target = $region32
      $region31: #{distill_kl_ml_forward.3} parent=27 // pred_region
        %p156 = scmp.lt.s32.totalorder %s10, 1
        %s157 = scalar_select %p156, %s10, 1
        %s158 = smul.addr %s157, 8
        %s159 = scalar_lea.vmem %s0, %s158
      $region32: #{distill_kl_ml_forward.3} parent=27 // pred_fallthru
        _
    $region28: #{distill_kl_ml_forward.3} parent=5 // pred_fallthru
      _
    %p160 = scmp.le.s32.totalorder 1, %s10
    %p161 = scmp.lt.s32.totalorder %s10, 3
    %p162 = pnand %p160, %p161
    %p163 = pneg %p162
    // Predicated region
    $region33: #{distill_kl_ml_forward.3} parent=5 // pred_check
      _
    $region34: #{distill_kl_ml_forward.3} parent=5 // pred_check_branch
      %165 = sbr.rel (%p162) target = $region36
    $region35: #{distill_kl_ml_forward.3} parent=5 // pred_region
      %s166 = ssub.s32 %s10, 1
      %p167 = scmp.lt.s32.totalorder %s15, 1
      %s168 = scalar_select %p167, %s15, 1
      %s169 = smul.addr %s168, 8
      %s170 = scalar_lea.vmem %s0, %s169
      %p171 = pneg %p36
      %p172 = pneg %p33
      %p173 = pneg %p57
      %p174 = pneg %p54
      %p175 = pneg %p78
      %p176 = pneg %p75
      %p177 = pneg %p99
      %p178 = pneg %p96
      %p179 = pneg %p125
      %p180 = pneg %p122
      %p181 = scmp.lt.s32.totalorder %s15, 1
      %s182 = scalar_select %p181, %s15, 1
      %s183 = smul.addr %s182, 8
      %s184 = scalar_lea.vmem %s4, %s183
      %p185 = scmp.lt.s32.totalorder %s15, 1
      %s186 = scalar_select %p185, %s15, 1
      %s187 = smul.addr %s186, 8
      %s188 = scalar_lea.vmem %s0, %s187
      %p189 = scmp.lt.s32.totalorder %s15, 1
      %s190 = scalar_select %p189, %s15, 1
      %s191 = smul.addr %s190, 8
      %s192 = scalar_lea.vmem %s4, %s191
      %vm193 = vcmask 408576
      %194 = vst.msk [vmem:[#allocation2] sm:$0xff] %vm193, 0.0
      %v195 = vld [vmem:[%s188] sm:$0xff]
      %197 = vrot.lane.b32.xlu0 %v195, 7
      %v198 = vpop.permute.xlu0 %197
      %vm200 = vcmask 351288
      %201 = vst.msk [vmem:[#allocation2] sm:$0xff] %vm200, %v198
      %v202 = vld [vmem:[%s1] sm:$0xff]
      %v203 = vld [vmem:[#allocation2] sm:$0xff]
      %s204 = scalar_lea.vmem %s1, 8
      %v205 = vld [vmem:[%s204] sm:$0xff]
      %207 = vrot.lane.b32.xlu0 %v203, 127
      %v208 = vpop.permute.xlu0 %207
      %vm210 = vcmask 64512
      %v212 = vsel %vm210, %v205, 0
      %214 = vmatprep.subr.mxu0 0.0
      %215 = vmatpush1.msra.mxu0 %v208
      %216 = vmatprep.subr.mxu0 0.0
      %217 = vmatpush1.msra.mxu0 0.0
      %218 = vmatprep.subr.mxu0 0.0
      %219 = vmatpush1.msra.mxu0 0.0
      %220 = vmatprep.subr.mxu0 0.0
      %221 = vmatpush1.msra.mxu0 0.0
      %222 = vmatprep.subr.mxu0 0.0
      %223 = vmatpush1.msra.mxu0 0.0
      %224 = vmatprep.subr.mxu0 0.0
      %225 = vmatpush1.msra.mxu0 0.0
      %226 = vmatprep.subr.mxu0 0.0
      %227 = vmatpush1.msra.mxu0 0.0
      %228 = vmatprep.subr.mxu0 0.0
      %229 = vmatpush1.msra.mxu0 0.0
      %230 = vmatprep.subr.mxu0 0.0
      %231 = vmatpush1.msra.mxu0 0.0
      %232 = vmatprep.subr.mxu0 0.0
      %233 = vmatpush1.msra.mxu0 0.0
      %234 = vmatprep.subr.mxu0 0.0
      %235 = vmatpush1.msra.mxu0 0.0
      %236 = vmatprep.subr.mxu0 0.0
      %237 = vmatpush1.msra.mxu0 0.0
      %238 = vmatprep.subr.mxu0 0.0
      %239 = vmatpush1.msra.mxu0 0.0
      %240 = vmatprep.subr.mxu0 0.0
      %241 = vmatpush1.msra.mxu0 0.0
      %242 = vmatprep.subr.mxu0 0.0
      %243 = vmatpush1.msra.mxu0 0.0
      %244 = vmatprep.subr.mxu0 0.0
      %245 = vmatpush1.msra.mxu0 0.0
      %246 = vmatprep.subr.mxu0 0.0
      %247 = vmatpush1.msra.mxu0 0.0
      %248 = vmatprep.subr.mxu0 0.0
      %249 = vmatpush1.msra.mxu0 0.0
      %250 = vmatprep.subr.mxu0 0.0
      %251 = vmatpush1.msra.mxu0 0.0
      %252 = vmatprep.subr.mxu0 0.0
      %253 = vmatpush1.msra.mxu0 0.0
      %254 = vmatprep.subr.mxu0 0.0
      %255 = vmatpush1.msra.mxu0 0.0
      %256 = vmatprep.subr.mxu0 0.0
      %257 = vmatpush1.msra.mxu0 0.0
      %258 = vmatprep.subr.mxu0 0.0
      %259 = vmatpush1.msra.mxu0 0.0
      %260 = vmatprep.subr.mxu0 0.0
      %261 = vmatpush1.msra.mxu0 0.0
      %262 = vmatprep.subr.mxu0 0.0
      %263 = vmatpush1.msra.mxu0 0.0
      %264 = vmatprep.subr.mxu0 0.0
      %265 = vmatpush1.msra.mxu0 0.0
      %266 = vmatprep.subr.mxu0 0.0
      %267 = vmatpush1.msra.mxu0 0.0
      %268 = vmatprep.subr.mxu0 0.0
      %269 = vmatpush1.msra.mxu0 0.0
      %270 = vmatprep.subr.mxu0 0.0
      %271 = vmatpush1.msra.mxu0 0.0
      %272 = vmatprep.subr.mxu0 0.0
      %273 = vmatpush1.msra.mxu0 0.0
      %274 = vmatprep.subr.mxu0 0.0
      %275 = vmatpush1.msra.mxu0 0.0
      %276 = vmatprep.subr.mxu0 0.0
      %277 = vmatpush1.msra.mxu0 0.0
      %278 = vmatprep.mubr.f32.mxu0 0.0
      %279 = vmatmul.mubr.f32.gmra.mrb[0].mxu0 %v212
      %v280 = vpop.f32.mrb[0].mxu0
      %v281 = vadd.f32 0.0, %v280
      %v282 = vpop.f32.mrb[0].mxu0
      %283 = vdwg.mxu0
      %v285 = vsel %vm210, %v202, 0
      %287 = vmatprep.subr.mxu0 0.0
      %288 = vmatpush1.msra.mxu0 %v203
      %289 = vmatprep.subr.mxu0 0.0
      %290 = vmatpush1.msra.mxu0 0.0
      %291 = vmatprep.subr.mxu0 0.0
      %292 = vmatpush1.msra.mxu0 0.0
      %293 = vmatprep.subr.mxu0 0.0
      %294 = vmatpush1.msra.mxu0 0.0
      %295 = vmatprep.subr.mxu0 0.0
      %296 = vmatpush1.msra.mxu0 0.0
      %297 = vmatprep.subr.mxu0 0.0
      %298 = vmatpush1.msra.mxu0 0.0
      %299 = vmatprep.subr.mxu0 0.0
      %300 = vmatpush1.msra.mxu0 0.0
      %301 = vmatprep.subr.mxu0 0.0
      %302 = vmatpush1.msra.mxu0 0.0
      %303 = vmatprep.subr.mxu0 0.0
      %304 = vmatpush1.msra.mxu0 0.0
      %305 = vmatprep.subr.mxu0 0.0
      %306 = vmatpush1.msra.mxu0 0.0
      %307 = vmatprep.subr.mxu0 0.0
      %308 = vmatpush1.msra.mxu0 0.0
      %309 = vmatprep.subr.mxu0 0.0
      %310 = vmatpush1.msra.mxu0 0.0
      %311 = vmatprep.subr.mxu0 0.0
      %312 = vmatpush1.msra.mxu0 0.0
      %313 = vmatprep.subr.mxu0 0.0
      %314 = vmatpush1.msra.mxu0 0.0
      %315 = vmatprep.subr.mxu0 0.0
      %316 = vmatpush1.msra.mxu0 0.0
      %317 = vmatprep.subr.mxu0 0.0
      %318 = vmatpush1.msra.mxu0 0.0
      %319 = vmatprep.subr.mxu0 0.0
      %320 = vmatpush1.msra.mxu0 0.0
      %321 = vmatprep.subr.mxu0 0.0
      %322 = vmatpush1.msra.mxu0 0.0
      %323 = vmatprep.subr.mxu0 0.0
      %324 = vmatpush1.msra.mxu0 0.0
      %325 = vmatprep.subr.mxu0 0.0
      %326 = vmatpush1.msra.mxu0 0.0
      %327 = vmatprep.subr.mxu0 0.0
      %328 = vmatpush1.msra.mxu0 0.0
      %329 = vmatprep.subr.mxu0 0.0
      %330 = vmatpush1.msra.mxu0 0.0
      %331 = vmatprep.subr.mxu0 0.0
      %332 = vmatpush1.msra.mxu0 0.0
      %333 = vmatprep.subr.mxu0 0.0
      %334 = vmatpush1.msra.mxu0 0.0
      %335 = vmatprep.subr.mxu0 0.0
      %336 = vmatpush1.msra.mxu0 0.0
      %337 = vmatprep.subr.mxu0 0.0
      %338 = vmatpush1.msra.mxu0 0.0
      %339 = vmatprep.subr.mxu0 0.0
      %340 = vmatpush1.msra.mxu0 0.0
      %341 = vmatprep.subr.mxu0 0.0
      %342 = vmatpush1.msra.mxu0 0.0
      %343 = vmatprep.subr.mxu0 0.0
      %344 = vmatpush1.msra.mxu0 0.0
      %345 = vmatprep.subr.mxu0 0.0
      %346 = vmatpush1.msra.mxu0 0.0
      %347 = vmatprep.subr.mxu0 0.0
      %348 = vmatpush1.msra.mxu0 0.0
      %349 = vmatprep.subr.mxu0 0.0
      %350 = vmatpush1.msra.mxu0 0.0
      %351 = vmatprep.mubr.f32.mxu0 0.0
      %352 = vmatmul.mubr.f32.gmra.mrb[0].mxu0 %v285
      %v353 = vpop.f32.mrb[0].mxu0
      %v354 = vadd.f32 %v281, %v353
      %v355 = vpop.f32.mrb[0].mxu0
      %356 = vdwg.mxu0
      %s357 = scalar_lea.vmem %s1, 16
      %v358 = vld [vmem:[%s357] sm:$0xff]
      %359 = vrot.lane.b32.xlu0 %v203, 126
      %v360 = vpop.permute.xlu0 %359
      %v363 = vsel %vm210, %v358, 0
      %365 = vmatprep.subr.mxu0 0.0
      %366 = vmatpush1.msra.mxu0 %v360
      %367 = vmatprep.subr.mxu0 0.0
      %368 = vmatpush1.msra.mxu0 0.0
      %369 = vmatprep.subr.mxu0 0.0
      %370 = vmatpush1.msra.mxu0 0.0
      %371 = vmatprep.subr.mxu0 0.0
      %372 = vmatpush1.msra.mxu0 0.0
      %373 = vmatprep.subr.mxu0 0.0
      %374 = vmatpush1.msra.mxu0 0.0
      %375 = vmatprep.subr.mxu0 0.0
      %376 = vmatpush1.msra.mxu0 0.0
      %377 = vmatprep.subr.mxu0 0.0
      %378 = vmatpush1.msra.mxu0 0.0
      %379 = vmatprep.subr.mxu0 0.0
      %380 = vmatpush1.msra.mxu0 0.0
      %381 = vmatprep.subr.mxu0 0.0
      %382 = vmatpush1.msra.mxu0 0.0
      %383 = vmatprep.subr.mxu0 0.0
      %384 = vmatpush1.msra.mxu0 0.0
      %385 = vmatprep.subr.mxu0 0.0
      %386 = vmatpush1.msra.mxu0 0.0
      %387 = vmatprep.subr.mxu0 0.0
      %388 = vmatpush1.msra.mxu0 0.0
      %389 = vmatprep.subr.mxu0 0.0
      %390 = vmatpush1.msra.mxu0 0.0
      %391 = vmatprep.subr.mxu0 0.0
      %392 = vmatpush1.msra.mxu0 0.0
      %393 = vmatprep.subr.mxu0 0.0
      %394 = vmatpush1.msra.mxu0 0.0
      %395 = vmatprep.subr.mxu0 0.0
      %396 = vmatpush1.msra.mxu0 0.0
      %397 = vmatprep.subr.mxu0 0.0
      %398 = vmatpush1.msra.mxu0 0.0
      %399 = vmatprep.subr.mxu0 0.0
      %400 = vmatpush1.msra.mxu0 0.0
      %401 = vmatprep.subr.mxu0 0.0
      %402 = vmatpush1.msra.mxu0 0.0
      %403 = vmatprep.subr.mxu0 0.0
      %404 = vmatpush1.msra.mxu0 0.0
      %405 = vmatprep.subr.mxu0 0.0
      %406 = vmatpush1.msra.mxu0 0.0
      %407 = vmatprep.subr.mxu0 0.0
      %408 = vmatpush1.msra.mxu0 0.0
      %409 = vmatprep.subr.mxu0 0.0
      %410 = vmatpush1.msra.mxu0 0.0
      %411 = vmatprep.subr.mxu0 0.0
      %412 = vmatpush1.msra.mxu0 0.0
      %413 = vmatprep.subr.mxu0 0.0
      %414 = vmatpush1.msra.mxu0 0.0
      %415 = vmatprep.subr.mxu0 0.0
      %416 = vmatpush1.msra.mxu0 0.0
      %417 = vmatprep.subr.mxu0 0.0
      %418 = vmatpush1.msra.mxu0 0.0
      %419 = vmatprep.subr.mxu0 0.0
      %420 = vmatpush1.msra.mxu0 0.0
      %421 = vmatprep.subr.mxu0 0.0
      %422 = vmatpush1.msra.mxu0 0.0
      %423 = vmatprep.subr.mxu0 0.0
      %424 = vmatpush1.msra.mxu0 0.0
      %425 = vmatprep.subr.mxu0 0.0
      %426 = vmatpush1.msra.mxu0 0.0
      %427 = vmatprep.subr.mxu0 0.0
      %428 = vmatpush1.msra.mxu0 0.0
      %429 = vmatprep.mubr.f32.mxu0 0.0
      %430 = vmatmul.mubr.f32.gmra.mrb[0].mxu0 %v363
      %v431 = vpop.f32.mrb[0].mxu0
      %v432 = vadd.f32 0.0, %v431
      %v433 = vpop.f32.mrb[0].mxu0
      %434 = vdwg.mxu0
      %v435 = vadd.f32 %v354, %v432
      %s436 = scalar_lea.vmem %s1, 24
      %v437 = vld [vmem:[%s436] sm:$0xff]
      %438 = vrot.lane.b32.xlu0 %v203, 122
      %v439 = vpop.permute.xlu0 %438
      %v442 = vsel %vm210, %v437, 0
      %444 = vmatprep.subr.mxu0 0.0
      %445 = vmatpush1.msra.mxu0 %v439
      %446 = vmatprep.subr.mxu0 0.0
      %447 = vmatpush1.msra.mxu0 0.0
      %448 = vmatprep.subr.mxu0 0.0
      %449 = vmatpush1.msra.mxu0 0.0
      %450 = vmatprep.subr.mxu0 0.0
      %451 = vmatpush1.msra.mxu0 0.0
      %452 = vmatprep.subr.mxu0 0.0
      %453 = vmatpush1.msra.mxu0 0.0
      %454 = vmatprep.subr.mxu0 0.0
      %455 = vmatpush1.msra.mxu0 0.0
      %456 = vmatprep.subr.mxu0 0.0
      %457 = vmatpush1.msra.mxu0 0.0
      %458 = vmatprep.subr.mxu0 0.0
      %459 = vmatpush1.msra.mxu0 0.0
      %460 = vmatprep.subr.mxu0 0.0
      %461 = vmatpush1.msra.mxu0 0.0
      %462 = vmatprep.subr.mxu0 0.0
      %463 = vmatpush1.msra.mxu0 0.0
      %464 = vmatprep.subr.mxu0 0.0
      %465 = vmatpush1.msra.mxu0 0.0
      %466 = vmatprep.subr.mxu0 0.0
      %467 = vmatpush1.msra.mxu0 0.0
      %468 = vmatprep.subr.mxu0 0.0
      %469 = vmatpush1.msra.mxu0 0.0
      %470 = vmatprep.subr.mxu0 0.0
      %471 = vmatpush1.msra.mxu0 0.0
      %472 = vmatprep.subr.mxu0 0.0
      %473 = vmatpush1.msra.mxu0 0.0
      %474 = vmatprep.subr.mxu0 0.0
      %475 = vmatpush1.msra.mxu0 0.0
      %476 = vmatprep.subr.mxu0 0.0
      %477 = vmatpush1.msra.mxu0 0.0
      %478 = vmatprep.subr.mxu0 0.0
      %479 = vmatpush1.msra.mxu0 0.0
      %480 = vmatprep.subr.mxu0 0.0
      %481 = vmatpush1.msra.mxu0 0.0
      %482 = vmatprep.subr.mxu0 0.0
      %483 = vmatpush1.msra.mxu0 0.0
      %484 = vmatprep.subr.mxu0 0.0
      %485 = vmatpush1.msra.mxu0 0.0
      %486 = vmatprep.subr.mxu0 0.0
      %487 = vmatpush1.msra.mxu0 0.0
      %488 = vmatprep.subr.mxu0 0.0
      %489 = vmatpush1.msra.mxu0 0.0
      %490 = vmatprep.subr.mxu0 0.0
      %491 = vmatpush1.msra.mxu0 0.0
      %492 = vmatprep.subr.mxu0 0.0
      %493 = vmatpush1.msra.mxu0 0.0
      %494 = vmatprep.subr.mxu0 0.0
      %495 = vmatpush1.msra.mxu0 0.0
      %496 = vmatprep.subr.mxu0 0.0
      %497 = vmatpush1.msra.mxu0 0.0
      %498 = vmatprep.subr.mxu0 0.0
      %499 = vmatpush1.msra.mxu0 0.0
      %500 = vmatprep.subr.mxu0 0.0
      %501 = vmatpush1.msra.mxu0 0.0
      %502 = vmatprep.subr.mxu0 0.0
      %503 = vmatpush1.msra.mxu0 0.0
      %504 = vmatprep.subr.mxu0 0.0
      %505 = vmatpush1.msra.mxu0 0.0
      %506 = vmatprep.subr.mxu0 0.0
      %507 = vmatpush1.msra.mxu0 0.0
      %508 = vmatprep.mubr.f32.mxu0 0.0
      %509 = vmatmul.mubr.f32.gmra.mrb[0].mxu0 %v442
      %v510 = vpop.f32.mrb[0].mxu0
      %v511 = vadd.f32 0.0, %v510
      %v512 = vpop.f32.mrb[0].mxu0
      %513 = vdwg.mxu0
      %v514 = vadd.f32 %v435, %v511
      %s515 = scalar_lea.vmem %s1, 32
      %v516 = vld [vmem:[%s515] sm:$0xff]
      %517 = vrot.lane.b32.xlu0 %v203, 121
      %v518 = vpop.permute.xlu0 %517
      %v521 = vsel %vm210, %v516, 0
      %523 = vmatprep.subr.mxu0 0.0
      %524 = vmatpush1.msra.mxu0 %v518
      %525 = vmatprep.subr.mxu0 0.0
      %526 = vmatpush1.msra.mxu0 0.0
      %527 = vmatprep.subr.mxu0 0.0
      %528 = vmatpush1.msra.mxu0 0.0
      %529 = vmatprep.subr.mxu0 0.0
      %530 = vmatpush1.msra.mxu0 0.0
      %531 = vmatprep.subr.mxu0 0.0
      %532 = vmatpush1.msra.mxu0 0.0
      %533 = vmatprep.subr.mxu0 0.0
      %534 = vmatpush1.msra.mxu0 0.0
      %535 = vmatprep.subr.mxu0 0.0
      %536 = vmatpush1.msra.mxu0 0.0
      %537 = vmatprep.subr.mxu0 0.0
      %538 = vmatpush1.msra.mxu0 0.0
      %539 = vmatprep.subr.mxu0 0.0
      %540 = vmatpush1.msra.mxu0 0.0
      %541 = vmatprep.subr.mxu0 0.0
      %542 = vmatpush1.msra.mxu0 0.0
      %543 = vmatprep.subr.mxu0 0.0
      %544 = vmatpush1.msra.mxu0 0.0
      %545 = vmatprep.subr.mxu0 0.0
      %546 = vmatpush1.msra.mxu0 0.0
      %547 = vmatprep.subr.mxu0 0.0
      %548 = vmatpush1.msra.mxu0 0.0
      %549 = vmatprep.subr.mxu0 0.0
      %550 = vmatpush1.msra.mxu0 0.0
      %551 = vmatprep.subr.mxu0 0.0
      %552 = vmatpush1.msra.mxu0 0.0
      %553 = vmatprep.subr.mxu0 0.0
      %554 = vmatpush1.msra.mxu0 0.0
      %555 = vmatprep.subr.mxu0 0.0
      %556 = vmatpush1.msra.mxu0 0.0
      %557 = vmatprep.subr.mxu0 0.0
      %558 = vmatpush1.msra.mxu0 0.0
      %559 = vmatprep.subr.mxu0 0.0
      %560 = vmatpush1.msra.mxu0 0.0
      %561 = vmatprep.subr.mxu0 0.0
      %562 = vmatpush1.msra.mxu0 0.0
      %563 = vmatprep.subr.mxu0 0.0
      %564 = vmatpush1.msra.mxu0 0.0
      %565 = vmatprep.subr.mxu0 0.0
      %566 = vmatpush1.msra.mxu0 0.0
      %567 = vmatprep.subr.mxu0 0.0
      %568 = vmatpush1.msra.mxu0 0.0
      %569 = vmatprep.subr.mxu0 0.0
      %570 = vmatpush1.msra.mxu0 0.0
      %571 = vmatprep.subr.mxu0 0.0
      %572 = vmatpush1.msra.mxu0 0.0
      %573 = vmatprep.subr.mxu0 0.0
      %574 = vmatpush1.msra.mxu0 0.0
      %575 = vmatprep.subr.mxu0 0.0
      %576 = vmatpush1.msra.mxu0 0.0
      %577 = vmatprep.subr.mxu0 0.0
      %578 = vmatpush1.msra.mxu0 0.0
      %579 = vmatprep.subr.mxu0 0.0
      %580 = vmatpush1.msra.mxu0 0.0
      %581 = vmatprep.subr.mxu0 0.0
      %582 = vmatpush1.msra.mxu0 0.0
      %583 = vmatprep.subr.mxu0 0.0
      %584 = vmatpush1.msra.mxu0 0.0
      %585 = vmatprep.subr.mxu0 0.0
      %586 = vmatpush1.msra.mxu0 0.0
      %587 = vmatprep.mubr.f32.mxu0 0.0
      %588 = vmatmul.mubr.f32.gmra.mrb[0].mxu0 %v521
      %v589 = vpop.f32.mrb[0].mxu0
      %v590 = vadd.f32 0.0, %v589
      %v591 = vpop.f32.mrb[0].mxu0
      %592 = vdwg.mxu0
      %v593 = vadd.f32 %v514, %v590
      %s594 = scalar_lea.vmem %s1, 40
      %v595 = vld [vmem:[%s594] sm:$0xff]
      %596 = vrot.lane.b32.xlu0 %v203, 120
      %v597 = vpop.permute.xlu0 %596
      %v600 = vsel %vm210, %v595, 0
      %602 = vmatprep.subr.mxu0 0.0
      %603 = vmatpush1.msra.mxu0 %v597
      %604 = vmatprep.subr.mxu0 0.0
      %605 = vmatpush1.msra.mxu0 0.0
      %606 = vmatprep.subr.mxu0 0.0
      %607 = vmatpush1.msra.mxu0 0.0
      %608 = vmatprep.subr.mxu0 0.0
      %609 = vmatpush1.msra.mxu0 0.0
      %610 = vmatprep.subr.mxu0 0.0
      %611 = vmatpush1.msra.mxu0 0.0
      %612 = vmatprep.subr.mxu0 0.0
      %613 = vmatpush1.msra.mxu0 0.0
      %614 = vmatprep.subr.mxu0 0.0
      %615 = vmatpush1.msra.mxu0 0.0
      %616 = vmatprep.subr.mxu0 0.0
      %617 = vmatpush1.msra.mxu0 0.0
      %618 = vmatprep.subr.mxu0 0.0
      %619 = vmatpush1.msra.mxu0 0.0
      %620 = vmatprep.subr.mxu0 0.0
      %621 = vmatpush1.msra.mxu0 0.0
      %622 = vmatprep.subr.mxu0 0.0
      %623 = vmatpush1.msra.mxu0 0.0
      %624 = vmatprep.subr.mxu0 0.0
      %625 = vmatpush1.msra.mxu0 0.0
      %626 = vmatprep.subr.mxu0 0.0
      %627 = vmatpush1.msra.mxu0 0.0
      %628 = vmatprep.subr.mxu0 0.0
      %629 = vmatpush1.msra.mxu0 0.0
      %630 = vmatprep.subr.mxu0 0.0
      %631 = vmatpush1.msra.mxu0 0.0
      %632 = vmatprep.subr.mxu0 0.0
      %633 = vmatpush1.msra.mxu0 0.0
      %634 = vmatprep.subr.mxu0 0.0
      %635 = vmatpush1.msra.mxu0 0.0
      %636 = vmatprep.subr.mxu0 0.0
      %637 = vmatpush1.msra.mxu0 0.0
      %638 = vmatprep.subr.mxu0 0.0
      %639 = vmatpush1.msra.mxu0 0.0
      %640 = vmatprep.subr.mxu0 0.0
      %641 = vmatpush1.msra.mxu0 0.0
      %642 = vmatprep.subr.mxu0 0.0
      %643 = vmatpush1.msra.mxu0 0.0
      %644 = vmatprep.subr.mxu0 0.0
      %645 = vmatpush1.msra.mxu0 0.0
      %646 = vmatprep.subr.mxu0 0.0
      %647 = vmatpush1.msra.mxu0 0.0
      %648 = vmatprep.subr.mxu0 0.0
      %649 = vmatpush1.msra.mxu0 0.0
      %650 = vmatprep.subr.mxu0 0.0
      %651 = vmatpush1.msra.mxu0 0.0
      %652 = vmatprep.subr.mxu0 0.0
      %653 = vmatpush1.msra.mxu0 0.0
      %654 = vmatprep.subr.mxu0 0.0
      %655 = vmatpush1.msra.mxu0 0.0
      %656 = vmatprep.subr.mxu0 0.0
      %657 = vmatpush1.msra.mxu0 0.0
      %658 = vmatprep.subr.mxu0 0.0
      %659 = vmatpush1.msra.mxu0 0.0
      %660 = vmatprep.subr.mxu0 0.0
      %661 = vmatpush1.msra.mxu0 0.0
      %662 = vmatprep.subr.mxu0 0.0
      %663 = vmatpush1.msra.mxu0 0.0
      %664 = vmatprep.subr.mxu0 0.0
      %665 = vmatpush1.msra.mxu0 0.0
      %666 = vmatprep.mubr.f32.mxu0 0.0
      %667 = vmatmul.mubr.f32.gmra.mrb[0].mxu0 %v600
      %v668 = vpop.f32.mrb[0].mxu0
      %v669 = vadd.f32 0.0, %v668
      %v670 = vpop.f32.mrb[0].mxu0
      %671 = vdwg.mxu0
      %v672 = vadd.f32 %v593, %v669
      %s673 = scalar_lea.vmem %s1, 48
      %v674 = vld [vmem:[%s673] sm:$0xff]
      %675 = vrot.lane.b32.xlu0 %v203, 116
      %v676 = vpop.permute.xlu0 %675
      %v679 = vsel %vm210, %v674, 0
      %681 = vmatprep.subr.mxu0 0.0
      %682 = vmatpush1.msra.mxu0 %v676
      %683 = vmatprep.subr.mxu0 0.0
      %684 = vmatpush1.msra.mxu0 0.0
      %685 = vmatprep.subr.mxu0 0.0
      %686 = vmatpush1.msra.mxu0 0.0
      %687 = vmatprep.subr.mxu0 0.0
      %688 = vmatpush1.msra.mxu0 0.0
      %689 = vmatprep.subr.mxu0 0.0
      %690 = vmatpush1.msra.mxu0 0.0
      %691 = vmatprep.subr.mxu0 0.0
      %692 = vmatpush1.msra.mxu0 0.0
      %693 = vmatprep.subr.mxu0 0.0
      %694 = vmatpush1.msra.mxu0 0.0
      %695 = vmatprep.subr.mxu0 0.0
      %696 = vmatpush1.msra.mxu0 0.0
      %697 = vmatprep.subr.mxu0 0.0
      %698 = vmatpush1.msra.mxu0 0.0
      %699 = vmatprep.subr.mxu0 0.0
      %700 = vmatpush1.msra.mxu0 0.0
      %701 = vmatprep.subr.mxu0 0.0
      %702 = vmatpush1.msra.mxu0 0.0
      %703 = vmatprep.subr.mxu0 0.0
      %704 = vmatpush1.msra.mxu0 0.0
      %705 = vmatprep.subr.mxu0 0.0
      %706 = vmatpush1.msra.mxu0 0.0
      %707 = vmatprep.subr.mxu0 0.0
      %708 = vmatpush1.msra.mxu0 0.0
      %709 = vmatprep.subr.mxu0 0.0
      %710 = vmatpush1.msra.mxu0 0.0
      %711 = vmatprep.subr.mxu0 0.0
      %712 = vmatpush1.msra.mxu0 0.0
      %713 = vmatprep.subr.mxu0 0.0
      %714 = vmatpush1.msra.mxu0 0.0
      %715 = vmatprep.subr.mxu0 0.0
      %716 = vmatpush1.msra.mxu0 0.0
      %717 = vmatprep.subr.mxu0 0.0
      %718 = vmatpush1.msra.mxu0 0.0
      %719 = vmatprep.subr.mxu0 0.0
      %720 = vmatpush1.msra.mxu0 0.0
      %721 = vmatprep.subr.mxu0 0.0
      %722 = vmatpush1.msra.mxu0 0.0
      %723 = vmatprep.subr.mxu0 0.0
      %724 = vmatpush1.msra.mxu0 0.0
      %725 = vmatprep.subr.mxu0 0.0
      %726 = vmatpush1.msra.mxu0 0.0
      %727 = vmatprep.subr.mxu0 0.0
      %728 = vmatpush1.msra.mxu0 0.0
      %729 = vmatprep.subr.mxu0 0.0
      %730 = vmatpush1.msra.mxu0 0.0
      %731 = vmatprep.subr.mxu0 0.0
      %732 = vmatpush1.msra.mxu0 0.0
      %733 = vmatprep.subr.mxu0 0.0
      %734 = vmatpush1.msra.mxu0 0.0
      %735 = vmatprep.subr.mxu0 0.0
      %736 = vmatpush1.msra.mxu0 0.0
      %737 = vmatprep.subr.mxu0 0.0
      %738 = vmatpush1.msra.mxu0 0.0
      %739 = vmatprep.subr.mxu0 0.0
      %740 = vmatpush1.msra.mxu0 0.0
      %741 = vmatprep.subr.mxu0 0.0
      %742 = vmatpush1.msra.mxu0 0.0
      %743 = vmatprep.subr.mxu0 0.0
      %744 = vmatpush1.msra.mxu0 0.0
      %745 = vmatprep.mubr.f32.mxu0 0.0
      %746 = vmatmul.mubr.f32.gmra.mrb[0].mxu0 %v679
      %v747 = vpop.f32.mrb[0].mxu0
      %v748 = vadd.f32 0.0, %v747
      %v749 = vpop.f32.mrb[0].mxu0
      %750 = vdwg.mxu0
      %v751 = vadd.f32 %v672, %v748
      %s752 = scalar_lea.vmem %s1, 56
      %v753 = vld [vmem:[%s752] sm:$0xff]
      %754 = vrot.lane.b32.xlu0 %v203, 115
      %v755 = vpop.permute.xlu0 %754
      %v758 = vsel %vm210, %v753, 0
      %760 = vmatprep.subr.mxu0 0.0
      %761 = vmatpush1.msra.mxu0 %v755
      %762 = vmatprep.subr.mxu0 0.0
      %763 = vmatpush1.msra.mxu0 0.0
      %764 = vmatprep.subr.mxu0 0.0
      %765 = vmatpush1.msra.mxu0 0.0
      %766 = vmatprep.subr.mxu0 0.0
      %767 = vmatpush1.msra.mxu0 0.0
      %768 = vmatprep.subr.mxu0 0.0
      %769 = vmatpush1.msra.mxu0 0.0
      %770 = vmatprep.subr.mxu0 0.0
      %771 = vmatpush1.msra.mxu0 0.0
      %772 = vmatprep.subr.mxu0 0.0
      %773 = vmatpush1.msra.mxu0 0.0
      %774 = vmatprep.subr.mxu0 0.0
      %775 = vmatpush1.msra.mxu0 0.0
      %776 = vmatprep.subr.mxu0 0.0
      %777 = vmatpush1.msra.mxu0 0.0
      %778 = vmatprep.subr.mxu0 0.0
      %779 = vmatpush1.msra.mxu0 0.0
      %780 = vmatprep.subr.mxu0 0.0
      %781 = vmatpush1.msra.mxu0 0.0
      %782 = vmatprep.subr.mxu0 0.0
      %783 = vmatpush1.msra.mxu0 0.0
      %784 = vmatprep.subr.mxu0 0.0
      %785 = vmatpush1.msra.mxu0 0.0
      %786 = vmatprep.subr.mxu0 0.0
      %787 = vmatpush1.msra.mxu0 0.0
      %788 = vmatprep.subr.mxu0 0.0
      %789 = vmatpush1.msra.mxu0 0.0
      %790 = vmatprep.subr.mxu0 0.0
      %791 = vmatpush1.msra.mxu0 0.0
      %792 = vmatprep.subr.mxu0 0.0
      %793 = vmatpush1.msra.mxu0 0.0
      %794 = vmatprep.subr.mxu0 0.0
      %795 = vmatpush1.msra.mxu0 0.0
      %796 = vmatprep.subr.mxu0 0.0
      %797 = vmatpush1.msra.mxu0 0.0
      %798 = vmatprep.subr.mxu0 0.0
      %799 = vmatpush1.msra.mxu0 0.0
      %800 = vmatprep.subr.mxu0 0.0
      %801 = vmatpush1.msra.mxu0 0.0
      %802 = vmatprep.subr.mxu0 0.0
      %803 = vmatpush1.msra.mxu0 0.0
      %804 = vmatprep.subr.mxu0 0.0
      %805 = vmatpush1.msra.mxu0 0.0
      %806 = vmatprep.subr.mxu0 0.0
      %807 = vmatpush1.msra.mxu0 0.0
      %808 = vmatprep.subr.mxu0 0.0
      %809 = vmatpush1.msra.mxu0 0.0
      %810 = vmatprep.subr.mxu0 0.0
      %811 = vmatpush1.msra.mxu0 0.0
      %812 = vmatprep.subr.mxu0 0.0
      %813 = vmatpush1.msra.mxu0 0.0
      %814 = vmatprep.subr.mxu0 0.0
      %815 = vmatpush1.msra.mxu0 0.0
      %816 = vmatprep.subr.mxu0 0.0
      %817 = vmatpush1.msra.mxu0 0.0
      %818 = vmatprep.subr.mxu0 0.0
      %819 = vmatpush1.msra.mxu0 0.0
      %820 = vmatprep.subr.mxu0 0.0
      %821 = vmatpush1.msra.mxu0 0.0
      %822 = vmatprep.subr.mxu0 0.0
      %823 = vmatpush1.msra.mxu0 0.0
      %824 = vmatprep.mubr.f32.mxu0 0.0
      %825 = vmatmul.mubr.f32.gmra.mrb[0].mxu0 %v758
      %v826 = vpop.f32.mrb[0].mxu0
      %v827 = vadd.f32 0.0, %v826
      %v828 = vpop.f32.mrb[0].mxu0
      %829 = vdwg.mxu0
      %v830 = vadd.f32 %v751, %v827
      %s831 = scalar_lea.vmem %s1, 64
      %v832 = vld [vmem:[%s831] sm:$0xff]
      %833 = vrot.lane.b32.xlu0 %v203, 114
      %v834 = vpop.permute.xlu0 %833
      %v837 = vsel %vm210, %v832, 0
      %839 = vmatprep.subr.mxu0 0.0
      %840 = vmatpush1.msra.mxu0 %v834
      %841 = vmatprep.subr.mxu0 0.0
      %842 = vmatpush1.msra.mxu0 0.0
      %843 = vmatprep.subr.mxu0 0.0
      %844 = vmatpush1.msra.mxu0 0.0
      %845 = vmatprep.subr.mxu0 0.0
      %846 = vmatpush1.msra.mxu0 0.0
      %847 = vmatprep.subr.mxu0 0.0
      %848 = vmatpush1.msra.mxu0 0.0
      %849 = vmatprep.subr.mxu0 0.0
      %850 = vmatpush1.msra.mxu0 0.0
      %851 = vmatprep.subr.mxu0 0.0
      %852 = vmatpush1.msra.mxu0 0.0
      %853 = vmatprep.subr.mxu0 0.0
      %854 = vmatpush1.msra.mxu0 0.0
      %855 = vmatprep.subr.mxu0 0.0
      %856 = vmatpush1.msra.mxu0 0.0
      %857 = vmatprep.subr.mxu0 0.0
      %858 = vmatpush1.msra.mxu0 0.0
      %859 = vmatprep.subr.mxu0 0.0
      %860 = vmatpush1.msra.mxu0 0.0
      %861 = vmatprep.subr.mxu0 0.0
      %862 = vmatpush1.msra.mxu0 0.0
      %863 = vmatprep.subr.mxu0 0.0
      %864 = vmatpush1.msra.mxu0 0.0
      %865 = vmatprep.subr.mxu0 0.0
      %866 = vmatpush1.msra.mxu0 0.0
      %867 = vmatprep.subr.mxu0 0.0
      %868 = vmatpush1.msra.mxu0 0.0
      %869 = vmatprep.subr.mxu0 0.0
      %870 = vmatpush1.msra.mxu0 0.0
      %871 = vmatprep.subr.mxu0 0.0
      %872 = vmatpush1.msra.mxu0 0.0
      %873 = vmatprep.subr.mxu0 0.0
      %874 = vmatpush1.msra.mxu0 0.0
      %875 = vmatprep.subr.mxu0 0.0
      %876 = vmatpush1.msra.mxu0 0.0
      %877 = vmatprep.subr.mxu0 0.0
      %878 = vmatpush1.msra.mxu0 0.0
      %879 = vmatprep.subr.mxu0 0.0
      %880 = vmatpush1.msra.mxu0 0.0
      %881 = vmatprep.subr.mxu0 0.0
      %882 = vmatpush1.msra.mxu0 0.0
      %883 = vmatprep.subr.mxu0 0.0
      %884 = vmatpush1.msra.mxu0 0.0
      %885 = vmatprep.subr.mxu0 0.0
      %886 = vmatpush1.msra.mxu0 0.0
      %887 = vmatprep.subr.mxu0 0.0
      %888 = vmatpush1.msra.mxu0 0.0
      %889 = vmatprep.subr.mxu0 0.0
      %890 = vmatpush1.msra.mxu0 0.0
      %891 = vmatprep.subr.mxu0 0.0
      %892 = vmatpush1.msra.mxu0 0.0
      %893 = vmatprep.subr.mxu0 0.0
      %894 = vmatpush1.msra.mxu0 0.0
      %895 = vmatprep.subr.mxu0 0.0
      %896 = vmatpush1.msra.mxu0 0.0
      %897 = vmatprep.subr.mxu0 0.0
      %898 = vmatpush1.msra.mxu0 0.0
      %899 = vmatprep.subr.mxu0 0.0
      %900 = vmatpush1.msra.mxu0 0.0
      %901 = vmatprep.subr.mxu0 0.0
      %902 = vmatpush1.msra.mxu0 0.0
      %903 = vmatprep.mubr.f32.mxu0 0.0
      %904 = vmatmul.mubr.f32.gmra.mrb[0].mxu0 %v837
      %v905 = vpop.f32.mrb[0].mxu0
      %v906 = vadd.f32 0.0, %v905
      %v907 = vpop.f32.mrb[0].mxu0
      %908 = vdwg.mxu0
      %v909 = vadd.f32 %v830, %v906
      %v910 = vld [vmem:[%s2] sm:$0xff]
      %912 = vset.pattern.permute.xlu0 0
      %913 = vperm.xlu0 %912, %v910
      %v914 = vpop.permute.xlu0 %913
      %v916 = vadd.f32 %v909, %v914
      %v917 = vld [vmem:[%s3] sm:$0x1]
      %v919 = vlaneseq
      %v920 = vshrl.u32 %v919, 7
      %v921 = vsub.s32 0, %v920
      %v922 = vrot.slane %v917, %v921
      %v924 = vmul.f32 %v916, %v922
      %vm925 = vcmask 293888
      %926 = vst.msk [vmem:[%s192] sm:$0xff] %vm925, %v924
      %p927 = scmp.lt.s32.totalorder %s15, 1
      %s928 = scalar_select %p927, %s15, 1
      %s929 = smul.addr %s928, 8
      %s930 = scalar_lea.vmem %s4, %s929
      // Predicated region
      $region37: #{distill_kl_ml_forward.3} parent=35 // pred_check
        %p931 = pneg %p122
      $region38: #{distill_kl_ml_forward.3} parent=35 // pred_check_branch
        %933 = sbr.rel (%p931) target = $region40
      $region39: #{distill_kl_ml_forward.3} parent=35 // pred_region
        _
      $region40: #{distill_kl_ml_forward.3} parent=35 // pred_fallthru
        _
    $region36: #{distill_kl_ml_forward.3} parent=5 // pred_fallthru
      _
    %p934 = scmp.le.s32.totalorder 2, %s10
    // Predicated region
    $region41: #{distill_kl_ml_forward.3} parent=5 // pred_check
      %p935 = pneg %p934
    $region42: #{distill_kl_ml_forward.3} parent=5 // pred_check_branch
      %937 = sbr.rel (%p935) target = $region44
    $region43: #{distill_kl_ml_forward.3} parent=5 // pred_region
      %s938 = ssub.s32 %s10, 2
      // Predicated region
      $region45: #{distill_kl_ml_forward.3} parent=43 // pred_check
        %p939 = pneg %p128
      $region46: #{distill_kl_ml_forward.3} parent=43 // pred_check_branch
        %941 = sbr.rel (%p939) target = $region48
      $region47: #{distill_kl_ml_forward.3} parent=43 // pred_region
        %p942 = scmp.lt.s32.totalorder %s16, 1
        %s943 = scalar_select %p942, %s16, 1
        %s944 = smul.addr %s943, 8
        %s945 = scalar_lea.vmem %s4, %s944
      $region48: #{distill_kl_ml_forward.3} parent=43 // pred_fallthru
        _
    $region44: #{distill_kl_ml_forward.3} parent=5 // pred_fallthru
      _
  $region6: #{distill_kl_ml_forward.3} parent=0 // loop_footer
    %s14 = sadd.s32 1, %s10
  $region7: #{distill_kl_ml_forward.3} parent=0 // loop_footer_branch
    %9 = sbr.rel target = $region3
  $region8: #{distill_kl_ml_forward.3} parent=0 // loop_exit
    _

// kernel: distill_kl_ml_forward.4
$region0: #{distill_kl_ml_forward.4}
  #allocation0 [shape = 'u32[]', space=smem, size = 0x4, offset = 0x4, fixed_abs, tag = 'smem constant byte address 0x4 - core index']
  #allocation1 [shape = 'u32[144,128]{1,0:T(1,128)}', space=vmem, size = 0x12000, scoped, tag = 'internal scratch']
  #allocation2 [shape = 'f32[8,1226]{1,0:T(8,128)}', space=vmem, size = 0xa000, scoped, tag = 'scratch operand']
  %s0 = inlined_call_operand.vmem [shape: f32[2,8,36], index: 0, kind: input, shape index: {}]
  %s1 = inlined_call_operand.vmem [shape: f32[36,1156], index: 1, kind: input, shape index: {}]
  %s2 = inlined_call_operand.vmem [shape: f32[9,4,8], index: 2, kind: input, shape index: {}]
  %s3 = inlined_call_operand.vmem [shape: f32[4,1], index: 3, kind: input, shape index: {}]
  %s4 = inlined_call_operand.vmem [shape: f32[1,1156], index: 4, kind: input, shape index: {}]
  %s5 = inlined_call_operand.vmem [shape: f32[2,4,1156], index: 5, kind: output, shape index: {}]
  %s6 = sld [smem:[#allocation0]]
  $region53: #{distill_kl_ml_forward.4} parent=0
    _
  %s8 = ssub.s32 1, %s6
  %s9 = scalar_select 0, %s8, %s6
  loop: start=0, step=1, limit=4
  $region2: #{distill_kl_ml_forward.4} parent=0 // loop_pre_header
    _
  $region3: #{distill_kl_ml_forward.4} parent=0 // loop_header
    %s11 = sphi 0, %s15
    %p12 = scmp.ge.s32.totalorder %s11, 4
    %s21 = sphi 0, %s23
    %s24 = sphi 0, %s21
    %s25 = sphi 0, %s24
    %s41 = sphi 0, %s25
    %s45 = sphi 0, %s45
    %s47 = sphi 0, %s45
    %s48 = sphi 0, %s47
    %s62 = sphi 0, %s48
    %s66 = sphi 0, %s66
    %s68 = sphi 0, %s66
    %s69 = sphi 0, %s68
    %s83 = sphi 0, %s69
    %s87 = sphi 0, %s87
    %s89 = sphi 0, %s87
    %s90 = sphi 0, %s89
    %s104 = sphi 0, %s90
    %s108 = sphi 0, %s108
    %s110 = sphi 0, %s108
    %s111 = sphi 0, %s110
    %s125 = sphi 0, %s111
    %s131 = sphi 0, %s133
    %s134 = sphi 0, %s131
    %s135 = sphi 0, %s134
    %s151 = sphi 0, %s135
  $region4: #{distill_kl_ml_forward.4} parent=0 // loop_header_branch
    %14 = sbr.rel (%p12) target = $region8
  $region5: #{distill_kl_ml_forward.4} parent=0 // loop_body
    %s16 = ssub.s32 %s11, 1
    %s17 = ssub.s32 %s11, 2
    %s18 = sadd.s32 %s11, 1
    %s19 = ssub.s32 %s11, %s18
    %p20 = scmp.eq.s32.totalorder %s19, 0
    %s22 = sadd.s32 %s21, 1
    %s23 = scalar_select %p20, %s21, %s22
    %p26 = pneg %p20
    %p27 = scmp.eq.s32.totalorder %s11, 1
    %p28 = por %p26, %p27
    %p29 = scmp.ne.s32.totalorder %s21, %s24
    %p30 = scmp.eq.s32.totalorder %s11, 0
    %p31 = por %p29, %p30
    %p32 = scmp.ne.s32.totalorder %s21, %s24
    %p33 = scmp.eq.s32.totalorder %s16, 1
    %p34 = por %p32, %p33
    %p35 = scmp.ne.s32.totalorder %s24, %s25
    %p36 = scmp.eq.s32.totalorder %s16, 0
    %p37 = por %p35, %p36
    %p38 = scmp.ne.s32.totalorder %s24, %s25
    %p39 = scmp.eq.s32.totalorder %s17, 1
    %p40 = por %p38, %p39
    %p42 = scmp.ne.s32.totalorder %s25, %s41
    %p43 = scmp.eq.s32.totalorder %s17, 0
    %p44 = por %p42, %p43
    %s46 = sadd.s32 %s45, 1
    %p49 = scmp.eq.s32.totalorder %s11, 1
    %p50 = scmp.ne.s32.totalorder %s45, %s47
    %p51 = scmp.eq.s32.totalorder %s11, 0
    %p52 = por %p50, %p51
    %p53 = scmp.ne.s32.totalorder %s45, %s47
    %p54 = scmp.eq.s32.totalorder %s16, 1
    %p55 = por %p53, %p54
    %p56 = scmp.ne.s32.totalorder %s47, %s48
    %p57 = scmp.eq.s32.totalorder %s16, 0
    %p58 = por %p56, %p57
    %p59 = scmp.ne.s32.totalorder %s47, %s48
    %p60 = scmp.eq.s32.totalorder %s17, 1
    %p61 = por %p59, %p60
    %p63 = scmp.ne.s32.totalorder %s48, %s62
    %p64 = scmp.eq.s32.totalorder %s17, 0
    %p65 = por %p63, %p64
    %s67 = sadd.s32 %s66, 1
    %p70 = scmp.eq.s32.totalorder %s11, 1
    %p71 = scmp.ne.s32.totalorder %s66, %s68
    %p72 = scmp.eq.s32.totalorder %s11, 0
    %p73 = por %p71, %p72
    %p74 = scmp.ne.s32.totalorder %s66, %s68
    %p75 = scmp.eq.s32.totalorder %s16, 1
    %p76 = por %p74, %p75
    %p77 = scmp.ne.s32.totalorder %s68, %s69
    %p78 = scmp.eq.s32.totalorder %s16, 0
    %p79 = por %p77, %p78
    %p80 = scmp.ne.s32.totalorder %s68, %s69
    %p81 = scmp.eq.s32.totalorder %s17, 1
    %p82 = por %p80, %p81
    %p84 = scmp.ne.s32.totalorder %s69, %s83
    %p85 = scmp.eq.s32.totalorder %s17, 0
    %p86 = por %p84, %p85
    %s88 = sadd.s32 %s87, 1
    %p91 = scmp.eq.s32.totalorder %s11, 1
    %p92 = scmp.ne.s32.totalorder %s87, %s89
    %p93 = scmp.eq.s32.totalorder %s11, 0
    %p94 = por %p92, %p93
    %p95 = scmp.ne.s32.totalorder %s87, %s89
    %p96 = scmp.eq.s32.totalorder %s16, 1
    %p97 = por %p95, %p96
    %p98 = scmp.ne.s32.totalorder %s89, %s90
    %p99 = scmp.eq.s32.totalorder %s16, 0
    %p100 = por %p98, %p99
    %p101 = scmp.ne.s32.totalorder %s89, %s90
    %p102 = scmp.eq.s32.totalorder %s17, 1
    %p103 = por %p101, %p102
    %p105 = scmp.ne.s32.totalorder %s90, %s104
    %p106 = scmp.eq.s32.totalorder %s17, 0
    %p107 = por %p105, %p106
    %s109 = sadd.s32 %s108, 1
    %p112 = scmp.eq.s32.totalorder %s11, 1
    %p113 = scmp.ne.s32.totalorder %s108, %s110
    %p114 = scmp.eq.s32.totalorder %s11, 0
    %p115 = por %p113, %p114
    %p116 = scmp.ne.s32.totalorder %s108, %s110
    %p117 = scmp.eq.s32.totalorder %s16, 1
    %p118 = por %p116, %p117
    %p119 = scmp.ne.s32.totalorder %s110, %s111
    %p120 = scmp.eq.s32.totalorder %s16, 0
    %p121 = por %p119, %p120
    %p122 = scmp.ne.s32.totalorder %s110, %s111
    %p123 = scmp.eq.s32.totalorder %s17, 1
    %p124 = por %p122, %p123
    %p126 = scmp.ne.s32.totalorder %s111, %s125
    %p127 = scmp.eq.s32.totalorder %s17, 0
    %p128 = por %p126, %p127
    %s129 = ssub.s32 %s11, %s18
    %p130 = scmp.eq.s32.totalorder %s129, 0
    %s132 = sadd.s32 %s131, 1
    %s133 = scalar_select %p130, %s131, %s132
    %p136 = pneg %p130
    %p137 = scmp.eq.s32.totalorder %s11, 1
    %p138 = por %p136, %p137
    %p139 = scmp.ne.s32.totalorder %s131, %s134
    %p140 = scmp.eq.s32.totalorder %s11, 0
    %p141 = por %p139, %p140
    %p142 = scmp.ne.s32.totalorder %s131, %s134
    %p143 = scmp.eq.s32.totalorder %s16, 1
    %p144 = por %p142, %p143
    %p145 = scmp.ne.s32.totalorder %s134, %s135
    %p146 = scmp.eq.s32.totalorder %s16, 0
    %p147 = por %p145, %p146
    %p148 = scmp.ne.s32.totalorder %s134, %s135
    %p149 = scmp.eq.s32.totalorder %s17, 1
    %p150 = por %p148, %p149
    %p152 = scmp.ne.s32.totalorder %s135, %s151
    %p153 = scmp.eq.s32.totalorder %s17, 0
    %p154 = por %p152, %p153
    %p155 = scmp.le.s32.totalorder 1, %s11
    %p156 = scmp.lt.s32.totalorder %s11, 3
    %p157 = pnand %p155, %p156
    %p158 = pneg %p157
    // Predicated region
    $region9: #{distill_kl_ml_forward.4} parent=5 // pred_check
      _
    $region10: #{distill_kl_ml_forward.4} parent=5 // pred_check_branch
      %160 = sbr.rel (%p157) target = $region12
    $region11: #{distill_kl_ml_forward.4} parent=5 // pred_region
      %s161 = ssub.s32 %s11, 1
      // Predicated region
      $region13: #{distill_kl_ml_forward.4} parent=11 // pred_check
        %p162 = pneg %p58
      $region14: #{distill_kl_ml_forward.4} parent=11 // pred_check_branch
        %164 = sbr.rel (%p162) target = $region16
      $region15: #{distill_kl_ml_forward.4} parent=11 // pred_region
        _
      $region16: #{distill_kl_ml_forward.4} parent=11 // pred_fallthru
        _
      // Predicated region
      $region17: #{distill_kl_ml_forward.4} parent=11 // pred_check
        %p165 = pneg %p79
      $region18: #{distill_kl_ml_forward.4} parent=11 // pred_check_branch
        %167 = sbr.rel (%p165) target = $region20
      $region19: #{distill_kl_ml_forward.4} parent=11 // pred_region
        _
      $region20: #{distill_kl_ml_forward.4} parent=11 // pred_fallthru
        _
      // Predicated region
      $region21: #{distill_kl_ml_forward.4} parent=11 // pred_check
        %p168 = pneg %p100
      $region22: #{distill_kl_ml_forward.4} parent=11 // pred_check_branch
        %170 = sbr.rel (%p168) target = $region24
      $region23: #{distill_kl_ml_forward.4} parent=11 // pred_region
        _
      $region24: #{distill_kl_ml_forward.4} parent=11 // pred_fallthru
        _
      // Predicated region
      $region25: #{distill_kl_ml_forward.4} parent=11 // pred_check
        %p171 = pneg %p121
      $region26: #{distill_kl_ml_forward.4} parent=11 // pred_check_branch
        %173 = sbr.rel (%p171) target = $region28
      $region27: #{distill_kl_ml_forward.4} parent=11 // pred_region
        _
      $region28: #{distill_kl_ml_forward.4} parent=11 // pred_fallthru
        _
    $region12: #{distill_kl_ml_forward.4} parent=5 // pred_fallthru
      _
    %p174 = scmp.lt.s32.totalorder %s11, 2
    // Predicated region
    $region29: #{distill_kl_ml_forward.4} parent=5 // pred_check
      %p175 = pneg %p174
    $region30: #{distill_kl_ml_forward.4} parent=5 // pred_check_branch
      %177 = sbr.rel (%p175) target = $region32
    $region31: #{distill_kl_ml_forward.4} parent=5 // pred_region
      // Predicated region
      $region33: #{distill_kl_ml_forward.4} parent=31 // pred_check
        %p178 = pneg %p31
      $region34: #{distill_kl_ml_forward.4} parent=31 // pred_check_branch
        %180 = sbr.rel (%p178) target = $region36
      $region35: #{distill_kl_ml_forward.4} parent=31 // pred_region
        %p181 = scmp.lt.s32.totalorder %s11, 1
        %s182 = scalar_select %p181, %s11, 1
        %s183 = smul.addr %s182, 8
        %s184 = scalar_lea.vmem %s0, %s183
      $region36: #{distill_kl_ml_forward.4} parent=31 // pred_fallthru
        _
    $region32: #{distill_kl_ml_forward.4} parent=5 // pred_fallthru
      _
    %p185 = scmp.le.s32.totalorder 1, %s11
    %p186 = scmp.lt.s32.totalorder %s11, 3
    %p187 = pnand %p185, %p186
    %p188 = pneg %p187
    // Predicated region
    $region37: #{distill_kl_ml_forward.4} parent=5 // pred_check
      _
    $region38: #{distill_kl_ml_forward.4} parent=5 // pred_check_branch
      %190 = sbr.rel (%p187) target = $region40
    $region39: #{distill_kl_ml_forward.4} parent=5 // pred_region
      %s191 = ssub.s32 %s11, 1
      %p192 = scmp.lt.s32.totalorder %s16, 1
      %s193 = scalar_select %p192, %s16, 1
      %s194 = smul.addr %s193, 8
      %s195 = scalar_lea.vmem %s0, %s194
      %p196 = pneg %p37
      %p197 = pneg %p34
      %p198 = pneg %p58
      %p199 = pneg %p55
      %p200 = pneg %p79
      %p201 = pneg %p76
      %p202 = pneg %p100
      %p203 = pneg %p97
      %p204 = pneg %p121
      %p205 = pneg %p118
      %p206 = pneg %p147
      %p207 = pneg %p144
      %p208 = scmp.lt.s32.totalorder %s16, 1
      %s209 = scalar_select %p208, %s16, 1
      %s210 = smul.addr %s209, 10
      %s211 = smul.addr %s210, 4
      %s212 = scalar_lea.vmem %s5, %s211
      %p213 = scmp.lt.s32.totalorder %s16, 1
      %s214 = scalar_select %p213, %s16, 1
      %s215 = smul.addr %s214, 8
      %s216 = scalar_lea.vmem %s0, %s215
      %p217 = scmp.lt.s32.totalorder %s16, 1
      %s218 = scalar_select %p217, %s16, 1
      %s219 = smul.addr %s218, 10
      %s220 = smul.addr %s219, 4
      %s221 = scalar_lea.vmem %s5, %s220
      %222 = vst [vmem:[#allocation2] sm:$0xff] 0.0
      %223 = vst [vmem:[#allocation2 + $0x8] sm:$0xff] 0.0
      %224 = vst [vmem:[#allocation2 + $0x10] sm:$0xff] 0.0
      %225 = vst [vmem:[#allocation2 + $0x18] sm:$0xff] 0.0
      %226 = vst [vmem:[#allocation2 + $0x20] sm:$0xff] 0.0
      %227 = vst [vmem:[#allocation2 + $0x28] sm:$0xff] 0.0
      %228 = vst [vmem:[#allocation2 + $0x30] sm:$0xff] 0.0
      %229 = vst [vmem:[#allocation2 + $0x38] sm:$0xff] 0.0
      %230 = vst [vmem:[#allocation2 + $0x40] sm:$0xff] 0.0
      %vm231 = vcmask 605184
      %232 = vst.msk [vmem:[#allocation2 + $0x48] sm:$0xff] %vm231, 0.0
      %v233 = vld [vmem:[%s216] sm:$0xff]
      %v234 = vld [vmem:[%s1] sm:$0xff]
      %v235 = vld [vmem:[%s1 + $0x8] sm:$0xff]
      %v236 = vld [vmem:[%s1 + $0x10] sm:$0xff]
      %v237 = vld [vmem:[%s1 + $0x18] sm:$0xff]
      %v238 = vld [vmem:[%s1 + $0x20] sm:$0xff]
      %v239 = vld [vmem:[%s1 + $0x28] sm:$0xff]
      %v240 = vld [vmem:[%s1 + $0x30] sm:$0xff]
      %v241 = vld [vmem:[%s1 + $0x38] sm:$0xff]
      %v242 = vld [vmem:[%s1 + $0x40] sm:$0xff]
      %v243 = vld [vmem:[%s1 + $0x48] sm:$0xff]
      %v244 = vld [vmem:[%s1 + $0x50] sm:$0xff]
      %v245 = vld [vmem:[%s1 + $0x58] sm:$0xff]
      %v246 = vld [vmem:[%s1 + $0x60] sm:$0xff]
      %v247 = vld [vmem:[%s1 + $0x68] sm:$0xff]
      %v248 = vld [vmem:[%s1 + $0x70] sm:$0xff]
      %v249 = vld [vmem:[%s1 + $0x78] sm:$0xff]
      %v250 = vld [vmem:[%s1 + $0x80] sm:$0xff]
      %v251 = vld [vmem:[%s1 + $0x88] sm:$0xff]
      %v252 = vld [vmem:[%s1 + $0x90] sm:$0xff]
      %v253 = vld [vmem:[%s1 + $0x98] sm:$0xff]
      %v254 = vld [vmem:[%s1 + $0xa0] sm:$0xff]
      %v255 = vld [vmem:[%s1 + $0xa8] sm:$0xff]
      %v256 = vld [vmem:[%s1 + $0xb0] sm:$0xff]
      %v257 = vld [vmem:[%s1 + $0xb8] sm:$0xff]
      %v258 = vld [vmem:[%s1 + $0xc0] sm:$0xff]
      %v259 = vld [vmem:[%s1 + $0xc8] sm:$0xff]
      %v260 = vld [vmem:[%s1 + $0xd0] sm:$0xff]
      %v261 = vld [vmem:[%s1 + $0xd8] sm:$0xff]
      %v262 = vld [vmem:[%s1 + $0xe0] sm:$0xff]
      %v263 = vld [vmem:[%s1 + $0xe8] sm:$0xff]
      %v264 = vld [vmem:[%s1 + $0xf0] sm:$0xff]
      %v265 = vld [vmem:[%s1 + $0xf8] sm:$0xff]
      %v266 = vld [vmem:[%s1 + $0x100] sm:$0xff]
      %v267 = vld [vmem:[%s1 + $0x108] sm:$0xff]
      %v268 = vld [vmem:[%s1 + $0x110] sm:$0xff]
      %v269 = vld [vmem:[%s1 + $0x118] sm:$0xff]
      %v270 = vld [vmem:[%s1 + $0x120] sm:$0xff]
      %v271 = vld [vmem:[%s1 + $0x128] sm:$0xff]
      %v272 = vld [vmem:[%s1 + $0x130] sm:$0xff]
      %v273 = vld [vmem:[%s1 + $0x138] sm:$0xff]
      %v274 = vld [vmem:[%s1 + $0x140] sm:$0xf]
      %v275 = vld [vmem:[%s1 + $0x148] sm:$0xf]
      %v276 = vld [vmem:[%s1 + $0x150] sm:$0xf]
      %v277 = vld [vmem:[%s1 + $0x158] sm:$0xf]
      %v278 = vld [vmem:[%s1 + $0x160] sm:$0xf]
      %v279 = vld [vmem:[%s1 + $0x168] sm:$0xf]
      %v280 = vld [vmem:[%s1 + $0x170] sm:$0xf]
      %v281 = vld [vmem:[%s1 + $0x178] sm:$0xf]
      %v282 = vld [vmem:[%s1 + $0x180] sm:$0xf]
      %v283 = vld [vmem:[%s1 + $0x188] sm:$0xf]
      %vm284 = vcmask 293888
      %v286 = vsel %vm284, %v233, 0
      %vm288 = vcmask 1043456
      %v290 = vsel %vm288, %v274, 0
      %v293 = vsel %vm288, %v275, 0
      %v296 = vsel %vm288, %v276, 0
      %v299 = vsel %vm288, %v277, 0
      %v302 = vsel %vm288, %v278, 0
      %v305 = vsel %vm288, %v279, 0
      %v308 = vsel %vm288, %v280, 0
      %v311 = vsel %vm288, %v281, 0
      %v314 = vsel %vm288, %v282, 0
      %v317 = vsel %vm288, %v283, 0
      %319 = vmatprep.subr.mxu0 %v235
      %320 = vmatpush1.msra.mxu0 %v234
      %321 = vmatprep.subr.mxu0 %v245
      %322 = vmatpush1.msra.mxu0 %v244
      %323 = vmatprep.subr.mxu0 %v255
      %324 = vmatpush1.msra.mxu0 %v254
      %325 = vmatprep.subr.mxu0 %v265
      %326 = vmatpush1.msra.mxu0 %v264
      %327 = vmatprep.subr.mxu0 %v293
      %328 = vmatpush1.msra.mxu0 %v290
      %329 = vmatprep.subr.mxu0 0.0
      %330 = vmatpush1.msra.mxu0 0.0
      %331 = vmatprep.subr.mxu0 0.0
      %332 = vmatpush1.msra.mxu0 0.0
      %333 = vmatprep.subr.mxu0 0.0
      %334 = vmatpush1.msra.mxu0 0.0
      %335 = vmatprep.subr.mxu0 0.0
      %336 = vmatpush1.msra.mxu0 0.0
      %337 = vmatprep.subr.mxu0 0.0
      %338 = vmatpush1.msra.mxu0 0.0
      %339 = vmatprep.subr.mxu0 0.0
      %340 = vmatpush1.msra.mxu0 0.0
      %341 = vmatprep.subr.mxu0 0.0
      %342 = vmatpush1.msra.mxu0 0.0
      %343 = vmatprep.subr.mxu0 0.0
      %344 = vmatpush1.msra.mxu0 0.0
      %345 = vmatprep.subr.mxu0 0.0
      %346 = vmatpush1.msra.mxu0 0.0
      %347 = vmatprep.subr.mxu0 0.0
      %348 = vmatpush1.msra.mxu0 0.0
      %349 = vmatprep.subr.mxu0 0.0
      %350 = vmatpush1.msra.mxu0 0.0
      %351 = vmatprep.subr.mxu0 0.0
      %352 = vmatpush1.msra.mxu0 0.0
      %353 = vmatprep.subr.mxu0 0.0
      %354 = vmatpush1.msra.mxu0 0.0
      %355 = vmatprep.subr.mxu0 0.0
      %356 = vmatpush1.msra.mxu0 0.0
      %357 = vmatprep.subr.mxu0 0.0
      %358 = vmatpush1.msra.mxu0 0.0
      %359 = vmatprep.subr.mxu0 0.0
      %360 = vmatpush1.msra.mxu0 0.0
      %361 = vmatprep.subr.mxu0 0.0
      %362 = vmatpush1.msra.mxu0 0.0
      %363 = vmatprep.subr.mxu0 0.0
      %364 = vmatpush1.msra.mxu0 0.0
      %365 = vmatprep.subr.mxu0 0.0
      %366 = vmatpush1.msra.mxu0 0.0
      %367 = vmatprep.subr.mxu0 0.0
      %368 = vmatpush1.msra.mxu0 0.0
      %369 = vmatprep.subr.mxu0 0.0
      %370 = vmatpush1.msra.mxu0 0.0
      %371 = vmatprep.subr.mxu0 0.0
      %372 = vmatpush1.msra.mxu0 0.0
      %373 = vmatprep.subr.mxu0 0.0
      %374 = vmatpush1.msra.mxu0 0.0
      %375 = vmatprep.subr.mxu0 0.0
      %376 = vmatpush1.msra.mxu0 0.0
      %377 = vmatprep.subr.mxu0 0.0
      %378 = vmatpush1.msra.mxu0 0.0
      %379 = vmatprep.subr.mxu0 0.0
      %380 = vmatpush1.msra.mxu0 0.0
      %381 = vmatprep.subr.mxu0 0.0
      %382 = vmatpush1.msra.mxu0 0.0
      %383 = vmatprep.mubr.f32.mxu0 0.0
      %384 = vmatmul.mubr.f32.gmra.mrb[0].mxu0 %v286
      %v385 = vpop.f32.mrb[0].mxu0
      %v386 = vadd.f32 0.0, %v385
      %v387 = vpop.f32.mrb[0].mxu0
      %v388 = vadd.f32 0.0, %v387
      %389 = vdwg.mxu0
      %390 = vmatprep.subr.mxu0 %v237
      %391 = vmatpush1.msra.mxu0 %v236
      %392 = vmatprep.subr.mxu0 %v247
      %393 = vmatpush1.msra.mxu0 %v246
      %394 = vmatprep.subr.mxu0 %v257
      %395 = vmatpush1.msra.mxu0 %v256
      %396 = vmatprep.subr.mxu0 %v267
      %397 = vmatpush1.msra.mxu0 %v266
      %398 = vmatprep.subr.mxu0 %v299
      %399 = vmatpush1.msra.mxu0 %v296
      %400 = vmatprep.subr.mxu0 0.0
      %401 = vmatpush1.msra.mxu0 0.0
      %402 = vmatprep.subr.mxu0 0.0
      %403 = vmatpush1.msra.mxu0 0.0
      %404 = vmatprep.subr.mxu0 0.0
      %405 = vmatpush1.msra.mxu0 0.0
      %406 = vmatprep.subr.mxu0 0.0
      %407 = vmatpush1.msra.mxu0 0.0
      %408 = vmatprep.subr.mxu0 0.0
      %409 = vmatpush1.msra.mxu0 0.0
      %410 = vmatprep.subr.mxu0 0.0
      %411 = vmatpush1.msra.mxu0 0.0
      %412 = vmatprep.subr.mxu0 0.0
      %413 = vmatpush1.msra.mxu0 0.0
      %414 = vmatprep.subr.mxu0 0.0
      %415 = vmatpush1.msra.mxu0 0.0
      %416 = vmatprep.subr.mxu0 0.0
      %417 = vmatpush1.msra.mxu0 0.0
      %418 = vmatprep.subr.mxu0 0.0
      %419 = vmatpush1.msra.mxu0 0.0
      %420 = vmatprep.subr.mxu0 0.0
      %421 = vmatpush1.msra.mxu0 0.0
      %422 = vmatprep.subr.mxu0 0.0
      %423 = vmatpush1.msra.mxu0 0.0
      %424 = vmatprep.subr.mxu0 0.0
      %425 = vmatpush1.msra.mxu0 0.0
      %426 = vmatprep.subr.mxu0 0.0
      %427 = vmatpush1.msra.mxu0 0.0
      %428 = vmatprep.subr.mxu0 0.0
      %429 = vmatpush1.msra.mxu0 0.0
      %430 = vmatprep.subr.mxu0 0.0
      %431 = vmatpush1.msra.mxu0 0.0
      %432 = vmatprep.subr.mxu0 0.0
      %433 = vmatpush1.msra.mxu0 0.0
      %434 = vmatprep.subr.mxu0 0.0
      %435 = vmatpush1.msra.mxu0 0.0
      %436 = vmatprep.subr.mxu0 0.0
      %437 = vmatpush1.msra.mxu0 0.0
      %438 = vmatprep.subr.mxu0 0.0
      %439 = vmatpush1.msra.mxu0 0.0
      %440 = vmatprep.subr.mxu0 0.0
      %441 = vmatpush1.msra.mxu0 0.0
      %442 = vmatprep.subr.mxu0 0.0
      %443 = vmatpush1.msra.mxu0 0.0
      %444 = vmatprep.subr.mxu0 0.0
      %445 = vmatpush1.msra.mxu0 0.0
      %446 = vmatprep.subr.mxu0 0.0
      %447 = vmatpush1.msra.mxu0 0.0
      %448 = vmatprep.subr.mxu0 0.0
      %449 = vmatpush1.msra.mxu0 0.0
      %450 = vmatprep.subr.mxu0 0.0
      %451 = vmatpush1.msra.mxu0 0.0
      %452 = vmatprep.subr.mxu0 0.0
      %453 = vmatpush1.msra.mxu0 0.0
      %454 = vmatprep.mubr.f32.mxu0 0.0
      %455 = vmatmul.mubr.f32.gmra.mrb[0].mxu0 %v286
      %v456 = vpop.f32.mrb[0].mxu0
      %v457 = vadd.f32 0.0, %v456
      %v458 = vpop.f32.mrb[0].mxu0
      %v459 = vadd.f32 0.0, %v458
      %460 = vdwg.mxu0
      %461 = vmatprep.subr.mxu0 %v239
      %462 = vmatpush1.msra.mxu0 %v238
      %463 = vmatprep.subr.mxu0 %v249
      %464 = vmatpush1.msra.mxu0 %v248
      %465 = vmatprep.subr.mxu0 %v259
      %466 = vmatpush1.msra.mxu0 %v258
      %467 = vmatprep.subr.mxu0 %v269
      %468 = vmatpush1.msra.mxu0 %v268
      %469 = vmatprep.subr.mxu0 %v305
      %470 = vmatpush1.msra.mxu0 %v302
      %471 = vmatprep.subr.mxu0 0.0
      %472 = vmatpush1.msra.mxu0 0.0
      %473 = vmatprep.subr.mxu0 0.0
      %474 = vmatpush1.msra.mxu0 0.0
      %475 = vmatprep.subr.mxu0 0.0
      %476 = vmatpush1.msra.mxu0 0.0
      %477 = vmatprep.subr.mxu0 0.0
      %478 = vmatpush1.msra.mxu0 0.0
      %479 = vmatprep.subr.mxu0 0.0
      %480 = vmatpush1.msra.mxu0 0.0
      %481 = vmatprep.subr.mxu0 0.0
      %482 = vmatpush1.msra.mxu0 0.0
      %483 = vmatprep.subr.mxu0 0.0
      %484 = vmatpush1.msra.mxu0 0.0
      %485 = vmatprep.subr.mxu0 0.0
      %486 = vmatpush1.msra.mxu0 0.0
      %487 = vmatprep.subr.mxu0 0.0
      %488 = vmatpush1.msra.mxu0 0.0
      %489 = vmatprep.subr.mxu0 0.0
      %490 = vmatpush1.msra.mxu0 0.0
      %491 = vmatprep.subr.mxu0 0.0
      %492 = vmatpush1.msra.mxu0 0.0
      %493 = vmatprep.subr.mxu0 0.0
      %494 = vmatpush1.msra.mxu0 0.0
      %495 = vmatprep.subr.mxu0 0.0
      %496 = vmatpush1.msra.mxu0 0.0
      %497 = vmatprep.subr.mxu0 0.0
      %498 = vmatpush1.msra.mxu0 0.0
      %499 = vmatprep.subr.mxu0 0.0
      %500 = vmatpush1.msra.mxu0 0.0
      %501 = vmatprep.subr.mxu0 0.0
      %502 = vmatpush1.msra.mxu0 0.0
      %503 = vmatprep.subr.mxu0 0.0
      %504 = vmatpush1.msra.mxu0 0.0
      %505 = vmatprep.subr.mxu0 0.0
      %506 = vmatpush1.msra.mxu0 0.0
      %507 = vmatprep.subr.mxu0 0.0
      %508 = vmatpush1.msra.mxu0 0.0
      %509 = vmatprep.subr.mxu0 0.0
      %510 = vmatpush1.msra.mxu0 0.0
      %511 = vmatprep.subr.mxu0 0.0
      %512 = vmatpush1.msra.mxu0 0.0
      %513 = vmatprep.subr.mxu0 0.0
      %514 = vmatpush1.msra.mxu0 0.0
      %515 = vmatprep.subr.mxu0 0.0
      %516 = vmatpush1.msra.mxu0 0.0
      %517 = vmatprep.subr.mxu0 0.0
      %518 = vmatpush1.msra.mxu0 0.0
      %519 = vmatprep.subr.mxu0 0.0
      %520 = vmatpush1.msra.mxu0 0.0
      %521 = vmatprep.subr.mxu0 0.0
      %522 = vmatpush1.msra.mxu0 0.0
      %523 = vmatprep.subr.mxu0 0.0
      %524 = vmatpush1.msra.mxu0 0.0
      %525 = vmatprep.mubr.f32.mxu0 0.0
      %526 = vmatmul.mubr.f32.gmra.mrb[0].mxu0 %v286
      %v527 = vpop.f32.mrb[0].mxu0
      %v528 = vadd.f32 0.0, %v527
      %v529 = vpop.f32.mrb[0].mxu0
      %v530 = vadd.f32 0.0, %v529
      %531 = vdwg.mxu0
      %532 = vmatprep.subr.mxu0 %v241
      %533 = vmatpush1.msra.mxu0 %v240
      %534 = vmatprep.subr.mxu0 %v251
      %535 = vmatpush1.msra.mxu0 %v250
      %536 = vmatprep.subr.mxu0 %v261
      %537 = vmatpush1.msra.mxu0 %v260
      %538 = vmatprep.subr.mxu0 %v271
      %539 = vmatpush1.msra.mxu0 %v270
      %540 = vmatprep.subr.mxu0 %v311
      %541 = vmatpush1.msra.mxu0 %v308
      %542 = vmatprep.subr.mxu0 0.0
      %543 = vmatpush1.msra.mxu0 0.0
      %544 = vmatprep.subr.mxu0 0.0
      %545 = vmatpush1.msra.mxu0 0.0
      %546 = vmatprep.subr.mxu0 0.0
      %547 = vmatpush1.msra.mxu0 0.0
      %548 = vmatprep.subr.mxu0 0.0
      %549 = vmatpush1.msra.mxu0 0.0
      %550 = vmatprep.subr.mxu0 0.0
      %551 = vmatpush1.msra.mxu0 0.0
      %552 = vmatprep.subr.mxu0 0.0
      %553 = vmatpush1.msra.mxu0 0.0
      %554 = vmatprep.subr.mxu0 0.0
      %555 = vmatpush1.msra.mxu0 0.0
      %556 = vmatprep.subr.mxu0 0.0
      %557 = vmatpush1.msra.mxu0 0.0
      %558 = vmatprep.subr.mxu0 0.0
      %559 = vmatpush1.msra.mxu0 0.0
      %560 = vmatprep.subr.mxu0 0.0
      %561 = vmatpush1.msra.mxu0 0.0
      %562 = vmatprep.subr.mxu0 0.0
      %563 = vmatpush1.msra.mxu0 0.0
      %564 = vmatprep.subr.mxu0 0.0
      %565 = vmatpush1.msra.mxu0 0.0
      %566 = vmatprep.subr.mxu0 0.0
      %567 = vmatpush1.msra.mxu0 0.0
      %568 = vmatprep.subr.mxu0 0.0
      %569 = vmatpush1.msra.mxu0 0.0
      %570 = vmatprep.subr.mxu0 0.0
      %571 = vmatpush1.msra.mxu0 0.0
      %572 = vmatprep.subr.mxu0 0.0
      %573 = vmatpush1.msra.mxu0 0.0
      %574 = vmatprep.subr.mxu0 0.0
      %575 = vmatpush1.msra.mxu0 0.0
      %576 = vmatprep.subr.mxu0 0.0
      %577 = vmatpush1.msra.mxu0 0.0
      %578 = vmatprep.subr.mxu0 0.0
      %579 = vmatpush1.msra.mxu0 0.0
      %580 = vmatprep.subr.mxu0 0.0
      %581 = vmatpush1.msra.mxu0 0.0
      %582 = vmatprep.subr.mxu0 0.0
      %583 = vmatpush1.msra.mxu0 0.0
      %584 = vmatprep.subr.mxu0 0.0
      %585 = vmatpush1.msra.mxu0 0.0
      %586 = vmatprep.subr.mxu0 0.0
      %587 = vmatpush1.msra.mxu0 0.0
      %588 = vmatprep.subr.mxu0 0.0
      %589 = vmatpush1.msra.mxu0 0.0
      %590 = vmatprep.subr.mxu0 0.0
      %591 = vmatpush1.msra.mxu0 0.0
      %592 = vmatprep.subr.mxu0 0.0
      %593 = vmatpush1.msra.mxu0 0.0
      %594 = vmatprep.subr.mxu0 0.0
      %595 = vmatpush1.msra.mxu0 0.0
      %596 = vmatprep.mubr.f32.mxu0 0.0
      %597 = vmatmul.mubr.f32.gmra.mrb[0].mxu0 %v286
      %v598 = vpop.f32.mrb[0].mxu0
      %v599 = vadd.f32 0.0, %v598
      %v600 = vpop.f32.mrb[0].mxu0
      %v601 = vadd.f32 0.0, %v600
      %602 = vdwg.mxu0
      %603 = vmatprep.subr.mxu0 %v243
      %604 = vmatpush1.msra.mxu0 %v242
      %605 = vmatprep.subr.mxu0 %v253
      %606 = vmatpush1.msra.mxu0 %v252
      %607 = vmatprep.subr.mxu0 %v263
      %608 = vmatpush1.msra.mxu0 %v262
      %609 = vmatprep.subr.mxu0 %v273
      %610 = vmatpush1.msra.mxu0 %v272
      %611 = vmatprep.subr.mxu0 %v317
      %612 = vmatpush1.msra.mxu0 %v314
      %613 = vmatprep.subr.mxu0 0.0
      %614 = vmatpush1.msra.mxu0 0.0
      %615 = vmatprep.subr.mxu0 0.0
      %616 = vmatpush1.msra.mxu0 0.0
      %617 = vmatprep.subr.mxu0 0.0
      %618 = vmatpush1.msra.mxu0 0.0
      %619 = vmatprep.subr.mxu0 0.0
      %620 = vmatpush1.msra.mxu0 0.0
      %621 = vmatprep.subr.mxu0 0.0
      %622 = vmatpush1.msra.mxu0 0.0
      %623 = vmatprep.subr.mxu0 0.0
      %624 = vmatpush1.msra.mxu0 0.0
      %625 = vmatprep.subr.mxu0 0.0
      %626 = vmatpush1.msra.mxu0 0.0
      %627 = vmatprep.subr.mxu0 0.0
      %628 = vmatpush1.msra.mxu0 0.0
      %629 = vmatprep.subr.mxu0 0.0
      %630 = vmatpush1.msra.mxu0 0.0
      %631 = vmatprep.subr.mxu0 0.0
      %632 = vmatpush1.msra.mxu0 0.0
      %633 = vmatprep.subr.mxu0 0.0
      %634 = vmatpush1.msra.mxu0 0.0
      %635 = vmatprep.subr.mxu0 0.0
      %636 = vmatpush1.msra.mxu0 0.0
      %637 = vmatprep.subr.mxu0 0.0
      %638 = vmatpush1.msra.mxu0 0.0
      %639 = vmatprep.subr.mxu0 0.0
      %640 = vmatpush1.msra.mxu0 0.0
      %641 = vmatprep.subr.mxu0 0.0
      %642 = vmatpush1.msra.mxu0 0.0
      %643 = vmatprep.subr.mxu0 0.0
      %644 = vmatpush1.msra.mxu0 0.0
      %645 = vmatprep.subr.mxu0 0.0
      %646 = vmatpush1.msra.mxu0 0.0
      %647 = vmatprep.subr.mxu0 0.0
      %648 = vmatpush1.msra.mxu0 0.0
      %649 = vmatprep.subr.mxu0 0.0
      %650 = vmatpush1.msra.mxu0 0.0
      %651 = vmatprep.subr.mxu0 0.0
      %652 = vmatpush1.msra.mxu0 0.0
      %653 = vmatprep.subr.mxu0 0.0
      %654 = vmatpush1.msra.mxu0 0.0
      %655 = vmatprep.subr.mxu0 0.0
      %656 = vmatpush1.msra.mxu0 0.0
      %657 = vmatprep.subr.mxu0 0.0
      %658 = vmatpush1.msra.mxu0 0.0
      %659 = vmatprep.subr.mxu0 0.0
      %660 = vmatpush1.msra.mxu0 0.0
      %661 = vmatprep.subr.mxu0 0.0
      %662 = vmatpush1.msra.mxu0 0.0
      %663 = vmatprep.subr.mxu0 0.0
      %664 = vmatpush1.msra.mxu0 0.0
      %665 = vmatprep.subr.mxu0 0.0
      %666 = vmatpush1.msra.mxu0 0.0
      %667 = vmatprep.mubr.f32.mxu0 0.0
      %668 = vmatmul.mubr.f32.gmra.mrb[0].mxu0 %v286
      %v669 = vpop.f32.mrb[0].mxu0
      %v670 = vadd.f32 0.0, %v669
      %v671 = vpop.f32.mrb[0].mxu0
      %v672 = vadd.f32 0.0, %v671
      %673 = vdwg.mxu0
      %684 = vrot.lane.b32.xlu0 %v386, 35
      %v685 = vpop.permute.xlu0 %684
      %686 = vrot.lane.b32.xlu0 %v388, 35
      %v687 = vpop.permute.xlu0 %686
      %688 = vrot.lane.b32.xlu0 %v457, 35
      %v689 = vpop.permute.xlu0 %688
      %690 = vrot.lane.b32.xlu0 %v459, 35
      %v691 = vpop.permute.xlu0 %690
      %692 = vrot.lane.b32.xlu0 %v528, 35
      %v693 = vpop.permute.xlu0 %692
      %694 = vrot.lane.b32.xlu0 %v530, 35
      %v695 = vpop.permute.xlu0 %694
      %696 = vrot.lane.b32.xlu0 %v599, 35
      %v697 = vpop.permute.xlu0 %696
      %698 = vrot.lane.b32.xlu0 %v601, 35
      %v699 = vpop.permute.xlu0 %698
      %700 = vrot.lane.b32.xlu0 %v670, 35
      %v701 = vpop.permute.xlu0 %700
      %702 = vrot.lane.b32.xlu0 %v672, 35
      %v703 = vpop.permute.xlu0 %702
      %vm704 = vcmask 285696
      %v705 = vsel %vm704, %v685, %v687
      %v706 = vsel %vm704, %v687, %v689
      %v707 = vsel %vm704, %v689, %v691
      %v708 = vsel %vm704, %v691, %v693
      %v709 = vsel %vm704, %v693, %v695
      %v710 = vsel %vm704, %v695, %v697
      %v711 = vsel %vm704, %v697, %v699
      %v712 = vsel %vm704, %v699, %v701
      %v713 = vsel %vm704, %v701, %v703
      %vm724 = vcmask 1047832
      %725 = vst.msk [vmem:[#allocation2] sm:$0xff] %vm724, %v685
      %726 = vst [vmem:[#allocation2 + $0x8] sm:$0xff] %v705
      %727 = vst [vmem:[#allocation2 + $0x10] sm:$0xff] %v706
      %728 = vst [vmem:[#allocation2 + $0x18] sm:$0xff] %v707
      %729 = vst [vmem:[#allocation2 + $0x20] sm:$0xff] %v708
      %730 = vst [vmem:[#allocation2 + $0x28] sm:$0xff] %v709
      %731 = vst [vmem:[#allocation2 + $0x30] sm:$0xff] %v710
      %732 = vst [vmem:[#allocation2 + $0x38] sm:$0xff] %v711
      %733 = vst [vmem:[#allocation2 + $0x40] sm:$0xff] %v712
      %vm734 = vcmask 318464
      %735 = vst.msk [vmem:[#allocation2 + $0x48] sm:$0xff] %vm734, %v713
      %v736 = vld [vmem:[%s2] sm:$0xf]
      %v737 = vld [vmem:[#allocation2] sm:$0xff]
      %v738 = vld [vmem:[#allocation2 + $0x8] sm:$0xff]
      %v739 = vld [vmem:[#allocation2 + $0x10] sm:$0xff]
      %v740 = vld [vmem:[#allocation2 + $0x18] sm:$0xff]
      %v741 = vld [vmem:[#allocation2 + $0x20] sm:$0xff]
      %v742 = vld [vmem:[#allocation2 + $0x28] sm:$0xff]
      %v743 = vld [vmem:[#allocation2 + $0x30] sm:$0xff]
      %v744 = vld [vmem:[#allocation2 + $0x38] sm:$0xff]
      %v745 = vld [vmem:[#allocation2 + $0x40] sm:$0xff]
      %v746 = vld [vmem:[#allocation2 + $0x48] sm:$0xff]
      %s747 = scalar_lea.vmem %s2, 4
      %v748 = vld [vmem:[%s747] sm:$0xf]
      %759 = vrot.lane.b32.xlu0 %v737, 127
      %v760 = vpop.permute.xlu0 %759
      %761 = vrot.lane.b32.xlu0 %v738, 127
      %v762 = vpop.permute.xlu0 %761
      %763 = vrot.lane.b32.xlu0 %v739, 127
      %v764 = vpop.permute.xlu0 %763
      %765 = vrot.lane.b32.xlu0 %v740, 127
      %v766 = vpop.permute.xlu0 %765
      %767 = vrot.lane.b32.xlu0 %v741, 127
      %v768 = vpop.permute.xlu0 %767
      %769 = vrot.lane.b32.xlu0 %v742, 127
      %v770 = vpop.permute.xlu0 %769
      %771 = vrot.lane.b32.xlu0 %v743, 127
      %v772 = vpop.permute.xlu0 %771
      %773 = vrot.lane.b32.xlu0 %v744, 127
      %v774 = vpop.permute.xlu0 %773
      %775 = vrot.lane.b32.xlu0 %v745, 127
      %v776 = vpop.permute.xlu0 %775
      %777 = vrot.lane.b32.xlu0 %v746, 127
      %v778 = vpop.permute.xlu0 %777
      %vm779 = vcmask 1039360
      %v780 = vsel %vm779, %v760, %v762
      %v781 = vsel %vm779, %v762, %v764
      %v782 = vsel %vm779, %v764, %v766
      %v783 = vsel %vm779, %v766, %v768
      %v784 = vsel %vm779, %v768, %v770
      %v785 = vsel %vm779, %v770, %v772
      %v786 = vsel %vm779, %v772, %v774
      %v787 = vsel %vm779, %v774, %v776
      %v788 = vsel %vm779, %v776, %v778
      %vm799 = vcmask 64512
      %v801 = vsel %vm799, %v748, 0
      %803 = vmatprep.subr.mxu0 %v781
      %804 = vmatpush1.msra.mxu0 %v780
      %805 = vmatprep.subr.mxu0 0.0
      %806 = vmatpush1.msra.mxu0 0.0
      %807 = vmatprep.subr.mxu0 0.0
      %808 = vmatpush1.msra.mxu0 0.0
      %809 = vmatprep.subr.mxu0 0.0
      %810 = vmatpush1.msra.mxu0 0.0
      %811 = vmatprep.subr.mxu0 0.0
      %812 = vmatpush1.msra.mxu0 0.0
      %813 = vmatprep.subr.mxu0 0.0
      %814 = vmatpush1.msra.mxu0 0.0
      %815 = vmatprep.subr.mxu0 0.0
      %816 = vmatpush1.msra.mxu0 0.0
      %817 = vmatprep.subr.mxu0 0.0
      %818 = vmatpush1.msra.mxu0 0.0
      %819 = vmatprep.subr.mxu0 0.0
      %820 = vmatpush1.msra.mxu0 0.0
      %821 = vmatprep.subr.mxu0 0.0
      %822 = vmatpush1.msra.mxu0 0.0
      %823 = vmatprep.subr.mxu0 0.0
      %824 = vmatpush1.msra.mxu0 0.0
      %825 = vmatprep.subr.mxu0 0.0
      %826 = vmatpush1.msra.mxu0 0.0
      %827 = vmatprep.subr.mxu0 0.0
      %828 = vmatpush1.msra.mxu0 0.0
      %829 = vmatprep.subr.mxu0 0.0
      %830 = vmatpush1.msra.mxu0 0.0
      %831 = vmatprep.subr.mxu0 0.0
      %832 = vmatpush1.msra.mxu0 0.0
      %833 = vmatprep.subr.mxu0 0.0
      %834 = vmatpush1.msra.mxu0 0.0
      %835 = vmatprep.subr.mxu0 0.0
      %836 = vmatpush1.msra.mxu0 0.0
      %837 = vmatprep.subr.mxu0 0.0
      %838 = vmatpush1.msra.mxu0 0.0
      %839 = vmatprep.subr.mxu0 0.0
      %840 = vmatpush1.msra.mxu0 0.0
      %841 = vmatprep.subr.mxu0 0.0
      %842 = vmatpush1.msra.mxu0 0.0
      %843 = vmatprep.subr.mxu0 0.0
      %844 = vmatpush1.msra.mxu0 0.0
      %845 = vmatprep.subr.mxu0 0.0
      %846 = vmatpush1.msra.mxu0 0.0
      %847 = vmatprep.subr.mxu0 0.0
      %848 = vmatpush1.msra.mxu0 0.0
      %849 = vmatprep.subr.mxu0 0.0
      %850 = vmatpush1.msra.mxu0 0.0
      %851 = vmatprep.subr.mxu0 0.0
      %852 = vmatpush1.msra.mxu0 0.0
      %853 = vmatprep.subr.mxu0 0.0
      %854 = vmatpush1.msra.mxu0 0.0
      %855 = vmatprep.subr.mxu0 0.0
      %856 = vmatpush1.msra.mxu0 0.0
      %857 = vmatprep.subr.mxu0 0.0
      %858 = vmatpush1.msra.mxu0 0.0
      %859 = vmatprep.subr.mxu0 0.0
      %860 = vmatpush1.msra.mxu0 0.0
      %861 = vmatprep.subr.mxu0 0.0
      %862 = vmatpush1.msra.mxu0 0.0
      %863 = vmatprep.subr.mxu0 0.0
      %864 = vmatpush1.msra.mxu0 0.0
      %865 = vmatprep.subr.mxu0 0.0
      %866 = vmatpush1.msra.mxu0 0.0
      %867 = vmatprep.mubr.f32.mxu0 0.0
      %868 = vmatmul.mubr.f32.gmra.mrb[0].mxu0 %v801
      %v869 = vpop.f32.mrb[0].mxu0
      %v870 = vadd.f32 0.0, %v869
      %v871 = vpop.f32.mrb[0].mxu0
      %v872 = vadd.f32 0.0, %v871
      %873 = vdwg.mxu0
      %874 = vmatprep.subr.mxu0 %v783
      %875 = vmatpush1.msra.mxu0 %v782
      %876 = vmatprep.subr.mxu0 0.0
      %877 = vmatpush1.msra.mxu0 0.0
      %878 = vmatprep.subr.mxu0 0.0
      %879 = vmatpush1.msra.mxu0 0.0
      %880 = vmatprep.subr.mxu0 0.0
      %881 = vmatpush1.msra.mxu0 0.0
      %882 = vmatprep.subr.mxu0 0.0
      %883 = vmatpush1.msra.mxu0 0.0
      %884 = vmatprep.subr.mxu0 0.0
      %885 = vmatpush1.msra.mxu0 0.0
      %886 = vmatprep.subr.mxu0 0.0
      %887 = vmatpush1.msra.mxu0 0.0
      %888 = vmatprep.subr.mxu0 0.0
      %889 = vmatpush1.msra.mxu0 0.0
      %890 = vmatprep.subr.mxu0 0.0
      %891 = vmatpush1.msra.mxu0 0.0
      %892 = vmatprep.subr.mxu0 0.0
      %893 = vmatpush1.msra.mxu0 0.0
      %894 = vmatprep.subr.mxu0 0.0
      %895 = vmatpush1.msra.mxu0 0.0
      %896 = vmatprep.subr.mxu0 0.0
      %897 = vmatpush1.msra.mxu0 0.0
      %898 = vmatprep.subr.mxu0 0.0
      %899 = vmatpush1.msra.mxu0 0.0
      %900 = vmatprep.subr.mxu0 0.0
      %901 = vmatpush1.msra.mxu0 0.0
      %902 = vmatprep.subr.mxu0 0.0
      %903 = vmatpush1.msra.mxu0 0.0
      %904 = vmatprep.subr.mxu0 0.0
      %905 = vmatpush1.msra.mxu0 0.0
      %906 = vmatprep.subr.mxu0 0.0
      %907 = vmatpush1.msra.mxu0 0.0
      %908 = vmatprep.subr.mxu0 0.0
      %909 = vmatpush1.msra.mxu0 0.0
      %910 = vmatprep.subr.mxu0 0.0
      %911 = vmatpush1.msra.mxu0 0.0
      %912 = vmatprep.subr.mxu0 0.0
      %913 = vmatpush1.msra.mxu0 0.0
      %914 = vmatprep.subr.mxu0 0.0
      %915 = vmatpush1.msra.mxu0 0.0
      %916 = vmatprep.subr.mxu0 0.0
      %917 = vmatpush1.msra.mxu0 0.0
      %918 = vmatprep.subr.mxu0 0.0
      %919 = vmatpush1.msra.mxu0 0.0
      %920 = vmatprep.subr.mxu0 0.0
      %921 = vmatpush1.msra.mxu0 0.0
      %922 = vmatprep.subr.mxu0 0.0
      %923 = vmatpush1.msra.mxu0 0.0
      %924 = vmatprep.subr.mxu0 0.0
      %925 = vmatpush1.msra.mxu0 0.0
      %926 = vmatprep.subr.mxu0 0.0
      %927 = vmatpush1.msra.mxu0 0.0
      %928 = vmatprep.subr.mxu0 0.0
      %929 = vmatpush1.msra.mxu0 0.0
      %930 = vmatprep.subr.mxu0 0.0
      %931 = vmatpush1.msra.mxu0 0.0
      %932 = vmatprep.subr.mxu0 0.0
      %933 = vmatpush1.msra.mxu0 0.0
      %934 = vmatprep.subr.mxu0 0.0
      %935 = vmatpush1.msra.mxu0 0.0
      %936 = vmatprep.subr.mxu0 0.0
      %937 = vmatpush1.msra.mxu0 0.0
      %938 = vmatprep.mubr.f32.mxu0 0.0
      %939 = vmatmul.mubr.f32.gmra.mrb[0].mxu0 %v801
      %v940 = vpop.f32.mrb[0].mxu0
      %v941 = vadd.f32 0.0, %v940
      %v942 = vpop.f32.mrb[0].mxu0
      %v943 = vadd.f32 0.0, %v942
      %944 = vdwg.mxu0
      %945 = vmatprep.subr.mxu0 %v785
      %946 = vmatpush1.msra.mxu0 %v784
      %947 = vmatprep.subr.mxu0 0.0
      %948 = vmatpush1.msra.mxu0 0.0
      %949 = vmatprep.subr.mxu0 0.0
      %950 = vmatpush1.msra.mxu0 0.0
      %951 = vmatprep.subr.mxu0 0.0
      %952 = vmatpush1.msra.mxu0 0.0
      %953 = vmatprep.subr.mxu0 0.0
      %954 = vmatpush1.msra.mxu0 0.0
      %955 = vmatprep.subr.mxu0 0.0
      %956 = vmatpush1.msra.mxu0 0.0
      %957 = vmatprep.subr.mxu0 0.0
      %958 = vmatpush1.msra.mxu0 0.0
      %959 = vmatprep.subr.mxu0 0.0
      %960 = vmatpush1.msra.mxu0 0.0
      %961 = vmatprep.subr.mxu0 0.0
      %962 = vmatpush1.msra.mxu0 0.0
      %963 = vmatprep.subr.mxu0 0.0
      %964 = vmatpush1.msra.mxu0 0.0
      %965 = vmatprep.subr.mxu0 0.0
      %966 = vmatpush1.msra.mxu0 0.0
      %967 = vmatprep.subr.mxu0 0.0
      %968 = vmatpush1.msra.mxu0 0.0
      %969 = vmatprep.subr.mxu0 0.0
      %970 = vmatpush1.msra.mxu0 0.0
      %971 = vmatprep.subr.mxu0 0.0
      %972 = vmatpush1.msra.mxu0 0.0
      %973 = vmatprep.subr.mxu0 0.0
      %974 = vmatpush1.msra.mxu0 0.0
      %975 = vmatprep.subr.mxu0 0.0
      %976 = vmatpush1.msra.mxu0 0.0
      %977 = vmatprep.subr.mxu0 0.0
      %978 = vmatpush1.msra.mxu0 0.0
      %979 = vmatprep.subr.mxu0 0.0
      %980 = vmatpush1.msra.mxu0 0.0
      %981 = vmatprep.subr.mxu0 0.0
      %982 = vmatpush1.msra.mxu0 0.0
      %983 = vmatprep.subr.mxu0 0.0
      %984 = vmatpush1.msra.mxu0 0.0
      %985 = vmatprep.subr.mxu0 0.0
      %986 = vmatpush1.msra.mxu0 0.0
      %987 = vmatprep.subr.mxu0 0.0
      %988 = vmatpush1.msra.mxu0 0.0
      %989 = vmatprep.subr.mxu0 0.0
      %990 = vmatpush1.msra.mxu0 0.0
      %991 = vmatprep.subr.mxu0 0.0
      %992 = vmatpush1.msra.mxu0 0.0
      %993 = vmatprep.subr.mxu0 0.0
      %994 = vmatpush1.msra.mxu0 0.0
      %995 = vmatprep.subr.mxu0 0.0
      %996 = vmatpush1.msra.mxu0 0.0
      %997 = vmatprep.subr.mxu0 0.0
      %998 = vmatpush1.msra.mxu0 0.0
      %999 = vmatprep.subr.mxu0 0.0
      %1000 = vmatpush1.msra.mxu0 0.0
      %1001 = vmatprep.subr.mxu0 0.0
      %1002 = vmatpush1.msra.mxu0 0.0
      %1003 = vmatprep.subr.mxu0 0.0
      %1004 = vmatpush1.msra.mxu0 0.0
      %1005 = vmatprep.subr.mxu0 0.0
      %1006 = vmatpush1.msra.mxu0 0.0
      %1007 = vmatprep.subr.mxu0 0.0
      %1008 = vmatpush1.msra.mxu0 0.0
      %1009 = vmatprep.mubr.f32.mxu0 0.0
      %1010 = vmatmul.mubr.f32.gmra.mrb[0].mxu0 %v801
      %v1011 = vpop.f32.mrb[0].mxu0
      %v1012 = vadd.f32 0.0, %v1011
      %v1013 = vpop.f32.mrb[0].mxu0
      %v1014 = vadd.f32 0.0, %v1013
      %1015 = vdwg.mxu0
      %1016 = vmatprep.subr.mxu0 %v787
      %1017 = vmatpush1.msra.mxu0 %v786
      %1018 = vmatprep.subr.mxu0 0.0
      %1019 = vmatpush1.msra.mxu0 0.0
      %1020 = vmatprep.subr.mxu0 0.0
      %1021 = vmatpush1.msra.mxu0 0.0
      %1022 = vmatprep.subr.mxu0 0.0
      %1023 = vmatpush1.msra.mxu0 0.0
      %1024 = vmatprep.subr.mxu0 0.0
      %1025 = vmatpush1.msra.mxu0 0.0
      %1026 = vmatprep.subr.mxu0 0.0
      %1027 = vmatpush1.msra.mxu0 0.0
      %1028 = vmatprep.subr.mxu0 0.0
      %1029 = vmatpush1.msra.mxu0 0.0
      %1030 = vmatprep.subr.mxu0 0.0
      %1031 = vmatpush1.msra.mxu0 0.0
      %1032 = vmatprep.subr.mxu0 0.0
      %1033 = vmatpush1.msra.mxu0 0.0
      %1034 = vmatprep.subr.mxu0 0.0
      %1035 = vmatpush1.msra.mxu0 0.0
      %1036 = vmatprep.subr.mxu0 0.0
      %1037 = vmatpush1.msra.mxu0 0.0
      %1038 = vmatprep.subr.mxu0 0.0
      %1039 = vmatpush1.msra.mxu0 0.0
      %1040 = vmatprep.subr.mxu0 0.0
      %1041 = vmatpush1.msra.mxu0 0.0
      %1042 = vmatprep.subr.mxu0 0.0
      %1043 = vmatpush1.msra.mxu0 0.0
      %1044 = vmatprep.subr.mxu0 0.0
      %1045 = vmatpush1.msra.mxu0 0.0
      %1046 = vmatprep.subr.mxu0 0.0
      %1047 = vmatpush1.msra.mxu0 0.0
      %1048 = vmatprep.subr.mxu0 0.0
      %1049 = vmatpush1.msra.mxu0 0.0
      %1050 = vmatprep.subr.mxu0 0.0
      %1051 = vmatpush1.msra.mxu0 0.0
      %1052 = vmatprep.subr.mxu0 0.0
      %1053 = vmatpush1.msra.mxu0 0.0
      %1054 = vmatprep.subr.mxu0 0.0
      %1055 = vmatpush1.msra.mxu0 0.0
      %1056 = vmatprep.subr.mxu0 0.0
      %1057 = vmatpush1.msra.mxu0 0.0
      %1058 = vmatprep.subr.mxu0 0.0
      %1059 = vmatpush1.msra.mxu0 0.0
      %1060 = vmatprep.subr.mxu0 0.0
      %1061 = vmatpush1.msra.mxu0 0.0
      %1062 = vmatprep.subr.mxu0 0.0
      %1063 = vmatpush1.msra.mxu0 0.0
      %1064 = vmatprep.subr.mxu0 0.0
      %1065 = vmatpush1.msra.mxu0 0.0
      %1066 = vmatprep.subr.mxu0 0.0
      %1067 = vmatpush1.msra.mxu0 0.0
      %1068 = vmatprep.subr.mxu0 0.0
      %1069 = vmatpush1.msra.mxu0 0.0
      %1070 = vmatprep.subr.mxu0 0.0
      %1071 = vmatpush1.msra.mxu0 0.0
      %1072 = vmatprep.subr.mxu0 0.0
      %1073 = vmatpush1.msra.mxu0 0.0
      %1074 = vmatprep.subr.mxu0 0.0
      %1075 = vmatpush1.msra.mxu0 0.0
      %1076 = vmatprep.subr.mxu0 0.0
      %1077 = vmatpush1.msra.mxu0 0.0
      %1078 = vmatprep.subr.mxu0 0.0
      %1079 = vmatpush1.msra.mxu0 0.0
      %1080 = vmatprep.mubr.f32.mxu0 0.0
      %1081 = vmatmul.mubr.f32.gmra.mrb[0].mxu0 %v801
      %v1082 = vpop.f32.mrb[0].mxu0
      %v1083 = vadd.f32 0.0, %v1082
      %v1084 = vpop.f32.mrb[0].mxu0
      %v1085 = vadd.f32 0.0, %v1084
      %1086 = vdwg.mxu0
      %1087 = vmatprep.subr.mxu0 %v778
      %1088 = vmatpush1.msra.mxu0 %v788
      %1089 = vmatprep.subr.mxu0 0.0
      %1090 = vmatpush1.msra.mxu0 0.0
      %1091 = vmatprep.subr.mxu0 0.0
      %1092 = vmatpush1.msra.mxu0 0.0
      %1093 = vmatprep.subr.mxu0 0.0
      %1094 = vmatpush1.msra.mxu0 0.0
      %1095 = vmatprep.subr.mxu0 0.0
      %1096 = vmatpush1.msra.mxu0 0.0
      %1097 = vmatprep.subr.mxu0 0.0
      %1098 = vmatpush1.msra.mxu0 0.0
      %1099 = vmatprep.subr.mxu0 0.0
      %1100 = vmatpush1.msra.mxu0 0.0
      %1101 = vmatprep.subr.mxu0 0.0
      %1102 = vmatpush1.msra.mxu0 0.0
      %1103 = vmatprep.subr.mxu0 0.0
      %1104 = vmatpush1.msra.mxu0 0.0
      %1105 = vmatprep.subr.mxu0 0.0
      %1106 = vmatpush1.msra.mxu0 0.0
      %1107 = vmatprep.subr.mxu0 0.0
      %1108 = vmatpush1.msra.mxu0 0.0
      %1109 = vmatprep.subr.mxu0 0.0
      %1110 = vmatpush1.msra.mxu0 0.0
      %1111 = vmatprep.subr.mxu0 0.0
      %1112 = vmatpush1.msra.mxu0 0.0
      %1113 = vmatprep.subr.mxu0 0.0
      %1114 = vmatpush1.msra.mxu0 0.0
      %1115 = vmatprep.subr.mxu0 0.0
      %1116 = vmatpush1.msra.mxu0 0.0
      %1117 = vmatprep.subr.mxu0 0.0
      %1118 = vmatpush1.msra.mxu0 0.0
      %1119 = vmatprep.subr.mxu0 0.0
      %1120 = vmatpush1.msra.mxu0 0.0
      %1121 = vmatprep.subr.mxu0 0.0
      %1122 = vmatpush1.msra.mxu0 0.0
      %1123 = vmatprep.subr.mxu0 0.0
      %1124 = vmatpush1.msra.mxu0 0.0
      %1125 = vmatprep.subr.mxu0 0.0
      %1126 = vmatpush1.msra.mxu0 0.0
      %1127 = vmatprep.subr.mxu0 0.0
      %1128 = vmatpush1.msra.mxu0 0.0
      %1129 = vmatprep.subr.mxu0 0.0
      %1130 = vmatpush1.msra.mxu0 0.0
      %1131 = vmatprep.subr.mxu0 0.0
      %1132 = vmatpush1.msra.mxu0 0.0
      %1133 = vmatprep.subr.mxu0 0.0
      %1134 = vmatpush1.msra.mxu0 0.0
      %1135 = vmatprep.subr.mxu0 0.0
      %1136 = vmatpush1.msra.mxu0 0.0
      %1137 = vmatprep.subr.mxu0 0.0
      %1138 = vmatpush1.msra.mxu0 0.0
      %1139 = vmatprep.subr.mxu0 0.0
      %1140 = vmatpush1.msra.mxu0 0.0
      %1141 = vmatprep.subr.mxu0 0.0
      %1142 = vmatpush1.msra.mxu0 0.0
      %1143 = vmatprep.subr.mxu0 0.0
      %1144 = vmatpush1.msra.mxu0 0.0
      %1145 = vmatprep.subr.mxu0 0.0
      %1146 = vmatpush1.msra.mxu0 0.0
      %1147 = vmatprep.subr.mxu0 0.0
      %1148 = vmatpush1.msra.mxu0 0.0
      %1149 = vmatprep.subr.mxu0 0.0
      %1150 = vmatpush1.msra.mxu0 0.0
      %1151 = vmatprep.mubr.f32.mxu0 0.0
      %1152 = vmatmul.mubr.f32.gmra.mrb[0].mxu0 %v801
      %v1153 = vpop.f32.mrb[0].mxu0
      %v1154 = vadd.f32 0.0, %v1153
      %v1155 = vpop.f32.mrb[0].mxu0
      %v1156 = vadd.f32 0.0, %v1155
      %1157 = vdwg.mxu0
      %v1159 = vsel %vm799, %v736, 0
      %1161 = vmatprep.subr.mxu0 %v738
      %1162 = vmatpush1.msra.mxu0 %v737
      %1163 = vmatprep.subr.mxu0 0.0
      %1164 = vmatpush1.msra.mxu0 0.0
      %1165 = vmatprep.subr.mxu0 0.0
      %1166 = vmatpush1.msra.mxu0 0.0
      %1167 = vmatprep.subr.mxu0 0.0
      %1168 = vmatpush1.msra.mxu0 0.0
      %1169 = vmatprep.subr.mxu0 0.0
      %1170 = vmatpush1.msra.mxu0 0.0
      %1171 = vmatprep.subr.mxu0 0.0
      %1172 = vmatpush1.msra.mxu0 0.0
      %1173 = vmatprep.subr.mxu0 0.0
      %1174 = vmatpush1.msra.mxu0 0.0
      %1175 = vmatprep.subr.mxu0 0.0
      %1176 = vmatpush1.msra.mxu0 0.0
      %1177 = vmatprep.subr.mxu0 0.0
      %1178 = vmatpush1.msra.mxu0 0.0
      %1179 = vmatprep.subr.mxu0 0.0
      %1180 = vmatpush1.msra.mxu0 0.0
      %1181 = vmatprep.subr.mxu0 0.0
      %1182 = vmatpush1.msra.mxu0 0.0
      %1183 = vmatprep.subr.mxu0 0.0
      %1184 = vmatpush1.msra.mxu0 0.0
      %1185 = vmatprep.subr.mxu0 0.0
      %1186 = vmatpush1.msra.mxu0 0.0
      %1187 = vmatprep.subr.mxu0 0.0
      %1188 = vmatpush1.msra.mxu0 0.0
      %1189 = vmatprep.subr.mxu0 0.0
      %1190 = vmatpush1.msra.mxu0 0.0
      %1191 = vmatprep.subr.mxu0 0.0
      %1192 = vmatpush1.msra.mxu0 0.0
      %1193 = vmatprep.subr.mxu0 0.0
      %1194 = vmatpush1.msra.mxu0 0.0
      %1195 = vmatprep.subr.mxu0 0.0
      %1196 = vmatpush1.msra.mxu0 0.0
      %1197 = vmatprep.subr.mxu0 0.0
      %1198 = vmatpush1.msra.mxu0 0.0
      %1199 = vmatprep.subr.mxu0 0.0
      %1200 = vmatpush1.msra.mxu0 0.0
      %1201 = vmatprep.subr.mxu0 0.0
      %1202 = vmatpush1.msra.mxu0 0.0
      %1203 = vmatprep.subr.mxu0 0.0
      %1204 = vmatpush1.msra.mxu0 0.0
      %1205 = vmatprep.subr.mxu0 0.0
      %1206 = vmatpush1.msra.mxu0 0.0
      %1207 = vmatprep.subr.mxu0 0.0
      %1208 = vmatpush1.msra.mxu0 0.0
      %1209 = vmatprep.subr.mxu0 0.0
      %1210 = vmatpush1.msra.mxu0 0.0
      %1211 = vmatprep.subr.mxu0 0.0
      %1212 = vmatpush1.msra.mxu0 0.0
      %1213 = vmatprep.subr.mxu0 0.0
      %1214 = vmatpush1.msra.mxu0 0.0
      %1215 = vmatprep.subr.mxu0 0.0
      %1216 = vmatpush1.msra.mxu0 0.0
      %1217 = vmatprep.subr.mxu0 0.0
      %1218 = vmatpush1.msra.mxu0 0.0
      %1219 = vmatprep.subr.mxu0 0.0
      %1220 = vmatpush1.msra.mxu0 0.0
      %1221 = vmatprep.subr.mxu0 0.0
      %1222 = vmatpush1.msra.mxu0 0.0
      %1223 = vmatprep.subr.mxu0 0.0
      %1224 = vmatpush1.msra.mxu0 0.0
      %1225 = vmatprep.mubr.f32.mxu0 0.0
      %1226 = vmatmul.mubr.f32.gmra.mrb[0].mxu0 %v1159
      %v1227 = vpop.f32.mrb[0].mxu0
      %v1228 = vadd.f32 %v870, %v1227
      %v1229 = vpop.f32.mrb[0].mxu0
      %v1230 = vadd.f32 %v872, %v1229
      %1231 = vdwg.mxu0
      %1232 = vmatprep.subr.mxu0 %v740
      %1233 = vmatpush1.msra.mxu0 %v739
      %1234 = vmatprep.subr.mxu0 0.0
      %1235 = vmatpush1.msra.mxu0 0.0
      %1236 = vmatprep.subr.mxu0 0.0
      %1237 = vmatpush1.msra.mxu0 0.0
      %1238 = vmatprep.subr.mxu0 0.0
      %1239 = vmatpush1.msra.mxu0 0.0
      %1240 = vmatprep.subr.mxu0 0.0
      %1241 = vmatpush1.msra.mxu0 0.0
      %1242 = vmatprep.subr.mxu0 0.0
      %1243 = vmatpush1.msra.mxu0 0.0
      %1244 = vmatprep.subr.mxu0 0.0
      %1245 = vmatpush1.msra.mxu0 0.0
      %1246 = vmatprep.subr.mxu0 0.0
      %1247 = vmatpush1.msra.mxu0 0.0
      %1248 = vmatprep.subr.mxu0 0.0
      %1249 = vmatpush1.msra.mxu0 0.0
      %1250 = vmatprep.subr.mxu0 0.0
      %1251 = vmatpush1.msra.mxu0 0.0
      %1252 = vmatprep.subr.mxu0 0.0
      %1253 = vmatpush1.msra.mxu0 0.0
      %1254 = vmatprep.subr.mxu0 0.0
      %1255 = vmatpush1.msra.mxu0 0.0
      %1256 = vmatprep.subr.mxu0 0.0
      %1257 = vmatpush1.msra.mxu0 0.0
      %1258 = vmatprep.subr.mxu0 0.0
      %1259 = vmatpush1.msra.mxu0 0.0
      %1260 = vmatprep.subr.mxu0 0.0
      %1261 = vmatpush1.msra.mxu0 0.0
      %1262 = vmatprep.subr.mxu0 0.0
      %1263 = vmatpush1.msra.mxu0 0.0
      %1264 = vmatprep.subr.mxu0 0.0
      %1265 = vmatpush1.msra.mxu0 0.0
      %1266 = vmatprep.subr.mxu0 0.0
      %1267 = vmatpush1.msra.mxu0 0.0
      %1268 = vmatprep.subr.mxu0 0.0
      %1269 = vmatpush1.msra.mxu0 0.0
      %1270 = vmatprep.subr.mxu0 0.0
      %1271 = vmatpush1.msra.mxu0 0.0
      %1272 = vmatprep.subr.mxu0 0.0
      %1273 = vmatpush1.msra.mxu0 0.0
      %1274 = vmatprep.subr.mxu0 0.0
      %1275 = vmatpush1.msra.mxu0 0.0
      %1276 = vmatprep.subr.mxu0 0.0
      %1277 = vmatpush1.msra.mxu0 0.0
      %1278 = vmatprep.subr.mxu0 0.0
      %1279 = vmatpush1.msra.mxu0 0.0
      %1280 = vmatprep.subr.mxu0 0.0
      %1281 = vmatpush1.msra.mxu0 0.0
      %1282 = vmatprep.subr.mxu0 0.0
      %1283 = vmatpush1.msra.mxu0 0.0
      %1284 = vmatprep.subr.mxu0 0.0
      %1285 = vmatpush1.msra.mxu0 0.0
      %1286 = vmatprep.subr.mxu0 0.0
      %1287 = vmatpush1.msra.mxu0 0.0
      %1288 = vmatprep.subr.mxu0 0.0
      %1289 = vmatpush1.msra.mxu0 0.0
      %1290 = vmatprep.subr.mxu0 0.0
      %1291 = vmatpush1.msra.mxu0 0.0
      %1292 = vmatprep.subr.mxu0 0.0
      %1293 = vmatpush1.msra.mxu0 0.0
      %1294 = vmatprep.subr.mxu0 0.0
      %1295 = vmatpush1.msra.mxu0 0.0
      %1296 = vmatprep.mubr.f32.mxu0 0.0
      %1297 = vmatmul.mubr.f32.gmra.mrb[0].mxu0 %v1159
      %v1298 = vpop.f32.mrb[0].mxu0
      %v1299 = vadd.f32 %v941, %v1298
      %v1300 = vpop.f32.mrb[0].mxu0
      %v1301 = vadd.f32 %v943, %v1300
      %1302 = vdwg.mxu0
      %1303 = vmatprep.subr.mxu0 %v742
      %1304 = vmatpush1.msra.mxu0 %v741
      %1305 = vmatprep.subr.mxu0 0.0
      %1306 = vmatpush1.msra.mxu0 0.0
      %1307 = vmatprep.subr.mxu0 0.0
      %1308 = vmatpush1.msra.mxu0 0.0
      %1309 = vmatprep.subr.mxu0 0.0
      %1310 = vmatpush1.msra.mxu0 0.0
      %1311 = vmatprep.subr.mxu0 0.0
      %1312 = vmatpush1.msra.mxu0 0.0
      %1313 = vmatprep.subr.mxu0 0.0
      %1314 = vmatpush1.msra.mxu0 0.0
      %1315 = vmatprep.subr.mxu0 0.0
      %1316 = vmatpush1.msra.mxu0 0.0
      %1317 = vmatprep.subr.mxu0 0.0
      %1318 = vmatpush1.msra.mxu0 0.0
      %1319 = vmatprep.subr.mxu0 0.0
      %1320 = vmatpush1.msra.mxu0 0.0
      %1321 = vmatprep.subr.mxu0 0.0
      %1322 = vmatpush1.msra.mxu0 0.0
      %1323 = vmatprep.subr.mxu0 0.0
      %1324 = vmatpush1.msra.mxu0 0.0
      %1325 = vmatprep.subr.mxu0 0.0
      %1326 = vmatpush1.msra.mxu0 0.0
      %1327 = vmatprep.subr.mxu0 0.0
      %1328 = vmatpush1.msra.mxu0 0.0
      %1329 = vmatprep.subr.mxu0 0.0
      %1330 = vmatpush1.msra.mxu0 0.0
      %1331 = vmatprep.subr.mxu0 0.0
      %1332 = vmatpush1.msra.mxu0 0.0
      %1333 = vmatprep.subr.mxu0 0.0
      %1334 = vmatpush1.msra.mxu0 0.0
      %1335 = vmatprep.subr.mxu0 0.0
      %1336 = vmatpush1.msra.mxu0 0.0
      %1337 = vmatprep.subr.mxu0 0.0
      %1338 = vmatpush1.msra.mxu0 0.0
      %1339 = vmatprep.subr.mxu0 0.0
      %1340 = vmatpush1.msra.mxu0 0.0
      %1341 = vmatprep.subr.mxu0 0.0
      %1342 = vmatpush1.msra.mxu0 0.0
      %1343 = vmatprep.subr.mxu0 0.0
      %1344 = vmatpush1.msra.mxu0 0.0
      %1345 = vmatprep.subr.mxu0 0.0
      %1346 = vmatpush1.msra.mxu0 0.0
      %1347 = vmatprep.subr.mxu0 0.0
      %1348 = vmatpush1.msra.mxu0 0.0
      %1349 = vmatprep.subr.mxu0 0.0
      %1350 = vmatpush1.msra.mxu0 0.0
      %1351 = vmatprep.subr.mxu0 0.0
      %1352 = vmatpush1.msra.mxu0 0.0
      %1353 = vmatprep.subr.mxu0 0.0
      %1354 = vmatpush1.msra.mxu0 0.0
      %1355 = vmatprep.subr.mxu0 0.0
      %1356 = vmatpush1.msra.mxu0 0.0
      %1357 = vmatprep.subr.mxu0 0.0
      %1358 = vmatpush1.msra.mxu0 0.0
      %1359 = vmatprep.subr.mxu0 0.0
      %1360 = vmatpush1.msra.mxu0 0.0
      %1361 = vmatprep.subr.mxu0 0.0
      %1362 = vmatpush1.msra.mxu0 0.0
      %1363 = vmatprep.subr.mxu0 0.0
      %1364 = vmatpush1.msra.mxu0 0.0
      %1365 = vmatprep.subr.mxu0 0.0
      %1366 = vmatpush1.msra.mxu0 0.0
      %1367 = vmatprep.mubr.f32.mxu0 0.0
      %1368 = vmatmul.mubr.f32.gmra.mrb[0].mxu0 %v1159
      %v1369 = vpop.f32.mrb[0].mxu0
      %v1370 = vadd.f32 %v1012, %v1369
      %v1371 = vpop.f32.mrb[0].mxu0
      %v1372 = vadd.f32 %v1014, %v1371
      %1373 = vdwg.mxu0
      %1374 = vmatprep.subr.mxu0 %v744
      %1375 = vmatpush1.msra.mxu0 %v743
      %1376 = vmatprep.subr.mxu0 0.0
      %1377 = vmatpush1.msra.mxu0 0.0
      %1378 = vmatprep.subr.mxu0 0.0
      %1379 = vmatpush1.msra.mxu0 0.0
      %1380 = vmatprep.subr.mxu0 0.0
      %1381 = vmatpush1.msra.mxu0 0.0
      %1382 = vmatprep.subr.mxu0 0.0
      %1383 = vmatpush1.msra.mxu0 0.0
      %1384 = vmatprep.subr.mxu0 0.0
      %1385 = vmatpush1.msra.mxu0 0.0
      %1386 = vmatprep.subr.mxu0 0.0
      %1387 = vmatpush1.msra.mxu0 0.0
      %1388 = vmatprep.subr.mxu0 0.0
      %1389 = vmatpush1.msra.mxu0 0.0
      %1390 = vmatprep.subr.mxu0 0.0
      %1391 = vmatpush1.msra.mxu0 0.0
      %1392 = vmatprep.subr.mxu0 0.0
      %1393 = vmatpush1.msra.mxu0 0.0
      %1394 = vmatprep.subr.mxu0 0.0
      %1395 = vmatpush1.msra.mxu0 0.0
      %1396 = vmatprep.subr.mxu0 0.0
      %1397 = vmatpush1.msra.mxu0 0.0
      %1398 = vmatprep.subr.mxu0 0.0
      %1399 = vmatpush1.msra.mxu0 0.0
      %1400 = vmatprep.subr.mxu0 0.0
      %1401 = vmatpush1.msra.mxu0 0.0
      %1402 = vmatprep.subr.mxu0 0.0
      %1403 = vmatpush1.msra.mxu0 0.0
      %1404 = vmatprep.subr.mxu0 0.0
      %1405 = vmatpush1.msra.mxu0 0.0
      %1406 = vmatprep.subr.mxu0 0.0
      %1407 = vmatpush1.msra.mxu0 0.0
      %1408 = vmatprep.subr.mxu0 0.0
      %1409 = vmatpush1.msra.mxu0 0.0
      %1410 = vmatprep.subr.mxu0 0.0
      %1411 = vmatpush1.msra.mxu0 0.0
      %1412 = vmatprep.subr.mxu0 0.0
      %1413 = vmatpush1.msra.mxu0 0.0
      %1414 = vmatprep.subr.mxu0 0.0
      %1415 = vmatpush1.msra.mxu0 0.0
      %1416 = vmatprep.subr.mxu0 0.0
      %1417 = vmatpush1.msra.mxu0 0.0
      %1418 = vmatprep.subr.mxu0 0.0
      %1419 = vmatpush1.msra.mxu0 0.0
      %1420 = vmatprep.subr.mxu0 0.0
      %1421 = vmatpush1.msra.mxu0 0.0
      %1422 = vmatprep.subr.mxu0 0.0
      %1423 = vmatpush1.msra.mxu0 0.0
      %1424 = vmatprep.subr.mxu0 0.0
      %1425 = vmatpush1.msra.mxu0 0.0
      %1426 = vmatprep.subr.mxu0 0.0
      %1427 = vmatpush1.msra.mxu0 0.0
      %1428 = vmatprep.subr.mxu0 0.0
      %1429 = vmatpush1.msra.mxu0 0.0
      %1430 = vmatprep.subr.mxu0 0.0
      %1431 = vmatpush1.msra.mxu0 0.0
      %1432 = vmatprep.subr.mxu0 0.0
      %1433 = vmatpush1.msra.mxu0 0.0
      %1434 = vmatprep.subr.mxu0 0.0
      %1435 = vmatpush1.msra.mxu0 0.0
      %1436 = vmatprep.subr.mxu0 0.0
      %1437 = vmatpush1.msra.mxu0 0.0
      %1438 = vmatprep.mubr.f32.mxu0 0.0
      %1439 = vmatmul.mubr.f32.gmra.mrb[0].mxu0 %v1159
      %v1440 = vpop.f32.mrb[0].mxu0
      %v1441 = vadd.f32 %v1083, %v1440
      %v1442 = vpop.f32.mrb[0].mxu0
      %v1443 = vadd.f32 %v1085, %v1442
      %1444 = vdwg.mxu0
      %1445 = vmatprep.subr.mxu0 %v746
      %1446 = vmatpush1.msra.mxu0 %v745
      %1447 = vmatprep.subr.mxu0 0.0
      %1448 = vmatpush1.msra.mxu0 0.0
      %1449 = vmatprep.subr.mxu0 0.0
      %1450 = vmatpush1.msra.mxu0 0.0
      %1451 = vmatprep.subr.mxu0 0.0
      %1452 = vmatpush1.msra.mxu0 0.0
      %1453 = vmatprep.subr.mxu0 0.0
      %1454 = vmatpush1.msra.mxu0 0.0
      %1455 = vmatprep.subr.mxu0 0.0
      %1456 = vmatpush1.msra.mxu0 0.0
      %1457 = vmatprep.subr.mxu0 0.0
      %1458 = vmatpush1.msra.mxu0 0.0
      %1459 = vmatprep.subr.mxu0 0.0
      %1460 = vmatpush1.msra.mxu0 0.0
      %1461 = vmatprep.subr.mxu0 0.0
      %1462 = vmatpush1.msra.mxu0 0.0
      %1463 = vmatprep.subr.mxu0 0.0
      %1464 = vmatpush1.msra.mxu0 0.0
      %1465 = vmatprep.subr.mxu0 0.0
      %1466 = vmatpush1.msra.mxu0 0.0
      %1467 = vmatprep.subr.mxu0 0.0
      %1468 = vmatpush1.msra.mxu0 0.0
      %1469 = vmatprep.subr.mxu0 0.0
      %1470 = vmatpush1.msra.mxu0 0.0
      %1471 = vmatprep.subr.mxu0 0.0
      %1472 = vmatpush1.msra.mxu0 0.0
      %1473 = vmatprep.subr.mxu0 0.0
      %1474 = vmatpush1.msra.mxu0 0.0
      %1475 = vmatprep.subr.mxu0 0.0
      %1476 = vmatpush1.msra.mxu0 0.0
      %1477 = vmatprep.subr.mxu0 0.0
      %1478 = vmatpush1.msra.mxu0 0.0
      %1479 = vmatprep.subr.mxu0 0.0
      %1480 = vmatpush1.msra.mxu0 0.0
      %1481 = vmatprep.subr.mxu0 0.0
      %1482 = vmatpush1.msra.mxu0 0.0
      %1483 = vmatprep.subr.mxu0 0.0
      %1484 = vmatpush1.msra.mxu0 0.0
      %1485 = vmatprep.subr.mxu0 0.0
      %1486 = vmatpush1.msra.mxu0 0.0
      %1487 = vmatprep.subr.mxu0 0.0
      %1488 = vmatpush1.msra.mxu0 0.0
      %1489 = vmatprep.subr.mxu0 0.0
      %1490 = vmatpush1.msra.mxu0 0.0
      %1491 = vmatprep.subr.mxu0 0.0
      %1492 = vmatpush1.msra.mxu0 0.0
      %1493 = vmatprep.subr.mxu0 0.0
      %1494 = vmatpush1.msra.mxu0 0.0
      %1495 = vmatprep.subr.mxu0 0.0
      %1496 = vmatpush1.msra.mxu0 0.0
      %1497 = vmatprep.subr.mxu0 0.0
      %1498 = vmatpush1.msra.mxu0 0.0
      %1499 = vmatprep.subr.mxu0 0.0
      %1500 = vmatpush1.msra.mxu0 0.0
      %1501 = vmatprep.subr.mxu0 0.0
      %1502 = vmatpush1.msra.mxu0 0.0
      %1503 = vmatprep.subr.mxu0 0.0
      %1504 = vmatpush1.msra.mxu0 0.0
      %1505 = vmatprep.subr.mxu0 0.0
      %1506 = vmatpush1.msra.mxu0 0.0
      %1507 = vmatprep.subr.mxu0 0.0
      %1508 = vmatpush1.msra.mxu0 0.0
      %1509 = vmatprep.mubr.f32.mxu0 0.0
      %1510 = vmatmul.mubr.f32.gmra.mrb[0].mxu0 %v1159
      %v1511 = vpop.f32.mrb[0].mxu0
      %v1512 = vadd.f32 %v1154, %v1511
      %v1513 = vpop.f32.mrb[0].mxu0
      %v1514 = vadd.f32 %v1156, %v1513
      %1515 = vdwg.mxu0
      %s1516 = scalar_lea.vmem %s2, 8
      %v1517 = vld [vmem:[%s1516] sm:$0xf]
      %1518 = vrot.lane.b32.xlu0 %v737, 126
      %v1519 = vpop.permute.xlu0 %1518
      %1520 = vrot.lane.b32.xlu0 %v738, 126
      %v1521 = vpop.permute.xlu0 %1520
      %1522 = vrot.lane.b32.xlu0 %v739, 126
      %v1523 = vpop.permute.xlu0 %1522
      %1524 = vrot.lane.b32.xlu0 %v740, 126
      %v1525 = vpop.permute.xlu0 %1524
      %1526 = vrot.lane.b32.xlu0 %v741, 126
      %v1527 = vpop.permute.xlu0 %1526
      %1528 = vrot.lane.b32.xlu0 %v742, 126
      %v1529 = vpop.permute.xlu0 %1528
      %1530 = vrot.lane.b32.xlu0 %v743, 126
      %v1531 = vpop.permute.xlu0 %1530
      %1532 = vrot.lane.b32.xlu0 %v744, 126
      %v1533 = vpop.permute.xlu0 %1532
      %1534 = vrot.lane.b32.xlu0 %v745, 126
      %v1535 = vpop.permute.xlu0 %1534
      %1536 = vrot.lane.b32.xlu0 %v746, 126
      %v1537 = vpop.permute.xlu0 %1536
      %vm1538 = vcmask 1031168
      %v1539 = vsel %vm1538, %v1519, %v1521
      %v1540 = vsel %vm1538, %v1521, %v1523
      %v1541 = vsel %vm1538, %v1523, %v1525
      %v1542 = vsel %vm1538, %v1525, %v1527
      %v1543 = vsel %vm1538, %v1527, %v1529
      %v1544 = vsel %vm1538, %v1529, %v1531
      %v1545 = vsel %vm1538, %v1531, %v1533
      %v1546 = vsel %vm1538, %v1533, %v1535
      %v1547 = vsel %vm1538, %v1535, %v1537
      %v1559 = vsel %vm799, %v1517, 0
      %1561 = vmatprep.subr.mxu0 %v1540
      %1562 = vmatpush1.msra.mxu0 %v1539
      %1563 = vmatprep.subr.mxu0 0.0
      %1564 = vmatpush1.msra.mxu0 0.0
      %1565 = vmatprep.subr.mxu0 0.0
      %1566 = vmatpush1.msra.mxu0 0.0
      %1567 = vmatprep.subr.mxu0 0.0
      %1568 = vmatpush1.msra.mxu0 0.0
      %1569 = vmatprep.subr.mxu0 0.0
      %1570 = vmatpush1.msra.mxu0 0.0
      %1571 = vmatprep.subr.mxu0 0.0
      %1572 = vmatpush1.msra.mxu0 0.0
      %1573 = vmatprep.subr.mxu0 0.0
      %1574 = vmatpush1.msra.mxu0 0.0
      %1575 = vmatprep.subr.mxu0 0.0
      %1576 = vmatpush1.msra.mxu0 0.0
      %1577 = vmatprep.subr.mxu0 0.0
      %1578 = vmatpush1.msra.mxu0 0.0
      %1579 = vmatprep.subr.mxu0 0.0
      %1580 = vmatpush1.msra.mxu0 0.0
      %1581 = vmatprep.subr.mxu0 0.0
      %1582 = vmatpush1.msra.mxu0 0.0
      %1583 = vmatprep.subr.mxu0 0.0
      %1584 = vmatpush1.msra.mxu0 0.0
      %1585 = vmatprep.subr.mxu0 0.0
      %1586 = vmatpush1.msra.mxu0 0.0
      %1587 = vmatprep.subr.mxu0 0.0
      %1588 = vmatpush1.msra.mxu0 0.0
      %1589 = vmatprep.subr.mxu0 0.0
      %1590 = vmatpush1.msra.mxu0 0.0
      %1591 = vmatprep.subr.mxu0 0.0
      %1592 = vmatpush1.msra.mxu0 0.0
      %1593 = vmatprep.subr.mxu0 0.0
      %1594 = vmatpush1.msra.mxu0 0.0
      %1595 = vmatprep.subr.mxu0 0.0
      %1596 = vmatpush1.msra.mxu0 0.0
      %1597 = vmatprep.subr.mxu0 0.0
      %1598 = vmatpush1.msra.mxu0 0.0
      %1599 = vmatprep.subr.mxu0 0.0
      %1600 = vmatpush1.msra.mxu0 0.0
      %1601 = vmatprep.subr.mxu0 0.0
      %1602 = vmatpush1.msra.mxu0 0.0
      %1603 = vmatprep.subr.mxu0 0.0
      %1604 = vmatpush1.msra.mxu0 0.0
      %1605 = vmatprep.subr.mxu0 0.0
      %1606 = vmatpush1.msra.mxu0 0.0
      %1607 = vmatprep.subr.mxu0 0.0
      %1608 = vmatpush1.msra.mxu0 0.0
      %1609 = vmatprep.subr.mxu0 0.0
      %1610 = vmatpush1.msra.mxu0 0.0
      %1611 = vmatprep.subr.mxu0 0.0
      %1612 = vmatpush1.msra.mxu0 0.0
      %1613 = vmatprep.subr.mxu0 0.0
      %1614 = vmatpush1.msra.mxu0 0.0
      %1615 = vmatprep.subr.mxu0 0.0
      %1616 = vmatpush1.msra.mxu0 0.0
      %1617 = vmatprep.subr.mxu0 0.0
      %1618 = vmatpush1.msra.mxu0 0.0
      %1619 = vmatprep.subr.mxu0 0.0
      %1620 = vmatpush1.msra.mxu0 0.0
      %1621 = vmatprep.subr.mxu0 0.0
      %1622 = vmatpush1.msra.mxu0 0.0
      %1623 = vmatprep.subr.mxu0 0.0
      %1624 = vmatpush1.msra.mxu0 0.0
      %1625 = vmatprep.mubr.f32.mxu0 0.0
      %1626 = vmatmul.mubr.f32.gmra.mrb[0].mxu0 %v1559
      %v1627 = vpop.f32.mrb[0].mxu0
      %v1628 = vadd.f32 0.0, %v1627
      %v1629 = vpop.f32.mrb[0].mxu0
      %v1630 = vadd.f32 0.0, %v1629
      %1631 = vdwg.mxu0
      %1632 = vmatprep.subr.mxu0 %v1542
      %1633 = vmatpush1.msra.mxu0 %v1541
      %1634 = vmatprep.subr.mxu0 0.0
      %1635 = vmatpush1.msra.mxu0 0.0
      %1636 = vmatprep.subr.mxu0 0.0
      %1637 = vmatpush1.msra.mxu0 0.0
      %1638 = vmatprep.subr.mxu0 0.0
      %1639 = vmatpush1.msra.mxu0 0.0
      %1640 = vmatprep.subr.mxu0 0.0
      %1641 = vmatpush1.msra.mxu0 0.0
      %1642 = vmatprep.subr.mxu0 0.0
      %1643 = vmatpush1.msra.mxu0 0.0
      %1644 = vmatprep.subr.mxu0 0.0
      %1645 = vmatpush1.msra.mxu0 0.0
      %1646 = vmatprep.subr.mxu0 0.0
      %1647 = vmatpush1.msra.mxu0 0.0
      %1648 = vmatprep.subr.mxu0 0.0
      %1649 = vmatpush1.msra.mxu0 0.0
      %1650 = vmatprep.subr.mxu0 0.0
      %1651 = vmatpush1.msra.mxu0 0.0
      %1652 = vmatprep.subr.mxu0 0.0
      %1653 = vmatpush1.msra.mxu0 0.0
      %1654 = vmatprep.subr.mxu0 0.0
      %1655 = vmatpush1.msra.mxu0 0.0
      %1656 = vmatprep.subr.mxu0 0.0
      %1657 = vmatpush1.msra.mxu0 0.0
      %1658 = vmatprep.subr.mxu0 0.0
      %1659 = vmatpush1.msra.mxu0 0.0
      %1660 = vmatprep.subr.mxu0 0.0
      %1661 = vmatpush1.msra.mxu0 0.0
      %1662 = vmatprep.subr.mxu0 0.0
      %1663 = vmatpush1.msra.mxu0 0.0
      %1664 = vmatprep.subr.mxu0 0.0
      %1665 = vmatpush1.msra.mxu0 0.0
      %1666 = vmatprep.subr.mxu0 0.0
      %1667 = vmatpush1.msra.mxu0 0.0
      %1668 = vmatprep.subr.mxu0 0.0
      %1669 = vmatpush1.msra.mxu0 0.0
      %1670 = vmatprep.subr.mxu0 0.0
      %1671 = vmatpush1.msra.mxu0 0.0
      %1672 = vmatprep.subr.mxu0 0.0
      %1673 = vmatpush1.msra.mxu0 0.0
      %1674 = vmatprep.subr.mxu0 0.0
      %1675 = vmatpush1.msra.mxu0 0.0
      %1676 = vmatprep.subr.mxu0 0.0
      %1677 = vmatpush1.msra.mxu0 0.0
      %1678 = vmatprep.subr.mxu0 0.0
      %1679 = vmatpush1.msra.mxu0 0.0
      %1680 = vmatprep.subr.mxu0 0.0
      %1681 = vmatpush1.msra.mxu0 0.0
      %1682 = vmatprep.subr.mxu0 0.0
      %1683 = vmatpush1.msra.mxu0 0.0
      %1684 = vmatprep.subr.mxu0 0.0
      %1685 = vmatpush1.msra.mxu0 0.0
      %1686 = vmatprep.subr.mxu0 0.0
      %1687 = vmatpush1.msra.mxu0 0.0
      %1688 = vmatprep.subr.mxu0 0.0
      %1689 = vmatpush1.msra.mxu0 0.0
      %1690 = vmatprep.subr.mxu0 0.0
      %1691 = vmatpush1.msra.mxu0 0.0
      %1692 = vmatprep.subr.mxu0 0.0
      %1693 = vmatpush1.msra.mxu0 0.0
      %1694 = vmatprep.subr.mxu0 0.0
      %1695 = vmatpush1.msra.mxu0 0.0
      %1696 = vmatprep.mubr.f32.mxu0 0.0
      %1697 = vmatmul.mubr.f32.gmra.mrb[0].mxu0 %v1559
      %v1698 = vpop.f32.mrb[0].mxu0
      %v1699 = vadd.f32 0.0, %v1698
      %v1700 = vpop.f32.mrb[0].mxu0
      %v1701 = vadd.f32 0.0, %v1700
      %1702 = vdwg.mxu0
      %1703 = vmatprep.subr.mxu0 %v1544
      %1704 = vmatpush1.msra.mxu0 %v1543
      %1705 = vmatprep.subr.mxu0 0.0
      %1706 = vmatpush1.msra.mxu0 0.0
      %1707 = vmatprep.subr.mxu0 0.0
      %1708 = vmatpush1.msra.mxu0 0.0
      %1709 = vmatprep.subr.mxu0 0.0
      %1710 = vmatpush1.msra.mxu0 0.0
      %1711 = vmatprep.subr.mxu0 0.0
      %1712 = vmatpush1.msra.mxu0 0.0
      %1713 = vmatprep.subr.mxu0 0.0
      %1714 = vmatpush1.msra.mxu0 0.0
      %1715 = vmatprep.subr.mxu0 0.0
      %1716 = vmatpush1.msra.mxu0 0.0
      %1717 = vmatprep.subr.mxu0 0.0
      %1718 = vmatpush1.msra.mxu0 0.0
      %1719 = vmatprep.subr.mxu0 0.0
      %1720 = vmatpush1.msra.mxu0 0.0
      %1721 = vmatprep.subr.mxu0 0.0
      %1722 = vmatpush1.msra.mxu0 0.0
      %1723 = vmatprep.subr.mxu0 0.0
      %1724 = vmatpush1.msra.mxu0 0.0
      %1725 = vmatprep.subr.mxu0 0.0
      %1726 = vmatpush1.msra.mxu0 0.0
      %1727 = vmatprep.subr.mxu0 0.0
      %1728 = vmatpush1.msra.mxu0 0.0
      %1729 = vmatprep.subr.mxu0 0.0
      %1730 = vmatpush1.msra.mxu0 0.0
      %1731 = vmatprep.subr.mxu0 0.0
      %1732 = vmatpush1.msra.mxu0 0.0
      %1733 = vmatprep.subr.mxu0 0.0
      %1734 = vmatpush1.msra.mxu0 0.0
      %1735 = vmatprep.subr.mxu0 0.0
      %1736 = vmatpush1.msra.mxu0 0.0
      %1737 = vmatprep.subr.mxu0 0.0
      %1738 = vmatpush1.msra.mxu0 0.0
      %1739 = vmatprep.subr.mxu0 0.0
      %1740 = vmatpush1.msra.mxu0 0.0
      %1741 = vmatprep.subr.mxu0 0.0
      %1742 = vmatpush1.msra.mxu0 0.0
      %1743 = vmatprep.subr.mxu0 0.0
      %1744 = vmatpush1.msra.mxu0 0.0
      %1745 = vmatprep.subr.mxu0 0.0
      %1746 = vmatpush1.msra.mxu0 0.0
      %1747 = vmatprep.subr.mxu0 0.0
      %1748 = vmatpush1.msra.mxu0 0.0
      %1749 = vmatprep.subr.mxu0 0.0
      %1750 = vmatpush1.msra.mxu0 0.0
      %1751 = vmatprep.subr.mxu0 0.0
      %1752 = vmatpush1.msra.mxu0 0.0
      %1753 = vmatprep.subr.mxu0 0.0
      %1754 = vmatpush1.msra.mxu0 0.0
      %1755 = vmatprep.subr.mxu0 0.0
      %1756 = vmatpush1.msra.mxu0 0.0
      %1757 = vmatprep.subr.mxu0 0.0
      %1758 = vmatpush1.msra.mxu0 0.0
      %1759 = vmatprep.subr.mxu0 0.0
      %1760 = vmatpush1.msra.mxu0 0.0
      %1761 = vmatprep.subr.mxu0 0.0
      %1762 = vmatpush1.msra.mxu0 0.0
      %1763 = vmatprep.subr.mxu0 0.0
      %1764 = vmatpush1.msra.mxu0 0.0
      %1765 = vmatprep.subr.mxu0 0.0
      %1766 = vmatpush1.msra.mxu0 0.0
      %1767 = vmatprep.mubr.f32.mxu0 0.0
      %1768 = vmatmul.mubr.f32.gmra.mrb[0].mxu0 %v1559
      %v1769 = vpop.f32.mrb[0].mxu0
      %v1770 = vadd.f32 0.0, %v1769
      %v1771 = vpop.f32.mrb[0].mxu0
      %v1772 = vadd.f32 0.0, %v1771
      %1773 = vdwg.mxu0
      %1774 = vmatprep.subr.mxu0 %v1546
      %1775 = vmatpush1.msra.mxu0 %v1545
      %1776 = vmatprep.subr.mxu0 0.0
      %1777 = vmatpush1.msra.mxu0 0.0
      %1778 = vmatprep.subr.mxu0 0.0
      %1779 = vmatpush1.msra.mxu0 0.0
      %1780 = vmatprep.subr.mxu0 0.0
      %1781 = vmatpush1.msra.mxu0 0.0
      %1782 = vmatprep.subr.mxu0 0.0
      %1783 = vmatpush1.msra.mxu0 0.0
      %1784 = vmatprep.subr.mxu0 0.0
      %1785 = vmatpush1.msra.mxu0 0.0
      %1786 = vmatprep.subr.mxu0 0.0
      %1787 = vmatpush1.msra.mxu0 0.0
      %1788 = vmatprep.subr.mxu0 0.0
      %1789 = vmatpush1.msra.mxu0 0.0
      %1790 = vmatprep.subr.mxu0 0.0
      %1791 = vmatpush1.msra.mxu0 0.0
      %1792 = vmatprep.subr.mxu0 0.0
      %1793 = vmatpush1.msra.mxu0 0.0
      %1794 = vmatprep.subr.mxu0 0.0
      %1795 = vmatpush1.msra.mxu0 0.0
      %1796 = vmatprep.subr.mxu0 0.0
      %1797 = vmatpush1.msra.mxu0 0.0
      %1798 = vmatprep.subr.mxu0 0.0
      %1799 = vmatpush1.msra.mxu0 0.0
      %1800 = vmatprep.subr.mxu0 0.0
      %1801 = vmatpush1.msra.mxu0 0.0
      %1802 = vmatprep.subr.mxu0 0.0
      %1803 = vmatpush1.msra.mxu0 0.0
      %1804 = vmatprep.subr.mxu0 0.0
      %1805 = vmatpush1.msra.mxu0 0.0
      %1806 = vmatprep.subr.mxu0 0.0
      %1807 = vmatpush1.msra.mxu0 0.0
      %1808 = vmatprep.subr.mxu0 0.0
      %1809 = vmatpush1.msra.mxu0 0.0
      %1810 = vmatprep.subr.mxu0 0.0
      %1811 = vmatpush1.msra.mxu0 0.0
      %1812 = vmatprep.subr.mxu0 0.0
      %1813 = vmatpush1.msra.mxu0 0.0
      %1814 = vmatprep.subr.mxu0 0.0
      %1815 = vmatpush1.msra.mxu0 0.0
      %1816 = vmatprep.subr.mxu0 0.0
      %1817 = vmatpush1.msra.mxu0 0.0
      %1818 = vmatprep.subr.mxu0 0.0
      %1819 = vmatpush1.msra.mxu0 0.0
      %1820 = vmatprep.subr.mxu0 0.0
      %1821 = vmatpush1.msra.mxu0 0.0
      %1822 = vmatprep.subr.mxu0 0.0
      %1823 = vmatpush1.msra.mxu0 0.0
      %1824 = vmatprep.subr.mxu0 0.0
      %1825 = vmatpush1.msra.mxu0 0.0
      %1826 = vmatprep.subr.mxu0 0.0
      %1827 = vmatpush1.msra.mxu0 0.0
      %1828 = vmatprep.subr.mxu0 0.0
      %1829 = vmatpush1.msra.mxu0 0.0
      %1830 = vmatprep.subr.mxu0 0.0
      %1831 = vmatpush1.msra.mxu0 0.0
      %1832 = vmatprep.subr.mxu0 0.0
      %1833 = vmatpush1.msra.mxu0 0.0
      %1834 = vmatprep.subr.mxu0 0.0
      %1835 = vmatpush1.msra.mxu0 0.0
      %1836 = vmatprep.subr.mxu0 0.0
      %1837 = vmatpush1.msra.mxu0 0.0
      %1838 = vmatprep.mubr.f32.mxu0 0.0
      %1839 = vmatmul.mubr.f32.gmra.mrb[0].mxu0 %v1559
      %v1840 = vpop.f32.mrb[0].mxu0
      %v1841 = vadd.f32 0.0, %v1840
      %v1842 = vpop.f32.mrb[0].mxu0
      %v1843 = vadd.f32 0.0, %v1842
      %1844 = vdwg.mxu0
      %1845 = vmatprep.subr.mxu0 %v1537
      %1846 = vmatpush1.msra.mxu0 %v1547
      %1847 = vmatprep.subr.mxu0 0.0
      %1848 = vmatpush1.msra.mxu0 0.0
      %1849 = vmatprep.subr.mxu0 0.0
      %1850 = vmatpush1.msra.mxu0 0.0
      %1851 = vmatprep.subr.mxu0 0.0
      %1852 = vmatpush1.msra.mxu0 0.0
      %1853 = vmatprep.subr.mxu0 0.0
      %1854 = vmatpush1.msra.mxu0 0.0
      %1855 = vmatprep.subr.mxu0 0.0
      %1856 = vmatpush1.msra.mxu0 0.0
      %1857 = vmatprep.subr.mxu0 0.0
      %1858 = vmatpush1.msra.mxu0 0.0
      %1859 = vmatprep.subr.mxu0 0.0
      %1860 = vmatpush1.msra.mxu0 0.0
      %1861 = vmatprep.subr.mxu0 0.0
      %1862 = vmatpush1.msra.mxu0 0.0
      %1863 = vmatprep.subr.mxu0 0.0
      %1864 = vmatpush1.msra.mxu0 0.0
      %1865 = vmatprep.subr.mxu0 0.0
      %1866 = vmatpush1.msra.mxu0 0.0
      %1867 = vmatprep.subr.mxu0 0.0
      %1868 = vmatpush1.msra.mxu0 0.0
      %1869 = vmatprep.subr.mxu0 0.0
      %1870 = vmatpush1.msra.mxu0 0.0
      %1871 = vmatprep.subr.mxu0 0.0
      %1872 = vmatpush1.msra.mxu0 0.0
      %1873 = vmatprep.subr.mxu0 0.0
      %1874 = vmatpush1.msra.mxu0 0.0
      %1875 = vmatprep.subr.mxu0 0.0
      %1876 = vmatpush1.msra.mxu0 0.0
      %1877 = vmatprep.subr.mxu0 0.0
      %1878 = vmatpush1.msra.mxu0 0.0
      %1879 = vmatprep.subr.mxu0 0.0
      %1880 = vmatpush1.msra.mxu0 0.0
      %1881 = vmatprep.subr.mxu0 0.0
      %1882 = vmatpush1.msra.mxu0 0.0
      %1883 = vmatprep.subr.mxu0 0.0
      %1884 = vmatpush1.msra.mxu0 0.0
      %1885 = vmatprep.subr.mxu0 0.0
      %1886 = vmatpush1.msra.mxu0 0.0
      %1887 = vmatprep.subr.mxu0 0.0
      %1888 = vmatpush1.msra.mxu0 0.0
      %1889 = vmatprep.subr.mxu0 0.0
      %1890 = vmatpush1.msra.mxu0 0.0
      %1891 = vmatprep.subr.mxu0 0.0
      %1892 = vmatpush1.msra.mxu0 0.0
      %1893 = vmatprep.subr.mxu0 0.0
      %1894 = vmatpush1.msra.mxu0 0.0
      %1895 = vmatprep.subr.mxu0 0.0
      %1896 = vmatpush1.msra.mxu0 0.0
      %1897 = vmatprep.subr.mxu0 0.0
      %1898 = vmatpush1.msra.mxu0 0.0
      %1899 = vmatprep.subr.mxu0 0.0
      %1900 = vmatpush1.msra.mxu0 0.0
      %1901 = vmatprep.subr.mxu0 0.0
      %1902 = vmatpush1.msra.mxu0 0.0
      %1903 = vmatprep.subr.mxu0 0.0
      %1904 = vmatpush1.msra.mxu0 0.0
      %1905 = vmatprep.subr.mxu0 0.0
      %1906 = vmatpush1.msra.mxu0 0.0
      %1907 = vmatprep.subr.mxu0 0.0
      %1908 = vmatpush1.msra.mxu0 0.0
      %1909 = vmatprep.mubr.f32.mxu0 0.0
      %1910 = vmatmul.mubr.f32.gmra.mrb[0].mxu0 %v1559
      %v1911 = vpop.f32.mrb[0].mxu0
      %v1912 = vadd.f32 0.0, %v1911
      %v1913 = vpop.f32.mrb[0].mxu0
      %v1914 = vadd.f32 0.0, %v1913
      %1915 = vdwg.mxu0
      %v1916 = vadd.f32 %v1228, %v1628
      %v1917 = vadd.f32 %v1230, %v1630
      %v1918 = vadd.f32 %v1299, %v1699
      %v1919 = vadd.f32 %v1301, %v1701
      %v1920 = vadd.f32 %v1370, %v1770
      %v1921 = vadd.f32 %v1372, %v1772
      %v1922 = vadd.f32 %v1441, %v1841
      %v1923 = vadd.f32 %v1443, %v1843
      %v1924 = vadd.f32 %v1512, %v1912
      %v1925 = vadd.f32 %v1514, %v1914
      %s1926 = scalar_lea.vmem %s2, 12
      %v1927 = vld [vmem:[%s1926] sm:$0xf]
      %1928 = vrot.lane.b32.xlu0 %v737, 94
      %v1929 = vpop.permute.xlu0 %1928
      %1930 = vrot.lane.b32.xlu0 %v738, 94
      %v1931 = vpop.permute.xlu0 %1930
      %1932 = vrot.lane.b32.xlu0 %v739, 94
      %v1933 = vpop.permute.xlu0 %1932
      %1934 = vrot.lane.b32.xlu0 %v740, 94
      %v1935 = vpop.permute.xlu0 %1934
      %1936 = vrot.lane.b32.xlu0 %v741, 94
      %v1937 = vpop.permute.xlu0 %1936
      %1938 = vrot.lane.b32.xlu0 %v742, 94
      %v1939 = vpop.permute.xlu0 %1938
      %1940 = vrot.lane.b32.xlu0 %v743, 94
      %v1941 = vpop.permute.xlu0 %1940
      %1942 = vrot.lane.b32.xlu0 %v744, 94
      %v1943 = vpop.permute.xlu0 %1942
      %1944 = vrot.lane.b32.xlu0 %v745, 94
      %v1945 = vpop.permute.xlu0 %1944
      %1946 = vrot.lane.b32.xlu0 %v746, 94
      %v1947 = vpop.permute.xlu0 %1946
      %vm1948 = vcmask 769024
      %v1949 = vsel %vm1948, %v1929, %v1931
      %v1950 = vsel %vm1948, %v1931, %v1933
      %v1951 = vsel %vm1948, %v1933, %v1935
      %v1952 = vsel %vm1948, %v1935, %v1937
      %v1953 = vsel %vm1948, %v1937, %v1939
      %v1954 = vsel %vm1948, %v1939, %v1941
      %v1955 = vsel %vm1948, %v1941, %v1943
      %v1956 = vsel %vm1948, %v1943, %v1945
      %v1957 = vsel %vm1948, %v1945, %v1947
      %v1969 = vsel %vm799, %v1927, 0
      %1971 = vmatprep.subr.mxu0 %v1950
      %1972 = vmatpush1.msra.mxu0 %v1949
      %1973 = vmatprep.subr.mxu0 0.0
      %1974 = vmatpush1.msra.mxu0 0.0
      %1975 = vmatprep.subr.mxu0 0.0
      %1976 = vmatpush1.msra.mxu0 0.0
      %1977 = vmatprep.subr.mxu0 0.0
      %1978 = vmatpush1.msra.mxu0 0.0
      %1979 = vmatprep.subr.mxu0 0.0
      %1980 = vmatpush1.msra.mxu0 0.0
      %1981 = vmatprep.subr.mxu0 0.0
      %1982 = vmatpush1.msra.mxu0 0.0
      %1983 = vmatprep.subr.mxu0 0.0
      %1984 = vmatpush1.msra.mxu0 0.0
      %1985 = vmatprep.subr.mxu0 0.0
      %1986 = vmatpush1.msra.mxu0 0.0
      %1987 = vmatprep.subr.mxu0 0.0
      %1988 = vmatpush1.msra.mxu0 0.0
      %1989 = vmatprep.subr.mxu0 0.0
      %1990 = vmatpush1.msra.mxu0 0.0
      %1991 = vmatprep.subr.mxu0 0.0
      %1992 = vmatpush1.msra.mxu0 0.0
      %1993 = vmatprep.subr.mxu0 0.0
      %1994 = vmatpush1.msra.mxu0 0.0
      %1995 = vmatprep.subr.mxu0 0.0
      %1996 = vmatpush1.msra.mxu0 0.0
      %1997 = vmatprep.subr.mxu0 0.0
      %1998 = vmatpush1.msra.mxu0 0.0
      %1999 = vmatprep.subr.mxu0 0.0
      %2000 = vmatpush1.msra.mxu0 0.0
      %2001 = vmatprep.subr.mxu0 0.0
      %2002 = vmatpush1.msra.mxu0 0.0
      %2003 = vmatprep.subr.mxu0 0.0
      %2004 = vmatpush1.msra.mxu0 0.0
      %2005 = vmatprep.subr.mxu0 0.0
      %2006 = vmatpush1.msra.mxu0 0.0
      %2007 = vmatprep.subr.mxu0 0.0
      %2008 = vmatpush1.msra.mxu0 0.0
      %2009 = vmatprep.subr.mxu0 0.0
      %2010 = vmatpush1.msra.mxu0 0.0
      %2011 = vmatprep.subr.mxu0 0.0
      %2012 = vmatpush1.msra.mxu0 0.0
      %2013 = vmatprep.subr.mxu0 0.0
      %2014 = vmatpush1.msra.mxu0 0.0
      %2015 = vmatprep.subr.mxu0 0.0
      %2016 = vmatpush1.msra.mxu0 0.0
      %2017 = vmatprep.subr.mxu0 0.0
      %2018 = vmatpush1.msra.mxu0 0.0
      %2019 = vmatprep.subr.mxu0 0.0
      %2020 = vmatpush1.msra.mxu0 0.0
      %2021 = vmatprep.subr.mxu0 0.0
      %2022 = vmatpush1.msra.mxu0 0.0
      %2023 = vmatprep.subr.mxu0 0.0
      %2024 = vmatpush1.msra.mxu0 0.0
      %2025 = vmatprep.subr.mxu0 0.0
      %2026 = vmatpush1.msra.mxu0 0.0
      %2027 = vmatprep.subr.mxu0 0.0
      %2028 = vmatpush1.msra.mxu0 0.0
      %2029 = vmatprep.subr.mxu0 0.0
      %2030 = vmatpush1.msra.mxu0 0.0
      %2031 = vmatprep.subr.mxu0 0.0
      %2032 = vmatpush1.msra.mxu0 0.0
      %2033 = vmatprep.subr.mxu0 0.0
      %2034 = vmatpush1.msra.mxu0 0.0
      %2035 = vmatprep.mubr.f32.mxu0 0.0
      %2036 = vmatmul.mubr.f32.gmra.mrb[0].mxu0 %v1969
      %v2037 = vpop.f32.mrb[0].mxu0
      %v2038 = vadd.f32 0.0, %v2037
      %v2039 = vpop.f32.mrb[0].mxu0
      %v2040 = vadd.f32 0.0, %v2039
      %2041 = vdwg.mxu0
      %2042 = vmatprep.subr.mxu0 %v1952
      %2043 = vmatpush1.msra.mxu0 %v1951
      %2044 = vmatprep.subr.mxu0 0.0
      %2045 = vmatpush1.msra.mxu0 0.0
      %2046 = vmatprep.subr.mxu0 0.0
      %2047 = vmatpush1.msra.mxu0 0.0
      %2048 = vmatprep.subr.mxu0 0.0
      %2049 = vmatpush1.msra.mxu0 0.0
      %2050 = vmatprep.subr.mxu0 0.0
      %2051 = vmatpush1.msra.mxu0 0.0
      %2052 = vmatprep.subr.mxu0 0.0
      %2053 = vmatpush1.msra.mxu0 0.0
      %2054 = vmatprep.subr.mxu0 0.0
      %2055 = vmatpush1.msra.mxu0 0.0
      %2056 = vmatprep.subr.mxu0 0.0
      %2057 = vmatpush1.msra.mxu0 0.0
      %2058 = vmatprep.subr.mxu0 0.0
      %2059 = vmatpush1.msra.mxu0 0.0
      %2060 = vmatprep.subr.mxu0 0.0
      %2061 = vmatpush1.msra.mxu0 0.0
      %2062 = vmatprep.subr.mxu0 0.0
      %2063 = vmatpush1.msra.mxu0 0.0
      %2064 = vmatprep.subr.mxu0 0.0
      %2065 = vmatpush1.msra.mxu0 0.0
      %2066 = vmatprep.subr.mxu0 0.0
      %2067 = vmatpush1.msra.mxu0 0.0
      %2068 = vmatprep.subr.mxu0 0.0
      %2069 = vmatpush1.msra.mxu0 0.0
      %2070 = vmatprep.subr.mxu0 0.0
      %2071 = vmatpush1.msra.mxu0 0.0
      %2072 = vmatprep.subr.mxu0 0.0
      %2073 = vmatpush1.msra.mxu0 0.0
      %2074 = vmatprep.subr.mxu0 0.0
      %2075 = vmatpush1.msra.mxu0 0.0
      %2076 = vmatprep.subr.mxu0 0.0
      %2077 = vmatpush1.msra.mxu0 0.0
      %2078 = vmatprep.subr.mxu0 0.0
      %2079 = vmatpush1.msra.mxu0 0.0
      %2080 = vmatprep.subr.mxu0 0.0
      %2081 = vmatpush1.msra.mxu0 0.0
      %2082 = vmatprep.subr.mxu0 0.0
      %2083 = vmatpush1.msra.mxu0 0.0
      %2084 = vmatprep.subr.mxu0 0.0
      %2085 = vmatpush1.msra.mxu0 0.0
      %2086 = vmatprep.subr.mxu0 0.0
      %2087 = vmatpush1.msra.mxu0 0.0
      %2088 = vmatprep.subr.mxu0 0.0
      %2089 = vmatpush1.msra.mxu0 0.0
      %2090 = vmatprep.subr.mxu0 0.0
      %2091 = vmatpush1.msra.mxu0 0.0
      %2092 = vmatprep.subr.mxu0 0.0
      %2093 = vmatpush1.msra.mxu0 0.0
      %2094 = vmatprep.subr.mxu0 0.0
      %2095 = vmatpush1.msra.mxu0 0.0
      %2096 = vmatprep.subr.mxu0 0.0
      %2097 = vmatpush1.msra.mxu0 0.0
      %2098 = vmatprep.subr.mxu0 0.0
      %2099 = vmatpush1.msra.mxu0 0.0
      %2100 = vmatprep.subr.mxu0 0.0
      %2101 = vmatpush1.msra.mxu0 0.0
      %2102 = vmatprep.subr.mxu0 0.0
      %2103 = vmatpush1.msra.mxu0 0.0
      %2104 = vmatprep.subr.mxu0 0.0
      %2105 = vmatpush1.msra.mxu0 0.0
      %2106 = vmatprep.mubr.f32.mxu0 0.0
      %2107 = vmatmul.mubr.f32.gmra.mrb[0].mxu0 %v1969
      %v2108 = vpop.f32.mrb[0].mxu0
      %v2109 = vadd.f32 0.0, %v2108
      %v2110 = vpop.f32.mrb[0].mxu0
      %v2111 = vadd.f32 0.0, %v2110
      %2112 = vdwg.mxu0
      %2113 = vmatprep.subr.mxu0 %v1954
      %2114 = vmatpush1.msra.mxu0 %v1953
      %2115 = vmatprep.subr.mxu0 0.0
      %2116 = vmatpush1.msra.mxu0 0.0
      %2117 = vmatprep.subr.mxu0 0.0
      %2118 = vmatpush1.msra.mxu0 0.0
      %2119 = vmatprep.subr.mxu0 0.0
      %2120 = vmatpush1.msra.mxu0 0.0
      %2121 = vmatprep.subr.mxu0 0.0
      %2122 = vmatpush1.msra.mxu0 0.0
      %2123 = vmatprep.subr.mxu0 0.0
      %2124 = vmatpush1.msra.mxu0 0.0
      %2125 = vmatprep.subr.mxu0 0.0
      %2126 = vmatpush1.msra.mxu0 0.0
      %2127 = vmatprep.subr.mxu0 0.0
      %2128 = vmatpush1.msra.mxu0 0.0
      %2129 = vmatprep.subr.mxu0 0.0
      %2130 = vmatpush1.msra.mxu0 0.0
      %2131 = vmatprep.subr.mxu0 0.0
      %2132 = vmatpush1.msra.mxu0 0.0
      %2133 = vmatprep.subr.mxu0 0.0
      %2134 = vmatpush1.msra.mxu0 0.0
      %2135 = vmatprep.subr.mxu0 0.0
      %2136 = vmatpush1.msra.mxu0 0.0
      %2137 = vmatprep.subr.mxu0 0.0
      %2138 = vmatpush1.msra.mxu0 0.0
      %2139 = vmatprep.subr.mxu0 0.0
      %2140 = vmatpush1.msra.mxu0 0.0
      %2141 = vmatprep.subr.mxu0 0.0
      %2142 = vmatpush1.msra.mxu0 0.0
      %2143 = vmatprep.subr.mxu0 0.0
      %2144 = vmatpush1.msra.mxu0 0.0
      %2145 = vmatprep.subr.mxu0 0.0
      %2146 = vmatpush1.msra.mxu0 0.0
      %2147 = vmatprep.subr.mxu0 0.0
      %2148 = vmatpush1.msra.mxu0 0.0
      %2149 = vmatprep.subr.mxu0 0.0
      %2150 = vmatpush1.msra.mxu0 0.0
      %2151 = vmatprep.subr.mxu0 0.0
      %2152 = vmatpush1.msra.mxu0 0.0
      %2153 = vmatprep.subr.mxu0 0.0
      %2154 = vmatpush1.msra.mxu0 0.0
      %2155 = vmatprep.subr.mxu0 0.0
      %2156 = vmatpush1.msra.mxu0 0.0
      %2157 = vmatprep.subr.mxu0 0.0
      %2158 = vmatpush1.msra.mxu0 0.0
      %2159 = vmatprep.subr.mxu0 0.0
      %2160 = vmatpush1.msra.mxu0 0.0
      %2161 = vmatprep.subr.mxu0 0.0
      %2162 = vmatpush1.msra.mxu0 0.0
      %2163 = vmatprep.subr.mxu0 0.0
      %2164 = vmatpush1.msra.mxu0 0.0
      %2165 = vmatprep.subr.mxu0 0.0
      %2166 = vmatpush1.msra.mxu0 0.0
      %2167 = vmatprep.subr.mxu0 0.0
      %2168 = vmatpush1.msra.mxu0 0.0
      %2169 = vmatprep.subr.mxu0 0.0
      %2170 = vmatpush1.msra.mxu0 0.0
      %2171 = vmatprep.subr.mxu0 0.0
      %2172 = vmatpush1.msra.mxu0 0.0
      %2173 = vmatprep.subr.mxu0 0.0
      %2174 = vmatpush1.msra.mxu0 0.0
      %2175 = vmatprep.subr.mxu0 0.0
      %2176 = vmatpush1.msra.mxu0 0.0
      %2177 = vmatprep.mubr.f32.mxu0 0.0
      %2178 = vmatmul.mubr.f32.gmra.mrb[0].mxu0 %v1969
      %v2179 = vpop.f32.mrb[0].mxu0
      %v2180 = vadd.f32 0.0, %v2179
      %v2181 = vpop.f32.mrb[0].mxu0
      %v2182 = vadd.f32 0.0, %v2181
      %2183 = vdwg.mxu0
      %2184 = vmatprep.subr.mxu0 %v1956
      %2185 = vmatpush1.msra.mxu0 %v1955
      %2186 = vmatprep.subr.mxu0 0.0
      %2187 = vmatpush1.msra.mxu0 0.0
      %2188 = vmatprep.subr.mxu0 0.0
      %2189 = vmatpush1.msra.mxu0 0.0
      %2190 = vmatprep.subr.mxu0 0.0
      %2191 = vmatpush1.msra.mxu0 0.0
      %2192 = vmatprep.subr.mxu0 0.0
      %2193 = vmatpush1.msra.mxu0 0.0
      %2194 = vmatprep.subr.mxu0 0.0
      %2195 = vmatpush1.msra.mxu0 0.0
      %2196 = vmatprep.subr.mxu0 0.0
      %2197 = vmatpush1.msra.mxu0 0.0
      %2198 = vmatprep.subr.mxu0 0.0
      %2199 = vmatpush1.msra.mxu0 0.0
      %2200 = vmatprep.subr.mxu0 0.0
      %2201 = vmatpush1.msra.mxu0 0.0
      %2202 = vmatprep.subr.mxu0 0.0
      %2203 = vmatpush1.msra.mxu0 0.0
      %2204 = vmatprep.subr.mxu0 0.0
      %2205 = vmatpush1.msra.mxu0 0.0
      %2206 = vmatprep.subr.mxu0 0.0
      %2207 = vmatpush1.msra.mxu0 0.0
      %2208 = vmatprep.subr.mxu0 0.0
      %2209 = vmatpush1.msra.mxu0 0.0
      %2210 = vmatprep.subr.mxu0 0.0
      %2211 = vmatpush1.msra.mxu0 0.0
      %2212 = vmatprep.subr.mxu0 0.0
      %2213 = vmatpush1.msra.mxu0 0.0
      %2214 = vmatprep.subr.mxu0 0.0
      %2215 = vmatpush1.msra.mxu0 0.0
      %2216 = vmatprep.subr.mxu0 0.0
      %2217 = vmatpush1.msra.mxu0 0.0
      %2218 = vmatprep.subr.mxu0 0.0
      %2219 = vmatpush1.msra.mxu0 0.0
      %2220 = vmatprep.subr.mxu0 0.0
      %2221 = vmatpush1.msra.mxu0 0.0
      %2222 = vmatprep.subr.mxu0 0.0
      %2223 = vmatpush1.msra.mxu0 0.0
      %2224 = vmatprep.subr.mxu0 0.0
      %2225 = vmatpush1.msra.mxu0 0.0
      %2226 = vmatprep.subr.mxu0 0.0
      %2227 = vmatpush1.msra.mxu0 0.0
      %2228 = vmatprep.subr.mxu0 0.0
      %2229 = vmatpush1.msra.mxu0 0.0
      %2230 = vmatprep.subr.mxu0 0.0
      %2231 = vmatpush1.msra.mxu0 0.0
      %2232 = vmatprep.subr.mxu0 0.0
      %2233 = vmatpush1.msra.mxu0 0.0
      %2234 = vmatprep.subr.mxu0 0.0
      %2235 = vmatpush1.msra.mxu0 0.0
      %2236 = vmatprep.subr.mxu0 0.0
      %2237 = vmatpush1.msra.mxu0 0.0
      %2238 = vmatprep.subr.mxu0 0.0
      %2239 = vmatpush1.msra.mxu0 0.0
      %2240 = vmatprep.subr.mxu0 0.0
      %2241 = vmatpush1.msra.mxu0 0.0
      %2242 = vmatprep.subr.mxu0 0.0
      %2243 = vmatpush1.msra.mxu0 0.0
      %2244 = vmatprep.subr.mxu0 0.0
      %2245 = vmatpush1.msra.mxu0 0.0
      %2246 = vmatprep.subr.mxu0 0.0
      %2247 = vmatpush1.msra.mxu0 0.0
      %2248 = vmatprep.mubr.f32.mxu0 0.0
      %2249 = vmatmul.mubr.f32.gmra.mrb[0].mxu0 %v1969
      %v2250 = vpop.f32.mrb[0].mxu0
      %v2251 = vadd.f32 0.0, %v2250
      %v2252 = vpop.f32.mrb[0].mxu0
      %v2253 = vadd.f32 0.0, %v2252
      %2254 = vdwg.mxu0
      %2255 = vmatprep.subr.mxu0 %v1947
      %2256 = vmatpush1.msra.mxu0 %v1957
      %2257 = vmatprep.subr.mxu0 0.0
      %2258 = vmatpush1.msra.mxu0 0.0
      %2259 = vmatprep.subr.mxu0 0.0
      %2260 = vmatpush1.msra.mxu0 0.0
      %2261 = vmatprep.subr.mxu0 0.0
      %2262 = vmatpush1.msra.mxu0 0.0
      %2263 = vmatprep.subr.mxu0 0.0
      %2264 = vmatpush1.msra.mxu0 0.0
      %2265 = vmatprep.subr.mxu0 0.0
      %2266 = vmatpush1.msra.mxu0 0.0
      %2267 = vmatprep.subr.mxu0 0.0
      %2268 = vmatpush1.msra.mxu0 0.0
      %2269 = vmatprep.subr.mxu0 0.0
      %2270 = vmatpush1.msra.mxu0 0.0
      %2271 = vmatprep.subr.mxu0 0.0
      %2272 = vmatpush1.msra.mxu0 0.0
      %2273 = vmatprep.subr.mxu0 0.0
      %2274 = vmatpush1.msra.mxu0 0.0
      %2275 = vmatprep.subr.mxu0 0.0
      %2276 = vmatpush1.msra.mxu0 0.0
      %2277 = vmatprep.subr.mxu0 0.0
      %2278 = vmatpush1.msra.mxu0 0.0
      %2279 = vmatprep.subr.mxu0 0.0
      %2280 = vmatpush1.msra.mxu0 0.0
      %2281 = vmatprep.subr.mxu0 0.0
      %2282 = vmatpush1.msra.mxu0 0.0
      %2283 = vmatprep.subr.mxu0 0.0
      %2284 = vmatpush1.msra.mxu0 0.0
      %2285 = vmatprep.subr.mxu0 0.0
      %2286 = vmatpush1.msra.mxu0 0.0
      %2287 = vmatprep.subr.mxu0 0.0
      %2288 = vmatpush1.msra.mxu0 0.0
      %2289 = vmatprep.subr.mxu0 0.0
      %2290 = vmatpush1.msra.mxu0 0.0
      %2291 = vmatprep.subr.mxu0 0.0
      %2292 = vmatpush1.msra.mxu0 0.0
      %2293 = vmatprep.subr.mxu0 0.0
      %2294 = vmatpush1.msra.mxu0 0.0
      %2295 = vmatprep.subr.mxu0 0.0
      %2296 = vmatpush1.msra.mxu0 0.0
      %2297 = vmatprep.subr.mxu0 0.0
      %2298 = vmatpush1.msra.mxu0 0.0
      %2299 = vmatprep.subr.mxu0 0.0
      %2300 = vmatpush1.msra.mxu0 0.0
      %2301 = vmatprep.subr.mxu0 0.0
      %2302 = vmatpush1.msra.mxu0 0.0
      %2303 = vmatprep.subr.mxu0 0.0
      %2304 = vmatpush1.msra.mxu0 0.0
      %2305 = vmatprep.subr.mxu0 0.0
      %2306 = vmatpush1.msra.mxu0 0.0
      %2307 = vmatprep.subr.mxu0 0.0
      %2308 = vmatpush1.msra.mxu0 0.0
      %2309 = vmatprep.subr.mxu0 0.0
      %2310 = vmatpush1.msra.mxu0 0.0
      %2311 = vmatprep.subr.mxu0 0.0
      %2312 = vmatpush1.msra.mxu0 0.0
      %2313 = vmatprep.subr.mxu0 0.0
      %2314 = vmatpush1.msra.mxu0 0.0
      %2315 = vmatprep.subr.mxu0 0.0
      %2316 = vmatpush1.msra.mxu0 0.0
      %2317 = vmatprep.subr.mxu0 0.0
      %2318 = vmatpush1.msra.mxu0 0.0
      %2319 = vmatprep.mubr.f32.mxu0 0.0
      %2320 = vmatmul.mubr.f32.gmra.mrb[0].mxu0 %v1969
      %v2321 = vpop.f32.mrb[0].mxu0
      %v2322 = vadd.f32 0.0, %v2321
      %v2323 = vpop.f32.mrb[0].mxu0
      %v2324 = vadd.f32 0.0, %v2323
      %2325 = vdwg.mxu0
      %v2326 = vadd.f32 %v1916, %v2038
      %v2327 = vadd.f32 %v1917, %v2040
      %v2328 = vadd.f32 %v1918, %v2109
      %v2329 = vadd.f32 %v1919, %v2111
      %v2330 = vadd.f32 %v1920, %v2180
      %v2331 = vadd.f32 %v1921, %v2182
      %v2332 = vadd.f32 %v1922, %v2251
      %v2333 = vadd.f32 %v1923, %v2253
      %v2334 = vadd.f32 %v1924, %v2322
      %v2335 = vadd.f32 %v1925, %v2324
      %s2336 = scalar_lea.vmem %s2, 16
      %v2337 = vld [vmem:[%s2336] sm:$0xf]
      %2338 = vrot.lane.b32.xlu0 %v737, 93
      %v2339 = vpop.permute.xlu0 %2338
      %2340 = vrot.lane.b32.xlu0 %v738, 93
      %v2341 = vpop.permute.xlu0 %2340
      %2342 = vrot.lane.b32.xlu0 %v739, 93
      %v2343 = vpop.permute.xlu0 %2342
      %2344 = vrot.lane.b32.xlu0 %v740, 93
      %v2345 = vpop.permute.xlu0 %2344
      %2346 = vrot.lane.b32.xlu0 %v741, 93
      %v2347 = vpop.permute.xlu0 %2346
      %2348 = vrot.lane.b32.xlu0 %v742, 93
      %v2349 = vpop.permute.xlu0 %2348
      %2350 = vrot.lane.b32.xlu0 %v743, 93
      %v2351 = vpop.permute.xlu0 %2350
      %2352 = vrot.lane.b32.xlu0 %v744, 93
      %v2353 = vpop.permute.xlu0 %2352
      %2354 = vrot.lane.b32.xlu0 %v745, 93
      %v2355 = vpop.permute.xlu0 %2354
      %2356 = vrot.lane.b32.xlu0 %v746, 93
      %v2357 = vpop.permute.xlu0 %2356
      %vm2358 = vcmask 760832
      %v2359 = vsel %vm2358, %v2339, %v2341
      %v2360 = vsel %vm2358, %v2341, %v2343
      %v2361 = vsel %vm2358, %v2343, %v2345
      %v2362 = vsel %vm2358, %v2345, %v2347
      %v2363 = vsel %vm2358, %v2347, %v2349
      %v2364 = vsel %vm2358, %v2349, %v2351
      %v2365 = vsel %vm2358, %v2351, %v2353
      %v2366 = vsel %vm2358, %v2353, %v2355
      %v2367 = vsel %vm2358, %v2355, %v2357
      %v2379 = vsel %vm799, %v2337, 0
      %2381 = vmatprep.subr.mxu0 %v2360
      %2382 = vmatpush1.msra.mxu0 %v2359
      %2383 = vmatprep.subr.mxu0 0.0
      %2384 = vmatpush1.msra.mxu0 0.0
      %2385 = vmatprep.subr.mxu0 0.0
      %2386 = vmatpush1.msra.mxu0 0.0
      %2387 = vmatprep.subr.mxu0 0.0
      %2388 = vmatpush1.msra.mxu0 0.0
      %2389 = vmatprep.subr.mxu0 0.0
      %2390 = vmatpush1.msra.mxu0 0.0
      %2391 = vmatprep.subr.mxu0 0.0
      %2392 = vmatpush1.msra.mxu0 0.0
      %2393 = vmatprep.subr.mxu0 0.0
      %2394 = vmatpush1.msra.mxu0 0.0
      %2395 = vmatprep.subr.mxu0 0.0
      %2396 = vmatpush1.msra.mxu0 0.0
      %2397 = vmatprep.subr.mxu0 0.0
      %2398 = vmatpush1.msra.mxu0 0.0
      %2399 = vmatprep.subr.mxu0 0.0
      %2400 = vmatpush1.msra.mxu0 0.0
      %2401 = vmatprep.subr.mxu0 0.0
      %2402 = vmatpush1.msra.mxu0 0.0
      %2403 = vmatprep.subr.mxu0 0.0
      %2404 = vmatpush1.msra.mxu0 0.0
      %2405 = vmatprep.subr.mxu0 0.0
      %2406 = vmatpush1.msra.mxu0 0.0
      %2407 = vmatprep.subr.mxu0 0.0
      %2408 = vmatpush1.msra.mxu0 0.0
      %2409 = vmatprep.subr.mxu0 0.0
      %2410 = vmatpush1.msra.mxu0 0.0
      %2411 = vmatprep.subr.mxu0 0.0
      %2412 = vmatpush1.msra.mxu0 0.0
      %2413 = vmatprep.subr.mxu0 0.0
      %2414 = vmatpush1.msra.mxu0 0.0
      %2415 = vmatprep.subr.mxu0 0.0
      %2416 = vmatpush1.msra.mxu0 0.0
      %2417 = vmatprep.subr.mxu0 0.0
      %2418 = vmatpush1.msra.mxu0 0.0
      %2419 = vmatprep.subr.mxu0 0.0
      %2420 = vmatpush1.msra.mxu0 0.0
      %2421 = vmatprep.subr.mxu0 0.0
      %2422 = vmatpush1.msra.mxu0 0.0
      %2423 = vmatprep.subr.mxu0 0.0
      %2424 = vmatpush1.msra.mxu0 0.0
      %2425 = vmatprep.subr.mxu0 0.0
      %2426 = vmatpush1.msra.mxu0 0.0
      %2427 = vmatprep.subr.mxu0 0.0
      %2428 = vmatpush1.msra.mxu0 0.0
      %2429 = vmatprep.subr.mxu0 0.0
      %2430 = vmatpush1.msra.mxu0 0.0
      %2431 = vmatprep.subr.mxu0 0.0
      %2432 = vmatpush1.msra.mxu0 0.0
      %2433 = vmatprep.subr.mxu0 0.0
      %2434 = vmatpush1.msra.mxu0 0.0
      %2435 = vmatprep.subr.mxu0 0.0
      %2436 = vmatpush1.msra.mxu0 0.0
      %2437 = vmatprep.subr.mxu0 0.0
      %2438 = vmatpush1.msra.mxu0 0.0
      %2439 = vmatprep.subr.mxu0 0.0
      %2440 = vmatpush1.msra.mxu0 0.0
      %2441 = vmatprep.subr.mxu0 0.0
      %2442 = vmatpush1.msra.mxu0 0.0
      %2443 = vmatprep.subr.mxu0 0.0
      %2444 = vmatpush1.msra.mxu0 0.0
      %2445 = vmatprep.mubr.f32.mxu0 0.0
      %2446 = vmatmul.mubr.f32.gmra.mrb[0].mxu0 %v2379
      %v2447 = vpop.f32.mrb[0].mxu0
      %v2448 = vadd.f32 0.0, %v2447
      %v2449 = vpop.f32.mrb[0].mxu0
      %v2450 = vadd.f32 0.0, %v2449
      %2451 = vdwg.mxu0
      %2452 = vmatprep.subr.mxu0 %v2362
      %2453 = vmatpush1.msra.mxu0 %v2361
      %2454 = vmatprep.subr.mxu0 0.0
      %2455 = vmatpush1.msra.mxu0 0.0
      %2456 = vmatprep.subr.mxu0 0.0
      %2457 = vmatpush1.msra.mxu0 0.0
      %2458 = vmatprep.subr.mxu0 0.0
      %2459 = vmatpush1.msra.mxu0 0.0
      %2460 = vmatprep.subr.mxu0 0.0
      %2461 = vmatpush1.msra.mxu0 0.0
      %2462 = vmatprep.subr.mxu0 0.0
      %2463 = vmatpush1.msra.mxu0 0.0
      %2464 = vmatprep.subr.mxu0 0.0
      %2465 = vmatpush1.msra.mxu0 0.0
      %2466 = vmatprep.subr.mxu0 0.0
      %2467 = vmatpush1.msra.mxu0 0.0
      %2468 = vmatprep.subr.mxu0 0.0
      %2469 = vmatpush1.msra.mxu0 0.0
      %2470 = vmatprep.subr.mxu0 0.0
      %2471 = vmatpush1.msra.mxu0 0.0
      %2472 = vmatprep.subr.mxu0 0.0
      %2473 = vmatpush1.msra.mxu0 0.0
      %2474 = vmatprep.subr.mxu0 0.0
      %2475 = vmatpush1.msra.mxu0 0.0
      %2476 = vmatprep.subr.mxu0 0.0
      %2477 = vmatpush1.msra.mxu0 0.0
      %2478 = vmatprep.subr.mxu0 0.0
      %2479 = vmatpush1.msra.mxu0 0.0
      %2480 = vmatprep.subr.mxu0 0.0
      %2481 = vmatpush1.msra.mxu0 0.0
      %2482 = vmatprep.subr.mxu0 0.0
      %2483 = vmatpush1.msra.mxu0 0.0
      %2484 = vmatprep.subr.mxu0 0.0
      %2485 = vmatpush1.msra.mxu0 0.0
      %2486 = vmatprep.subr.mxu0 0.0
      %2487 = vmatpush1.msra.mxu0 0.0
      %2488 = vmatprep.subr.mxu0 0.0
      %2489 = vmatpush1.msra.mxu0 0.0
      %2490 = vmatprep.subr.mxu0 0.0
      %2491 = vmatpush1.msra.mxu0 0.0
      %2492 = vmatprep.subr.mxu0 0.0
      %2493 = vmatpush1.msra.mxu0 0.0
      %2494 = vmatprep.subr.mxu0 0.0
      %2495 = vmatpush1.msra.mxu0 0.0
      %2496 = vmatprep.subr.mxu0 0.0
      %2497 = vmatpush1.msra.mxu0 0.0
      %2498 = vmatprep.subr.mxu0 0.0
      %2499 = vmatpush1.msra.mxu0 0.0
      %2500 = vmatprep.subr.mxu0 0.0
      %2501 = vmatpush1.msra.mxu0 0.0
      %2502 = vmatprep.subr.mxu0 0.0
      %2503 = vmatpush1.msra.mxu0 0.0
      %2504 = vmatprep.subr.mxu0 0.0
      %2505 = vmatpush1.msra.mxu0 0.0
      %2506 = vmatprep.subr.mxu0 0.0
      %2507 = vmatpush1.msra.mxu0 0.0
      %2508 = vmatprep.subr.mxu0 0.0
      %2509 = vmatpush1.msra.mxu0 0.0
      %2510 = vmatprep.subr.mxu0 0.0
      %2511 = vmatpush1.msra.mxu0 0.0
      %2512 = vmatprep.subr.mxu0 0.0
      %2513 = vmatpush1.msra.mxu0 0.0
      %2514 = vmatprep.subr.mxu0 0.0
      %2515 = vmatpush1.msra.mxu0 0.0
      %2516 = vmatprep.mubr.f32.mxu0 0.0
      %2517 = vmatmul.mubr.f32.gmra.mrb[0].mxu0 %v2379
      %v2518 = vpop.f32.mrb[0].mxu0
      %v2519 = vadd.f32 0.0, %v2518
      %v2520 = vpop.f32.mrb[0].mxu0
      %v2521 = vadd.f32 0.0, %v2520
      %2522 = vdwg.mxu0
      %2523 = vmatprep.subr.mxu0 %v2364
      %2524 = vmatpush1.msra.mxu0 %v2363
      %2525 = vmatprep.subr.mxu0 0.0
      %2526 = vmatpush1.msra.mxu0 0.0
      %2527 = vmatprep.subr.mxu0 0.0
      %2528 = vmatpush1.msra.mxu0 0.0
      %2529 = vmatprep.subr.mxu0 0.0
      %2530 = vmatpush1.msra.mxu0 0.0
      %2531 = vmatprep.subr.mxu0 0.0
      %2532 = vmatpush1.msra.mxu0 0.0
      %2533 = vmatprep.subr.mxu0 0.0
      %2534 = vmatpush1.msra.mxu0 0.0
      %2535 = vmatprep.subr.mxu0 0.0
      %2536 = vmatpush1.msra.mxu0 0.0
      %2537 = vmatprep.subr.mxu0 0.0
      %2538 = vmatpush1.msra.mxu0 0.0
      %2539 = vmatprep.subr.mxu0 0.0
      %2540 = vmatpush1.msra.mxu0 0.0
      %2541 = vmatprep.subr.mxu0 0.0
      %2542 = vmatpush1.msra.mxu0 0.0
      %2543 = vmatprep.subr.mxu0 0.0
      %2544 = vmatpush1.msra.mxu0 0.0
      %2545 = vmatprep.subr.mxu0 0.0
      %2546 = vmatpush1.msra.mxu0 0.0
      %2547 = vmatprep.subr.mxu0 0.0
      %2548 = vmatpush1.msra.mxu0 0.0
      %2549 = vmatprep.subr.mxu0 0.0
      %2550 = vmatpush1.msra.mxu0 0.0
      %2551 = vmatprep.subr.mxu0 0.0
      %2552 = vmatpush1.msra.mxu0 0.0
      %2553 = vmatprep.subr.mxu0 0.0
      %2554 = vmatpush1.msra.mxu0 0.0
      %2555 = vmatprep.subr.mxu0 0.0
      %2556 = vmatpush1.msra.mxu0 0.0
      %2557 = vmatprep.subr.mxu0 0.0
      %2558 = vmatpush1.msra.mxu0 0.0
      %2559 = vmatprep.subr.mxu0 0.0
      %2560 = vmatpush1.msra.mxu0 0.0
      %2561 = vmatprep.subr.mxu0 0.0
      %2562 = vmatpush1.msra.mxu0 0.0
      %2563 = vmatprep.subr.mxu0 0.0
      %2564 = vmatpush1.msra.mxu0 0.0
      %2565 = vmatprep.subr.mxu0 0.0
      %2566 = vmatpush1.msra.mxu0 0.0
      %2567 = vmatprep.subr.mxu0 0.0
      %2568 = vmatpush1.msra.mxu0 0.0
      %2569 = vmatprep.subr.mxu0 0.0
      %2570 = vmatpush1.msra.mxu0 0.0
      %2571 = vmatprep.subr.mxu0 0.0
      %2572 = vmatpush1.msra.mxu0 0.0
      %2573 = vmatprep.subr.mxu0 0.0
      %2574 = vmatpush1.msra.mxu0 0.0
      %2575 = vmatprep.subr.mxu0 0.0
      %2576 = vmatpush1.msra.mxu0 0.0
      %2577 = vmatprep.subr.mxu0 0.0
      %2578 = vmatpush1.msra.mxu0 0.0
      %2579 = vmatprep.subr.mxu0 0.0
      %2580 = vmatpush1.msra.mxu0 0.0
      %2581 = vmatprep.subr.mxu0 0.0
      %2582 = vmatpush1.msra.mxu0 0.0
      %2583 = vmatprep.subr.mxu0 0.0
      %2584 = vmatpush1.msra.mxu0 0.0
      %2585 = vmatprep.subr.mxu0 0.0
      %2586 = vmatpush1.msra.mxu0 0.0
      %2587 = vmatprep.mubr.f32.mxu0 0.0
      %2588 = vmatmul.mubr.f32.gmra.mrb[0].mxu0 %v2379
      %v2589 = vpop.f32.mrb[0].mxu0
      %v2590 = vadd.f32 0.0, %v2589
      %v2591 = vpop.f32.mrb[0].mxu0
      %v2592 = vadd.f32 0.0, %v2591
      %2593 = vdwg.mxu0
      %2594 = vmatprep.subr.mxu0 %v2366
      %2595 = vmatpush1.msra.mxu0 %v2365
      %2596 = vmatprep.subr.mxu0 0.0
      %2597 = vmatpush1.msra.mxu0 0.0
      %2598 = vmatprep.subr.mxu0 0.0
      %2599 = vmatpush1.msra.mxu0 0.0
      %2600 = vmatprep.subr.mxu0 0.0
      %2601 = vmatpush1.msra.mxu0 0.0
      %2602 = vmatprep.subr.mxu0 0.0
      %2603 = vmatpush1.msra.mxu0 0.0
      %2604 = vmatprep.subr.mxu0 0.0
      %2605 = vmatpush1.msra.mxu0 0.0
      %2606 = vmatprep.subr.mxu0 0.0
      %2607 = vmatpush1.msra.mxu0 0.0
      %2608 = vmatprep.subr.mxu0 0.0
      %2609 = vmatpush1.msra.mxu0 0.0
      %2610 = vmatprep.subr.mxu0 0.0
      %2611 = vmatpush1.msra.mxu0 0.0
      %2612 = vmatprep.subr.mxu0 0.0
      %2613 = vmatpush1.msra.mxu0 0.0
      %2614 = vmatprep.subr.mxu0 0.0
      %2615 = vmatpush1.msra.mxu0 0.0
      %2616 = vmatprep.subr.mxu0 0.0
      %2617 = vmatpush1.msra.mxu0 0.0
      %2618 = vmatprep.subr.mxu0 0.0
      %2619 = vmatpush1.msra.mxu0 0.0
      %2620 = vmatprep.subr.mxu0 0.0
      %2621 = vmatpush1.msra.mxu0 0.0
      %2622 = vmatprep.subr.mxu0 0.0
      %2623 = vmatpush1.msra.mxu0 0.0
      %2624 = vmatprep.subr.mxu0 0.0
      %2625 = vmatpush1.msra.mxu0 0.0
      %2626 = vmatprep.subr.mxu0 0.0
      %2627 = vmatpush1.msra.mxu0 0.0
      %2628 = vmatprep.subr.mxu0 0.0
      %2629 = vmatpush1.msra.mxu0 0.0
      %2630 = vmatprep.subr.mxu0 0.0
      %2631 = vmatpush1.msra.mxu0 0.0
      %2632 = vmatprep.subr.mxu0 0.0
      %2633 = vmatpush1.msra.mxu0 0.0
      %2634 = vmatprep.subr.mxu0 0.0
      %2635 = vmatpush1.msra.mxu0 0.0
      %2636 = vmatprep.subr.mxu0 0.0
      %2637 = vmatpush1.msra.mxu0 0.0
      %2638 = vmatprep.subr.mxu0 0.0
      %2639 = vmatpush1.msra.mxu0 0.0
      %2640 = vmatprep.subr.mxu0 0.0
      %2641 = vmatpush1.msra.mxu0 0.0
      %2642 = vmatprep.subr.mxu0 0.0
      %2643 = vmatpush1.msra.mxu0 0.0
      %2644 = vmatprep.subr.mxu0 0.0
      %2645 = vmatpush1.msra.mxu0 0.0
      %2646 = vmatprep.subr.mxu0 0.0
      %2647 = vmatpush1.msra.mxu0 0.0
      %2648 = vmatprep.subr.mxu0 0.0
      %2649 = vmatpush1.msra.mxu0 0.0
      %2650 = vmatprep.subr.mxu0 0.0
      %2651 = vmatpush1.msra.mxu0 0.0
      %2652 = vmatprep.subr.mxu0 0.0
      %2653 = vmatpush1.msra.mxu0 0.0
      %2654 = vmatprep.subr.mxu0 0.0
      %2655 = vmatpush1.msra.mxu0 0.0
      %2656 = vmatprep.subr.mxu0 0.0
      %2657 = vmatpush1.msra.mxu0 0.0
      %2658 = vmatprep.mubr.f32.mxu0 0.0
      %2659 = vmatmul.mubr.f32.gmra.mrb[0].mxu0 %v2379
      %v2660 = vpop.f32.mrb[0].mxu0
      %v2661 = vadd.f32 0.0, %v2660
      %v2662 = vpop.f32.mrb[0].mxu0
      %v2663 = vadd.f32 0.0, %v2662
      %2664 = vdwg.mxu0
      %2665 = vmatprep.subr.mxu0 %v2357
      %2666 = vmatpush1.msra.mxu0 %v2367
      %2667 = vmatprep.subr.mxu0 0.0
      %2668 = vmatpush1.msra.mxu0 0.0
      %2669 = vmatprep.subr.mxu0 0.0
      %2670 = vmatpush1.msra.mxu0 0.0
      %2671 = vmatprep.subr.mxu0 0.0
      %2672 = vmatpush1.msra.mxu0 0.0
      %2673 = vmatprep.subr.mxu0 0.0
      %2674 = vmatpush1.msra.mxu0 0.0
      %2675 = vmatprep.subr.mxu0 0.0
      %2676 = vmatpush1.msra.mxu0 0.0
      %2677 = vmatprep.subr.mxu0 0.0
      %2678 = vmatpush1.msra.mxu0 0.0
      %2679 = vmatprep.subr.mxu0 0.0
      %2680 = vmatpush1.msra.mxu0 0.0
      %2681 = vmatprep.subr.mxu0 0.0
      %2682 = vmatpush1.msra.mxu0 0.0
      %2683 = vmatprep.subr.mxu0 0.0
      %2684 = vmatpush1.msra.mxu0 0.0
      %2685 = vmatprep.subr.mxu0 0.0
      %2686 = vmatpush1.msra.mxu0 0.0
      %2687 = vmatprep.subr.mxu0 0.0
      %2688 = vmatpush1.msra.mxu0 0.0
      %2689 = vmatprep.subr.mxu0 0.0
      %2690 = vmatpush1.msra.mxu0 0.0
      %2691 = vmatprep.subr.mxu0 0.0
      %2692 = vmatpush1.msra.mxu0 0.0
      %2693 = vmatprep.subr.mxu0 0.0
      %2694 = vmatpush1.msra.mxu0 0.0
      %2695 = vmatprep.subr.mxu0 0.0
      %2696 = vmatpush1.msra.mxu0 0.0
      %2697 = vmatprep.subr.mxu0 0.0
      %2698 = vmatpush1.msra.mxu0 0.0
      %2699 = vmatprep.subr.mxu0 0.0
      %2700 = vmatpush1.msra.mxu0 0.0
      %2701 = vmatprep.subr.mxu0 0.0
      %2702 = vmatpush1.msra.mxu0 0.0
      %2703 = vmatprep.subr.mxu0 0.0
      %2704 = vmatpush1.msra.mxu0 0.0
      %2705 = vmatprep.subr.mxu0 0.0
      %2706 = vmatpush1.msra.mxu0 0.0
      %2707 = vmatprep.subr.mxu0 0.0
      %2708 = vmatpush1.msra.mxu0 0.0
      %2709 = vmatprep.subr.mxu0 0.0
      %2710 = vmatpush1.msra.mxu0 0.0
      %2711 = vmatprep.subr.mxu0 0.0
      %2712 = vmatpush1.msra.mxu0 0.0
      %2713 = vmatprep.subr.mxu0 0.0
      %2714 = vmatpush1.msra.mxu0 0.0
      %2715 = vmatprep.subr.mxu0 0.0
      %2716 = vmatpush1.msra.mxu0 0.0
      %2717 = vmatprep.subr.mxu0 0.0
      %2718 = vmatpush1.msra.mxu0 0.0
      %2719 = vmatprep.subr.mxu0 0.0
      %2720 = vmatpush1.msra.mxu0 0.0
      %2721 = vmatprep.subr.mxu0 0.0
      %2722 = vmatpush1.msra.mxu0 0.0
      %2723 = vmatprep.subr.mxu0 0.0
      %2724 = vmatpush1.msra.mxu0 0.0
      %2725 = vmatprep.subr.mxu0 0.0
      %2726 = vmatpush1.msra.mxu0 0.0
      %2727 = vmatprep.subr.mxu0 0.0
      %2728 = vmatpush1.msra.mxu0 0.0
      %2729 = vmatprep.mubr.f32.mxu0 0.0
      %2730 = vmatmul.mubr.f32.gmra.mrb[0].mxu0 %v2379
      %v2731 = vpop.f32.mrb[0].mxu0
      %v2732 = vadd.f32 0.0, %v2731
      %v2733 = vpop.f32.mrb[0].mxu0
      %v2734 = vadd.f32 0.0, %v2733
      %2735 = vdwg.mxu0
      %v2736 = vadd.f32 %v2326, %v2448
      %v2737 = vadd.f32 %v2327, %v2450
      %v2738 = vadd.f32 %v2328, %v2519
      %v2739 = vadd.f32 %v2329, %v2521
      %v2740 = vadd.f32 %v2330, %v2590
      %v2741 = vadd.f32 %v2331, %v2592
      %v2742 = vadd.f32 %v2332, %v2661
      %v2743 = vadd.f32 %v2333, %v2663
      %v2744 = vadd.f32 %v2334, %v2732
      %v2745 = vadd.f32 %v2335, %v2734
      %s2746 = scalar_lea.vmem %s2, 20
      %v2747 = vld [vmem:[%s2746] sm:$0xf]
      %2748 = vrot.lane.b32.xlu0 %v737, 92
      %v2749 = vpop.permute.xlu0 %2748
      %2750 = vrot.lane.b32.xlu0 %v738, 92
      %v2751 = vpop.permute.xlu0 %2750
      %2752 = vrot.lane.b32.xlu0 %v739, 92
      %v2753 = vpop.permute.xlu0 %2752
      %2754 = vrot.lane.b32.xlu0 %v740, 92
      %v2755 = vpop.permute.xlu0 %2754
      %2756 = vrot.lane.b32.xlu0 %v741, 92
      %v2757 = vpop.permute.xlu0 %2756
      %2758 = vrot.lane.b32.xlu0 %v742, 92
      %v2759 = vpop.permute.xlu0 %2758
      %2760 = vrot.lane.b32.xlu0 %v743, 92
      %v2761 = vpop.permute.xlu0 %2760
      %2762 = vrot.lane.b32.xlu0 %v744, 92
      %v2763 = vpop.permute.xlu0 %2762
      %2764 = vrot.lane.b32.xlu0 %v745, 92
      %v2765 = vpop.permute.xlu0 %2764
      %2766 = vrot.lane.b32.xlu0 %v746, 92
      %v2767 = vpop.permute.xlu0 %2766
      %vm2768 = vcmask 752640
      %v2769 = vsel %vm2768, %v2749, %v2751
      %v2770 = vsel %vm2768, %v2751, %v2753
      %v2771 = vsel %vm2768, %v2753, %v2755
      %v2772 = vsel %vm2768, %v2755, %v2757
      %v2773 = vsel %vm2768, %v2757, %v2759
      %v2774 = vsel %vm2768, %v2759, %v2761
      %v2775 = vsel %vm2768, %v2761, %v2763
      %v2776 = vsel %vm2768, %v2763, %v2765
      %v2777 = vsel %vm2768, %v2765, %v2767
      %v2789 = vsel %vm799, %v2747, 0
      %2791 = vmatprep.subr.mxu0 %v2770
      %2792 = vmatpush1.msra.mxu0 %v2769
      %2793 = vmatprep.subr.mxu0 0.0
      %2794 = vmatpush1.msra.mxu0 0.0
      %2795 = vmatprep.subr.mxu0 0.0
      %2796 = vmatpush1.msra.mxu0 0.0
      %2797 = vmatprep.subr.mxu0 0.0
      %2798 = vmatpush1.msra.mxu0 0.0
      %2799 = vmatprep.subr.mxu0 0.0
      %2800 = vmatpush1.msra.mxu0 0.0
      %2801 = vmatprep.subr.mxu0 0.0
      %2802 = vmatpush1.msra.mxu0 0.0
      %2803 = vmatprep.subr.mxu0 0.0
      %2804 = vmatpush1.msra.mxu0 0.0
      %2805 = vmatprep.subr.mxu0 0.0
      %2806 = vmatpush1.msra.mxu0 0.0
      %2807 = vmatprep.subr.mxu0 0.0
      %2808 = vmatpush1.msra.mxu0 0.0
      %2809 = vmatprep.subr.mxu0 0.0
      %2810 = vmatpush1.msra.mxu0 0.0
      %2811 = vmatprep.subr.mxu0 0.0
      %2812 = vmatpush1.msra.mxu0 0.0
      %2813 = vmatprep.subr.mxu0 0.0
      %2814 = vmatpush1.msra.mxu0 0.0
      %2815 = vmatprep.subr.mxu0 0.0
      %2816 = vmatpush1.msra.mxu0 0.0
      %2817 = vmatprep.subr.mxu0 0.0
      %2818 = vmatpush1.msra.mxu0 0.0
      %2819 = vmatprep.subr.mxu0 0.0
      %2820 = vmatpush1.msra.mxu0 0.0
      %2821 = vmatprep.subr.mxu0 0.0
      %2822 = vmatpush1.msra.mxu0 0.0
      %2823 = vmatprep.subr.mxu0 0.0
      %2824 = vmatpush1.msra.mxu0 0.0
      %2825 = vmatprep.subr.mxu0 0.0
      %2826 = vmatpush1.msra.mxu0 0.0
      %2827 = vmatprep.subr.mxu0 0.0
      %2828 = vmatpush1.msra.mxu0 0.0
      %2829 = vmatprep.subr.mxu0 0.0
      %2830 = vmatpush1.msra.mxu0 0.0
      %2831 = vmatprep.subr.mxu0 0.0
      %2832 = vmatpush1.msra.mxu0 0.0
      %2833 = vmatprep.subr.mxu0 0.0
      %2834 = vmatpush1.msra.mxu0 0.0
      %2835 = vmatprep.subr.mxu0 0.0
      %2836 = vmatpush1.msra.mxu0 0.0
      %2837 = vmatprep.subr.mxu0 0.0
      %2838 = vmatpush1.msra.mxu0 0.0
      %2839 = vmatprep.subr.mxu0 0.0
      %2840 = vmatpush1.msra.mxu0 0.0
      %2841 = vmatprep.subr.mxu0 0.0
      %2842 = vmatpush1.msra.mxu0 0.0
      %2843 = vmatprep.subr.mxu0 0.0
      %2844 = vmatpush1.msra.mxu0 0.0
      %2845 = vmatprep.subr.mxu0 0.0
      %2846 = vmatpush1.msra.mxu0 0.0
      %2847 = vmatprep.subr.mxu0 0.0
      %2848 = vmatpush1.msra.mxu0 0.0
      %2849 = vmatprep.subr.mxu0 0.0
      %2850 = vmatpush1.msra.mxu0 0.0
      %2851 = vmatprep.subr.mxu0 0.0
      %2852 = vmatpush1.msra.mxu0 0.0
      %2853 = vmatprep.subr.mxu0 0.0
      %2854 = vmatpush1.msra.mxu0 0.0
      %2855 = vmatprep.mubr.f32.mxu0 0.0
      %2856 = vmatmul.mubr.f32.gmra.mrb[0].mxu0 %v2789
      %v2857 = vpop.f32.mrb[0].mxu0
      %v2858 = vadd.f32 0.0, %v2857
      %v2859 = vpop.f32.mrb[0].mxu0
      %v2860 = vadd.f32 0.0, %v2859
      %2861 = vdwg.mxu0
      %2862 = vmatprep.subr.mxu0 %v2772
      %2863 = vmatpush1.msra.mxu0 %v2771
      %2864 = vmatprep.subr.mxu0 0.0
      %2865 = vmatpush1.msra.mxu0 0.0
      %2866 = vmatprep.subr.mxu0 0.0
      %2867 = vmatpush1.msra.mxu0 0.0
      %2868 = vmatprep.subr.mxu0 0.0
      %2869 = vmatpush1.msra.mxu0 0.0
      %2870 = vmatprep.subr.mxu0 0.0
      %2871 = vmatpush1.msra.mxu0 0.0
      %2872 = vmatprep.subr.mxu0 0.0
      %2873 = vmatpush1.msra.mxu0 0.0
      %2874 = vmatprep.subr.mxu0 0.0
      %2875 = vmatpush1.msra.mxu0 0.0
      %2876 = vmatprep.subr.mxu0 0.0
      %2877 = vmatpush1.msra.mxu0 0.0
      %2878 = vmatprep.subr.mxu0 0.0
      %2879 = vmatpush1.msra.mxu0 0.0
      %2880 = vmatprep.subr.mxu0 0.0
      %2881 = vmatpush1.msra.mxu0 0.0
      %2882 = vmatprep.subr.mxu0 0.0
      %2883 = vmatpush1.msra.mxu0 0.0
      %2884 = vmatprep.subr.mxu0 0.0
      %2885 = vmatpush1.msra.mxu0 0.0
      %2886 = vmatprep.subr.mxu0 0.0
      %2887 = vmatpush1.msra.mxu0 0.0
      %2888 = vmatprep.subr.mxu0 0.0
      %2889 = vmatpush1.msra.mxu0 0.0
      %2890 = vmatprep.subr.mxu0 0.0
      %2891 = vmatpush1.msra.mxu0 0.0
      %2892 = vmatprep.subr.mxu0 0.0
      %2893 = vmatpush1.msra.mxu0 0.0
      %2894 = vmatprep.subr.mxu0 0.0
      %2895 = vmatpush1.msra.mxu0 0.0
      %2896 = vmatprep.subr.mxu0 0.0
      %2897 = vmatpush1.msra.mxu0 0.0
      %2898 = vmatprep.subr.mxu0 0.0
      %2899 = vmatpush1.msra.mxu0 0.0
      %2900 = vmatprep.subr.mxu0 0.0
      %2901 = vmatpush1.msra.mxu0 0.0
      %2902 = vmatprep.subr.mxu0 0.0
      %2903 = vmatpush1.msra.mxu0 0.0
      %2904 = vmatprep.subr.mxu0 0.0
      %2905 = vmatpush1.msra.mxu0 0.0
      %2906 = vmatprep.subr.mxu0 0.0
      %2907 = vmatpush1.msra.mxu0 0.0
      %2908 = vmatprep.subr.mxu0 0.0
      %2909 = vmatpush1.msra.mxu0 0.0
      %2910 = vmatprep.subr.mxu0 0.0
      %2911 = vmatpush1.msra.mxu0 0.0
      %2912 = vmatprep.subr.mxu0 0.0
      %2913 = vmatpush1.msra.mxu0 0.0
      %2914 = vmatprep.subr.mxu0 0.0
      %2915 = vmatpush1.msra.mxu0 0.0
      %2916 = vmatprep.subr.mxu0 0.0
      %2917 = vmatpush1.msra.mxu0 0.0
      %2918 = vmatprep.subr.mxu0 0.0
      %2919 = vmatpush1.msra.mxu0 0.0
      %2920 = vmatprep.subr.mxu0 0.0
      %2921 = vmatpush1.msra.mxu0 0.0
      %2922 = vmatprep.subr.mxu0 0.0
      %2923 = vmatpush1.msra.mxu0 0.0
      %2924 = vmatprep.subr.mxu0 0.0
      %2925 = vmatpush1.msra.mxu0 0.0
      %2926 = vmatprep.mubr.f32.mxu0 0.0
      %2927 = vmatmul.mubr.f32.gmra.mrb[0].mxu0 %v2789
      %v2928 = vpop.f32.mrb[0].mxu0
      %v2929 = vadd.f32 0.0, %v2928
      %v2930 = vpop.f32.mrb[0].mxu0
      %v2931 = vadd.f32 0.0, %v2930
      %2932 = vdwg.mxu0
      %2933 = vmatprep.subr.mxu0 %v2774
      %2934 = vmatpush1.msra.mxu0 %v2773
      %2935 = vmatprep.subr.mxu0 0.0
      %2936 = vmatpush1.msra.mxu0 0.0
      %2937 = vmatprep.subr.mxu0 0.0
      %2938 = vmatpush1.msra.mxu0 0.0
      %2939 = vmatprep.subr.mxu0 0.0
      %2940 = vmatpush1.msra.mxu0 0.0
      %2941 = vmatprep.subr.mxu0 0.0
      %2942 = vmatpush1.msra.mxu0 0.0
      %2943 = vmatprep.subr.mxu0 0.0
      %2944 = vmatpush1.msra.mxu0 0.0
      %2945 = vmatprep.subr.mxu0 0.0
      %2946 = vmatpush1.msra.mxu0 0.0
      %2947 = vmatprep.subr.mxu0 0.0
      %2948 = vmatpush1.msra.mxu0 0.0
      %2949 = vmatprep.subr.mxu0 0.0
      %2950 = vmatpush1.msra.mxu0 0.0
      %2951 = vmatprep.subr.mxu0 0.0
      %2952 = vmatpush1.msra.mxu0 0.0
      %2953 = vmatprep.subr.mxu0 0.0
      %2954 = vmatpush1.msra.mxu0 0.0
      %2955 = vmatprep.subr.mxu0 0.0
      %2956 = vmatpush1.msra.mxu0 0.0
      %2957 = vmatprep.subr.mxu0 0.0
      %2958 = vmatpush1.msra.mxu0 0.0
      %2959 = vmatprep.subr.mxu0 0.0
      %2960 = vmatpush1.msra.mxu0 0.0
      %2961 = vmatprep.subr.mxu0 0.0
      %2962 = vmatpush1.msra.mxu0 0.0
      %2963 = vmatprep.subr.mxu0 0.0
      %2964 = vmatpush1.msra.mxu0 0.0
      %2965 = vmatprep.subr.mxu0 0.0
      %2966 = vmatpush1.msra.mxu0 0.0
      %2967 = vmatprep.subr.mxu0 0.0
      %2968 = vmatpush1.msra.mxu0 0.0
      %2969 = vmatprep.subr.mxu0 0.0
      %2970 = vmatpush1.msra.mxu0 0.0
      %2971 = vmatprep.subr.mxu0 0.0
      %2972 = vmatpush1.msra.mxu0 0.0
      %2973 = vmatprep.subr.mxu0 0.0
      %2974 = vmatpush1.msra.mxu0 0.0
      %2975 = vmatprep.subr.mxu0 0.0
      %2976 = vmatpush1.msra.mxu0 0.0
      %2977 = vmatprep.subr.mxu0 0.0
      %2978 = vmatpush1.msra.mxu0 0.0
      %2979 = vmatprep.subr.mxu0 0.0
      %2980 = vmatpush1.msra.mxu0 0.0
      %2981 = vmatprep.subr.mxu0 0.0
      %2982 = vmatpush1.msra.mxu0 0.0
      %2983 = vmatprep.subr.mxu0 0.0
      %2984 = vmatpush1.msra.mxu0 0.0
      %2985 = vmatprep.subr.mxu0 0.0
      %2986 = vmatpush1.msra.mxu0 0.0
      %2987 = vmatprep.subr.mxu0 0.0
      %2988 = vmatpush1.msra.mxu0 0.0
      %2989 = vmatprep.subr.mxu0 0.0
      %2990 = vmatpush1.msra.mxu0 0.0
      %2991 = vmatprep.subr.mxu0 0.0
      %2992 = vmatpush1.msra.mxu0 0.0
      %2993 = vmatprep.subr.mxu0 0.0
      %2994 = vmatpush1.msra.mxu0 0.0
      %2995 = vmatprep.subr.mxu0 0.0
      %2996 = vmatpush1.msra.mxu0 0.0
      %2997 = vmatprep.mubr.f32.mxu0 0.0
      %2998 = vmatmul.mubr.f32.gmra.mrb[0].mxu0 %v2789
      %v2999 = vpop.f32.mrb[0].mxu0
      %v3000 = vadd.f32 0.0, %v2999
      %v3001 = vpop.f32.mrb[0].mxu0
      %v3002 = vadd.f32 0.0, %v3001
      %3003 = vdwg.mxu0
      %3004 = vmatprep.subr.mxu0 %v2776
      %3005 = vmatpush1.msra.mxu0 %v2775
      %3006 = vmatprep.subr.mxu0 0.0
      %3007 = vmatpush1.msra.mxu0 0.0
      %3008 = vmatprep.subr.mxu0 0.0
      %3009 = vmatpush1.msra.mxu0 0.0
      %3010 = vmatprep.subr.mxu0 0.0
      %3011 = vmatpush1.msra.mxu0 0.0
      %3012 = vmatprep.subr.mxu0 0.0
      %3013 = vmatpush1.msra.mxu0 0.0
      %3014 = vmatprep.subr.mxu0 0.0
      %3015 = vmatpush1.msra.mxu0 0.0
      %3016 = vmatprep.subr.mxu0 0.0
      %3017 = vmatpush1.msra.mxu0 0.0
      %3018 = vmatprep.subr.mxu0 0.0
      %3019 = vmatpush1.msra.mxu0 0.0
      %3020 = vmatprep.subr.mxu0 0.0
      %3021 = vmatpush1.msra.mxu0 0.0
      %3022 = vmatprep.subr.mxu0 0.0
      %3023 = vmatpush1.msra.mxu0 0.0
      %3024 = vmatprep.subr.mxu0 0.0
      %3025 = vmatpush1.msra.mxu0 0.0
      %3026 = vmatprep.subr.mxu0 0.0
      %3027 = vmatpush1.msra.mxu0 0.0
      %3028 = vmatprep.subr.mxu0 0.0
      %3029 = vmatpush1.msra.mxu0 0.0
      %3030 = vmatprep.subr.mxu0 0.0
      %3031 = vmatpush1.msra.mxu0 0.0
      %3032 = vmatprep.subr.mxu0 0.0
      %3033 = vmatpush1.msra.mxu0 0.0
      %3034 = vmatprep.subr.mxu0 0.0
      %3035 = vmatpush1.msra.mxu0 0.0
      %3036 = vmatprep.subr.mxu0 0.0
      %3037 = vmatpush1.msra.mxu0 0.0
      %3038 = vmatprep.subr.mxu0 0.0
      %3039 = vmatpush1.msra.mxu0 0.0
      %3040 = vmatprep.subr.mxu0 0.0
      %3041 = vmatpush1.msra.mxu0 0.0
      %3042 = vmatprep.subr.mxu0 0.0
      %3043 = vmatpush1.msra.mxu0 0.0
      %3044 = vmatprep.subr.mxu0 0.0
      %3045 = vmatpush1.msra.mxu0 0.0
      %3046 = vmatprep.subr.mxu0 0.0
      %3047 = vmatpush1.msra.mxu0 0.0
      %3048 = vmatprep.subr.mxu0 0.0
      %3049 = vmatpush1.msra.mxu0 0.0
      %3050 = vmatprep.subr.mxu0 0.0
      %3051 = vmatpush1.msra.mxu0 0.0
      %3052 = vmatprep.subr.mxu0 0.0
      %3053 = vmatpush1.msra.mxu0 0.0
      %3054 = vmatprep.subr.mxu0 0.0
      %3055 = vmatpush1.msra.mxu0 0.0
      %3056 = vmatprep.subr.mxu0 0.0
      %3057 = vmatpush1.msra.mxu0 0.0
      %3058 = vmatprep.subr.mxu0 0.0
      %3059 = vmatpush1.msra.mxu0 0.0
      %3060 = vmatprep.subr.mxu0 0.0
      %3061 = vmatpush1.msra.mxu0 0.0
      %3062 = vmatprep.subr.mxu0 0.0
      %3063 = vmatpush1.msra.mxu0 0.0
      %3064 = vmatprep.subr.mxu0 0.0
      %3065 = vmatpush1.msra.mxu0 0.0
      %3066 = vmatprep.subr.mxu0 0.0
      %3067 = vmatpush1.msra.mxu0 0.0
      %3068 = vmatprep.mubr.f32.mxu0 0.0
      %3069 = vmatmul.mubr.f32.gmra.mrb[0].mxu0 %v2789
      %v3070 = vpop.f32.mrb[0].mxu0
      %v3071 = vadd.f32 0.0, %v3070
      %v3072 = vpop.f32.mrb[0].mxu0
      %v3073 = vadd.f32 0.0, %v3072
      %3074 = vdwg.mxu0
      %3075 = vmatprep.subr.mxu0 %v2767
      %3076 = vmatpush1.msra.mxu0 %v2777
      %3077 = vmatprep.subr.mxu0 0.0
      %3078 = vmatpush1.msra.mxu0 0.0
      %3079 = vmatprep.subr.mxu0 0.0
      %3080 = vmatpush1.msra.mxu0 0.0
      %3081 = vmatprep.subr.mxu0 0.0
      %3082 = vmatpush1.msra.mxu0 0.0
      %3083 = vmatprep.subr.mxu0 0.0
      %3084 = vmatpush1.msra.mxu0 0.0
      %3085 = vmatprep.subr.mxu0 0.0
      %3086 = vmatpush1.msra.mxu0 0.0
      %3087 = vmatprep.subr.mxu0 0.0
      %3088 = vmatpush1.msra.mxu0 0.0
      %3089 = vmatprep.subr.mxu0 0.0
      %3090 = vmatpush1.msra.mxu0 0.0
      %3091 = vmatprep.subr.mxu0 0.0
      %3092 = vmatpush1.msra.mxu0 0.0
      %3093 = vmatprep.subr.mxu0 0.0
      %3094 = vmatpush1.msra.mxu0 0.0
      %3095 = vmatprep.subr.mxu0 0.0
      %3096 = vmatpush1.msra.mxu0 0.0
      %3097 = vmatprep.subr.mxu0 0.0
      %3098 = vmatpush1.msra.mxu0 0.0
      %3099 = vmatprep.subr.mxu0 0.0
      %3100 = vmatpush1.msra.mxu0 0.0
      %3101 = vmatprep.subr.mxu0 0.0
      %3102 = vmatpush1.msra.mxu0 0.0
      %3103 = vmatprep.subr.mxu0 0.0
      %3104 = vmatpush1.msra.mxu0 0.0
      %3105 = vmatprep.subr.mxu0 0.0
      %3106 = vmatpush1.msra.mxu0 0.0
      %3107 = vmatprep.subr.mxu0 0.0
      %3108 = vmatpush1.msra.mxu0 0.0
      %3109 = vmatprep.subr.mxu0 0.0
      %3110 = vmatpush1.msra.mxu0 0.0
      %3111 = vmatprep.subr.mxu0 0.0
      %3112 = vmatpush1.msra.mxu0 0.0
      %3113 = vmatprep.subr.mxu0 0.0
      %3114 = vmatpush1.msra.mxu0 0.0
      %3115 = vmatprep.subr.mxu0 0.0
      %3116 = vmatpush1.msra.mxu0 0.0
      %3117 = vmatprep.subr.mxu0 0.0
      %3118 = vmatpush1.msra.mxu0 0.0
      %3119 = vmatprep.subr.mxu0 0.0
      %3120 = vmatpush1.msra.mxu0 0.0
      %3121 = vmatprep.subr.mxu0 0.0
      %3122 = vmatpush1.msra.mxu0 0.0
      %3123 = vmatprep.subr.mxu0 0.0
      %3124 = vmatpush1.msra.mxu0 0.0
      %3125 = vmatprep.subr.mxu0 0.0
      %3126 = vmatpush1.msra.mxu0 0.0
      %3127 = vmatprep.subr.mxu0 0.0
      %3128 = vmatpush1.msra.mxu0 0.0
      %3129 = vmatprep.subr.mxu0 0.0
      %3130 = vmatpush1.msra.mxu0 0.0
      %3131 = vmatprep.subr.mxu0 0.0
      %3132 = vmatpush1.msra.mxu0 0.0
      %3133 = vmatprep.subr.mxu0 0.0
      %3134 = vmatpush1.msra.mxu0 0.0
      %3135 = vmatprep.subr.mxu0 0.0
      %3136 = vmatpush1.msra.mxu0 0.0
      %3137 = vmatprep.subr.mxu0 0.0
      %3138 = vmatpush1.msra.mxu0 0.0
      %3139 = vmatprep.mubr.f32.mxu0 0.0
      %3140 = vmatmul.mubr.f32.gmra.mrb[0].mxu0 %v2789
      %v3141 = vpop.f32.mrb[0].mxu0
      %v3142 = vadd.f32 0.0, %v3141
      %v3143 = vpop.f32.mrb[0].mxu0
      %v3144 = vadd.f32 0.0, %v3143
      %3145 = vdwg.mxu0
      %v3146 = vadd.f32 %v2736, %v2858
      %v3147 = vadd.f32 %v2737, %v2860
      %v3148 = vadd.f32 %v2738, %v2929
      %v3149 = vadd.f32 %v2739, %v2931
      %v3150 = vadd.f32 %v2740, %v3000
      %v3151 = vadd.f32 %v2741, %v3002
      %v3152 = vadd.f32 %v2742, %v3071
      %v3153 = vadd.f32 %v2743, %v3073
      %v3154 = vadd.f32 %v2744, %v3142
      %v3155 = vadd.f32 %v2745, %v3144
      %s3156 = scalar_lea.vmem %s2, 24
      %v3157 = vld [vmem:[%s3156] sm:$0xf]
      %3158 = vrot.lane.b32.xlu0 %v737, 60
      %v3159 = vpop.permute.xlu0 %3158
      %3160 = vrot.lane.b32.xlu0 %v738, 60
      %v3161 = vpop.permute.xlu0 %3160
      %3162 = vrot.lane.b32.xlu0 %v739, 60
      %v3163 = vpop.permute.xlu0 %3162
      %3164 = vrot.lane.b32.xlu0 %v740, 60
      %v3165 = vpop.permute.xlu0 %3164
      %3166 = vrot.lane.b32.xlu0 %v741, 60
      %v3167 = vpop.permute.xlu0 %3166
      %3168 = vrot.lane.b32.xlu0 %v742, 60
      %v3169 = vpop.permute.xlu0 %3168
      %3170 = vrot.lane.b32.xlu0 %v743, 60
      %v3171 = vpop.permute.xlu0 %3170
      %3172 = vrot.lane.b32.xlu0 %v744, 60
      %v3173 = vpop.permute.xlu0 %3172
      %3174 = vrot.lane.b32.xlu0 %v745, 60
      %v3175 = vpop.permute.xlu0 %3174
      %3176 = vrot.lane.b32.xlu0 %v746, 60
      %v3177 = vpop.permute.xlu0 %3176
      %vm3178 = vcmask 490496
      %v3179 = vsel %vm3178, %v3159, %v3161
      %v3180 = vsel %vm3178, %v3161, %v3163
      %v3181 = vsel %vm3178, %v3163, %v3165
      %v3182 = vsel %vm3178, %v3165, %v3167
      %v3183 = vsel %vm3178, %v3167, %v3169
      %v3184 = vsel %vm3178, %v3169, %v3171
      %v3185 = vsel %vm3178, %v3171, %v3173
      %v3186 = vsel %vm3178, %v3173, %v3175
      %v3187 = vsel %vm3178, %v3175, %v3177
      %v3199 = vsel %vm799, %v3157, 0
      %3201 = vmatprep.subr.mxu0 %v3180
      %3202 = vmatpush1.msra.mxu0 %v3179
      %3203 = vmatprep.subr.mxu0 0.0
      %3204 = vmatpush1.msra.mxu0 0.0
      %3205 = vmatprep.subr.mxu0 0.0
      %3206 = vmatpush1.msra.mxu0 0.0
      %3207 = vmatprep.subr.mxu0 0.0
      %3208 = vmatpush1.msra.mxu0 0.0
      %3209 = vmatprep.subr.mxu0 0.0
      %3210 = vmatpush1.msra.mxu0 0.0
      %3211 = vmatprep.subr.mxu0 0.0
      %3212 = vmatpush1.msra.mxu0 0.0
      %3213 = vmatprep.subr.mxu0 0.0
      %3214 = vmatpush1.msra.mxu0 0.0
      %3215 = vmatprep.subr.mxu0 0.0
      %3216 = vmatpush1.msra.mxu0 0.0
      %3217 = vmatprep.subr.mxu0 0.0
      %3218 = vmatpush1.msra.mxu0 0.0
      %3219 = vmatprep.subr.mxu0 0.0
      %3220 = vmatpush1.msra.mxu0 0.0
      %3221 = vmatprep.subr.mxu0 0.0
      %3222 = vmatpush1.msra.mxu0 0.0
      %3223 = vmatprep.subr.mxu0 0.0
      %3224 = vmatpush1.msra.mxu0 0.0
      %3225 = vmatprep.subr.mxu0 0.0
      %3226 = vmatpush1.msra.mxu0 0.0
      %3227 = vmatprep.subr.mxu0 0.0
      %3228 = vmatpush1.msra.mxu0 0.0
      %3229 = vmatprep.subr.mxu0 0.0
      %3230 = vmatpush1.msra.mxu0 0.0
      %3231 = vmatprep.subr.mxu0 0.0
      %3232 = vmatpush1.msra.mxu0 0.0
      %3233 = vmatprep.subr.mxu0 0.0
      %3234 = vmatpush1.msra.mxu0 0.0
      %3235 = vmatprep.subr.mxu0 0.0
      %3236 = vmatpush1.msra.mxu0 0.0
      %3237 = vmatprep.subr.mxu0 0.0
      %3238 = vmatpush1.msra.mxu0 0.0
      %3239 = vmatprep.subr.mxu0 0.0
      %3240 = vmatpush1.msra.mxu0 0.0
      %3241 = vmatprep.subr.mxu0 0.0
      %3242 = vmatpush1.msra.mxu0 0.0
      %3243 = vmatprep.subr.mxu0 0.0
      %3244 = vmatpush1.msra.mxu0 0.0
      %3245 = vmatprep.subr.mxu0 0.0
      %3246 = vmatpush1.msra.mxu0 0.0
      %3247 = vmatprep.subr.mxu0 0.0
      %3248 = vmatpush1.msra.mxu0 0.0
      %3249 = vmatprep.subr.mxu0 0.0
      %3250 = vmatpush1.msra.mxu0 0.0
      %3251 = vmatprep.subr.mxu0 0.0
      %3252 = vmatpush1.msra.mxu0 0.0
      %3253 = vmatprep.subr.mxu0 0.0
      %3254 = vmatpush1.msra.mxu0 0.0
      %3255 = vmatprep.subr.mxu0 0.0
      %3256 = vmatpush1.msra.mxu0 0.0
      %3257 = vmatprep.subr.mxu0 0.0
      %3258 = vmatpush1.msra.mxu0 0.0
      %3259 = vmatprep.subr.mxu0 0.0
      %3260 = vmatpush1.msra.mxu0 0.0
      %3261 = vmatprep.subr.mxu0 0.0
      %3262 = vmatpush1.msra.mxu0 0.0
      %3263 = vmatprep.subr.mxu0 0.0
      %3264 = vmatpush1.msra.mxu0 0.0
      %3265 = vmatprep.mubr.f32.mxu0 0.0
      %3266 = vmatmul.mubr.f32.gmra.mrb[0].mxu0 %v3199
      %v3267 = vpop.f32.mrb[0].mxu0
      %v3268 = vadd.f32 0.0, %v3267
      %v3269 = vpop.f32.mrb[0].mxu0
      %v3270 = vadd.f32 0.0, %v3269
      %3271 = vdwg.mxu0
      %3272 = vmatprep.subr.mxu0 %v3182
      %3273 = vmatpush1.msra.mxu0 %v3181
      %3274 = vmatprep.subr.mxu0 0.0
      %3275 = vmatpush1.msra.mxu0 0.0
      %3276 = vmatprep.subr.mxu0 0.0
      %3277 = vmatpush1.msra.mxu0 0.0
      %3278 = vmatprep.subr.mxu0 0.0
      %3279 = vmatpush1.msra.mxu0 0.0
      %3280 = vmatprep.subr.mxu0 0.0
      %3281 = vmatpush1.msra.mxu0 0.0
      %3282 = vmatprep.subr.mxu0 0.0
      %3283 = vmatpush1.msra.mxu0 0.0
      %3284 = vmatprep.subr.mxu0 0.0
      %3285 = vmatpush1.msra.mxu0 0.0
      %3286 = vmatprep.subr.mxu0 0.0
      %3287 = vmatpush1.msra.mxu0 0.0
      %3288 = vmatprep.subr.mxu0 0.0
      %3289 = vmatpush1.msra.mxu0 0.0
      %3290 = vmatprep.subr.mxu0 0.0
      %3291 = vmatpush1.msra.mxu0 0.0
      %3292 = vmatprep.subr.mxu0 0.0
      %3293 = vmatpush1.msra.mxu0 0.0
      %3294 = vmatprep.subr.mxu0 0.0
      %3295 = vmatpush1.msra.mxu0 0.0
      %3296 = vmatprep.subr.mxu0 0.0
      %3297 = vmatpush1.msra.mxu0 0.0
      %3298 = vmatprep.subr.mxu0 0.0
      %3299 = vmatpush1.msra.mxu0 0.0
      %3300 = vmatprep.subr.mxu0 0.0
      %3301 = vmatpush1.msra.mxu0 0.0
      %3302 = vmatprep.subr.mxu0 0.0
      %3303 = vmatpush1.msra.mxu0 0.0
      %3304 = vmatprep.subr.mxu0 0.0
      %3305 = vmatpush1.msra.mxu0 0.0
      %3306 = vmatprep.subr.mxu0 0.0
      %3307 = vmatpush1.msra.mxu0 0.0
      %3308 = vmatprep.subr.mxu0 0.0
      %3309 = vmatpush1.msra.mxu0 0.0
      %3310 = vmatprep.subr.mxu0 0.0
      %3311 = vmatpush1.msra.mxu0 0.0
      %3312 = vmatprep.subr.mxu0 0.0
      %3313 = vmatpush1.msra.mxu0 0.0
      %3314 = vmatprep.subr.mxu0 0.0
      %3315 = vmatpush1.msra.mxu0 0.0
      %3316 = vmatprep.subr.mxu0 0.0
      %3317 = vmatpush1.msra.mxu0 0.0
      %3318 = vmatprep.subr.mxu0 0.0
      %3319 = vmatpush1.msra.mxu0 0.0
      %3320 = vmatprep.subr.mxu0 0.0
      %3321 = vmatpush1.msra.mxu0 0.0
      %3322 = vmatprep.subr.mxu0 0.0
      %3323 = vmatpush1.msra.mxu0 0.0
      %3324 = vmatprep.subr.mxu0 0.0
      %3325 = vmatpush1.msra.mxu0 0.0
      %3326 = vmatprep.subr.mxu0 0.0
      %3327 = vmatpush1.msra.mxu0 0.0
      %3328 = vmatprep.subr.mxu0 0.0
      %3329 = vmatpush1.msra.mxu0 0.0
      %3330 = vmatprep.subr.mxu0 0.0
      %3331 = vmatpush1.msra.mxu0 0.0
      %3332 = vmatprep.subr.mxu0 0.0
      %3333 = vmatpush1.msra.mxu0 0.0
      %3334 = vmatprep.subr.mxu0 0.0
      %3335 = vmatpush1.msra.mxu0 0.0
      %3336 = vmatprep.mubr.f32.mxu0 0.0
      %3337 = vmatmul.mubr.f32.gmra.mrb[0].mxu0 %v3199
      %v3338 = vpop.f32.mrb[0].mxu0
      %v3339 = vadd.f32 0.0, %v3338
      %v3340 = vpop.f32.mrb[0].mxu0
      %v3341 = vadd.f32 0.0, %v3340
      %3342 = vdwg.mxu0
      %3343 = vmatprep.subr.mxu0 %v3184
      %3344 = vmatpush1.msra.mxu0 %v3183
      %3345 = vmatprep.subr.mxu0 0.0
      %3346 = vmatpush1.msra.mxu0 0.0
      %3347 = vmatprep.subr.mxu0 0.0
      %3348 = vmatpush1.msra.mxu0 0.0
      %3349 = vmatprep.subr.mxu0 0.0
      %3350 = vmatpush1.msra.mxu0 0.0
      %3351 = vmatprep.subr.mxu0 0.0
      %3352 = vmatpush1.msra.mxu0 0.0
      %3353 = vmatprep.subr.mxu0 0.0
      %3354 = vmatpush1.msra.mxu0 0.0
      %3355 = vmatprep.subr.mxu0 0.0
      %3356 = vmatpush1.msra.mxu0 0.0
      %3357 = vmatprep.subr.mxu0 0.0
      %3358 = vmatpush1.msra.mxu0 0.0
      %3359 = vmatprep.subr.mxu0 0.0
      %3360 = vmatpush1.msra.mxu0 0.0
      %3361 = vmatprep.subr.mxu0 0.0
      %3362 = vmatpush1.msra.mxu0 0.0
      %3363 = vmatprep.subr.mxu0 0.0
      %3364 = vmatpush1.msra.mxu0 0.0
      %3365 = vmatprep.subr.mxu0 0.0
      %3366 = vmatpush1.msra.mxu0 0.0
      %3367 = vmatprep.subr.mxu0 0.0
      %3368 = vmatpush1.msra.mxu0 0.0
      %3369 = vmatprep.subr.mxu0 0.0
      %3370 = vmatpush1.msra.mxu0 0.0
      %3371 = vmatprep.subr.mxu0 0.0
      %3372 = vmatpush1.msra.mxu0 0.0
      %3373 = vmatprep.subr.mxu0 0.0
      %3374 = vmatpush1.msra.mxu0 0.0
      %3375 = vmatprep.subr.mxu0 0.0
      %3376 = vmatpush1.msra.mxu0 0.0
      %3377 = vmatprep.subr.mxu0 0.0
      %3378 = vmatpush1.msra.mxu0 0.0
      %3379 = vmatprep.subr.mxu0 0.0
      %3380 = vmatpush1.msra.mxu0 0.0
      %3381 = vmatprep.subr.mxu0 0.0
      %3382 = vmatpush1.msra.mxu0 0.0
      %3383 = vmatprep.subr.mxu0 0.0
      %3384 = vmatpush1.msra.mxu0 0.0
      %3385 = vmatprep.subr.mxu0 0.0
      %3386 = vmatpush1.msra.mxu0 0.0
      %3387 = vmatprep.subr.mxu0 0.0
      %3388 = vmatpush1.msra.mxu0 0.0
      %3389 = vmatprep.subr.mxu0 0.0
      %3390 = vmatpush1.msra.mxu0 0.0
      %3391 = vmatprep.subr.mxu0 0.0
      %3392 = vmatpush1.msra.mxu0 0.0
      %3393 = vmatprep.subr.mxu0 0.0
      %3394 = vmatpush1.msra.mxu0 0.0
      %3395 = vmatprep.subr.mxu0 0.0
      %3396 = vmatpush1.msra.mxu0 0.0
      %3397 = vmatprep.subr.mxu0 0.0
      %3398 = vmatpush1.msra.mxu0 0.0
      %3399 = vmatprep.subr.mxu0 0.0
      %3400 = vmatpush1.msra.mxu0 0.0
      %3401 = vmatprep.subr.mxu0 0.0
      %3402 = vmatpush1.msra.mxu0 0.0
      %3403 = vmatprep.subr.mxu0 0.0
      %3404 = vmatpush1.msra.mxu0 0.0
      %3405 = vmatprep.subr.mxu0 0.0
      %3406 = vmatpush1.msra.mxu0 0.0
      %3407 = vmatprep.mubr.f32.mxu0 0.0
      %3408 = vmatmul.mubr.f32.gmra.mrb[0].mxu0 %v3199
      %v3409 = vpop.f32.mrb[0].mxu0
      %v3410 = vadd.f32 0.0, %v3409
      %v3411 = vpop.f32.mrb[0].mxu0
      %v3412 = vadd.f32 0.0, %v3411
      %3413 = vdwg.mxu0
      %3414 = vmatprep.subr.mxu0 %v3186
      %3415 = vmatpush1.msra.mxu0 %v3185
      %3416 = vmatprep.subr.mxu0 0.0
      %3417 = vmatpush1.msra.mxu0 0.0
      %3418 = vmatprep.subr.mxu0 0.0
      %3419 = vmatpush1.msra.mxu0 0.0
      %3420 = vmatprep.subr.mxu0 0.0
      %3421 = vmatpush1.msra.mxu0 0.0
      %3422 = vmatprep.subr.mxu0 0.0
      %3423 = vmatpush1.msra.mxu0 0.0
      %3424 = vmatprep.subr.mxu0 0.0
      %3425 = vmatpush1.msra.mxu0 0.0
      %3426 = vmatprep.subr.mxu0 0.0
      %3427 = vmatpush1.msra.mxu0 0.0
      %3428 = vmatprep.subr.mxu0 0.0
      %3429 = vmatpush1.msra.mxu0 0.0
      %3430 = vmatprep.subr.mxu0 0.0
      %3431 = vmatpush1.msra.mxu0 0.0
      %3432 = vmatprep.subr.mxu0 0.0
      %3433 = vmatpush1.msra.mxu0 0.0
      %3434 = vmatprep.subr.mxu0 0.0
      %3435 = vmatpush1.msra.mxu0 0.0
      %3436 = vmatprep.subr.mxu0 0.0
      %3437 = vmatpush1.msra.mxu0 0.0
      %3438 = vmatprep.subr.mxu0 0.0
      %3439 = vmatpush1.msra.mxu0 0.0
      %3440 = vmatprep.subr.mxu0 0.0
      %3441 = vmatpush1.msra.mxu0 0.0
      %3442 = vmatprep.subr.mxu0 0.0
      %3443 = vmatpush1.msra.mxu0 0.0
      %3444 = vmatprep.subr.mxu0 0.0
      %3445 = vmatpush1.msra.mxu0 0.0
      %3446 = vmatprep.subr.mxu0 0.0
      %3447 = vmatpush1.msra.mxu0 0.0
      %3448 = vmatprep.subr.mxu0 0.0
      %3449 = vmatpush1.msra.mxu0 0.0
      %3450 = vmatprep.subr.mxu0 0.0
      %3451 = vmatpush1.msra.mxu0 0.0
      %3452 = vmatprep.subr.mxu0 0.0
      %3453 = vmatpush1.msra.mxu0 0.0
      %3454 = vmatprep.subr.mxu0 0.0
      %3455 = vmatpush1.msra.mxu0 0.0
      %3456 = vmatprep.subr.mxu0 0.0
      %3457 = vmatpush1.msra.mxu0 0.0
      %3458 = vmatprep.subr.mxu0 0.0
      %3459 = vmatpush1.msra.mxu0 0.0
      %3460 = vmatprep.subr.mxu0 0.0
      %3461 = vmatpush1.msra.mxu0 0.0
      %3462 = vmatprep.subr.mxu0 0.0
      %3463 = vmatpush1.msra.mxu0 0.0
      %3464 = vmatprep.subr.mxu0 0.0
      %3465 = vmatpush1.msra.mxu0 0.0
      %3466 = vmatprep.subr.mxu0 0.0
      %3467 = vmatpush1.msra.mxu0 0.0
      %3468 = vmatprep.subr.mxu0 0.0
      %3469 = vmatpush1.msra.mxu0 0.0
      %3470 = vmatprep.subr.mxu0 0.0
      %3471 = vmatpush1.msra.mxu0 0.0
      %3472 = vmatprep.subr.mxu0 0.0
      %3473 = vmatpush1.msra.mxu0 0.0
      %3474 = vmatprep.subr.mxu0 0.0
      %3475 = vmatpush1.msra.mxu0 0.0
      %3476 = vmatprep.subr.mxu0 0.0
      %3477 = vmatpush1.msra.mxu0 0.0
      %3478 = vmatprep.mubr.f32.mxu0 0.0
      %3479 = vmatmul.mubr.f32.gmra.mrb[0].mxu0 %v3199
      %v3480 = vpop.f32.mrb[0].mxu0
      %v3481 = vadd.f32 0.0, %v3480
      %v3482 = vpop.f32.mrb[0].mxu0
      %v3483 = vadd.f32 0.0, %v3482
      %3484 = vdwg.mxu0
      %3485 = vmatprep.subr.mxu0 %v3177
      %3486 = vmatpush1.msra.mxu0 %v3187
      %3487 = vmatprep.subr.mxu0 0.0
      %3488 = vmatpush1.msra.mxu0 0.0
      %3489 = vmatprep.subr.mxu0 0.0
      %3490 = vmatpush1.msra.mxu0 0.0
      %3491 = vmatprep.subr.mxu0 0.0
      %3492 = vmatpush1.msra.mxu0 0.0
      %3493 = vmatprep.subr.mxu0 0.0
      %3494 = vmatpush1.msra.mxu0 0.0
      %3495 = vmatprep.subr.mxu0 0.0
      %3496 = vmatpush1.msra.mxu0 0.0
      %3497 = vmatprep.subr.mxu0 0.0
      %3498 = vmatpush1.msra.mxu0 0.0
      %3499 = vmatprep.subr.mxu0 0.0
      %3500 = vmatpush1.msra.mxu0 0.0
      %3501 = vmatprep.subr.mxu0 0.0
      %3502 = vmatpush1.msra.mxu0 0.0
      %3503 = vmatprep.subr.mxu0 0.0
      %3504 = vmatpush1.msra.mxu0 0.0
      %3505 = vmatprep.subr.mxu0 0.0
      %3506 = vmatpush1.msra.mxu0 0.0
      %3507 = vmatprep.subr.mxu0 0.0
      %3508 = vmatpush1.msra.mxu0 0.0
      %3509 = vmatprep.subr.mxu0 0.0
      %3510 = vmatpush1.msra.mxu0 0.0
      %3511 = vmatprep.subr.mxu0 0.0
      %3512 = vmatpush1.msra.mxu0 0.0
      %3513 = vmatprep.subr.mxu0 0.0
      %3514 = vmatpush1.msra.mxu0 0.0
      %3515 = vmatprep.subr.mxu0 0.0
      %3516 = vmatpush1.msra.mxu0 0.0
      %3517 = vmatprep.subr.mxu0 0.0
      %3518 = vmatpush1.msra.mxu0 0.0
      %3519 = vmatprep.subr.mxu0 0.0
      %3520 = vmatpush1.msra.mxu0 0.0
      %3521 = vmatprep.subr.mxu0 0.0
      %3522 = vmatpush1.msra.mxu0 0.0
      %3523 = vmatprep.subr.mxu0 0.0
      %3524 = vmatpush1.msra.mxu0 0.0
      %3525 = vmatprep.subr.mxu0 0.0
      %3526 = vmatpush1.msra.mxu0 0.0
      %3527 = vmatprep.subr.mxu0 0.0
      %3528 = vmatpush1.msra.mxu0 0.0
      %3529 = vmatprep.subr.mxu0 0.0
      %3530 = vmatpush1.msra.mxu0 0.0
      %3531 = vmatprep.subr.mxu0 0.0
      %3532 = vmatpush1.msra.mxu0 0.0
      %3533 = vmatprep.subr.mxu0 0.0
      %3534 = vmatpush1.msra.mxu0 0.0
      %3535 = vmatprep.subr.mxu0 0.0
      %3536 = vmatpush1.msra.mxu0 0.0
      %3537 = vmatprep.subr.mxu0 0.0
      %3538 = vmatpush1.msra.mxu0 0.0
      %3539 = vmatprep.subr.mxu0 0.0
      %3540 = vmatpush1.msra.mxu0 0.0
      %3541 = vmatprep.subr.mxu0 0.0
      %3542 = vmatpush1.msra.mxu0 0.0
      %3543 = vmatprep.subr.mxu0 0.0
      %3544 = vmatpush1.msra.mxu0 0.0
      %3545 = vmatprep.subr.mxu0 0.0
      %3546 = vmatpush1.msra.mxu0 0.0
      %3547 = vmatprep.subr.mxu0 0.0
      %3548 = vmatpush1.msra.mxu0 0.0
      %3549 = vmatprep.mubr.f32.mxu0 0.0
      %3550 = vmatmul.mubr.f32.gmra.mrb[0].mxu0 %v3199
      %v3551 = vpop.f32.mrb[0].mxu0
      %v3552 = vadd.f32 0.0, %v3551
      %v3553 = vpop.f32.mrb[0].mxu0
      %v3554 = vadd.f32 0.0, %v3553
      %3555 = vdwg.mxu0
      %v3556 = vadd.f32 %v3146, %v3268
      %v3557 = vadd.f32 %v3147, %v3270
      %v3558 = vadd.f32 %v3148, %v3339
      %v3559 = vadd.f32 %v3149, %v3341
      %v3560 = vadd.f32 %v3150, %v3410
      %v3561 = vadd.f32 %v3151, %v3412
      %v3562 = vadd.f32 %v3152, %v3481
      %v3563 = vadd.f32 %v3153, %v3483
      %v3564 = vadd.f32 %v3154, %v3552
      %v3565 = vadd.f32 %v3155, %v3554
      %s3566 = scalar_lea.vmem %s2, 28
      %v3567 = vld [vmem:[%s3566] sm:$0xf]
      %3568 = vrot.lane.b32.xlu0 %v737, 59
      %v3569 = vpop.permute.xlu0 %3568
      %3570 = vrot.lane.b32.xlu0 %v738, 59
      %v3571 = vpop.permute.xlu0 %3570
      %3572 = vrot.lane.b32.xlu0 %v739, 59
      %v3573 = vpop.permute.xlu0 %3572
      %3574 = vrot.lane.b32.xlu0 %v740, 59
      %v3575 = vpop.permute.xlu0 %3574
      %3576 = vrot.lane.b32.xlu0 %v741, 59
      %v3577 = vpop.permute.xlu0 %3576
      %3578 = vrot.lane.b32.xlu0 %v742, 59
      %v3579 = vpop.permute.xlu0 %3578
      %3580 = vrot.lane.b32.xlu0 %v743, 59
      %v3581 = vpop.permute.xlu0 %3580
      %3582 = vrot.lane.b32.xlu0 %v744, 59
      %v3583 = vpop.permute.xlu0 %3582
      %3584 = vrot.lane.b32.xlu0 %v745, 59
      %v3585 = vpop.permute.xlu0 %3584
      %3586 = vrot.lane.b32.xlu0 %v746, 59
      %v3587 = vpop.permute.xlu0 %3586
      %vm3588 = vcmask 482304
      %v3589 = vsel %vm3588, %v3569, %v3571
      %v3590 = vsel %vm3588, %v3571, %v3573
      %v3591 = vsel %vm3588, %v3573, %v3575
      %v3592 = vsel %vm3588, %v3575, %v3577
      %v3593 = vsel %vm3588, %v3577, %v3579
      %v3594 = vsel %vm3588, %v3579, %v3581
      %v3595 = vsel %vm3588, %v3581, %v3583
      %v3596 = vsel %vm3588, %v3583, %v3585
      %v3597 = vsel %vm3588, %v3585, %v3587
      %v3609 = vsel %vm799, %v3567, 0
      %3611 = vmatprep.subr.mxu0 %v3590
      %3612 = vmatpush1.msra.mxu0 %v3589
      %3613 = vmatprep.subr.mxu0 0.0
      %3614 = vmatpush1.msra.mxu0 0.0
      %3615 = vmatprep.subr.mxu0 0.0
      %3616 = vmatpush1.msra.mxu0 0.0
      %3617 = vmatprep.subr.mxu0 0.0
      %3618 = vmatpush1.msra.mxu0 0.0
      %3619 = vmatprep.subr.mxu0 0.0
      %3620 = vmatpush1.msra.mxu0 0.0
      %3621 = vmatprep.subr.mxu0 0.0
      %3622 = vmatpush1.msra.mxu0 0.0
      %3623 = vmatprep.subr.mxu0 0.0
      %3624 = vmatpush1.msra.mxu0 0.0
      %3625 = vmatprep.subr.mxu0 0.0
      %3626 = vmatpush1.msra.mxu0 0.0
      %3627 = vmatprep.subr.mxu0 0.0
      %3628 = vmatpush1.msra.mxu0 0.0
      %3629 = vmatprep.subr.mxu0 0.0
      %3630 = vmatpush1.msra.mxu0 0.0
      %3631 = vmatprep.subr.mxu0 0.0
      %3632 = vmatpush1.msra.mxu0 0.0
      %3633 = vmatprep.subr.mxu0 0.0
      %3634 = vmatpush1.msra.mxu0 0.0
      %3635 = vmatprep.subr.mxu0 0.0
      %3636 = vmatpush1.msra.mxu0 0.0
      %3637 = vmatprep.subr.mxu0 0.0
      %3638 = vmatpush1.msra.mxu0 0.0
      %3639 = vmatprep.subr.mxu0 0.0
      %3640 = vmatpush1.msra.mxu0 0.0
      %3641 = vmatprep.subr.mxu0 0.0
      %3642 = vmatpush1.msra.mxu0 0.0
      %3643 = vmatprep.subr.mxu0 0.0
      %3644 = vmatpush1.msra.mxu0 0.0
      %3645 = vmatprep.subr.mxu0 0.0
      %3646 = vmatpush1.msra.mxu0 0.0
      %3647 = vmatprep.subr.mxu0 0.0
      %3648 = vmatpush1.msra.mxu0 0.0
      %3649 = vmatprep.subr.mxu0 0.0
      %3650 = vmatpush1.msra.mxu0 0.0
      %3651 = vmatprep.subr.mxu0 0.0
      %3652 = vmatpush1.msra.mxu0 0.0
      %3653 = vmatprep.subr.mxu0 0.0
      %3654 = vmatpush1.msra.mxu0 0.0
      %3655 = vmatprep.subr.mxu0 0.0
      %3656 = vmatpush1.msra.mxu0 0.0
      %3657 = vmatprep.subr.mxu0 0.0
      %3658 = vmatpush1.msra.mxu0 0.0
      %3659 = vmatprep.subr.mxu0 0.0
      %3660 = vmatpush1.msra.mxu0 0.0
      %3661 = vmatprep.subr.mxu0 0.0
      %3662 = vmatpush1.msra.mxu0 0.0
      %3663 = vmatprep.subr.mxu0 0.0
      %3664 = vmatpush1.msra.mxu0 0.0
      %3665 = vmatprep.subr.mxu0 0.0
      %3666 = vmatpush1.msra.mxu0 0.0
      %3667 = vmatprep.subr.mxu0 0.0
      %3668 = vmatpush1.msra.mxu0 0.0
      %3669 = vmatprep.subr.mxu0 0.0
      %3670 = vmatpush1.msra.mxu0 0.0
      %3671 = vmatprep.subr.mxu0 0.0
      %3672 = vmatpush1.msra.mxu0 0.0
      %3673 = vmatprep.subr.mxu0 0.0
      %3674 = vmatpush1.msra.mxu0 0.0
      %3675 = vmatprep.mubr.f32.mxu0 0.0
      %3676 = vmatmul.mubr.f32.gmra.mrb[0].mxu0 %v3609
      %v3677 = vpop.f32.mrb[0].mxu0
      %v3678 = vadd.f32 0.0, %v3677
      %v3679 = vpop.f32.mrb[0].mxu0
      %v3680 = vadd.f32 0.0, %v3679
      %3681 = vdwg.mxu0
      %3682 = vmatprep.subr.mxu0 %v3592
      %3683 = vmatpush1.msra.mxu0 %v3591
      %3684 = vmatprep.subr.mxu0 0.0
      %3685 = vmatpush1.msra.mxu0 0.0
      %3686 = vmatprep.subr.mxu0 0.0
      %3687 = vmatpush1.msra.mxu0 0.0
      %3688 = vmatprep.subr.mxu0 0.0
      %3689 = vmatpush1.msra.mxu0 0.0
      %3690 = vmatprep.subr.mxu0 0.0
      %3691 = vmatpush1.msra.mxu0 0.0
      %3692 = vmatprep.subr.mxu0 0.0
      %3693 = vmatpush1.msra.mxu0 0.0
      %3694 = vmatprep.subr.mxu0 0.0
      %3695 = vmatpush1.msra.mxu0 0.0
      %3696 = vmatprep.subr.mxu0 0.0
      %3697 = vmatpush1.msra.mxu0 0.0
      %3698 = vmatprep.subr.mxu0 0.0
      %3699 = vmatpush1.msra.mxu0 0.0
      %3700 = vmatprep.subr.mxu0 0.0
      %3701 = vmatpush1.msra.mxu0 0.0
      %3702 = vmatprep.subr.mxu0 0.0
      %3703 = vmatpush1.msra.mxu0 0.0
      %3704 = vmatprep.subr.mxu0 0.0
      %3705 = vmatpush1.msra.mxu0 0.0
      %3706 = vmatprep.subr.mxu0 0.0
      %3707 = vmatpush1.msra.mxu0 0.0
      %3708 = vmatprep.subr.mxu0 0.0
      %3709 = vmatpush1.msra.mxu0 0.0
      %3710 = vmatprep.subr.mxu0 0.0
      %3711 = vmatpush1.msra.mxu0 0.0
      %3712 = vmatprep.subr.mxu0 0.0
      %3713 = vmatpush1.msra.mxu0 0.0
      %3714 = vmatprep.subr.mxu0 0.0
      %3715 = vmatpush1.msra.mxu0 0.0
      %3716 = vmatprep.subr.mxu0 0.0
      %3717 = vmatpush1.msra.mxu0 0.0
      %3718 = vmatprep.subr.mxu0 0.0
      %3719 = vmatpush1.msra.mxu0 0.0
      %3720 = vmatprep.subr.mxu0 0.0
      %3721 = vmatpush1.msra.mxu0 0.0
      %3722 = vmatprep.subr.mxu0 0.0
      %3723 = vmatpush1.msra.mxu0 0.0
      %3724 = vmatprep.subr.mxu0 0.0
      %3725 = vmatpush1.msra.mxu0 0.0
      %3726 = vmatprep.subr.mxu0 0.0
      %3727 = vmatpush1.msra.mxu0 0.0
      %3728 = vmatprep.subr.mxu0 0.0
      %3729 = vmatpush1.msra.mxu0 0.0
      %3730 = vmatprep.subr.mxu0 0.0
      %3731 = vmatpush1.msra.mxu0 0.0
      %3732 = vmatprep.subr.mxu0 0.0
      %3733 = vmatpush1.msra.mxu0 0.0
      %3734 = vmatprep.subr.mxu0 0.0
      %3735 = vmatpush1.msra.mxu0 0.0
      %3736 = vmatprep.subr.mxu0 0.0
      %3737 = vmatpush1.msra.mxu0 0.0
      %3738 = vmatprep.subr.mxu0 0.0
      %3739 = vmatpush1.msra.mxu0 0.0
      %3740 = vmatprep.subr.mxu0 0.0
      %3741 = vmatpush1.msra.mxu0 0.0
      %3742 = vmatprep.subr.mxu0 0.0
      %3743 = vmatpush1.msra.mxu0 0.0
      %3744 = vmatprep.subr.mxu0 0.0
      %3745 = vmatpush1.msra.mxu0 0.0
      %3746 = vmatprep.mubr.f32.mxu0 0.0
      %3747 = vmatmul.mubr.f32.gmra.mrb[0].mxu0 %v3609
      %v3748 = vpop.f32.mrb[0].mxu0
      %v3749 = vadd.f32 0.0, %v3748
      %v3750 = vpop.f32.mrb[0].mxu0
      %v3751 = vadd.f32 0.0, %v3750
      %3752 = vdwg.mxu0
      %3753 = vmatprep.subr.mxu0 %v3594
      %3754 = vmatpush1.msra.mxu0 %v3593
      %3755 = vmatprep.subr.mxu0 0.0
      %3756 = vmatpush1.msra.mxu0 0.0
      %3757 = vmatprep.subr.mxu0 0.0
      %3758 = vmatpush1.msra.mxu0 0.0
      %3759 = vmatprep.subr.mxu0 0.0
      %3760 = vmatpush1.msra.mxu0 0.0
      %3761 = vmatprep.subr.mxu0 0.0
      %3762 = vmatpush1.msra.mxu0 0.0
      %3763 = vmatprep.subr.mxu0 0.0
      %3764 = vmatpush1.msra.mxu0 0.0
      %3765 = vmatprep.subr.mxu0 0.0
      %3766 = vmatpush1.msra.mxu0 0.0
      %3767 = vmatprep.subr.mxu0 0.0
      %3768 = vmatpush1.msra.mxu0 0.0
      %3769 = vmatprep.subr.mxu0 0.0
      %3770 = vmatpush1.msra.mxu0 0.0
      %3771 = vmatprep.subr.mxu0 0.0
      %3772 = vmatpush1.msra.mxu0 0.0
      %3773 = vmatprep.subr.mxu0 0.0
      %3774 = vmatpush1.msra.mxu0 0.0
      %3775 = vmatprep.subr.mxu0 0.0
      %3776 = vmatpush1.msra.mxu0 0.0
      %3777 = vmatprep.subr.mxu0 0.0
      %3778 = vmatpush1.msra.mxu0 0.0
      %3779 = vmatprep.subr.mxu0 0.0
      %3780 = vmatpush1.msra.mxu0 0.0
      %3781 = vmatprep.subr.mxu0 0.0
      %3782 = vmatpush1.msra.mxu0 0.0
      %3783 = vmatprep.subr.mxu0 0.0
      %3784 = vmatpush1.msra.mxu0 0.0
      %3785 = vmatprep.subr.mxu0 0.0
      %3786 = vmatpush1.msra.mxu0 0.0
      %3787 = vmatprep.subr.mxu0 0.0
      %3788 = vmatpush1.msra.mxu0 0.0
      %3789 = vmatprep.subr.mxu0 0.0
      %3790 = vmatpush1.msra.mxu0 0.0
      %3791 = vmatprep.subr.mxu0 0.0
      %3792 = vmatpush1.msra.mxu0 0.0
      %3793 = vmatprep.subr.mxu0 0.0
      %3794 = vmatpush1.msra.mxu0 0.0
      %3795 = vmatprep.subr.mxu0 0.0
      %3796 = vmatpush1.msra.mxu0 0.0
      %3797 = vmatprep.subr.mxu0 0.0
      %3798 = vmatpush1.msra.mxu0 0.0
      %3799 = vmatprep.subr.mxu0 0.0
      %3800 = vmatpush1.msra.mxu0 0.0
      %3801 = vmatprep.subr.mxu0 0.0
      %3802 = vmatpush1.msra.mxu0 0.0
      %3803 = vmatprep.subr.mxu0 0.0
      %3804 = vmatpush1.msra.mxu0 0.0
      %3805 = vmatprep.subr.mxu0 0.0
      %3806 = vmatpush1.msra.mxu0 0.0
      %3807 = vmatprep.subr.mxu0 0.0
      %3808 = vmatpush1.msra.mxu0 0.0
      %3809 = vmatprep.subr.mxu0 0.0
      %3810 = vmatpush1.msra.mxu0 0.0
      %3811 = vmatprep.subr.mxu0 0.0
      %3812 = vmatpush1.msra.mxu0 0.0
      %3813 = vmatprep.subr.mxu0 0.0
      %3814 = vmatpush1.msra.mxu0 0.0
      %3815 = vmatprep.subr.mxu0 0.0
      %3816 = vmatpush1.msra.mxu0 0.0
      %3817 = vmatprep.mubr.f32.mxu0 0.0
      %3818 = vmatmul.mubr.f32.gmra.mrb[0].mxu0 %v3609
      %v3819 = vpop.f32.mrb[0].mxu0
      %v3820 = vadd.f32 0.0, %v3819
      %v3821 = vpop.f32.mrb[0].mxu0
      %v3822 = vadd.f32 0.0, %v3821
      %3823 = vdwg.mxu0
      %3824 = vmatprep.subr.mxu0 %v3596
      %3825 = vmatpush1.msra.mxu0 %v3595
      %3826 = vmatprep.subr.mxu0 0.0
      %3827 = vmatpush1.msra.mxu0 0.0
      %3828 = vmatprep.subr.mxu0 0.0
      %3829 = vmatpush1.msra.mxu0 0.0
      %3830 = vmatprep.subr.mxu0 0.0
      %3831 = vmatpush1.msra.mxu0 0.0
      %3832 = vmatprep.subr.mxu0 0.0
      %3833 = vmatpush1.msra.mxu0 0.0
      %3834 = vmatprep.subr.mxu0 0.0
      %3835 = vmatpush1.msra.mxu0 0.0
      %3836 = vmatprep.subr.mxu0 0.0
      %3837 = vmatpush1.msra.mxu0 0.0
      %3838 = vmatprep.subr.mxu0 0.0
      %3839 = vmatpush1.msra.mxu0 0.0
      %3840 = vmatprep.subr.mxu0 0.0
      %3841 = vmatpush1.msra.mxu0 0.0
      %3842 = vmatprep.subr.mxu0 0.0
      %3843 = vmatpush1.msra.mxu0 0.0
      %3844 = vmatprep.subr.mxu0 0.0
      %3845 = vmatpush1.msra.mxu0 0.0
      %3846 = vmatprep.subr.mxu0 0.0
      %3847 = vmatpush1.msra.mxu0 0.0
      %3848 = vmatprep.subr.mxu0 0.0
      %3849 = vmatpush1.msra.mxu0 0.0
      %3850 = vmatprep.subr.mxu0 0.0
      %3851 = vmatpush1.msra.mxu0 0.0
      %3852 = vmatprep.subr.mxu0 0.0
      %3853 = vmatpush1.msra.mxu0 0.0
      %3854 = vmatprep.subr.mxu0 0.0
      %3855 = vmatpush1.msra.mxu0 0.0
      %3856 = vmatprep.subr.mxu0 0.0
      %3857 = vmatpush1.msra.mxu0 0.0
      %3858 = vmatprep.subr.mxu0 0.0
      %3859 = vmatpush1.msra.mxu0 0.0
      %3860 = vmatprep.subr.mxu0 0.0
      %3861 = vmatpush1.msra.mxu0 0.0
      %3862 = vmatprep.subr.mxu0 0.0
      %3863 = vmatpush1.msra.mxu0 0.0
      %3864 = vmatprep.subr.mxu0 0.0
      %3865 = vmatpush1.msra.mxu0 0.0
      %3866 = vmatprep.subr.mxu0 0.0
      %3867 = vmatpush1.msra.mxu0 0.0
      %3868 = vmatprep.subr.mxu0 0.0
      %3869 = vmatpush1.msra.mxu0 0.0
      %3870 = vmatprep.subr.mxu0 0.0
      %3871 = vmatpush1.msra.mxu0 0.0
      %3872 = vmatprep.subr.mxu0 0.0
      %3873 = vmatpush1.msra.mxu0 0.0
      %3874 = vmatprep.subr.mxu0 0.0
      %3875 = vmatpush1.msra.mxu0 0.0
      %3876 = vmatprep.subr.mxu0 0.0
      %3877 = vmatpush1.msra.mxu0 0.0
      %3878 = vmatprep.subr.mxu0 0.0
      %3879 = vmatpush1.msra.mxu0 0.0
      %3880 = vmatprep.subr.mxu0 0.0
      %3881 = vmatpush1.msra.mxu0 0.0
      %3882 = vmatprep.subr.mxu0 0.0
      %3883 = vmatpush1.msra.mxu0 0.0
      %3884 = vmatprep.subr.mxu0 0.0
      %3885 = vmatpush1.msra.mxu0 0.0
      %3886 = vmatprep.subr.mxu0 0.0
      %3887 = vmatpush1.msra.mxu0 0.0
      %3888 = vmatprep.mubr.f32.mxu0 0.0
      %3889 = vmatmul.mubr.f32.gmra.mrb[0].mxu0 %v3609
      %v3890 = vpop.f32.mrb[0].mxu0
      %v3891 = vadd.f32 0.0, %v3890
      %v3892 = vpop.f32.mrb[0].mxu0
      %v3893 = vadd.f32 0.0, %v3892
      %3894 = vdwg.mxu0
      %3895 = vmatprep.subr.mxu0 %v3587
      %3896 = vmatpush1.msra.mxu0 %v3597
      %3897 = vmatprep.subr.mxu0 0.0
      %3898 = vmatpush1.msra.mxu0 0.0
      %3899 = vmatprep.subr.mxu0 0.0
      %3900 = vmatpush1.msra.mxu0 0.0
      %3901 = vmatprep.subr.mxu0 0.0
      %3902 = vmatpush1.msra.mxu0 0.0
      %3903 = vmatprep.subr.mxu0 0.0
      %3904 = vmatpush1.msra.mxu0 0.0
      %3905 = vmatprep.subr.mxu0 0.0
      %3906 = vmatpush1.msra.mxu0 0.0
      %3907 = vmatprep.subr.mxu0 0.0
      %3908 = vmatpush1.msra.mxu0 0.0
      %3909 = vmatprep.subr.mxu0 0.0
      %3910 = vmatpush1.msra.mxu0 0.0
      %3911 = vmatprep.subr.mxu0 0.0
      %3912 = vmatpush1.msra.mxu0 0.0
      %3913 = vmatprep.subr.mxu0 0.0
      %3914 = vmatpush1.msra.mxu0 0.0
      %3915 = vmatprep.subr.mxu0 0.0
      %3916 = vmatpush1.msra.mxu0 0.0
      %3917 = vmatprep.subr.mxu0 0.0
      %3918 = vmatpush1.msra.mxu0 0.0
      %3919 = vmatprep.subr.mxu0 0.0
      %3920 = vmatpush1.msra.mxu0 0.0
      %3921 = vmatprep.subr.mxu0 0.0
      %3922 = vmatpush1.msra.mxu0 0.0
      %3923 = vmatprep.subr.mxu0 0.0
      %3924 = vmatpush1.msra.mxu0 0.0
      %3925 = vmatprep.subr.mxu0 0.0
      %3926 = vmatpush1.msra.mxu0 0.0
      %3927 = vmatprep.subr.mxu0 0.0
      %3928 = vmatpush1.msra.mxu0 0.0
      %3929 = vmatprep.subr.mxu0 0.0
      %3930 = vmatpush1.msra.mxu0 0.0
      %3931 = vmatprep.subr.mxu0 0.0
      %3932 = vmatpush1.msra.mxu0 0.0
      %3933 = vmatprep.subr.mxu0 0.0
      %3934 = vmatpush1.msra.mxu0 0.0
      %3935 = vmatprep.subr.mxu0 0.0
      %3936 = vmatpush1.msra.mxu0 0.0
      %3937 = vmatprep.subr.mxu0 0.0
      %3938 = vmatpush1.msra.mxu0 0.0
      %3939 = vmatprep.subr.mxu0 0.0
      %3940 = vmatpush1.msra.mxu0 0.0
      %3941 = vmatprep.subr.mxu0 0.0
      %3942 = vmatpush1.msra.mxu0 0.0
      %3943 = vmatprep.subr.mxu0 0.0
      %3944 = vmatpush1.msra.mxu0 0.0
      %3945 = vmatprep.subr.mxu0 0.0
      %3946 = vmatpush1.msra.mxu0 0.0
      %3947 = vmatprep.subr.mxu0 0.0
      %3948 = vmatpush1.msra.mxu0 0.0
      %3949 = vmatprep.subr.mxu0 0.0
      %3950 = vmatpush1.msra.mxu0 0.0
      %3951 = vmatprep.subr.mxu0 0.0
      %3952 = vmatpush1.msra.mxu0 0.0
      %3953 = vmatprep.subr.mxu0 0.0
      %3954 = vmatpush1.msra.mxu0 0.0
      %3955 = vmatprep.subr.mxu0 0.0
      %3956 = vmatpush1.msra.mxu0 0.0
      %3957 = vmatprep.subr.mxu0 0.0
      %3958 = vmatpush1.msra.mxu0 0.0
      %3959 = vmatprep.mubr.f32.mxu0 0.0
      %3960 = vmatmul.mubr.f32.gmra.mrb[0].mxu0 %v3609
      %v3961 = vpop.f32.mrb[0].mxu0
      %v3962 = vadd.f32 0.0, %v3961
      %v3963 = vpop.f32.mrb[0].mxu0
      %v3964 = vadd.f32 0.0, %v3963
      %3965 = vdwg.mxu0
      %v3966 = vadd.f32 %v3556, %v3678
      %v3967 = vadd.f32 %v3557, %v3680
      %v3968 = vadd.f32 %v3558, %v3749
      %v3969 = vadd.f32 %v3559, %v3751
      %v3970 = vadd.f32 %v3560, %v3820
      %v3971 = vadd.f32 %v3561, %v3822
      %v3972 = vadd.f32 %v3562, %v3891
      %v3973 = vadd.f32 %v3563, %v3893
      %v3974 = vadd.f32 %v3564, %v3962
      %v3975 = vadd.f32 %v3565, %v3964
      %s3976 = scalar_lea.vmem %s2, 32
      %v3977 = vld [vmem:[%s3976] sm:$0xf]
      %3978 = vrot.lane.b32.xlu0 %v737, 58
      %v3979 = vpop.permute.xlu0 %3978
      %3980 = vrot.lane.b32.xlu0 %v738, 58
      %v3981 = vpop.permute.xlu0 %3980
      %3982 = vrot.lane.b32.xlu0 %v739, 58
      %v3983 = vpop.permute.xlu0 %3982
      %3984 = vrot.lane.b32.xlu0 %v740, 58
      %v3985 = vpop.permute.xlu0 %3984
      %3986 = vrot.lane.b32.xlu0 %v741, 58
      %v3987 = vpop.permute.xlu0 %3986
      %3988 = vrot.lane.b32.xlu0 %v742, 58
      %v3989 = vpop.permute.xlu0 %3988
      %3990 = vrot.lane.b32.xlu0 %v743, 58
      %v3991 = vpop.permute.xlu0 %3990
      %3992 = vrot.lane.b32.xlu0 %v744, 58
      %v3993 = vpop.permute.xlu0 %3992
      %3994 = vrot.lane.b32.xlu0 %v745, 58
      %v3995 = vpop.permute.xlu0 %3994
      %3996 = vrot.lane.b32.xlu0 %v746, 58
      %v3997 = vpop.permute.xlu0 %3996
      %vm3998 = vcmask 474112
      %v3999 = vsel %vm3998, %v3979, %v3981
      %v4000 = vsel %vm3998, %v3981, %v3983
      %v4001 = vsel %vm3998, %v3983, %v3985
      %v4002 = vsel %vm3998, %v3985, %v3987
      %v4003 = vsel %vm3998, %v3987, %v3989
      %v4004 = vsel %vm3998, %v3989, %v3991
      %v4005 = vsel %vm3998, %v3991, %v3993
      %v4006 = vsel %vm3998, %v3993, %v3995
      %v4007 = vsel %vm3998, %v3995, %v3997
      %v4019 = vsel %vm799, %v3977, 0
      %4021 = vmatprep.subr.mxu0 %v4000
      %4022 = vmatpush1.msra.mxu0 %v3999
      %4023 = vmatprep.subr.mxu0 0.0
      %4024 = vmatpush1.msra.mxu0 0.0
      %4025 = vmatprep.subr.mxu0 0.0
      %4026 = vmatpush1.msra.mxu0 0.0
      %4027 = vmatprep.subr.mxu0 0.0
      %4028 = vmatpush1.msra.mxu0 0.0
      %4029 = vmatprep.subr.mxu0 0.0
      %4030 = vmatpush1.msra.mxu0 0.0
      %4031 = vmatprep.subr.mxu0 0.0
      %4032 = vmatpush1.msra.mxu0 0.0
      %4033 = vmatprep.subr.mxu0 0.0
      %4034 = vmatpush1.msra.mxu0 0.0
      %4035 = vmatprep.subr.mxu0 0.0
      %4036 = vmatpush1.msra.mxu0 0.0
      %4037 = vmatprep.subr.mxu0 0.0
      %4038 = vmatpush1.msra.mxu0 0.0
      %4039 = vmatprep.subr.mxu0 0.0
      %4040 = vmatpush1.msra.mxu0 0.0
      %4041 = vmatprep.subr.mxu0 0.0
      %4042 = vmatpush1.msra.mxu0 0.0
      %4043 = vmatprep.subr.mxu0 0.0
      %4044 = vmatpush1.msra.mxu0 0.0
      %4045 = vmatprep.subr.mxu0 0.0
      %4046 = vmatpush1.msra.mxu0 0.0
      %4047 = vmatprep.subr.mxu0 0.0
      %4048 = vmatpush1.msra.mxu0 0.0
      %4049 = vmatprep.subr.mxu0 0.0
      %4050 = vmatpush1.msra.mxu0 0.0
      %4051 = vmatprep.subr.mxu0 0.0
      %4052 = vmatpush1.msra.mxu0 0.0
      %4053 = vmatprep.subr.mxu0 0.0
      %4054 = vmatpush1.msra.mxu0 0.0
      %4055 = vmatprep.subr.mxu0 0.0
      %4056 = vmatpush1.msra.mxu0 0.0
      %4057 = vmatprep.subr.mxu0 0.0
      %4058 = vmatpush1.msra.mxu0 0.0
      %4059 = vmatprep.subr.mxu0 0.0
      %4060 = vmatpush1.msra.mxu0 0.0
      %4061 = vmatprep.subr.mxu0 0.0
      %4062 = vmatpush1.msra.mxu0 0.0
      %4063 = vmatprep.subr.mxu0 0.0
      %4064 = vmatpush1.msra.mxu0 0.0
      %4065 = vmatprep.subr.mxu0 0.0
      %4066 = vmatpush1.msra.mxu0 0.0
      %4067 = vmatprep.subr.mxu0 0.0
      %4068 = vmatpush1.msra.mxu0 0.0
      %4069 = vmatprep.subr.mxu0 0.0
      %4070 = vmatpush1.msra.mxu0 0.0
      %4071 = vmatprep.subr.mxu0 0.0
      %4072 = vmatpush1.msra.mxu0 0.0
      %4073 = vmatprep.subr.mxu0 0.0
      %4074 = vmatpush1.msra.mxu0 0.0
      %4075 = vmatprep.subr.mxu0 0.0
      %4076 = vmatpush1.msra.mxu0 0.0
      %4077 = vmatprep.subr.mxu0 0.0
      %4078 = vmatpush1.msra.mxu0 0.0
      %4079 = vmatprep.subr.mxu0 0.0
      %4080 = vmatpush1.msra.mxu0 0.0
      %4081 = vmatprep.subr.mxu0 0.0
      %4082 = vmatpush1.msra.mxu0 0.0
      %4083 = vmatprep.subr.mxu0 0.0
      %4084 = vmatpush1.msra.mxu0 0.0
      %4085 = vmatprep.mubr.f32.mxu0 0.0
      %4086 = vmatmul.mubr.f32.gmra.mrb[0].mxu0 %v4019
      %v4087 = vpop.f32.mrb[0].mxu0
      %v4088 = vadd.f32 0.0, %v4087
      %v4089 = vpop.f32.mrb[0].mxu0
      %v4090 = vadd.f32 0.0, %v4089
      %4091 = vdwg.mxu0
      %4092 = vmatprep.subr.mxu0 %v4002
      %4093 = vmatpush1.msra.mxu0 %v4001
      %4094 = vmatprep.subr.mxu0 0.0
      %4095 = vmatpush1.msra.mxu0 0.0
      %4096 = vmatprep.subr.mxu0 0.0
      %4097 = vmatpush1.msra.mxu0 0.0
      %4098 = vmatprep.subr.mxu0 0.0
      %4099 = vmatpush1.msra.mxu0 0.0
      %4100 = vmatprep.subr.mxu0 0.0
      %4101 = vmatpush1.msra.mxu0 0.0
      %4102 = vmatprep.subr.mxu0 0.0
      %4103 = vmatpush1.msra.mxu0 0.0
      %4104 = vmatprep.subr.mxu0 0.0
      %4105 = vmatpush1.msra.mxu0 0.0
      %4106 = vmatprep.subr.mxu0 0.0
      %4107 = vmatpush1.msra.mxu0 0.0
      %4108 = vmatprep.subr.mxu0 0.0
      %4109 = vmatpush1.msra.mxu0 0.0
      %4110 = vmatprep.subr.mxu0 0.0
      %4111 = vmatpush1.msra.mxu0 0.0
      %4112 = vmatprep.subr.mxu0 0.0
      %4113 = vmatpush1.msra.mxu0 0.0
      %4114 = vmatprep.subr.mxu0 0.0
      %4115 = vmatpush1.msra.mxu0 0.0
      %4116 = vmatprep.subr.mxu0 0.0
      %4117 = vmatpush1.msra.mxu0 0.0
      %4118 = vmatprep.subr.mxu0 0.0
      %4119 = vmatpush1.msra.mxu0 0.0
      %4120 = vmatprep.subr.mxu0 0.0
      %4121 = vmatpush1.msra.mxu0 0.0
      %4122 = vmatprep.subr.mxu0 0.0
      %4123 = vmatpush1.msra.mxu0 0.0
      %4124 = vmatprep.subr.mxu0 0.0
      %4125 = vmatpush1.msra.mxu0 0.0
      %4126 = vmatprep.subr.mxu0 0.0
      %4127 = vmatpush1.msra.mxu0 0.0
      %4128 = vmatprep.subr.mxu0 0.0
      %4129 = vmatpush1.msra.mxu0 0.0
      %4130 = vmatprep.subr.mxu0 0.0
      %4131 = vmatpush1.msra.mxu0 0.0
      %4132 = vmatprep.subr.mxu0 0.0
      %4133 = vmatpush1.msra.mxu0 0.0
      %4134 = vmatprep.subr.mxu0 0.0
      %4135 = vmatpush1.msra.mxu0 0.0
      %4136 = vmatprep.subr.mxu0 0.0
      %4137 = vmatpush1.msra.mxu0 0.0
      %4138 = vmatprep.subr.mxu0 0.0
      %4139 = vmatpush1.msra.mxu0 0.0
      %4140 = vmatprep.subr.mxu0 0.0
      %4141 = vmatpush1.msra.mxu0 0.0
      %4142 = vmatprep.subr.mxu0 0.0
      %4143 = vmatpush1.msra.mxu0 0.0
      %4144 = vmatprep.subr.mxu0 0.0
      %4145 = vmatpush1.msra.mxu0 0.0
      %4146 = vmatprep.subr.mxu0 0.0
      %4147 = vmatpush1.msra.mxu0 0.0
      %4148 = vmatprep.subr.mxu0 0.0
      %4149 = vmatpush1.msra.mxu0 0.0
      %4150 = vmatprep.subr.mxu0 0.0
      %4151 = vmatpush1.msra.mxu0 0.0
      %4152 = vmatprep.subr.mxu0 0.0
      %4153 = vmatpush1.msra.mxu0 0.0
      %4154 = vmatprep.subr.mxu0 0.0
      %4155 = vmatpush1.msra.mxu0 0.0
      %4156 = vmatprep.mubr.f32.mxu0 0.0
      %4157 = vmatmul.mubr.f32.gmra.mrb[0].mxu0 %v4019
      %v4158 = vpop.f32.mrb[0].mxu0
      %v4159 = vadd.f32 0.0, %v4158
      %v4160 = vpop.f32.mrb[0].mxu0
      %v4161 = vadd.f32 0.0, %v4160
      %4162 = vdwg.mxu0
      %4163 = vmatprep.subr.mxu0 %v4004
      %4164 = vmatpush1.msra.mxu0 %v4003
      %4165 = vmatprep.subr.mxu0 0.0
      %4166 = vmatpush1.msra.mxu0 0.0
      %4167 = vmatprep.subr.mxu0 0.0
      %4168 = vmatpush1.msra.mxu0 0.0
      %4169 = vmatprep.subr.mxu0 0.0
      %4170 = vmatpush1.msra.mxu0 0.0
      %4171 = vmatprep.subr.mxu0 0.0
      %4172 = vmatpush1.msra.mxu0 0.0
      %4173 = vmatprep.subr.mxu0 0.0
      %4174 = vmatpush1.msra.mxu0 0.0
      %4175 = vmatprep.subr.mxu0 0.0
      %4176 = vmatpush1.msra.mxu0 0.0
      %4177 = vmatprep.subr.mxu0 0.0
      %4178 = vmatpush1.msra.mxu0 0.0
      %4179 = vmatprep.subr.mxu0 0.0
      %4180 = vmatpush1.msra.mxu0 0.0
      %4181 = vmatprep.subr.mxu0 0.0
      %4182 = vmatpush1.msra.mxu0 0.0
      %4183 = vmatprep.subr.mxu0 0.0
      %4184 = vmatpush1.msra.mxu0 0.0
      %4185 = vmatprep.subr.mxu0 0.0
      %4186 = vmatpush1.msra.mxu0 0.0
      %4187 = vmatprep.subr.mxu0 0.0
      %4188 = vmatpush1.msra.mxu0 0.0
      %4189 = vmatprep.subr.mxu0 0.0
      %4190 = vmatpush1.msra.mxu0 0.0
      %4191 = vmatprep.subr.mxu0 0.0
      %4192 = vmatpush1.msra.mxu0 0.0
      %4193 = vmatprep.subr.mxu0 0.0
      %4194 = vmatpush1.msra.mxu0 0.0
      %4195 = vmatprep.subr.mxu0 0.0
      %4196 = vmatpush1.msra.mxu0 0.0
      %4197 = vmatprep.subr.mxu0 0.0
      %4198 = vmatpush1.msra.mxu0 0.0
      %4199 = vmatprep.subr.mxu0 0.0
      %4200 = vmatpush1.msra.mxu0 0.0
      %4201 = vmatprep.subr.mxu0 0.0
      %4202 = vmatpush1.msra.mxu0 0.0
      %4203 = vmatprep.subr.mxu0 0.0
      %4204 = vmatpush1.msra.mxu0 0.0
      %4205 = vmatprep.subr.mxu0 0.0
      %4206 = vmatpush1.msra.mxu0 0.0
      %4207 = vmatprep.subr.mxu0 0.0
      %4208 = vmatpush1.msra.mxu0 0.0
      %4209 = vmatprep.subr.mxu0 0.0
      %4210 = vmatpush1.msra.mxu0 0.0
      %4211 = vmatprep.subr.mxu0 0.0
      %4212 = vmatpush1.msra.mxu0 0.0
      %4213 = vmatprep.subr.mxu0 0.0
      %4214 = vmatpush1.msra.mxu0 0.0
      %4215 = vmatprep.subr.mxu0 0.0
      %4216 = vmatpush1.msra.mxu0 0.0
      %4217 = vmatprep.subr.mxu0 0.0
      %4218 = vmatpush1.msra.mxu0 0.0
      %4219 = vmatprep.subr.mxu0 0.0
      %4220 = vmatpush1.msra.mxu0 0.0
      %4221 = vmatprep.subr.mxu0 0.0
      %4222 = vmatpush1.msra.mxu0 0.0
      %4223 = vmatprep.subr.mxu0 0.0
      %4224 = vmatpush1.msra.mxu0 0.0
      %4225 = vmatprep.subr.mxu0 0.0
      %4226 = vmatpush1.msra.mxu0 0.0
      %4227 = vmatprep.mubr.f32.mxu0 0.0
      %4228 = vmatmul.mubr.f32.gmra.mrb[0].mxu0 %v4019
      %v4229 = vpop.f32.mrb[0].mxu0
      %v4230 = vadd.f32 0.0, %v4229
      %v4231 = vpop.f32.mrb[0].mxu0
      %v4232 = vadd.f32 0.0, %v4231
      %4233 = vdwg.mxu0
      %4234 = vmatprep.subr.mxu0 %v4006
      %4235 = vmatpush1.msra.mxu0 %v4005
      %4236 = vmatprep.subr.mxu0 0.0
      %4237 = vmatpush1.msra.mxu0 0.0
      %4238 = vmatprep.subr.mxu0 0.0
      %4239 = vmatpush1.msra.mxu0 0.0
      %4240 = vmatprep.subr.mxu0 0.0
      %4241 = vmatpush1.msra.mxu0 0.0
      %4242 = vmatprep.subr.mxu0 0.0
      %4243 = vmatpush1.msra.mxu0 0.0
      %4244 = vmatprep.subr.mxu0 0.0
      %4245 = vmatpush1.msra.mxu0 0.0
      %4246 = vmatprep.subr.mxu0 0.0
      %4247 = vmatpush1.msra.mxu0 0.0
      %4248 = vmatprep.subr.mxu0 0.0
      %4249 = vmatpush1.msra.mxu0 0.0
      %4250 = vmatprep.subr.mxu0 0.0
      %4251 = vmatpush1.msra.mxu0 0.0
      %4252 = vmatprep.subr.mxu0 0.0
      %4253 = vmatpush1.msra.mxu0 0.0
      %4254 = vmatprep.subr.mxu0 0.0
      %4255 = vmatpush1.msra.mxu0 0.0
      %4256 = vmatprep.subr.mxu0 0.0
      %4257 = vmatpush1.msra.mxu0 0.0
      %4258 = vmatprep.subr.mxu0 0.0
      %4259 = vmatpush1.msra.mxu0 0.0
      %4260 = vmatprep.subr.mxu0 0.0
      %4261 = vmatpush1.msra.mxu0 0.0
      %4262 = vmatprep.subr.mxu0 0.0
      %4263 = vmatpush1.msra.mxu0 0.0
      %4264 = vmatprep.subr.mxu0 0.0
      %4265 = vmatpush1.msra.mxu0 0.0
      %4266 = vmatprep.subr.mxu0 0.0
      %4267 = vmatpush1.msra.mxu0 0.0
      %4268 = vmatprep.subr.mxu0 0.0
      %4269 = vmatpush1.msra.mxu0 0.0
      %4270 = vmatprep.subr.mxu0 0.0
      %4271 = vmatpush1.msra.mxu0 0.0
      %4272 = vmatprep.subr.mxu0 0.0
      %4273 = vmatpush1.msra.mxu0 0.0
      %4274 = vmatprep.subr.mxu0 0.0
      %4275 = vmatpush1.msra.mxu0 0.0
      %4276 = vmatprep.subr.mxu0 0.0
      %4277 = vmatpush1.msra.mxu0 0.0
      %4278 = vmatprep.subr.mxu0 0.0
      %4279 = vmatpush1.msra.mxu0 0.0
      %4280 = vmatprep.subr.mxu0 0.0
      %4281 = vmatpush1.msra.mxu0 0.0
      %4282 = vmatprep.subr.mxu0 0.0
      %4283 = vmatpush1.msra.mxu0 0.0
      %4284 = vmatprep.subr.mxu0 0.0
      %4285 = vmatpush1.msra.mxu0 0.0
      %4286 = vmatprep.subr.mxu0 0.0
      %4287 = vmatpush1.msra.mxu0 0.0
      %4288 = vmatprep.subr.mxu0 0.0
      %4289 = vmatpush1.msra.mxu0 0.0
      %4290 = vmatprep.subr.mxu0 0.0
      %4291 = vmatpush1.msra.mxu0 0.0
      %4292 = vmatprep.subr.mxu0 0.0
      %4293 = vmatpush1.msra.mxu0 0.0
      %4294 = vmatprep.subr.mxu0 0.0
      %4295 = vmatpush1.msra.mxu0 0.0
      %4296 = vmatprep.subr.mxu0 0.0
      %4297 = vmatpush1.msra.mxu0 0.0
      %4298 = vmatprep.mubr.f32.mxu0 0.0
      %4299 = vmatmul.mubr.f32.gmra.mrb[0].mxu0 %v4019
      %v4300 = vpop.f32.mrb[0].mxu0
      %v4301 = vadd.f32 0.0, %v4300
      %v4302 = vpop.f32.mrb[0].mxu0
      %v4303 = vadd.f32 0.0, %v4302
      %4304 = vdwg.mxu0
      %4305 = vmatprep.subr.mxu0 %v3997
      %4306 = vmatpush1.msra.mxu0 %v4007
      %4307 = vmatprep.subr.mxu0 0.0
      %4308 = vmatpush1.msra.mxu0 0.0
      %4309 = vmatprep.subr.mxu0 0.0
      %4310 = vmatpush1.msra.mxu0 0.0
      %4311 = vmatprep.subr.mxu0 0.0
      %4312 = vmatpush1.msra.mxu0 0.0
      %4313 = vmatprep.subr.mxu0 0.0
      %4314 = vmatpush1.msra.mxu0 0.0
      %4315 = vmatprep.subr.mxu0 0.0
      %4316 = vmatpush1.msra.mxu0 0.0
      %4317 = vmatprep.subr.mxu0 0.0
      %4318 = vmatpush1.msra.mxu0 0.0
      %4319 = vmatprep.subr.mxu0 0.0
      %4320 = vmatpush1.msra.mxu0 0.0
      %4321 = vmatprep.subr.mxu0 0.0
      %4322 = vmatpush1.msra.mxu0 0.0
      %4323 = vmatprep.subr.mxu0 0.0
      %4324 = vmatpush1.msra.mxu0 0.0
      %4325 = vmatprep.subr.mxu0 0.0
      %4326 = vmatpush1.msra.mxu0 0.0
      %4327 = vmatprep.subr.mxu0 0.0
      %4328 = vmatpush1.msra.mxu0 0.0
      %4329 = vmatprep.subr.mxu0 0.0
      %4330 = vmatpush1.msra.mxu0 0.0
      %4331 = vmatprep.subr.mxu0 0.0
      %4332 = vmatpush1.msra.mxu0 0.0
      %4333 = vmatprep.subr.mxu0 0.0
      %4334 = vmatpush1.msra.mxu0 0.0
      %4335 = vmatprep.subr.mxu0 0.0
      %4336 = vmatpush1.msra.mxu0 0.0
      %4337 = vmatprep.subr.mxu0 0.0
      %4338 = vmatpush1.msra.mxu0 0.0
      %4339 = vmatprep.subr.mxu0 0.0
      %4340 = vmatpush1.msra.mxu0 0.0
      %4341 = vmatprep.subr.mxu0 0.0
      %4342 = vmatpush1.msra.mxu0 0.0
      %4343 = vmatprep.subr.mxu0 0.0
      %4344 = vmatpush1.msra.mxu0 0.0
      %4345 = vmatprep.subr.mxu0 0.0
      %4346 = vmatpush1.msra.mxu0 0.0
      %4347 = vmatprep.subr.mxu0 0.0
      %4348 = vmatpush1.msra.mxu0 0.0
      %4349 = vmatprep.subr.mxu0 0.0
      %4350 = vmatpush1.msra.mxu0 0.0
      %4351 = vmatprep.subr.mxu0 0.0
      %4352 = vmatpush1.msra.mxu0 0.0
      %4353 = vmatprep.subr.mxu0 0.0
      %4354 = vmatpush1.msra.mxu0 0.0
      %4355 = vmatprep.subr.mxu0 0.0
      %4356 = vmatpush1.msra.mxu0 0.0
      %4357 = vmatprep.subr.mxu0 0.0
      %4358 = vmatpush1.msra.mxu0 0.0
      %4359 = vmatprep.subr.mxu0 0.0
      %4360 = vmatpush1.msra.mxu0 0.0
      %4361 = vmatprep.subr.mxu0 0.0
      %4362 = vmatpush1.msra.mxu0 0.0
      %4363 = vmatprep.subr.mxu0 0.0
      %4364 = vmatpush1.msra.mxu0 0.0
      %4365 = vmatprep.subr.mxu0 0.0
      %4366 = vmatpush1.msra.mxu0 0.0
      %4367 = vmatprep.subr.mxu0 0.0
      %4368 = vmatpush1.msra.mxu0 0.0
      %4369 = vmatprep.mubr.f32.mxu0 0.0
      %4370 = vmatmul.mubr.f32.gmra.mrb[0].mxu0 %v4019
      %v4371 = vpop.f32.mrb[0].mxu0
      %v4372 = vadd.f32 0.0, %v4371
      %v4373 = vpop.f32.mrb[0].mxu0
      %v4374 = vadd.f32 0.0, %v4373
      %4375 = vdwg.mxu0
      %v4376 = vadd.f32 %v3966, %v4088
      %v4377 = vadd.f32 %v3967, %v4090
      %v4378 = vadd.f32 %v3968, %v4159
      %v4379 = vadd.f32 %v3969, %v4161
      %v4380 = vadd.f32 %v3970, %v4230
      %v4381 = vadd.f32 %v3971, %v4232
      %v4382 = vadd.f32 %v3972, %v4301
      %v4383 = vadd.f32 %v3973, %v4303
      %v4384 = vadd.f32 %v3974, %v4372
      %v4385 = vadd.f32 %v3975, %v4374
      %v4386 = vld [vmem:[%s3] sm:$0xf]
      %4388 = vset.pattern.permute.xlu0 0
      %4389 = vperm.xlu0 %4388, %v4386
      %v4390 = vpop.permute.xlu0 %4389
      %v4392 = vadd.f32 %v4376, %v4390
      %v4393 = vadd.f32 %v4377, %v4390
      %v4394 = vadd.f32 %v4378, %v4390
      %v4395 = vadd.f32 %v4379, %v4390
      %v4396 = vadd.f32 %v4380, %v4390
      %v4397 = vadd.f32 %v4381, %v4390
      %v4398 = vadd.f32 %v4382, %v4390
      %v4399 = vadd.f32 %v4383, %v4390
      %v4400 = vadd.f32 %v4384, %v4390
      %v4401 = vadd.f32 %v4385, %v4390
      %v4402 = vld [vmem:[%s4] sm:$0xff]
      %v4403 = vld [vmem:[%s4 + $0x8] sm:$0x3]
      %v4406 = vlaneseq
      %v4407 = vshrl.u32 %v4406, 7
      %v4408 = vsub.s32 0, %v4407
      %v4409 = vrot.slane %v4402, %v4408
      %v4410 = vlaneseq
      %v4411 = vshrl.u32 %v4410, 7
      %v4412 = vsub.s32 1, %v4411
      %v4413 = vrot.slane %v4402, %v4412
      %v4414 = vlaneseq
      %v4415 = vshrl.u32 %v4414, 7
      %v4416 = vsub.s32 2, %v4415
      %v4417 = vrot.slane %v4402, %v4416
      %v4418 = vlaneseq
      %v4419 = vshrl.u32 %v4418, 7
      %v4420 = vsub.s32 3, %v4419
      %v4421 = vrot.slane %v4402, %v4420
      %v4422 = vlaneseq
      %v4423 = vshrl.u32 %v4422, 7
      %v4424 = vsub.s32 4, %v4423
      %v4425 = vrot.slane %v4402, %v4424
      %v4426 = vlaneseq
      %v4427 = vshrl.u32 %v4426, 7
      %v4428 = vsub.s32 5, %v4427
      %v4429 = vrot.slane %v4402, %v4428
      %v4430 = vlaneseq
      %v4431 = vshrl.u32 %v4430, 7
      %v4432 = vsub.s32 6, %v4431
      %v4433 = vrot.slane %v4402, %v4432
      %v4434 = vlaneseq
      %v4435 = vshrl.u32 %v4434, 7
      %v4436 = vsub.s32 7, %v4435
      %v4437 = vrot.slane %v4402, %v4436
      %v4438 = vlaneseq
      %v4439 = vshrl.u32 %v4438, 7
      %v4440 = vsub.s32 0, %v4439
      %v4441 = vrot.slane %v4403, %v4440
      %v4442 = vlaneseq
      %v4443 = vshrl.u32 %v4442, 7
      %v4444 = vsub.s32 1, %v4443
      %v4445 = vrot.slane %v4403, %v4444
      %v4456 = vmul.f32 %v4392, %v4409
      %v4457 = vmul.f32 %v4393, %v4413
      %v4458 = vmul.f32 %v4394, %v4417
      %v4459 = vmul.f32 %v4395, %v4421
      %v4460 = vmul.f32 %v4396, %v4425
      %v4461 = vmul.f32 %v4397, %v4429
      %v4462 = vmul.f32 %v4398, %v4433
      %v4463 = vmul.f32 %v4399, %v4437
      %v4464 = vmul.f32 %v4400, %v4441
      %v4465 = vmul.f32 %v4401, %v4445
      %v4476 = vcombine.low %v4456, %v4457
      %v4477 = vcombine.low %v4458, %v4459
      %v4478 = vcombine.low %v4460, %v4461
      %v4479 = vcombine.low %v4462, %v4463
      %v4480 = vcombine.low %v4464, %v4465
      %4486 = vst [vmem:[%s221] sm:$0xff] %v4476
      %4487 = vst [vmem:[%s221 + $0x8] sm:$0xff] %v4477
      %4488 = vst [vmem:[%s221 + $0x10] sm:$0xff] %v4478
      %4489 = vst [vmem:[%s221 + $0x18] sm:$0xff] %v4479
      %vm4490 = vcmask 31748
      %vm4491 = vmor %vm4490, %vm288
      %4492 = vst.msk [vmem:[%s221 + $0x20] sm:$0xff] %vm4491, %v4480
      %p4493 = scmp.lt.s32.totalorder %s16, 1
      %s4494 = scalar_select %p4493, %s16, 1
      %s4495 = smul.addr %s4494, 10
      %s4496 = smul.addr %s4495, 4
      %s4497 = scalar_lea.vmem %s5, %s4496
      // Predicated region
      $region41: #{distill_kl_ml_forward.4} parent=39 // pred_check
        %p4498 = pneg %p144
      $region42: #{distill_kl_ml_forward.4} parent=39 // pred_check_branch
        %4500 = sbr.rel (%p4498) target = $region44
      $region43: #{distill_kl_ml_forward.4} parent=39 // pred_region
        _
      $region44: #{distill_kl_ml_forward.4} parent=39 // pred_fallthru
        _
    $region40: #{distill_kl_ml_forward.4} parent=5 // pred_fallthru
      _
    %p4501 = scmp.le.s32.totalorder 2, %s11
    // Predicated region
    $region45: #{distill_kl_ml_forward.4} parent=5 // pred_check
      %p4502 = pneg %p4501
    $region46: #{distill_kl_ml_forward.4} parent=5 // pred_check_branch
      %4504 = sbr.rel (%p4502) target = $region48
    $region47: #{distill_kl_ml_forward.4} parent=5 // pred_region
      %s4505 = ssub.s32 %s11, 2
      // Predicated region
      $region49: #{distill_kl_ml_forward.4} parent=47 // pred_check
        %p4506 = pneg %p150
      $region50: #{distill_kl_ml_forward.4} parent=47 // pred_check_branch
        %4508 = sbr.rel (%p4506) target = $region52
      $region51: #{distill_kl_ml_forward.4} parent=47 // pred_region
        %p4509 = scmp.lt.s32.totalorder %s17, 1
        %s4510 = scalar_select %p4509, %s17, 1
        %s4511 = smul.addr %s4510, 10
        %s4512 = smul.addr %s4511, 4
        %s4513 = scalar_lea.vmem %s5, %s4512
      $region52: #{distill_kl_ml_forward.4} parent=47 // pred_fallthru
        _
    $region48: #{distill_kl_ml_forward.4} parent=5 // pred_fallthru
      _
  $region6: #{distill_kl_ml_forward.4} parent=0 // loop_footer
    %s15 = sadd.s32 1, %s11
  $region7: #{distill_kl_ml_forward.4} parent=0 // loop_footer_branch
    %10 = sbr.rel target = $region3
  $region8: #{distill_kl_ml_forward.4} parent=0 // loop_exit
    _

// kernel: distill_kl_ml_forward.5
$region0: #{distill_kl_ml_forward.5}
  #allocation0 [shape = 'u32[]', space=smem, size = 0x4, offset = 0x4, fixed_abs, tag = 'smem constant byte address 0x4 - core index']
  #allocation1 [shape = 'u32[144,128]{1,0:T(1,128)}', space=vmem, size = 0x12000, scoped, tag = 'internal scratch']
  #allocation2 [shape = 'f32[4,1226]{1,0:T(4,128)}', space=vmem, size = 0x5000, scoped, tag = 'scratch operand']
  #allocation3 [shape = 'f32[1,1]{1,0:T(1,128)}', space=smem, size = 0x200, scoped, tag = 'scratch operand']
  %s0 = inlined_call_operand.vmem [shape: f32[2,4,1156], index: 0, kind: input, shape index: {}]
  %s1 = inlined_call_operand.vmem [shape: f32[2,4,1156], index: 1, kind: input, shape index: {}]
  %s2 = inlined_call_operand.vmem [shape: f32[9,4,4], index: 2, kind: input, shape index: {}]
  %s3 = inlined_call_operand.vmem [shape: f32[4,1], index: 3, kind: input, shape index: {}]
  %s4 = inlined_call_operand.vmem [shape: f32[1,1156], index: 4, kind: input, shape index: {}]
  %s5 = inlined_call_operand.hbm [shape: f32[1,1], index: 5, kind: output, shape index: {}]
  %s6 = sld [smem:[#allocation0]]
  $region61: #{distill_kl_ml_forward.5} parent=0
    _
  %s8 = ssub.s32 1, %s6
  %s9 = scalar_select 0, %s8, %s6
  $region1: #{distill_kl_ml_forward.5} parent=0
    #allocation4 [shape = 'u8[512]{0}', space=smem, size = 0x200, scoped, tag = 'output window, operand 0, single buffered']
    #allocation5 [shape = 's32[2]{0}', space=sflag, size = 0x8, scoped, tag = 'scoped memory for distill_kl_ml_forward.5']
    %10 = vsyncpa [#allocation5], 0
    loop: start=0, step=1, limit=4
    $region2: #{distill_kl_ml_forward.5} parent=1 // loop_pre_header
      _
    $region3: #{distill_kl_ml_forward.5} parent=1 // loop_header
      %s12 = sphi 0, %s16
      %p13 = scmp.ge.s32.totalorder %s12, 4
      %s22 = sphi 0, %s24
      %s25 = sphi 0, %s22
      %s26 = sphi 0, %s25
      %s42 = sphi 0, %s26
      %s48 = sphi 0, %s50
      %s51 = sphi 0, %s48
      %s52 = sphi 0, %s51
      %s68 = sphi 0, %s52
      %s72 = sphi 0, %s72
      %s74 = sphi 0, %s72
      %s75 = sphi 0, %s74
      %s89 = sphi 0, %s75
      %s93 = sphi 0, %s93
      %s95 = sphi 0, %s93
      %s96 = sphi 0, %s95
      %s110 = sphi 0, %s96
      %s114 = sphi 0, %s114
      %s116 = sphi 0, %s114
      %s117 = sphi 0, %s116
      %s131 = sphi 0, %s117
      %s135 = sphi 0, %s135
      %s137 = sphi 0, %s135
      %s138 = sphi 0, %s137
      %s152 = sphi 0, %s138
    $region4: #{distill_kl_ml_forward.5} parent=1 // loop_header_branch
      %15 = sbr.rel (%p13) target = $region8
    $region5: #{distill_kl_ml_forward.5} parent=1 // loop_body
      %s17 = ssub.s32 %s12, 1
      %s18 = ssub.s32 %s12, 2
      %s19 = sadd.s32 %s12, 1
      %s20 = ssub.s32 %s12, %s19
      %p21 = scmp.eq.s32.totalorder %s20, 0
      %s23 = sadd.s32 %s22, 1
      %s24 = scalar_select %p21, %s22, %s23
      %p27 = pneg %p21
      %p28 = scmp.eq.s32.totalorder %s12, 1
      %p29 = por %p27, %p28
      %p30 = scmp.ne.s32.totalorder %s22, %s25
      %p31 = scmp.eq.s32.totalorder %s12, 0
      %p32 = por %p30, %p31
      %p33 = scmp.ne.s32.totalorder %s22, %s25
      %p34 = scmp.eq.s32.totalorder %s17, 1
      %p35 = por %p33, %p34
      %p36 = scmp.ne.s32.totalorder %s25, %s26
      %p37 = scmp.eq.s32.totalorder %s17, 0
      %p38 = por %p36, %p37
      %p39 = scmp.ne.s32.totalorder %s25, %s26
      %p40 = scmp.eq.s32.totalorder %s18, 1
      %p41 = por %p39, %p40
      %p43 = scmp.ne.s32.totalorder %s26, %s42
      %p44 = scmp.eq.s32.totalorder %s18, 0
      %p45 = por %p43, %p44
      %s46 = ssub.s32 %s12, %s19
      %p47 = scmp.eq.s32.totalorder %s46, 0
      %s49 = sadd.s32 %s48, 1
      %s50 = scalar_select %p47, %s48, %s49
      %p53 = pneg %p47
      %p54 = scmp.eq.s32.totalorder %s12, 1
      %p55 = por %p53, %p54
      %p56 = scmp.ne.s32.totalorder %s48, %s51
      %p57 = scmp.eq.s32.totalorder %s12, 0
      %p58 = por %p56, %p57
      %p59 = scmp.ne.s32.totalorder %s48, %s51
      %p60 = scmp.eq.s32.totalorder %s17, 1
      %p61 = por %p59, %p60
      %p62 = scmp.ne.s32.totalorder %s51, %s52
      %p63 = scmp.eq.s32.totalorder %s17, 0
      %p64 = por %p62, %p63
      %p65 = scmp.ne.s32.totalorder %s51, %s52
      %p66 = scmp.eq.s32.totalorder %s18, 1
      %p67 = por %p65, %p66
      %p69 = scmp.ne.s32.totalorder %s52, %s68
      %p70 = scmp.eq.s32.totalorder %s18, 0
      %p71 = por %p69, %p70
      %s73 = sadd.s32 %s72, 1
      %p76 = scmp.eq.s32.totalorder %s12, 1
      %p77 = scmp.ne.s32.totalorder %s72, %s74
      %p78 = scmp.eq.s32.totalorder %s12, 0
      %p79 = por %p77, %p78
      %p80 = scmp.ne.s32.totalorder %s72, %s74
      %p81 = scmp.eq.s32.totalorder %s17, 1
      %p82 = por %p80, %p81
      %p83 = scmp.ne.s32.totalorder %s74, %s75
      %p84 = scmp.eq.s32.totalorder %s17, 0
      %p85 = por %p83, %p84
      %p86 = scmp.ne.s32.totalorder %s74, %s75
      %p87 = scmp.eq.s32.totalorder %s18, 1
      %p88 = por %p86, %p87
      %p90 = scmp.ne.s32.totalorder %s75, %s89
      %p91 = scmp.eq.s32.totalorder %s18, 0
      %p92 = por %p90, %p91
      %s94 = sadd.s32 %s93, 1
      %p97 = scmp.eq.s32.totalorder %s12, 1
      %p98 = scmp.ne.s32.totalorder %s93, %s95
      %p99 = scmp.eq.s32.totalorder %s12, 0
      %p100 = por %p98, %p99
      %p101 = scmp.ne.s32.totalorder %s93, %s95
      %p102 = scmp.eq.s32.totalorder %s17, 1
      %p103 = por %p101, %p102
      %p104 = scmp.ne.s32.totalorder %s95, %s96
      %p105 = scmp.eq.s32.totalorder %s17, 0
      %p106 = por %p104, %p105
      %p107 = scmp.ne.s32.totalorder %s95, %s96
      %p108 = scmp.eq.s32.totalorder %s18, 1
      %p109 = por %p107, %p108
      %p111 = scmp.ne.s32.totalorder %s96, %s110
      %p112 = scmp.eq.s32.totalorder %s18, 0
      %p113 = por %p111, %p112
      %s115 = sadd.s32 %s114, 1
      %p118 = scmp.eq.s32.totalorder %s12, 1
      %p119 = scmp.ne.s32.totalorder %s114, %s116
      %p120 = scmp.eq.s32.totalorder %s12, 0
      %p121 = por %p119, %p120
      %p122 = scmp.ne.s32.totalorder %s114, %s116
      %p123 = scmp.eq.s32.totalorder %s17, 1
      %p124 = por %p122, %p123
      %p125 = scmp.ne.s32.totalorder %s116, %s117
      %p126 = scmp.eq.s32.totalorder %s17, 0
      %p127 = por %p125, %p126
      %p128 = scmp.ne.s32.totalorder %s116, %s117
      %p129 = scmp.eq.s32.totalorder %s18, 1
      %p130 = por %p128, %p129
      %p132 = scmp.ne.s32.totalorder %s117, %s131
      %p133 = scmp.eq.s32.totalorder %s18, 0
      %p134 = por %p132, %p133
      %s136 = sadd.s32 %s135, 1
      %p139 = scmp.eq.s32.totalorder %s12, 1
      %p140 = scmp.ne.s32.totalorder %s135, %s137
      %p141 = scmp.eq.s32.totalorder %s12, 0
      %p142 = por %p140, %p141
      %p143 = scmp.ne.s32.totalorder %s135, %s137
      %p144 = scmp.eq.s32.totalorder %s17, 1
      %p145 = por %p143, %p144
      %p146 = scmp.ne.s32.totalorder %s137, %s138
      %p147 = scmp.eq.s32.totalorder %s17, 0
      %p148 = por %p146, %p147
      %p149 = scmp.ne.s32.totalorder %s137, %s138
      %p150 = scmp.eq.s32.totalorder %s18, 1
      %p151 = por %p149, %p150
      %p153 = scmp.ne.s32.totalorder %s138, %s152
      %p154 = scmp.eq.s32.totalorder %s18, 0
      %p155 = por %p153, %p154
      %p156 = scmp.le.s32.totalorder 1, %s12
      %p157 = scmp.lt.s32.totalorder %s12, 3
      %p158 = pnand %p156, %p157
      %p159 = pneg %p158
      // Predicated region
      $region9: #{distill_kl_ml_forward.5} parent=5 // pred_check
        _
      $region10: #{distill_kl_ml_forward.5} parent=5 // pred_check_branch
        %161 = sbr.rel (%p158) target = $region12
      $region11: #{distill_kl_ml_forward.5} parent=5 // pred_region
        %s162 = ssub.s32 %s12, 1
        // Predicated region
        $region13: #{distill_kl_ml_forward.5} parent=11 // pred_check
          %p163 = pneg %p85
        $region14: #{distill_kl_ml_forward.5} parent=11 // pred_check_branch
          %165 = sbr.rel (%p163) target = $region16
        $region15: #{distill_kl_ml_forward.5} parent=11 // pred_region
          _
        $region16: #{distill_kl_ml_forward.5} parent=11 // pred_fallthru
          _
        // Predicated region
        $region17: #{distill_kl_ml_forward.5} parent=11 // pred_check
          %p166 = pneg %p106
        $region18: #{distill_kl_ml_forward.5} parent=11 // pred_check_branch
          %168 = sbr.rel (%p166) target = $region20
        $region19: #{distill_kl_ml_forward.5} parent=11 // pred_region
          _
        $region20: #{distill_kl_ml_forward.5} parent=11 // pred_fallthru
          _
        // Predicated region
        $region21: #{distill_kl_ml_forward.5} parent=11 // pred_check
          %p169 = pneg %p127
        $region22: #{distill_kl_ml_forward.5} parent=11 // pred_check_branch
          %171 = sbr.rel (%p169) target = $region24
        $region23: #{distill_kl_ml_forward.5} parent=11 // pred_region
          _
        $region24: #{distill_kl_ml_forward.5} parent=11 // pred_fallthru
          _
      $region12: #{distill_kl_ml_forward.5} parent=5 // pred_fallthru
        _
      %p172 = scmp.lt.s32.totalorder %s12, 2
      // Predicated region
      $region25: #{distill_kl_ml_forward.5} parent=5 // pred_check
        %p173 = pneg %p172
      $region26: #{distill_kl_ml_forward.5} parent=5 // pred_check_branch
        %175 = sbr.rel (%p173) target = $region28
      $region27: #{distill_kl_ml_forward.5} parent=5 // pred_region
        // Predicated region
        $region29: #{distill_kl_ml_forward.5} parent=27 // pred_check
          %p176 = pneg %p32
        $region30: #{distill_kl_ml_forward.5} parent=27 // pred_check_branch
          %178 = sbr.rel (%p176) target = $region32
        $region31: #{distill_kl_ml_forward.5} parent=27 // pred_region
          %p179 = scmp.lt.s32.totalorder %s12, 1
          %s180 = scalar_select %p179, %s12, 1
          %s181 = smul.addr %s180, 10
          %s182 = smul.addr %s181, 4
          %s183 = scalar_lea.vmem %s0, %s182
        $region32: #{distill_kl_ml_forward.5} parent=27 // pred_fallthru
          _
        // Predicated region
        $region33: #{distill_kl_ml_forward.5} parent=27 // pred_check
          %p184 = pneg %p58
        $region34: #{distill_kl_ml_forward.5} parent=27 // pred_check_branch
          %186 = sbr.rel (%p184) target = $region36
        $region35: #{distill_kl_ml_forward.5} parent=27 // pred_region
          %p187 = scmp.lt.s32.totalorder %s12, 1
          %s188 = scalar_select %p187, %s12, 1
          %s189 = smul.addr %s188, 10
          %s190 = smul.addr %s189, 4
          %s191 = scalar_lea.vmem %s1, %s190
        $region36: #{distill_kl_ml_forward.5} parent=27 // pred_fallthru
          _
      $region28: #{distill_kl_ml_forward.5} parent=5 // pred_fallthru
        _
      %p192 = scmp.le.s32.totalorder 1, %s12
      %p193 = scmp.lt.s32.totalorder %s12, 3
      %p194 = pnand %p192, %p193
      %p195 = pneg %p194
      // Predicated region
      $region37: #{distill_kl_ml_forward.5} parent=5 // pred_check
        _
      $region38: #{distill_kl_ml_forward.5} parent=5 // pred_check_branch
        %197 = sbr.rel (%p194) target = $region40
      $region39: #{distill_kl_ml_forward.5} parent=5 // pred_region
        %s198 = ssub.s32 %s12, 1
        %p199 = scmp.lt.s32.totalorder %s17, 1
        %s200 = scalar_select %p199, %s17, 1
        %s201 = smul.addr %s200, 10
        %s202 = smul.addr %s201, 4
        %s203 = scalar_lea.vmem %s0, %s202
        %p204 = pneg %p38
        %p205 = pneg %p35
        %p206 = scmp.lt.s32.totalorder %s17, 1
        %s207 = scalar_select %p206, %s17, 1
        %s208 = smul.addr %s207, 10
        %s209 = smul.addr %s208, 4
        %s210 = scalar_lea.vmem %s1, %s209
        %p211 = pneg %p64
        %p212 = pneg %p61
        %p213 = pneg %p85
        %p214 = pneg %p82
        %p215 = pneg %p106
        %p216 = pneg %p103
        %p217 = pneg %p127
        %p218 = pneg %p124
        %p219 = pneg %p148
        %p220 = pneg %p145
        %p221 = scmp.lt.s32.totalorder %s17, 1
        %s222 = scalar_select %p221, %s17, 1
        %s223 = smul.addr %s222, 10
        %s224 = smul.addr %s223, 4
        %s225 = scalar_lea.vmem %s0, %s224
        %p226 = scmp.lt.s32.totalorder %s17, 1
        %s227 = scalar_select %p226, %s17, 1
        %s228 = smul.addr %s227, 10
        %s229 = smul.addr %s228, 4
        %s230 = scalar_lea.vmem %s1, %s229
        %231 = vst [vmem:[#allocation2] sm:$0xff] 0.0
        %232 = vst [vmem:[#allocation2 + $0x8] sm:$0xff] 0.0
        %233 = vst [vmem:[#allocation2 + $0x10] sm:$0xff] 0.0
        %234 = vst [vmem:[#allocation2 + $0x18] sm:$0xff] 0.0
        %vm235 = vcmask 1043456
        %vm236 = vcmask 605188
        %vm237 = vmor %vm236, %vm235
        %238 = vst.msk [vmem:[#allocation2 + $0x20] sm:$0xff] %vm237, 0.0
        %v239 = vld [vmem:[%s225] sm:$0xff]
        %v240 = vld [vmem:[%s225 + $0x8] sm:$0xff]
        %v241 = vld [vmem:[%s225 + $0x10] sm:$0xff]
        %v242 = vld [vmem:[%s225 + $0x18] sm:$0xff]
        %v243 = vld [vmem:[%s225 + $0x20] sm:$0xff]
        %249 = vrot.lane.b32.xlu0 %v239, 35
        %v250 = vpop.permute.xlu0 %249
        %251 = vrot.lane.b32.xlu0 %v240, 35
        %v252 = vpop.permute.xlu0 %251
        %253 = vrot.lane.b32.xlu0 %v241, 35
        %v254 = vpop.permute.xlu0 %253
        %255 = vrot.lane.b32.xlu0 %v242, 35
        %v256 = vpop.permute.xlu0 %255
        %257 = vrot.lane.b32.xlu0 %v243, 35
        %v258 = vpop.permute.xlu0 %257
        %v259 = vrot.slane %v250, 4
        %v260 = vrot.slane %v252, 4
        %v261 = vrot.slane %v254, 4
        %v262 = vrot.slane %v256, 4
        %v263 = vrot.slane %v258, 4
        %vm264 = vcmask 285696
        %v265 = vsel %vm264, %v259, %v250
        %v266 = vsel %vm235, %v259, %v260
        %v267 = vsel %vm264, %v266, %v252
        %v268 = vsel %vm235, %v260, %v261
        %v269 = vsel %vm264, %v268, %v254
        %v270 = vsel %vm235, %v261, %v262
        %v271 = vsel %vm264, %v270, %v256
        %v272 = vsel %vm235, %v262, %v263
        %v273 = vsel %vm264, %v272, %v258
        %vm279 = vcmask 1043736
        %vm280 = vcmask 1047556
        %vm281 = vmor %vm280, %vm279
        %282 = vst.msk [vmem:[#allocation2] sm:$0xff] %vm281, %v265
        %283 = vst [vmem:[#allocation2 + $0x8] sm:$0xff] %v267
        %284 = vst [vmem:[#allocation2 + $0x10] sm:$0xff] %v269
        %285 = vst [vmem:[#allocation2 + $0x18] sm:$0xff] %v271
        %vm286 = vcmask 318468
        %vm287 = vmor %vm286, %vm235
        %288 = vst.msk [vmem:[#allocation2 + $0x20] sm:$0xff] %vm287, %v273
        %v289 = vld [vmem:[%s2] sm:$0xf]
        %v290 = vld [vmem:[#allocation2] sm:$0xff]
        %v291 = vld [vmem:[#allocation2 + $0x8] sm:$0xff]
        %v292 = vld [vmem:[#allocation2 + $0x10] sm:$0xff]
        %v293 = vld [vmem:[#allocation2 + $0x18] sm:$0xff]
        %v294 = vld [vmem:[#allocation2 + $0x20] sm:$0xff]
        %s295 = scalar_lea.vmem %s2, 4
        %v296 = vld [vmem:[%s295] sm:$0xf]
        %v302 = vcombine.high %v290, %v290
        %v303 = vcombine.high %v291, %v291
        %v304 = vcombine.high %v292, %v292
        %v305 = vcombine.high %v293, %v293
        %v306 = vcombine.high %v294, %v294
        %307 = vrot.lane.b32.xlu0 %v290, 127
        %v308 = vpop.permute.xlu0 %307
        %309 = vrot.lane.b32.xlu0 %v302, 127
        %v310 = vpop.permute.xlu0 %309
        %311 = vrot.lane.b32.xlu0 %v291, 127
        %v312 = vpop.permute.xlu0 %311
        %313 = vrot.lane.b32.xlu0 %v303, 127
        %v314 = vpop.permute.xlu0 %313
        %315 = vrot.lane.b32.xlu0 %v292, 127
        %v316 = vpop.permute.xlu0 %315
        %317 = vrot.lane.b32.xlu0 %v304, 127
        %v318 = vpop.permute.xlu0 %317
        %319 = vrot.lane.b32.xlu0 %v293, 127
        %v320 = vpop.permute.xlu0 %319
        %321 = vrot.lane.b32.xlu0 %v305, 127
        %v322 = vpop.permute.xlu0 %321
        %323 = vrot.lane.b32.xlu0 %v294, 127
        %v324 = vpop.permute.xlu0 %323
        %325 = vrot.lane.b32.xlu0 %v306, 127
        %v326 = vpop.permute.xlu0 %325
        %vm327 = vcmask 1039360
        %v328 = vsel %vm327, %v308, %v310
        %v329 = vsel %vm327, %v310, %v312
        %v330 = vsel %vm327, %v312, %v314
        %v331 = vsel %vm327, %v314, %v316
        %v332 = vsel %vm327, %v316, %v318
        %v333 = vsel %vm327, %v318, %v320
        %v334 = vsel %vm327, %v320, %v322
        %v335 = vsel %vm327, %v322, %v324
        %v336 = vsel %vm327, %v324, %v326
        %vm337 = vcmask 31744
        %v339 = vsel %vm337, %v296, 0
        %v341 = vsel %vm235, %v328, 0
        %v343 = vsel %vm235, %v329, 0
        %v345 = vsel %vm235, %v330, 0
        %v347 = vsel %vm235, %v331, 0
        %v349 = vsel %vm235, %v332, 0
        %v351 = vsel %vm235, %v333, 0
        %v353 = vsel %vm235, %v334, 0
        %v355 = vsel %vm235, %v335, 0
        %v357 = vsel %vm235, %v336, 0
        %v359 = vsel %vm235, %v326, 0
        %361 = vmatprep.subr.mxu0 %v343
        %362 = vmatpush1.msra.mxu0 %v341
        %363 = vmatprep.subr.mxu0 0.0
        %364 = vmatpush1.msra.mxu0 0.0
        %365 = vmatprep.subr.mxu0 0.0
        %366 = vmatpush1.msra.mxu0 0.0
        %367 = vmatprep.subr.mxu0 0.0
        %368 = vmatpush1.msra.mxu0 0.0
        %369 = vmatprep.subr.mxu0 0.0
        %370 = vmatpush1.msra.mxu0 0.0
        %371 = vmatprep.subr.mxu0 0.0
        %372 = vmatpush1.msra.mxu0 0.0
        %373 = vmatprep.subr.mxu0 0.0
        %374 = vmatpush1.msra.mxu0 0.0
        %375 = vmatprep.subr.mxu0 0.0
        %376 = vmatpush1.msra.mxu0 0.0
        %377 = vmatprep.subr.mxu0 0.0
        %378 = vmatpush1.msra.mxu0 0.0
        %379 = vmatprep.subr.mxu0 0.0
        %380 = vmatpush1.msra.mxu0 0.0
        %381 = vmatprep.subr.mxu0 0.0
        %382 = vmatpush1.msra.mxu0 0.0
        %383 = vmatprep.subr.mxu0 0.0
        %384 = vmatpush1.msra.mxu0 0.0
        %385 = vmatprep.subr.mxu0 0.0
        %386 = vmatpush1.msra.mxu0 0.0
        %387 = vmatprep.subr.mxu0 0.0
        %388 = vmatpush1.msra.mxu0 0.0
        %389 = vmatprep.subr.mxu0 0.0
        %390 = vmatpush1.msra.mxu0 0.0
        %391 = vmatprep.subr.mxu0 0.0
        %392 = vmatpush1.msra.mxu0 0.0
        %393 = vmatprep.subr.mxu0 0.0
        %394 = vmatpush1.msra.mxu0 0.0
        %395 = vmatprep.subr.mxu0 0.0
        %396 = vmatpush1.msra.mxu0 0.0
        %397 = vmatprep.subr.mxu0 0.0
        %398 = vmatpush1.msra.mxu0 0.0
        %399 = vmatprep.subr.mxu0 0.0
        %400 = vmatpush1.msra.mxu0 0.0
        %401 = vmatprep.subr.mxu0 0.0
        %402 = vmatpush1.msra.mxu0 0.0
        %403 = vmatprep.subr.mxu0 0.0
        %404 = vmatpush1.msra.mxu0 0.0
        %405 = vmatprep.subr.mxu0 0.0
        %406 = vmatpush1.msra.mxu0 0.0
        %407 = vmatprep.subr.mxu0 0.0
        %408 = vmatpush1.msra.mxu0 0.0
        %409 = vmatprep.subr.mxu0 0.0
        %410 = vmatpush1.msra.mxu0 0.0
        %411 = vmatprep.subr.mxu0 0.0
        %412 = vmatpush1.msra.mxu0 0.0
        %413 = vmatprep.subr.mxu0 0.0
        %414 = vmatpush1.msra.mxu0 0.0
        %415 = vmatprep.subr.mxu0 0.0
        %416 = vmatpush1.msra.mxu0 0.0
        %417 = vmatprep.subr.mxu0 0.0
        %418 = vmatpush1.msra.mxu0 0.0
        %419 = vmatprep.subr.mxu0 0.0
        %420 = vmatpush1.msra.mxu0 0.0
        %421 = vmatprep.subr.mxu0 0.0
        %422 = vmatpush1.msra.mxu0 0.0
        %423 = vmatprep.subr.mxu0 0.0
        %424 = vmatpush1.msra.mxu0 0.0
        %425 = vmatprep.mubr.f32.mxu0 0.0
        %426 = vmatmul.mubr.f32.gmra.mrb[0].mxu0 %v339
        %v427 = vpop.f32.mrb[0].mxu0
        %v428 = vadd.f32 0.0, %v427
        %v429 = vpop.f32.mrb[0].mxu0
        %v430 = vadd.f32 0.0, %v429
        %431 = vdwg.mxu0
        %432 = vmatprep.subr.mxu0 %v347
        %433 = vmatpush1.msra.mxu0 %v345
        %434 = vmatprep.subr.mxu0 0.0
        %435 = vmatpush1.msra.mxu0 0.0
        %436 = vmatprep.subr.mxu0 0.0
        %437 = vmatpush1.msra.mxu0 0.0
        %438 = vmatprep.subr.mxu0 0.0
        %439 = vmatpush1.msra.mxu0 0.0
        %440 = vmatprep.subr.mxu0 0.0
        %441 = vmatpush1.msra.mxu0 0.0
        %442 = vmatprep.subr.mxu0 0.0
        %443 = vmatpush1.msra.mxu0 0.0
        %444 = vmatprep.subr.mxu0 0.0
        %445 = vmatpush1.msra.mxu0 0.0
        %446 = vmatprep.subr.mxu0 0.0
        %447 = vmatpush1.msra.mxu0 0.0
        %448 = vmatprep.subr.mxu0 0.0
        %449 = vmatpush1.msra.mxu0 0.0
        %450 = vmatprep.subr.mxu0 0.0
        %451 = vmatpush1.msra.mxu0 0.0
        %452 = vmatprep.subr.mxu0 0.0
        %453 = vmatpush1.msra.mxu0 0.0
        %454 = vmatprep.subr.mxu0 0.0
        %455 = vmatpush1.msra.mxu0 0.0
        %456 = vmatprep.subr.mxu0 0.0
        %457 = vmatpush1.msra.mxu0 0.0
        %458 = vmatprep.subr.mxu0 0.0
        %459 = vmatpush1.msra.mxu0 0.0
        %460 = vmatprep.subr.mxu0 0.0
        %461 = vmatpush1.msra.mxu0 0.0
        %462 = vmatprep.subr.mxu0 0.0
        %463 = vmatpush1.msra.mxu0 0.0
        %464 = vmatprep.subr.mxu0 0.0
        %465 = vmatpush1.msra.mxu0 0.0
        %466 = vmatprep.subr.mxu0 0.0
        %467 = vmatpush1.msra.mxu0 0.0
        %468 = vmatprep.subr.mxu0 0.0
        %469 = vmatpush1.msra.mxu0 0.0
        %470 = vmatprep.subr.mxu0 0.0
        %471 = vmatpush1.msra.mxu0 0.0
        %472 = vmatprep.subr.mxu0 0.0
        %473 = vmatpush1.msra.mxu0 0.0
        %474 = vmatprep.subr.mxu0 0.0
        %475 = vmatpush1.msra.mxu0 0.0
        %476 = vmatprep.subr.mxu0 0.0
        %477 = vmatpush1.msra.mxu0 0.0
        %478 = vmatprep.subr.mxu0 0.0
        %479 = vmatpush1.msra.mxu0 0.0
        %480 = vmatprep.subr.mxu0 0.0
        %481 = vmatpush1.msra.mxu0 0.0
        %482 = vmatprep.subr.mxu0 0.0
        %483 = vmatpush1.msra.mxu0 0.0
        %484 = vmatprep.subr.mxu0 0.0
        %485 = vmatpush1.msra.mxu0 0.0
        %486 = vmatprep.subr.mxu0 0.0
        %487 = vmatpush1.msra.mxu0 0.0
        %488 = vmatprep.subr.mxu0 0.0
        %489 = vmatpush1.msra.mxu0 0.0
        %490 = vmatprep.subr.mxu0 0.0
        %491 = vmatpush1.msra.mxu0 0.0
        %492 = vmatprep.subr.mxu0 0.0
        %493 = vmatpush1.msra.mxu0 0.0
        %494 = vmatprep.subr.mxu0 0.0
        %495 = vmatpush1.msra.mxu0 0.0
        %496 = vmatprep.mubr.f32.mxu0 0.0
        %497 = vmatmul.mubr.f32.gmra.mrb[0].mxu0 %v339
        %v498 = vpop.f32.mrb[0].mxu0
        %v499 = vadd.f32 0.0, %v498
        %v500 = vpop.f32.mrb[0].mxu0
        %v501 = vadd.f32 0.0, %v500
        %502 = vdwg.mxu0
        %503 = vmatprep.subr.mxu0 %v351
        %504 = vmatpush1.msra.mxu0 %v349
        %505 = vmatprep.subr.mxu0 0.0
        %506 = vmatpush1.msra.mxu0 0.0
        %507 = vmatprep.subr.mxu0 0.0
        %508 = vmatpush1.msra.mxu0 0.0
        %509 = vmatprep.subr.mxu0 0.0
        %510 = vmatpush1.msra.mxu0 0.0
        %511 = vmatprep.subr.mxu0 0.0
        %512 = vmatpush1.msra.mxu0 0.0
        %513 = vmatprep.subr.mxu0 0.0
        %514 = vmatpush1.msra.mxu0 0.0
        %515 = vmatprep.subr.mxu0 0.0
        %516 = vmatpush1.msra.mxu0 0.0
        %517 = vmatprep.subr.mxu0 0.0
        %518 = vmatpush1.msra.mxu0 0.0
        %519 = vmatprep.subr.mxu0 0.0
        %520 = vmatpush1.msra.mxu0 0.0
        %521 = vmatprep.subr.mxu0 0.0
        %522 = vmatpush1.msra.mxu0 0.0
        %523 = vmatprep.subr.mxu0 0.0
        %524 = vmatpush1.msra.mxu0 0.0
        %525 = vmatprep.subr.mxu0 0.0
        %526 = vmatpush1.msra.mxu0 0.0
        %527 = vmatprep.subr.mxu0 0.0
        %528 = vmatpush1.msra.mxu0 0.0
        %529 = vmatprep.subr.mxu0 0.0
        %530 = vmatpush1.msra.mxu0 0.0
        %531 = vmatprep.subr.mxu0 0.0
        %532 = vmatpush1.msra.mxu0 0.0
        %533 = vmatprep.subr.mxu0 0.0
        %534 = vmatpush1.msra.mxu0 0.0
        %535 = vmatprep.subr.mxu0 0.0
        %536 = vmatpush1.msra.mxu0 0.0
        %537 = vmatprep.subr.mxu0 0.0
        %538 = vmatpush1.msra.mxu0 0.0
        %539 = vmatprep.subr.mxu0 0.0
        %540 = vmatpush1.msra.mxu0 0.0
        %541 = vmatprep.subr.mxu0 0.0
        %542 = vmatpush1.msra.mxu0 0.0
        %543 = vmatprep.subr.mxu0 0.0
        %544 = vmatpush1.msra.mxu0 0.0
        %545 = vmatprep.subr.mxu0 0.0
        %546 = vmatpush1.msra.mxu0 0.0
        %547 = vmatprep.subr.mxu0 0.0
        %548 = vmatpush1.msra.mxu0 0.0
        %549 = vmatprep.subr.mxu0 0.0
        %550 = vmatpush1.msra.mxu0 0.0
        %551 = vmatprep.subr.mxu0 0.0
        %552 = vmatpush1.msra.mxu0 0.0
        %553 = vmatprep.subr.mxu0 0.0
        %554 = vmatpush1.msra.mxu0 0.0
        %555 = vmatprep.subr.mxu0 0.0
        %556 = vmatpush1.msra.mxu0 0.0
        %557 = vmatprep.subr.mxu0 0.0
        %558 = vmatpush1.msra.mxu0 0.0
        %559 = vmatprep.subr.mxu0 0.0
        %560 = vmatpush1.msra.mxu0 0.0
        %561 = vmatprep.subr.mxu0 0.0
        %562 = vmatpush1.msra.mxu0 0.0
        %563 = vmatprep.subr.mxu0 0.0
        %564 = vmatpush1.msra.mxu0 0.0
        %565 = vmatprep.subr.mxu0 0.0
        %566 = vmatpush1.msra.mxu0 0.0
        %567 = vmatprep.mubr.f32.mxu0 0.0
        %568 = vmatmul.mubr.f32.gmra.mrb[0].mxu0 %v339
        %v569 = vpop.f32.mrb[0].mxu0
        %v570 = vadd.f32 0.0, %v569
        %v571 = vpop.f32.mrb[0].mxu0
        %v572 = vadd.f32 0.0, %v571
        %573 = vdwg.mxu0
        %574 = vmatprep.subr.mxu0 %v355
        %575 = vmatpush1.msra.mxu0 %v353
        %576 = vmatprep.subr.mxu0 0.0
        %577 = vmatpush1.msra.mxu0 0.0
        %578 = vmatprep.subr.mxu0 0.0
        %579 = vmatpush1.msra.mxu0 0.0
        %580 = vmatprep.subr.mxu0 0.0
        %581 = vmatpush1.msra.mxu0 0.0
        %582 = vmatprep.subr.mxu0 0.0
        %583 = vmatpush1.msra.mxu0 0.0
        %584 = vmatprep.subr.mxu0 0.0
        %585 = vmatpush1.msra.mxu0 0.0
        %586 = vmatprep.subr.mxu0 0.0
        %587 = vmatpush1.msra.mxu0 0.0
        %588 = vmatprep.subr.mxu0 0.0
        %589 = vmatpush1.msra.mxu0 0.0
        %590 = vmatprep.subr.mxu0 0.0
        %591 = vmatpush1.msra.mxu0 0.0
        %592 = vmatprep.subr.mxu0 0.0
        %593 = vmatpush1.msra.mxu0 0.0
        %594 = vmatprep.subr.mxu0 0.0
        %595 = vmatpush1.msra.mxu0 0.0
        %596 = vmatprep.subr.mxu0 0.0
        %597 = vmatpush1.msra.mxu0 0.0
        %598 = vmatprep.subr.mxu0 0.0
        %599 = vmatpush1.msra.mxu0 0.0
        %600 = vmatprep.subr.mxu0 0.0
        %601 = vmatpush1.msra.mxu0 0.0
        %602 = vmatprep.subr.mxu0 0.0
        %603 = vmatpush1.msra.mxu0 0.0
        %604 = vmatprep.subr.mxu0 0.0
        %605 = vmatpush1.msra.mxu0 0.0
        %606 = vmatprep.subr.mxu0 0.0
        %607 = vmatpush1.msra.mxu0 0.0
        %608 = vmatprep.subr.mxu0 0.0
        %609 = vmatpush1.msra.mxu0 0.0
        %610 = vmatprep.subr.mxu0 0.0
        %611 = vmatpush1.msra.mxu0 0.0
        %612 = vmatprep.subr.mxu0 0.0
        %613 = vmatpush1.msra.mxu0 0.0
        %614 = vmatprep.subr.mxu0 0.0
        %615 = vmatpush1.msra.mxu0 0.0
        %616 = vmatprep.subr.mxu0 0.0
        %617 = vmatpush1.msra.mxu0 0.0
        %618 = vmatprep.subr.mxu0 0.0
        %619 = vmatpush1.msra.mxu0 0.0
        %620 = vmatprep.subr.mxu0 0.0
        %621 = vmatpush1.msra.mxu0 0.0
        %622 = vmatprep.subr.mxu0 0.0
        %623 = vmatpush1.msra.mxu0 0.0
        %624 = vmatprep.subr.mxu0 0.0
        %625 = vmatpush1.msra.mxu0 0.0
        %626 = vmatprep.subr.mxu0 0.0
        %627 = vmatpush1.msra.mxu0 0.0
        %628 = vmatprep.subr.mxu0 0.0
        %629 = vmatpush1.msra.mxu0 0.0
        %630 = vmatprep.subr.mxu0 0.0
        %631 = vmatpush1.msra.mxu0 0.0
        %632 = vmatprep.subr.mxu0 0.0
        %633 = vmatpush1.msra.mxu0 0.0
        %634 = vmatprep.subr.mxu0 0.0
        %635 = vmatpush1.msra.mxu0 0.0
        %636 = vmatprep.subr.mxu0 0.0
        %637 = vmatpush1.msra.mxu0 0.0
        %638 = vmatprep.mubr.f32.mxu0 0.0
        %639 = vmatmul.mubr.f32.gmra.mrb[0].mxu0 %v339
        %v640 = vpop.f32.mrb[0].mxu0
        %v641 = vadd.f32 0.0, %v640
        %v642 = vpop.f32.mrb[0].mxu0
        %v643 = vadd.f32 0.0, %v642
        %644 = vdwg.mxu0
        %645 = vmatprep.subr.mxu0 %v359
        %646 = vmatpush1.msra.mxu0 %v357
        %647 = vmatprep.subr.mxu0 0.0
        %648 = vmatpush1.msra.mxu0 0.0
        %649 = vmatprep.subr.mxu0 0.0
        %650 = vmatpush1.msra.mxu0 0.0
        %651 = vmatprep.subr.mxu0 0.0
        %652 = vmatpush1.msra.mxu0 0.0
        %653 = vmatprep.subr.mxu0 0.0
        %654 = vmatpush1.msra.mxu0 0.0
        %655 = vmatprep.subr.mxu0 0.0
        %656 = vmatpush1.msra.mxu0 0.0
        %657 = vmatprep.subr.mxu0 0.0
        %658 = vmatpush1.msra.mxu0 0.0
        %659 = vmatprep.subr.mxu0 0.0
        %660 = vmatpush1.msra.mxu0 0.0
        %661 = vmatprep.subr.mxu0 0.0
        %662 = vmatpush1.msra.mxu0 0.0
        %663 = vmatprep.subr.mxu0 0.0
        %664 = vmatpush1.msra.mxu0 0.0
        %665 = vmatprep.subr.mxu0 0.0
        %666 = vmatpush1.msra.mxu0 0.0
        %667 = vmatprep.subr.mxu0 0.0
        %668 = vmatpush1.msra.mxu0 0.0
        %669 = vmatprep.subr.mxu0 0.0
        %670 = vmatpush1.msra.mxu0 0.0
        %671 = vmatprep.subr.mxu0 0.0
        %672 = vmatpush1.msra.mxu0 0.0
        %673 = vmatprep.subr.mxu0 0.0
        %674 = vmatpush1.msra.mxu0 0.0
        %675 = vmatprep.subr.mxu0 0.0
        %676 = vmatpush1.msra.mxu0 0.0
        %677 = vmatprep.subr.mxu0 0.0
        %678 = vmatpush1.msra.mxu0 0.0
        %679 = vmatprep.subr.mxu0 0.0
        %680 = vmatpush1.msra.mxu0 0.0
        %681 = vmatprep.subr.mxu0 0.0
        %682 = vmatpush1.msra.mxu0 0.0
        %683 = vmatprep.subr.mxu0 0.0
        %684 = vmatpush1.msra.mxu0 0.0
        %685 = vmatprep.subr.mxu0 0.0
        %686 = vmatpush1.msra.mxu0 0.0
        %687 = vmatprep.subr.mxu0 0.0
        %688 = vmatpush1.msra.mxu0 0.0
        %689 = vmatprep.subr.mxu0 0.0
        %690 = vmatpush1.msra.mxu0 0.0
        %691 = vmatprep.subr.mxu0 0.0
        %692 = vmatpush1.msra.mxu0 0.0
        %693 = vmatprep.subr.mxu0 0.0
        %694 = vmatpush1.msra.mxu0 0.0
        %695 = vmatprep.subr.mxu0 0.0
        %696 = vmatpush1.msra.mxu0 0.0
        %697 = vmatprep.subr.mxu0 0.0
        %698 = vmatpush1.msra.mxu0 0.0
        %699 = vmatprep.subr.mxu0 0.0
        %700 = vmatpush1.msra.mxu0 0.0
        %701 = vmatprep.subr.mxu0 0.0
        %702 = vmatpush1.msra.mxu0 0.0
        %703 = vmatprep.subr.mxu0 0.0
        %704 = vmatpush1.msra.mxu0 0.0
        %705 = vmatprep.subr.mxu0 0.0
        %706 = vmatpush1.msra.mxu0 0.0
        %707 = vmatprep.subr.mxu0 0.0
        %708 = vmatpush1.msra.mxu0 0.0
        %709 = vmatprep.mubr.f32.mxu0 0.0
        %710 = vmatmul.mubr.f32.gmra.mrb[0].mxu0 %v339
        %v711 = vpop.f32.mrb[0].mxu0
        %v712 = vadd.f32 0.0, %v711
        %v713 = vpop.f32.mrb[0].mxu0
        %v714 = vadd.f32 0.0, %v713
        %715 = vdwg.mxu0
        %v717 = vsel %vm337, %v289, 0
        %v719 = vsel %vm235, %v290, 0
        %v721 = vsel %vm235, %v302, 0
        %v723 = vsel %vm235, %v291, 0
        %v725 = vsel %vm235, %v303, 0
        %v727 = vsel %vm235, %v292, 0
        %v729 = vsel %vm235, %v304, 0
        %v731 = vsel %vm235, %v293, 0
        %v733 = vsel %vm235, %v305, 0
        %v735 = vsel %vm235, %v294, 0
        %v737 = vsel %vm235, %v306, 0
        %739 = vmatprep.subr.mxu0 %v721
        %740 = vmatpush1.msra.mxu0 %v719
        %741 = vmatprep.subr.mxu0 0.0
        %742 = vmatpush1.msra.mxu0 0.0
        %743 = vmatprep.subr.mxu0 0.0
        %744 = vmatpush1.msra.mxu0 0.0
        %745 = vmatprep.subr.mxu0 0.0
        %746 = vmatpush1.msra.mxu0 0.0
        %747 = vmatprep.subr.mxu0 0.0
        %748 = vmatpush1.msra.mxu0 0.0
        %749 = vmatprep.subr.mxu0 0.0
        %750 = vmatpush1.msra.mxu0 0.0
        %751 = vmatprep.subr.mxu0 0.0
        %752 = vmatpush1.msra.mxu0 0.0
        %753 = vmatprep.subr.mxu0 0.0
        %754 = vmatpush1.msra.mxu0 0.0
        %755 = vmatprep.subr.mxu0 0.0
        %756 = vmatpush1.msra.mxu0 0.0
        %757 = vmatprep.subr.mxu0 0.0
        %758 = vmatpush1.msra.mxu0 0.0
        %759 = vmatprep.subr.mxu0 0.0
        %760 = vmatpush1.msra.mxu0 0.0
        %761 = vmatprep.subr.mxu0 0.0
        %762 = vmatpush1.msra.mxu0 0.0
        %763 = vmatprep.subr.mxu0 0.0
        %764 = vmatpush1.msra.mxu0 0.0
        %765 = vmatprep.subr.mxu0 0.0
        %766 = vmatpush1.msra.mxu0 0.0
        %767 = vmatprep.subr.mxu0 0.0
        %768 = vmatpush1.msra.mxu0 0.0
        %769 = vmatprep.subr.mxu0 0.0
        %770 = vmatpush1.msra.mxu0 0.0
        %771 = vmatprep.subr.mxu0 0.0
        %772 = vmatpush1.msra.mxu0 0.0
        %773 = vmatprep.subr.mxu0 0.0
        %774 = vmatpush1.msra.mxu0 0.0
        %775 = vmatprep.subr.mxu0 0.0
        %776 = vmatpush1.msra.mxu0 0.0
        %777 = vmatprep.subr.mxu0 0.0
        %778 = vmatpush1.msra.mxu0 0.0
        %779 = vmatprep.subr.mxu0 0.0
        %780 = vmatpush1.msra.mxu0 0.0
        %781 = vmatprep.subr.mxu0 0.0
        %782 = vmatpush1.msra.mxu0 0.0
        %783 = vmatprep.subr.mxu0 0.0
        %784 = vmatpush1.msra.mxu0 0.0
        %785 = vmatprep.subr.mxu0 0.0
        %786 = vmatpush1.msra.mxu0 0.0
        %787 = vmatprep.subr.mxu0 0.0
        %788 = vmatpush1.msra.mxu0 0.0
        %789 = vmatprep.subr.mxu0 0.0
        %790 = vmatpush1.msra.mxu0 0.0
        %791 = vmatprep.subr.mxu0 0.0
        %792 = vmatpush1.msra.mxu0 0.0
        %793 = vmatprep.subr.mxu0 0.0
        %794 = vmatpush1.msra.mxu0 0.0
        %795 = vmatprep.subr.mxu0 0.0
        %796 = vmatpush1.msra.mxu0 0.0
        %797 = vmatprep.subr.mxu0 0.0
        %798 = vmatpush1.msra.mxu0 0.0
        %799 = vmatprep.subr.mxu0 0.0
        %800 = vmatpush1.msra.mxu0 0.0
        %801 = vmatprep.subr.mxu0 0.0
        %802 = vmatpush1.msra.mxu0 0.0
        %803 = vmatprep.mubr.f32.mxu0 0.0
        %804 = vmatmul.mubr.f32.gmra.mrb[0].mxu0 %v717
        %v805 = vpop.f32.mrb[0].mxu0
        %v806 = vadd.f32 %v428, %v805
        %v807 = vpop.f32.mrb[0].mxu0
        %v808 = vadd.f32 %v430, %v807
        %809 = vdwg.mxu0
        %810 = vmatprep.subr.mxu0 %v725
        %811 = vmatpush1.msra.mxu0 %v723
        %812 = vmatprep.subr.mxu0 0.0
        %813 = vmatpush1.msra.mxu0 0.0
        %814 = vmatprep.subr.mxu0 0.0
        %815 = vmatpush1.msra.mxu0 0.0
        %816 = vmatprep.subr.mxu0 0.0
        %817 = vmatpush1.msra.mxu0 0.0
        %818 = vmatprep.subr.mxu0 0.0
        %819 = vmatpush1.msra.mxu0 0.0
        %820 = vmatprep.subr.mxu0 0.0
        %821 = vmatpush1.msra.mxu0 0.0
        %822 = vmatprep.subr.mxu0 0.0
        %823 = vmatpush1.msra.mxu0 0.0
        %824 = vmatprep.subr.mxu0 0.0
        %825 = vmatpush1.msra.mxu0 0.0
        %826 = vmatprep.subr.mxu0 0.0
        %827 = vmatpush1.msra.mxu0 0.0
        %828 = vmatprep.subr.mxu0 0.0
        %829 = vmatpush1.msra.mxu0 0.0
        %830 = vmatprep.subr.mxu0 0.0
        %831 = vmatpush1.msra.mxu0 0.0
        %832 = vmatprep.subr.mxu0 0.0
        %833 = vmatpush1.msra.mxu0 0.0
        %834 = vmatprep.subr.mxu0 0.0
        %835 = vmatpush1.msra.mxu0 0.0
        %836 = vmatprep.subr.mxu0 0.0
        %837 = vmatpush1.msra.mxu0 0.0
        %838 = vmatprep.subr.mxu0 0.0
        %839 = vmatpush1.msra.mxu0 0.0
        %840 = vmatprep.subr.mxu0 0.0
        %841 = vmatpush1.msra.mxu0 0.0
        %842 = vmatprep.subr.mxu0 0.0
        %843 = vmatpush1.msra.mxu0 0.0
        %844 = vmatprep.subr.mxu0 0.0
        %845 = vmatpush1.msra.mxu0 0.0
        %846 = vmatprep.subr.mxu0 0.0
        %847 = vmatpush1.msra.mxu0 0.0
        %848 = vmatprep.subr.mxu0 0.0
        %849 = vmatpush1.msra.mxu0 0.0
        %850 = vmatprep.subr.mxu0 0.0
        %851 = vmatpush1.msra.mxu0 0.0
        %852 = vmatprep.subr.mxu0 0.0
        %853 = vmatpush1.msra.mxu0 0.0
        %854 = vmatprep.subr.mxu0 0.0
        %855 = vmatpush1.msra.mxu0 0.0
        %856 = vmatprep.subr.mxu0 0.0
        %857 = vmatpush1.msra.mxu0 0.0
        %858 = vmatprep.subr.mxu0 0.0
        %859 = vmatpush1.msra.mxu0 0.0
        %860 = vmatprep.subr.mxu0 0.0
        %861 = vmatpush1.msra.mxu0 0.0
        %862 = vmatprep.subr.mxu0 0.0
        %863 = vmatpush1.msra.mxu0 0.0
        %864 = vmatprep.subr.mxu0 0.0
        %865 = vmatpush1.msra.mxu0 0.0
        %866 = vmatprep.subr.mxu0 0.0
        %867 = vmatpush1.msra.mxu0 0.0
        %868 = vmatprep.subr.mxu0 0.0
        %869 = vmatpush1.msra.mxu0 0.0
        %870 = vmatprep.subr.mxu0 0.0
        %871 = vmatpush1.msra.mxu0 0.0
        %872 = vmatprep.subr.mxu0 0.0
        %873 = vmatpush1.msra.mxu0 0.0
        %874 = vmatprep.mubr.f32.mxu0 0.0
        %875 = vmatmul.mubr.f32.gmra.mrb[0].mxu0 %v717
        %v876 = vpop.f32.mrb[0].mxu0
        %v877 = vadd.f32 %v499, %v876
        %v878 = vpop.f32.mrb[0].mxu0
        %v879 = vadd.f32 %v501, %v878
        %880 = vdwg.mxu0
        %881 = vmatprep.subr.mxu0 %v729
        %882 = vmatpush1.msra.mxu0 %v727
        %883 = vmatprep.subr.mxu0 0.0
        %884 = vmatpush1.msra.mxu0 0.0
        %885 = vmatprep.subr.mxu0 0.0
        %886 = vmatpush1.msra.mxu0 0.0
        %887 = vmatprep.subr.mxu0 0.0
        %888 = vmatpush1.msra.mxu0 0.0
        %889 = vmatprep.subr.mxu0 0.0
        %890 = vmatpush1.msra.mxu0 0.0
        %891 = vmatprep.subr.mxu0 0.0
        %892 = vmatpush1.msra.mxu0 0.0
        %893 = vmatprep.subr.mxu0 0.0
        %894 = vmatpush1.msra.mxu0 0.0
        %895 = vmatprep.subr.mxu0 0.0
        %896 = vmatpush1.msra.mxu0 0.0
        %897 = vmatprep.subr.mxu0 0.0
        %898 = vmatpush1.msra.mxu0 0.0
        %899 = vmatprep.subr.mxu0 0.0
        %900 = vmatpush1.msra.mxu0 0.0
        %901 = vmatprep.subr.mxu0 0.0
        %902 = vmatpush1.msra.mxu0 0.0
        %903 = vmatprep.subr.mxu0 0.0
        %904 = vmatpush1.msra.mxu0 0.0
        %905 = vmatprep.subr.mxu0 0.0
        %906 = vmatpush1.msra.mxu0 0.0
        %907 = vmatprep.subr.mxu0 0.0
        %908 = vmatpush1.msra.mxu0 0.0
        %909 = vmatprep.subr.mxu0 0.0
        %910 = vmatpush1.msra.mxu0 0.0
        %911 = vmatprep.subr.mxu0 0.0
        %912 = vmatpush1.msra.mxu0 0.0
        %913 = vmatprep.subr.mxu0 0.0
        %914 = vmatpush1.msra.mxu0 0.0
        %915 = vmatprep.subr.mxu0 0.0
        %916 = vmatpush1.msra.mxu0 0.0
        %917 = vmatprep.subr.mxu0 0.0
        %918 = vmatpush1.msra.mxu0 0.0
        %919 = vmatprep.subr.mxu0 0.0
        %920 = vmatpush1.msra.mxu0 0.0
        %921 = vmatprep.subr.mxu0 0.0
        %922 = vmatpush1.msra.mxu0 0.0
        %923 = vmatprep.subr.mxu0 0.0
        %924 = vmatpush1.msra.mxu0 0.0
        %925 = vmatprep.subr.mxu0 0.0
        %926 = vmatpush1.msra.mxu0 0.0
        %927 = vmatprep.subr.mxu0 0.0
        %928 = vmatpush1.msra.mxu0 0.0
        %929 = vmatprep.subr.mxu0 0.0
        %930 = vmatpush1.msra.mxu0 0.0
        %931 = vmatprep.subr.mxu0 0.0
        %932 = vmatpush1.msra.mxu0 0.0
        %933 = vmatprep.subr.mxu0 0.0
        %934 = vmatpush1.msra.mxu0 0.0
        %935 = vmatprep.subr.mxu0 0.0
        %936 = vmatpush1.msra.mxu0 0.0
        %937 = vmatprep.subr.mxu0 0.0
        %938 = vmatpush1.msra.mxu0 0.0
        %939 = vmatprep.subr.mxu0 0.0
        %940 = vmatpush1.msra.mxu0 0.0
        %941 = vmatprep.subr.mxu0 0.0
        %942 = vmatpush1.msra.mxu0 0.0
        %943 = vmatprep.subr.mxu0 0.0
        %944 = vmatpush1.msra.mxu0 0.0
        %945 = vmatprep.mubr.f32.mxu0 0.0
        %946 = vmatmul.mubr.f32.gmra.mrb[0].mxu0 %v717
        %v947 = vpop.f32.mrb[0].mxu0
        %v948 = vadd.f32 %v570, %v947
        %v949 = vpop.f32.mrb[0].mxu0
        %v950 = vadd.f32 %v572, %v949
        %951 = vdwg.mxu0
        %952 = vmatprep.subr.mxu0 %v733
        %953 = vmatpush1.msra.mxu0 %v731
        %954 = vmatprep.subr.mxu0 0.0
        %955 = vmatpush1.msra.mxu0 0.0
        %956 = vmatprep.subr.mxu0 0.0
        %957 = vmatpush1.msra.mxu0 0.0
        %958 = vmatprep.subr.mxu0 0.0
        %959 = vmatpush1.msra.mxu0 0.0
        %960 = vmatprep.subr.mxu0 0.0
        %961 = vmatpush1.msra.mxu0 0.0
        %962 = vmatprep.subr.mxu0 0.0
        %963 = vmatpush1.msra.mxu0 0.0
        %964 = vmatprep.subr.mxu0 0.0
        %965 = vmatpush1.msra.mxu0 0.0
        %966 = vmatprep.subr.mxu0 0.0
        %967 = vmatpush1.msra.mxu0 0.0
        %968 = vmatprep.subr.mxu0 0.0
        %969 = vmatpush1.msra.mxu0 0.0
        %970 = vmatprep.subr.mxu0 0.0
        %971 = vmatpush1.msra.mxu0 0.0
        %972 = vmatprep.subr.mxu0 0.0
        %973 = vmatpush1.msra.mxu0 0.0
        %974 = vmatprep.subr.mxu0 0.0
        %975 = vmatpush1.msra.mxu0 0.0
        %976 = vmatprep.subr.mxu0 0.0
        %977 = vmatpush1.msra.mxu0 0.0
        %978 = vmatprep.subr.mxu0 0.0
        %979 = vmatpush1.msra.mxu0 0.0
        %980 = vmatprep.subr.mxu0 0.0
        %981 = vmatpush1.msra.mxu0 0.0
        %982 = vmatprep.subr.mxu0 0.0
        %983 = vmatpush1.msra.mxu0 0.0
        %984 = vmatprep.subr.mxu0 0.0
        %985 = vmatpush1.msra.mxu0 0.0
        %986 = vmatprep.subr.mxu0 0.0
        %987 = vmatpush1.msra.mxu0 0.0
        %988 = vmatprep.subr.mxu0 0.0
        %989 = vmatpush1.msra.mxu0 0.0
        %990 = vmatprep.subr.mxu0 0.0
        %991 = vmatpush1.msra.mxu0 0.0
        %992 = vmatprep.subr.mxu0 0.0
        %993 = vmatpush1.msra.mxu0 0.0
        %994 = vmatprep.subr.mxu0 0.0
        %995 = vmatpush1.msra.mxu0 0.0
        %996 = vmatprep.subr.mxu0 0.0
        %997 = vmatpush1.msra.mxu0 0.0
        %998 = vmatprep.subr.mxu0 0.0
        %999 = vmatpush1.msra.mxu0 0.0
        %1000 = vmatprep.subr.mxu0 0.0
        %1001 = vmatpush1.msra.mxu0 0.0
        %1002 = vmatprep.subr.mxu0 0.0
        %1003 = vmatpush1.msra.mxu0 0.0
        %1004 = vmatprep.subr.mxu0 0.0
        %1005 = vmatpush1.msra.mxu0 0.0
        %1006 = vmatprep.subr.mxu0 0.0
        %1007 = vmatpush1.msra.mxu0 0.0
        %1008 = vmatprep.subr.mxu0 0.0
        %1009 = vmatpush1.msra.mxu0 0.0
        %1010 = vmatprep.subr.mxu0 0.0
        %1011 = vmatpush1.msra.mxu0 0.0
        %1012 = vmatprep.subr.mxu0 0.0
        %1013 = vmatpush1.msra.mxu0 0.0
        %1014 = vmatprep.subr.mxu0 0.0
        %1015 = vmatpush1.msra.mxu0 0.0
        %1016 = vmatprep.mubr.f32.mxu0 0.0
        %1017 = vmatmul.mubr.f32.gmra.mrb[0].mxu0 %v717
        %v1018 = vpop.f32.mrb[0].mxu0
        %v1019 = vadd.f32 %v641, %v1018
        %v1020 = vpop.f32.mrb[0].mxu0
        %v1021 = vadd.f32 %v643, %v1020
        %1022 = vdwg.mxu0
        %1023 = vmatprep.subr.mxu0 %v737
        %1024 = vmatpush1.msra.mxu0 %v735
        %1025 = vmatprep.subr.mxu0 0.0
        %1026 = vmatpush1.msra.mxu0 0.0
        %1027 = vmatprep.subr.mxu0 0.0
        %1028 = vmatpush1.msra.mxu0 0.0
        %1029 = vmatprep.subr.mxu0 0.0
        %1030 = vmatpush1.msra.mxu0 0.0
        %1031 = vmatprep.subr.mxu0 0.0
        %1032 = vmatpush1.msra.mxu0 0.0
        %1033 = vmatprep.subr.mxu0 0.0
        %1034 = vmatpush1.msra.mxu0 0.0
        %1035 = vmatprep.subr.mxu0 0.0
        %1036 = vmatpush1.msra.mxu0 0.0
        %1037 = vmatprep.subr.mxu0 0.0
        %1038 = vmatpush1.msra.mxu0 0.0
        %1039 = vmatprep.subr.mxu0 0.0
        %1040 = vmatpush1.msra.mxu0 0.0
        %1041 = vmatprep.subr.mxu0 0.0
        %1042 = vmatpush1.msra.mxu0 0.0
        %1043 = vmatprep.subr.mxu0 0.0
        %1044 = vmatpush1.msra.mxu0 0.0
        %1045 = vmatprep.subr.mxu0 0.0
        %1046 = vmatpush1.msra.mxu0 0.0
        %1047 = vmatprep.subr.mxu0 0.0
        %1048 = vmatpush1.msra.mxu0 0.0
        %1049 = vmatprep.subr.mxu0 0.0
        %1050 = vmatpush1.msra.mxu0 0.0
        %1051 = vmatprep.subr.mxu0 0.0
        %1052 = vmatpush1.msra.mxu0 0.0
        %1053 = vmatprep.subr.mxu0 0.0
        %1054 = vmatpush1.msra.mxu0 0.0
        %1055 = vmatprep.subr.mxu0 0.0
        %1056 = vmatpush1.msra.mxu0 0.0
        %1057 = vmatprep.subr.mxu0 0.0
        %1058 = vmatpush1.msra.mxu0 0.0
        %1059 = vmatprep.subr.mxu0 0.0
        %1060 = vmatpush1.msra.mxu0 0.0
        %1061 = vmatprep.subr.mxu0 0.0
        %1062 = vmatpush1.msra.mxu0 0.0
        %1063 = vmatprep.subr.mxu0 0.0
        %1064 = vmatpush1.msra.mxu0 0.0
        %1065 = vmatprep.subr.mxu0 0.0
        %1066 = vmatpush1.msra.mxu0 0.0
        %1067 = vmatprep.subr.mxu0 0.0
        %1068 = vmatpush1.msra.mxu0 0.0
        %1069 = vmatprep.subr.mxu0 0.0
        %1070 = vmatpush1.msra.mxu0 0.0
        %1071 = vmatprep.subr.mxu0 0.0
        %1072 = vmatpush1.msra.mxu0 0.0
        %1073 = vmatprep.subr.mxu0 0.0
        %1074 = vmatpush1.msra.mxu0 0.0
        %1075 = vmatprep.subr.mxu0 0.0
        %1076 = vmatpush1.msra.mxu0 0.0
        %1077 = vmatprep.subr.mxu0 0.0
        %1078 = vmatpush1.msra.mxu0 0.0
        %1079 = vmatprep.subr.mxu0 0.0
        %1080 = vmatpush1.msra.mxu0 0.0
        %1081 = vmatprep.subr.mxu0 0.0
        %1082 = vmatpush1.msra.mxu0 0.0
        %1083 = vmatprep.subr.mxu0 0.0
        %1084 = vmatpush1.msra.mxu0 0.0
        %1085 = vmatprep.subr.mxu0 0.0
        %1086 = vmatpush1.msra.mxu0 0.0
        %1087 = vmatprep.mubr.f32.mxu0 0.0
        %1088 = vmatmul.mubr.f32.gmra.mrb[0].mxu0 %v717
        %v1089 = vpop.f32.mrb[0].mxu0
        %v1090 = vadd.f32 %v712, %v1089
        %v1091 = vpop.f32.mrb[0].mxu0
        %v1092 = vadd.f32 %v714, %v1091
        %1093 = vdwg.mxu0
        %s1094 = scalar_lea.vmem %s2, 8
        %v1095 = vld [vmem:[%s1094] sm:$0xf]
        %v1096 = vld [vmem:[#allocation2] sm:$0xff]
        %v1097 = vld [vmem:[#allocation2 + $0x8] sm:$0xff]
        %v1098 = vld [vmem:[#allocation2 + $0x10] sm:$0xff]
        %v1099 = vld [vmem:[#allocation2 + $0x18] sm:$0xff]
        %v1100 = vld [vmem:[#allocation2 + $0x20] sm:$0xff]
        %v1106 = vcombine.high %v1096, %v1096
        %v1107 = vcombine.high %v1097, %v1097
        %v1108 = vcombine.high %v1098, %v1098
        %v1109 = vcombine.high %v1099, %v1099
        %v1110 = vcombine.high %v1100, %v1100
        %1111 = vrot.lane.b32.xlu0 %v1096, 126
        %v1112 = vpop.permute.xlu0 %1111
        %1113 = vrot.lane.b32.xlu0 %v1106, 126
        %v1114 = vpop.permute.xlu0 %1113
        %1115 = vrot.lane.b32.xlu0 %v1097, 126
        %v1116 = vpop.permute.xlu0 %1115
        %1117 = vrot.lane.b32.xlu0 %v1107, 126
        %v1118 = vpop.permute.xlu0 %1117
        %1119 = vrot.lane.b32.xlu0 %v1098, 126
        %v1120 = vpop.permute.xlu0 %1119
        %1121 = vrot.lane.b32.xlu0 %v1108, 126
        %v1122 = vpop.permute.xlu0 %1121
        %1123 = vrot.lane.b32.xlu0 %v1099, 126
        %v1124 = vpop.permute.xlu0 %1123
        %1125 = vrot.lane.b32.xlu0 %v1109, 126
        %v1126 = vpop.permute.xlu0 %1125
        %1127 = vrot.lane.b32.xlu0 %v1100, 126
        %v1128 = vpop.permute.xlu0 %1127
        %1129 = vrot.lane.b32.xlu0 %v1110, 126
        %v1130 = vpop.permute.xlu0 %1129
        %vm1131 = vcmask 1031168
        %v1132 = vsel %vm1131, %v1112, %v1114
        %v1133 = vsel %vm1131, %v1114, %v1116
        %v1134 = vsel %vm1131, %v1116, %v1118
        %v1135 = vsel %vm1131, %v1118, %v1120
        %v1136 = vsel %vm1131, %v1120, %v1122
        %v1137 = vsel %vm1131, %v1122, %v1124
        %v1138 = vsel %vm1131, %v1124, %v1126
        %v1139 = vsel %vm1131, %v1126, %v1128
        %v1140 = vsel %vm1131, %v1128, %v1130
        %v1142 = vsel %vm337, %v1095, 0
        %v1144 = vsel %vm235, %v1132, 0
        %v1146 = vsel %vm235, %v1133, 0
        %v1148 = vsel %vm235, %v1134, 0
        %v1150 = vsel %vm235, %v1135, 0
        %v1152 = vsel %vm235, %v1136, 0
        %v1154 = vsel %vm235, %v1137, 0
        %v1156 = vsel %vm235, %v1138, 0
        %v1158 = vsel %vm235, %v1139, 0
        %v1160 = vsel %vm235, %v1140, 0
        %v1162 = vsel %vm235, %v1130, 0
        %1164 = vmatprep.subr.mxu0 %v1146
        %1165 = vmatpush1.msra.mxu0 %v1144
        %1166 = vmatprep.subr.mxu0 0.0
        %1167 = vmatpush1.msra.mxu0 0.0
        %1168 = vmatprep.subr.mxu0 0.0
        %1169 = vmatpush1.msra.mxu0 0.0
        %1170 = vmatprep.subr.mxu0 0.0
        %1171 = vmatpush1.msra.mxu0 0.0
        %1172 = vmatprep.subr.mxu0 0.0
        %1173 = vmatpush1.msra.mxu0 0.0
        %1174 = vmatprep.subr.mxu0 0.0
        %1175 = vmatpush1.msra.mxu0 0.0
        %1176 = vmatprep.subr.mxu0 0.0
        %1177 = vmatpush1.msra.mxu0 0.0
        %1178 = vmatprep.subr.mxu0 0.0
        %1179 = vmatpush1.msra.mxu0 0.0
        %1180 = vmatprep.subr.mxu0 0.0
        %1181 = vmatpush1.msra.mxu0 0.0
        %1182 = vmatprep.subr.mxu0 0.0
        %1183 = vmatpush1.msra.mxu0 0.0
        %1184 = vmatprep.subr.mxu0 0.0
        %1185 = vmatpush1.msra.mxu0 0.0
        %1186 = vmatprep.subr.mxu0 0.0
        %1187 = vmatpush1.msra.mxu0 0.0
        %1188 = vmatprep.subr.mxu0 0.0
        %1189 = vmatpush1.msra.mxu0 0.0
        %1190 = vmatprep.subr.mxu0 0.0
        %1191 = vmatpush1.msra.mxu0 0.0
        %1192 = vmatprep.subr.mxu0 0.0
        %1193 = vmatpush1.msra.mxu0 0.0
        %1194 = vmatprep.subr.mxu0 0.0
        %1195 = vmatpush1.msra.mxu0 0.0
        %1196 = vmatprep.subr.mxu0 0.0
        %1197 = vmatpush1.msra.mxu0 0.0
        %1198 = vmatprep.subr.mxu0 0.0
        %1199 = vmatpush1.msra.mxu0 0.0
        %1200 = vmatprep.subr.mxu0 0.0
        %1201 = vmatpush1.msra.mxu0 0.0
        %1202 = vmatprep.subr.mxu0 0.0
        %1203 = vmatpush1.msra.mxu0 0.0
        %1204 = vmatprep.subr.mxu0 0.0
        %1205 = vmatpush1.msra.mxu0 0.0
        %1206 = vmatprep.subr.mxu0 0.0
        %1207 = vmatpush1.msra.mxu0 0.0
        %1208 = vmatprep.subr.mxu0 0.0
        %1209 = vmatpush1.msra.mxu0 0.0
        %1210 = vmatprep.subr.mxu0 0.0
        %1211 = vmatpush1.msra.mxu0 0.0
        %1212 = vmatprep.subr.mxu0 0.0
        %1213 = vmatpush1.msra.mxu0 0.0
        %1214 = vmatprep.subr.mxu0 0.0
        %1215 = vmatpush1.msra.mxu0 0.0
        %1216 = vmatprep.subr.mxu0 0.0
        %1217 = vmatpush1.msra.mxu0 0.0
        %1218 = vmatprep.subr.mxu0 0.0
        %1219 = vmatpush1.msra.mxu0 0.0
        %1220 = vmatprep.subr.mxu0 0.0
        %1221 = vmatpush1.msra.mxu0 0.0
        %1222 = vmatprep.subr.mxu0 0.0
        %1223 = vmatpush1.msra.mxu0 0.0
        %1224 = vmatprep.subr.mxu0 0.0
        %1225 = vmatpush1.msra.mxu0 0.0
        %1226 = vmatprep.subr.mxu0 0.0
        %1227 = vmatpush1.msra.mxu0 0.0
        %1228 = vmatprep.mubr.f32.mxu0 0.0
        %1229 = vmatmul.mubr.f32.gmra.mrb[0].mxu0 %v1142
        %v1230 = vpop.f32.mrb[0].mxu0
        %v1231 = vadd.f32 0.0, %v1230
        %v1232 = vpop.f32.mrb[0].mxu0
        %v1233 = vadd.f32 0.0, %v1232
        %1234 = vdwg.mxu0
        %1235 = vmatprep.subr.mxu0 %v1150
        %1236 = vmatpush1.msra.mxu0 %v1148
        %1237 = vmatprep.subr.mxu0 0.0
        %1238 = vmatpush1.msra.mxu0 0.0
        %1239 = vmatprep.subr.mxu0 0.0
        %1240 = vmatpush1.msra.mxu0 0.0
        %1241 = vmatprep.subr.mxu0 0.0
        %1242 = vmatpush1.msra.mxu0 0.0
        %1243 = vmatprep.subr.mxu0 0.0
        %1244 = vmatpush1.msra.mxu0 0.0
        %1245 = vmatprep.subr.mxu0 0.0
        %1246 = vmatpush1.msra.mxu0 0.0
        %1247 = vmatprep.subr.mxu0 0.0
        %1248 = vmatpush1.msra.mxu0 0.0
        %1249 = vmatprep.subr.mxu0 0.0
        %1250 = vmatpush1.msra.mxu0 0.0
        %1251 = vmatprep.subr.mxu0 0.0
        %1252 = vmatpush1.msra.mxu0 0.0
        %1253 = vmatprep.subr.mxu0 0.0
        %1254 = vmatpush1.msra.mxu0 0.0
        %1255 = vmatprep.subr.mxu0 0.0
        %1256 = vmatpush1.msra.mxu0 0.0
        %1257 = vmatprep.subr.mxu0 0.0
        %1258 = vmatpush1.msra.mxu0 0.0
        %1259 = vmatprep.subr.mxu0 0.0
        %1260 = vmatpush1.msra.mxu0 0.0
        %1261 = vmatprep.subr.mxu0 0.0
        %1262 = vmatpush1.msra.mxu0 0.0
        %1263 = vmatprep.subr.mxu0 0.0
        %1264 = vmatpush1.msra.mxu0 0.0
        %1265 = vmatprep.subr.mxu0 0.0
        %1266 = vmatpush1.msra.mxu0 0.0
        %1267 = vmatprep.subr.mxu0 0.0
        %1268 = vmatpush1.msra.mxu0 0.0
        %1269 = vmatprep.subr.mxu0 0.0
        %1270 = vmatpush1.msra.mxu0 0.0
        %1271 = vmatprep.subr.mxu0 0.0
        %1272 = vmatpush1.msra.mxu0 0.0
        %1273 = vmatprep.subr.mxu0 0.0
        %1274 = vmatpush1.msra.mxu0 0.0
        %1275 = vmatprep.subr.mxu0 0.0
        %1276 = vmatpush1.msra.mxu0 0.0
        %1277 = vmatprep.subr.mxu0 0.0
        %1278 = vmatpush1.msra.mxu0 0.0
        %1279 = vmatprep.subr.mxu0 0.0
        %1280 = vmatpush1.msra.mxu0 0.0
        %1281 = vmatprep.subr.mxu0 0.0
        %1282 = vmatpush1.msra.mxu0 0.0
        %1283 = vmatprep.subr.mxu0 0.0
        %1284 = vmatpush1.msra.mxu0 0.0
        %1285 = vmatprep.subr.mxu0 0.0
        %1286 = vmatpush1.msra.mxu0 0.0
        %1287 = vmatprep.subr.mxu0 0.0
        %1288 = vmatpush1.msra.mxu0 0.0
        %1289 = vmatprep.subr.mxu0 0.0
        %1290 = vmatpush1.msra.mxu0 0.0
        %1291 = vmatprep.subr.mxu0 0.0
        %1292 = vmatpush1.msra.mxu0 0.0
        %1293 = vmatprep.subr.mxu0 0.0
        %1294 = vmatpush1.msra.mxu0 0.0
        %1295 = vmatprep.subr.mxu0 0.0
        %1296 = vmatpush1.msra.mxu0 0.0
        %1297 = vmatprep.subr.mxu0 0.0
        %1298 = vmatpush1.msra.mxu0 0.0
        %1299 = vmatprep.mubr.f32.mxu0 0.0
        %1300 = vmatmul.mubr.f32.gmra.mrb[0].mxu0 %v1142
        %v1301 = vpop.f32.mrb[0].mxu0
        %v1302 = vadd.f32 0.0, %v1301
        %v1303 = vpop.f32.mrb[0].mxu0
        %v1304 = vadd.f32 0.0, %v1303
        %1305 = vdwg.mxu0
        %1306 = vmatprep.subr.mxu0 %v1154
        %1307 = vmatpush1.msra.mxu0 %v1152
        %1308 = vmatprep.subr.mxu0 0.0
        %1309 = vmatpush1.msra.mxu0 0.0
        %1310 = vmatprep.subr.mxu0 0.0
        %1311 = vmatpush1.msra.mxu0 0.0
        %1312 = vmatprep.subr.mxu0 0.0
        %1313 = vmatpush1.msra.mxu0 0.0
        %1314 = vmatprep.subr.mxu0 0.0
        %1315 = vmatpush1.msra.mxu0 0.0
        %1316 = vmatprep.subr.mxu0 0.0
        %1317 = vmatpush1.msra.mxu0 0.0
        %1318 = vmatprep.subr.mxu0 0.0
        %1319 = vmatpush1.msra.mxu0 0.0
        %1320 = vmatprep.subr.mxu0 0.0
        %1321 = vmatpush1.msra.mxu0 0.0
        %1322 = vmatprep.subr.mxu0 0.0
        %1323 = vmatpush1.msra.mxu0 0.0
        %1324 = vmatprep.subr.mxu0 0.0
        %1325 = vmatpush1.msra.mxu0 0.0
        %1326 = vmatprep.subr.mxu0 0.0
        %1327 = vmatpush1.msra.mxu0 0.0
        %1328 = vmatprep.subr.mxu0 0.0
        %1329 = vmatpush1.msra.mxu0 0.0
        %1330 = vmatprep.subr.mxu0 0.0
        %1331 = vmatpush1.msra.mxu0 0.0
        %1332 = vmatprep.subr.mxu0 0.0
        %1333 = vmatpush1.msra.mxu0 0.0
        %1334 = vmatprep.subr.mxu0 0.0
        %1335 = vmatpush1.msra.mxu0 0.0
        %1336 = vmatprep.subr.mxu0 0.0
        %1337 = vmatpush1.msra.mxu0 0.0
        %1338 = vmatprep.subr.mxu0 0.0
        %1339 = vmatpush1.msra.mxu0 0.0
        %1340 = vmatprep.subr.mxu0 0.0
        %1341 = vmatpush1.msra.mxu0 0.0
        %1342 = vmatprep.subr.mxu0 0.0
        %1343 = vmatpush1.msra.mxu0 0.0
        %1344 = vmatprep.subr.mxu0 0.0
        %1345 = vmatpush1.msra.mxu0 0.0
        %1346 = vmatprep.subr.mxu0 0.0
        %1347 = vmatpush1.msra.mxu0 0.0
        %1348 = vmatprep.subr.mxu0 0.0
        %1349 = vmatpush1.msra.mxu0 0.0
        %1350 = vmatprep.subr.mxu0 0.0
        %1351 = vmatpush1.msra.mxu0 0.0
        %1352 = vmatprep.subr.mxu0 0.0
        %1353 = vmatpush1.msra.mxu0 0.0
        %1354 = vmatprep.subr.mxu0 0.0
        %1355 = vmatpush1.msra.mxu0 0.0
        %1356 = vmatprep.subr.mxu0 0.0
        %1357 = vmatpush1.msra.mxu0 0.0
        %1358 = vmatprep.subr.mxu0 0.0
        %1359 = vmatpush1.msra.mxu0 0.0
        %1360 = vmatprep.subr.mxu0 0.0
        %1361 = vmatpush1.msra.mxu0 0.0
        %1362 = vmatprep.subr.mxu0 0.0
        %1363 = vmatpush1.msra.mxu0 0.0
        %1364 = vmatprep.subr.mxu0 0.0
        %1365 = vmatpush1.msra.mxu0 0.0
        %1366 = vmatprep.subr.mxu0 0.0
        %1367 = vmatpush1.msra.mxu0 0.0
        %1368 = vmatprep.subr.mxu0 0.0
        %1369 = vmatpush1.msra.mxu0 0.0
        %1370 = vmatprep.mubr.f32.mxu0 0.0
        %1371 = vmatmul.mubr.f32.gmra.mrb[0].mxu0 %v1142
        %v1372 = vpop.f32.mrb[0].mxu0
        %v1373 = vadd.f32 0.0, %v1372
        %v1374 = vpop.f32.mrb[0].mxu0
        %v1375 = vadd.f32 0.0, %v1374
        %1376 = vdwg.mxu0
        %1377 = vmatprep.subr.mxu0 %v1158
        %1378 = vmatpush1.msra.mxu0 %v1156
        %1379 = vmatprep.subr.mxu0 0.0
        %1380 = vmatpush1.msra.mxu0 0.0
        %1381 = vmatprep.subr.mxu0 0.0
        %1382 = vmatpush1.msra.mxu0 0.0
        %1383 = vmatprep.subr.mxu0 0.0
        %1384 = vmatpush1.msra.mxu0 0.0
        %1385 = vmatprep.subr.mxu0 0.0
        %1386 = vmatpush1.msra.mxu0 0.0
        %1387 = vmatprep.subr.mxu0 0.0
        %1388 = vmatpush1.msra.mxu0 0.0
        %1389 = vmatprep.subr.mxu0 0.0
        %1390 = vmatpush1.msra.mxu0 0.0
        %1391 = vmatprep.subr.mxu0 0.0
        %1392 = vmatpush1.msra.mxu0 0.0
        %1393 = vmatprep.subr.mxu0 0.0
        %1394 = vmatpush1.msra.mxu0 0.0
        %1395 = vmatprep.subr.mxu0 0.0
        %1396 = vmatpush1.msra.mxu0 0.0
        %1397 = vmatprep.subr.mxu0 0.0
        %1398 = vmatpush1.msra.mxu0 0.0
        %1399 = vmatprep.subr.mxu0 0.0
        %1400 = vmatpush1.msra.mxu0 0.0
        %1401 = vmatprep.subr.mxu0 0.0
        %1402 = vmatpush1.msra.mxu0 0.0
        %1403 = vmatprep.subr.mxu0 0.0
        %1404 = vmatpush1.msra.mxu0 0.0
        %1405 = vmatprep.subr.mxu0 0.0
        %1406 = vmatpush1.msra.mxu0 0.0
        %1407 = vmatprep.subr.mxu0 0.0
        %1408 = vmatpush1.msra.mxu0 0.0
        %1409 = vmatprep.subr.mxu0 0.0
        %1410 = vmatpush1.msra.mxu0 0.0
        %1411 = vmatprep.subr.mxu0 0.0
        %1412 = vmatpush1.msra.mxu0 0.0
        %1413 = vmatprep.subr.mxu0 0.0
        %1414 = vmatpush1.msra.mxu0 0.0
        %1415 = vmatprep.subr.mxu0 0.0
        %1416 = vmatpush1.msra.mxu0 0.0
        %1417 = vmatprep.subr.mxu0 0.0
        %1418 = vmatpush1.msra.mxu0 0.0
        %1419 = vmatprep.subr.mxu0 0.0
        %1420 = vmatpush1.msra.mxu0 0.0
        %1421 = vmatprep.subr.mxu0 0.0
        %1422 = vmatpush1.msra.mxu0 0.0
        %1423 = vmatprep.subr.mxu0 0.0
        %1424 = vmatpush1.msra.mxu0 0.0
        %1425 = vmatprep.subr.mxu0 0.0
        %1426 = vmatpush1.msra.mxu0 0.0
        %1427 = vmatprep.subr.mxu0 0.0
        %1428 = vmatpush1.msra.mxu0 0.0
        %1429 = vmatprep.subr.mxu0 0.0
        %1430 = vmatpush1.msra.mxu0 0.0
        %1431 = vmatprep.subr.mxu0 0.0
        %1432 = vmatpush1.msra.mxu0 0.0
        %1433 = vmatprep.subr.mxu0 0.0
        %1434 = vmatpush1.msra.mxu0 0.0
        %1435 = vmatprep.subr.mxu0 0.0
        %1436 = vmatpush1.msra.mxu0 0.0
        %1437 = vmatprep.subr.mxu0 0.0
        %1438 = vmatpush1.msra.mxu0 0.0
        %1439 = vmatprep.subr.mxu0 0.0
        %1440 = vmatpush1.msra.mxu0 0.0
        %1441 = vmatprep.mubr.f32.mxu0 0.0
        %1442 = vmatmul.mubr.f32.gmra.mrb[0].mxu0 %v1142
        %v1443 = vpop.f32.mrb[0].mxu0
        %v1444 = vadd.f32 0.0, %v1443
        %v1445 = vpop.f32.mrb[0].mxu0
        %v1446 = vadd.f32 0.0, %v1445
        %1447 = vdwg.mxu0
        %1448 = vmatprep.subr.mxu0 %v1162
        %1449 = vmatpush1.msra.mxu0 %v1160
        %1450 = vmatprep.subr.mxu0 0.0
        %1451 = vmatpush1.msra.mxu0 0.0
        %1452 = vmatprep.subr.mxu0 0.0
        %1453 = vmatpush1.msra.mxu0 0.0
        %1454 = vmatprep.subr.mxu0 0.0
        %1455 = vmatpush1.msra.mxu0 0.0
        %1456 = vmatprep.subr.mxu0 0.0
        %1457 = vmatpush1.msra.mxu0 0.0
        %1458 = vmatprep.subr.mxu0 0.0
        %1459 = vmatpush1.msra.mxu0 0.0
        %1460 = vmatprep.subr.mxu0 0.0
        %1461 = vmatpush1.msra.mxu0 0.0
        %1462 = vmatprep.subr.mxu0 0.0
        %1463 = vmatpush1.msra.mxu0 0.0
        %1464 = vmatprep.subr.mxu0 0.0
        %1465 = vmatpush1.msra.mxu0 0.0
        %1466 = vmatprep.subr.mxu0 0.0
        %1467 = vmatpush1.msra.mxu0 0.0
        %1468 = vmatprep.subr.mxu0 0.0
        %1469 = vmatpush1.msra.mxu0 0.0
        %1470 = vmatprep.subr.mxu0 0.0
        %1471 = vmatpush1.msra.mxu0 0.0
        %1472 = vmatprep.subr.mxu0 0.0
        %1473 = vmatpush1.msra.mxu0 0.0
        %1474 = vmatprep.subr.mxu0 0.0
        %1475 = vmatpush1.msra.mxu0 0.0
        %1476 = vmatprep.subr.mxu0 0.0
        %1477 = vmatpush1.msra.mxu0 0.0
        %1478 = vmatprep.subr.mxu0 0.0
        %1479 = vmatpush1.msra.mxu0 0.0
        %1480 = vmatprep.subr.mxu0 0.0
        %1481 = vmatpush1.msra.mxu0 0.0
        %1482 = vmatprep.subr.mxu0 0.0
        %1483 = vmatpush1.msra.mxu0 0.0
        %1484 = vmatprep.subr.mxu0 0.0
        %1485 = vmatpush1.msra.mxu0 0.0
        %1486 = vmatprep.subr.mxu0 0.0
        %1487 = vmatpush1.msra.mxu0 0.0
        %1488 = vmatprep.subr.mxu0 0.0
        %1489 = vmatpush1.msra.mxu0 0.0
        %1490 = vmatprep.subr.mxu0 0.0
        %1491 = vmatpush1.msra.mxu0 0.0
        %1492 = vmatprep.subr.mxu0 0.0
        %1493 = vmatpush1.msra.mxu0 0.0
        %1494 = vmatprep.subr.mxu0 0.0
        %1495 = vmatpush1.msra.mxu0 0.0
        %1496 = vmatprep.subr.mxu0 0.0
        %1497 = vmatpush1.msra.mxu0 0.0
        %1498 = vmatprep.subr.mxu0 0.0
        %1499 = vmatpush1.msra.mxu0 0.0
        %1500 = vmatprep.subr.mxu0 0.0
        %1501 = vmatpush1.msra.mxu0 0.0
        %1502 = vmatprep.subr.mxu0 0.0
        %1503 = vmatpush1.msra.mxu0 0.0
        %1504 = vmatprep.subr.mxu0 0.0
        %1505 = vmatpush1.msra.mxu0 0.0
        %1506 = vmatprep.subr.mxu0 0.0
        %1507 = vmatpush1.msra.mxu0 0.0
        %1508 = vmatprep.subr.mxu0 0.0
        %1509 = vmatpush1.msra.mxu0 0.0
        %1510 = vmatprep.subr.mxu0 0.0
        %1511 = vmatpush1.msra.mxu0 0.0
        %1512 = vmatprep.mubr.f32.mxu0 0.0
        %1513 = vmatmul.mubr.f32.gmra.mrb[0].mxu0 %v1142
        %v1514 = vpop.f32.mrb[0].mxu0
        %v1515 = vadd.f32 0.0, %v1514
        %v1516 = vpop.f32.mrb[0].mxu0
        %v1517 = vadd.f32 0.0, %v1516
        %1518 = vdwg.mxu0
        %v1519 = vadd.f32 %v806, %v1231
        %v1520 = vadd.f32 %v808, %v1233
        %v1521 = vadd.f32 %v877, %v1302
        %v1522 = vadd.f32 %v879, %v1304
        %v1523 = vadd.f32 %v948, %v1373
        %v1524 = vadd.f32 %v950, %v1375
        %v1525 = vadd.f32 %v1019, %v1444
        %v1526 = vadd.f32 %v1021, %v1446
        %v1527 = vadd.f32 %v1090, %v1515
        %v1528 = vadd.f32 %v1092, %v1517
        %s1529 = scalar_lea.vmem %s2, 12
        %v1530 = vld [vmem:[%s1529] sm:$0xf]
        %v1531 = vld [vmem:[#allocation2] sm:$0xff]
        %v1532 = vld [vmem:[#allocation2 + $0x8] sm:$0xff]
        %v1533 = vld [vmem:[#allocation2 + $0x10] sm:$0xff]
        %v1534 = vld [vmem:[#allocation2 + $0x18] sm:$0xff]
        %v1535 = vld [vmem:[#allocation2 + $0x20] sm:$0xff]
        %v1541 = vcombine.high %v1531, %v1531
        %v1542 = vcombine.high %v1532, %v1532
        %v1543 = vcombine.high %v1533, %v1533
        %v1544 = vcombine.high %v1534, %v1534
        %v1545 = vcombine.high %v1535, %v1535
        %1546 = vrot.lane.b32.xlu0 %v1531, 94
        %v1547 = vpop.permute.xlu0 %1546
        %1548 = vrot.lane.b32.xlu0 %v1541, 94
        %v1549 = vpop.permute.xlu0 %1548
        %1550 = vrot.lane.b32.xlu0 %v1532, 94
        %v1551 = vpop.permute.xlu0 %1550
        %1552 = vrot.lane.b32.xlu0 %v1542, 94
        %v1553 = vpop.permute.xlu0 %1552
        %1554 = vrot.lane.b32.xlu0 %v1533, 94
        %v1555 = vpop.permute.xlu0 %1554
        %1556 = vrot.lane.b32.xlu0 %v1543, 94
        %v1557 = vpop.permute.xlu0 %1556
        %1558 = vrot.lane.b32.xlu0 %v1534, 94
        %v1559 = vpop.permute.xlu0 %1558
        %1560 = vrot.lane.b32.xlu0 %v1544, 94
        %v1561 = vpop.permute.xlu0 %1560
        %1562 = vrot.lane.b32.xlu0 %v1535, 94
        %v1563 = vpop.permute.xlu0 %1562
        %1564 = vrot.lane.b32.xlu0 %v1545, 94
        %v1565 = vpop.permute.xlu0 %1564
        %vm1566 = vcmask 769024
        %v1567 = vsel %vm1566, %v1547, %v1549
        %v1568 = vsel %vm1566, %v1549, %v1551
        %v1569 = vsel %vm1566, %v1551, %v1553
        %v1570 = vsel %vm1566, %v1553, %v1555
        %v1571 = vsel %vm1566, %v1555, %v1557
        %v1572 = vsel %vm1566, %v1557, %v1559
        %v1573 = vsel %vm1566, %v1559, %v1561
        %v1574 = vsel %vm1566, %v1561, %v1563
        %v1575 = vsel %vm1566, %v1563, %v1565
        %v1577 = vsel %vm337, %v1530, 0
        %v1579 = vsel %vm235, %v1567, 0
        %v1581 = vsel %vm235, %v1568, 0
        %v1583 = vsel %vm235, %v1569, 0
        %v1585 = vsel %vm235, %v1570, 0
        %v1587 = vsel %vm235, %v1571, 0
        %v1589 = vsel %vm235, %v1572, 0
        %v1591 = vsel %vm235, %v1573, 0
        %v1593 = vsel %vm235, %v1574, 0
        %v1595 = vsel %vm235, %v1575, 0
        %v1597 = vsel %vm235, %v1565, 0
        %1599 = vmatprep.subr.mxu0 %v1581
        %1600 = vmatpush1.msra.mxu0 %v1579
        %1601 = vmatprep.subr.mxu0 0.0
        %1602 = vmatpush1.msra.mxu0 0.0
        %1603 = vmatprep.subr.mxu0 0.0
        %1604 = vmatpush1.msra.mxu0 0.0
        %1605 = vmatprep.subr.mxu0 0.0
        %1606 = vmatpush1.msra.mxu0 0.0
        %1607 = vmatprep.subr.mxu0 0.0
        %1608 = vmatpush1.msra.mxu0 0.0
        %1609 = vmatprep.subr.mxu0 0.0
        %1610 = vmatpush1.msra.mxu0 0.0
        %1611 = vmatprep.subr.mxu0 0.0
        %1612 = vmatpush1.msra.mxu0 0.0
        %1613 = vmatprep.subr.mxu0 0.0
        %1614 = vmatpush1.msra.mxu0 0.0
        %1615 = vmatprep.subr.mxu0 0.0
        %1616 = vmatpush1.msra.mxu0 0.0
        %1617 = vmatprep.subr.mxu0 0.0
        %1618 = vmatpush1.msra.mxu0 0.0
        %1619 = vmatprep.subr.mxu0 0.0
        %1620 = vmatpush1.msra.mxu0 0.0
        %1621 = vmatprep.subr.mxu0 0.0
        %1622 = vmatpush1.msra.mxu0 0.0
        %1623 = vmatprep.subr.mxu0 0.0
        %1624 = vmatpush1.msra.mxu0 0.0
        %1625 = vmatprep.subr.mxu0 0.0
        %1626 = vmatpush1.msra.mxu0 0.0
        %1627 = vmatprep.subr.mxu0 0.0
        %1628 = vmatpush1.msra.mxu0 0.0
        %1629 = vmatprep.subr.mxu0 0.0
        %1630 = vmatpush1.msra.mxu0 0.0
        %1631 = vmatprep.subr.mxu0 0.0
        %1632 = vmatpush1.msra.mxu0 0.0
        %1633 = vmatprep.subr.mxu0 0.0
        %1634 = vmatpush1.msra.mxu0 0.0
        %1635 = vmatprep.subr.mxu0 0.0
        %1636 = vmatpush1.msra.mxu0 0.0
        %1637 = vmatprep.subr.mxu0 0.0
        %1638 = vmatpush1.msra.mxu0 0.0
        %1639 = vmatprep.subr.mxu0 0.0
        %1640 = vmatpush1.msra.mxu0 0.0
        %1641 = vmatprep.subr.mxu0 0.0
        %1642 = vmatpush1.msra.mxu0 0.0
        %1643 = vmatprep.subr.mxu0 0.0
        %1644 = vmatpush1.msra.mxu0 0.0
        %1645 = vmatprep.subr.mxu0 0.0
        %1646 = vmatpush1.msra.mxu0 0.0
        %1647 = vmatprep.subr.mxu0 0.0
        %1648 = vmatpush1.msra.mxu0 0.0
        %1649 = vmatprep.subr.mxu0 0.0
        %1650 = vmatpush1.msra.mxu0 0.0
        %1651 = vmatprep.subr.mxu0 0.0
        %1652 = vmatpush1.msra.mxu0 0.0
        %1653 = vmatprep.subr.mxu0 0.0
        %1654 = vmatpush1.msra.mxu0 0.0
        %1655 = vmatprep.subr.mxu0 0.0
        %1656 = vmatpush1.msra.mxu0 0.0
        %1657 = vmatprep.subr.mxu0 0.0
        %1658 = vmatpush1.msra.mxu0 0.0
        %1659 = vmatprep.subr.mxu0 0.0
        %1660 = vmatpush1.msra.mxu0 0.0
        %1661 = vmatprep.subr.mxu0 0.0
        %1662 = vmatpush1.msra.mxu0 0.0
        %1663 = vmatprep.mubr.f32.mxu0 0.0
        %1664 = vmatmul.mubr.f32.gmra.mrb[0].mxu0 %v1577
        %v1665 = vpop.f32.mrb[0].mxu0
        %v1666 = vadd.f32 0.0, %v1665
        %v1667 = vpop.f32.mrb[0].mxu0
        %v1668 = vadd.f32 0.0, %v1667
        %1669 = vdwg.mxu0
        %1670 = vmatprep.subr.mxu0 %v1585
        %1671 = vmatpush1.msra.mxu0 %v1583
        %1672 = vmatprep.subr.mxu0 0.0
        %1673 = vmatpush1.msra.mxu0 0.0
        %1674 = vmatprep.subr.mxu0 0.0
        %1675 = vmatpush1.msra.mxu0 0.0
        %1676 = vmatprep.subr.mxu0 0.0
        %1677 = vmatpush1.msra.mxu0 0.0
        %1678 = vmatprep.subr.mxu0 0.0
        %1679 = vmatpush1.msra.mxu0 0.0
        %1680 = vmatprep.subr.mxu0 0.0
        %1681 = vmatpush1.msra.mxu0 0.0
        %1682 = vmatprep.subr.mxu0 0.0
        %1683 = vmatpush1.msra.mxu0 0.0
        %1684 = vmatprep.subr.mxu0 0.0
        %1685 = vmatpush1.msra.mxu0 0.0
        %1686 = vmatprep.subr.mxu0 0.0
        %1687 = vmatpush1.msra.mxu0 0.0
        %1688 = vmatprep.subr.mxu0 0.0
        %1689 = vmatpush1.msra.mxu0 0.0
        %1690 = vmatprep.subr.mxu0 0.0
        %1691 = vmatpush1.msra.mxu0 0.0
        %1692 = vmatprep.subr.mxu0 0.0
        %1693 = vmatpush1.msra.mxu0 0.0
        %1694 = vmatprep.subr.mxu0 0.0
        %1695 = vmatpush1.msra.mxu0 0.0
        %1696 = vmatprep.subr.mxu0 0.0
        %1697 = vmatpush1.msra.mxu0 0.0
        %1698 = vmatprep.subr.mxu0 0.0
        %1699 = vmatpush1.msra.mxu0 0.0
        %1700 = vmatprep.subr.mxu0 0.0
        %1701 = vmatpush1.msra.mxu0 0.0
        %1702 = vmatprep.subr.mxu0 0.0
        %1703 = vmatpush1.msra.mxu0 0.0
        %1704 = vmatprep.subr.mxu0 0.0
        %1705 = vmatpush1.msra.mxu0 0.0
        %1706 = vmatprep.subr.mxu0 0.0
        %1707 = vmatpush1.msra.mxu0 0.0
        %1708 = vmatprep.subr.mxu0 0.0
        %1709 = vmatpush1.msra.mxu0 0.0
        %1710 = vmatprep.subr.mxu0 0.0
        %1711 = vmatpush1.msra.mxu0 0.0
        %1712 = vmatprep.subr.mxu0 0.0
        %1713 = vmatpush1.msra.mxu0 0.0
        %1714 = vmatprep.subr.mxu0 0.0
        %1715 = vmatpush1.msra.mxu0 0.0
        %1716 = vmatprep.subr.mxu0 0.0
        %1717 = vmatpush1.msra.mxu0 0.0
        %1718 = vmatprep.subr.mxu0 0.0
        %1719 = vmatpush1.msra.mxu0 0.0
        %1720 = vmatprep.subr.mxu0 0.0
        %1721 = vmatpush1.msra.mxu0 0.0
        %1722 = vmatprep.subr.mxu0 0.0
        %1723 = vmatpush1.msra.mxu0 0.0
        %1724 = vmatprep.subr.mxu0 0.0
        %1725 = vmatpush1.msra.mxu0 0.0
        %1726 = vmatprep.subr.mxu0 0.0
        %1727 = vmatpush1.msra.mxu0 0.0
        %1728 = vmatprep.subr.mxu0 0.0
        %1729 = vmatpush1.msra.mxu0 0.0
        %1730 = vmatprep.subr.mxu0 0.0
        %1731 = vmatpush1.msra.mxu0 0.0
        %1732 = vmatprep.subr.mxu0 0.0
        %1733 = vmatpush1.msra.mxu0 0.0
        %1734 = vmatprep.mubr.f32.mxu0 0.0
        %1735 = vmatmul.mubr.f32.gmra.mrb[0].mxu0 %v1577
        %v1736 = vpop.f32.mrb[0].mxu0
        %v1737 = vadd.f32 0.0, %v1736
        %v1738 = vpop.f32.mrb[0].mxu0
        %v1739 = vadd.f32 0.0, %v1738
        %1740 = vdwg.mxu0
        %1741 = vmatprep.subr.mxu0 %v1589
        %1742 = vmatpush1.msra.mxu0 %v1587
        %1743 = vmatprep.subr.mxu0 0.0
        %1744 = vmatpush1.msra.mxu0 0.0
        %1745 = vmatprep.subr.mxu0 0.0
        %1746 = vmatpush1.msra.mxu0 0.0
        %1747 = vmatprep.subr.mxu0 0.0
        %1748 = vmatpush1.msra.mxu0 0.0
        %1749 = vmatprep.subr.mxu0 0.0
        %1750 = vmatpush1.msra.mxu0 0.0
        %1751 = vmatprep.subr.mxu0 0.0
        %1752 = vmatpush1.msra.mxu0 0.0
        %1753 = vmatprep.subr.mxu0 0.0
        %1754 = vmatpush1.msra.mxu0 0.0
        %1755 = vmatprep.subr.mxu0 0.0
        %1756 = vmatpush1.msra.mxu0 0.0
        %1757 = vmatprep.subr.mxu0 0.0
        %1758 = vmatpush1.msra.mxu0 0.0
        %1759 = vmatprep.subr.mxu0 0.0
        %1760 = vmatpush1.msra.mxu0 0.0
        %1761 = vmatprep.subr.mxu0 0.0
        %1762 = vmatpush1.msra.mxu0 0.0
        %1763 = vmatprep.subr.mxu0 0.0
        %1764 = vmatpush1.msra.mxu0 0.0
        %1765 = vmatprep.subr.mxu0 0.0
        %1766 = vmatpush1.msra.mxu0 0.0
        %1767 = vmatprep.subr.mxu0 0.0
        %1768 = vmatpush1.msra.mxu0 0.0
        %1769 = vmatprep.subr.mxu0 0.0
        %1770 = vmatpush1.msra.mxu0 0.0
        %1771 = vmatprep.subr.mxu0 0.0
        %1772 = vmatpush1.msra.mxu0 0.0
        %1773 = vmatprep.subr.mxu0 0.0
        %1774 = vmatpush1.msra.mxu0 0.0
        %1775 = vmatprep.subr.mxu0 0.0
        %1776 = vmatpush1.msra.mxu0 0.0
        %1777 = vmatprep.subr.mxu0 0.0
        %1778 = vmatpush1.msra.mxu0 0.0
        %1779 = vmatprep.subr.mxu0 0.0
        %1780 = vmatpush1.msra.mxu0 0.0
        %1781 = vmatprep.subr.mxu0 0.0
        %1782 = vmatpush1.msra.mxu0 0.0
        %1783 = vmatprep.subr.mxu0 0.0
        %1784 = vmatpush1.msra.mxu0 0.0
        %1785 = vmatprep.subr.mxu0 0.0
        %1786 = vmatpush1.msra.mxu0 0.0
        %1787 = vmatprep.subr.mxu0 0.0
        %1788 = vmatpush1.msra.mxu0 0.0
        %1789 = vmatprep.subr.mxu0 0.0
        %1790 = vmatpush1.msra.mxu0 0.0
        %1791 = vmatprep.subr.mxu0 0.0
        %1792 = vmatpush1.msra.mxu0 0.0
        %1793 = vmatprep.subr.mxu0 0.0
        %1794 = vmatpush1.msra.mxu0 0.0
        %1795 = vmatprep.subr.mxu0 0.0
        %1796 = vmatpush1.msra.mxu0 0.0
        %1797 = vmatprep.subr.mxu0 0.0
        %1798 = vmatpush1.msra.mxu0 0.0
        %1799 = vmatprep.subr.mxu0 0.0
        %1800 = vmatpush1.msra.mxu0 0.0
        %1801 = vmatprep.subr.mxu0 0.0
        %1802 = vmatpush1.msra.mxu0 0.0
        %1803 = vmatprep.subr.mxu0 0.0
        %1804 = vmatpush1.msra.mxu0 0.0
        %1805 = vmatprep.mubr.f32.mxu0 0.0
        %1806 = vmatmul.mubr.f32.gmra.mrb[0].mxu0 %v1577
        %v1807 = vpop.f32.mrb[0].mxu0
        %v1808 = vadd.f32 0.0, %v1807
        %v1809 = vpop.f32.mrb[0].mxu0
        %v1810 = vadd.f32 0.0, %v1809
        %1811 = vdwg.mxu0
        %1812 = vmatprep.subr.mxu0 %v1593
        %1813 = vmatpush1.msra.mxu0 %v1591
        %1814 = vmatprep.subr.mxu0 0.0
        %1815 = vmatpush1.msra.mxu0 0.0
        %1816 = vmatprep.subr.mxu0 0.0
        %1817 = vmatpush1.msra.mxu0 0.0
        %1818 = vmatprep.subr.mxu0 0.0
        %1819 = vmatpush1.msra.mxu0 0.0
        %1820 = vmatprep.subr.mxu0 0.0
        %1821 = vmatpush1.msra.mxu0 0.0
        %1822 = vmatprep.subr.mxu0 0.0
        %1823 = vmatpush1.msra.mxu0 0.0
        %1824 = vmatprep.subr.mxu0 0.0
        %1825 = vmatpush1.msra.mxu0 0.0
        %1826 = vmatprep.subr.mxu0 0.0
        %1827 = vmatpush1.msra.mxu0 0.0
        %1828 = vmatprep.subr.mxu0 0.0
        %1829 = vmatpush1.msra.mxu0 0.0
        %1830 = vmatprep.subr.mxu0 0.0
        %1831 = vmatpush1.msra.mxu0 0.0
        %1832 = vmatprep.subr.mxu0 0.0
        %1833 = vmatpush1.msra.mxu0 0.0
        %1834 = vmatprep.subr.mxu0 0.0
        %1835 = vmatpush1.msra.mxu0 0.0
        %1836 = vmatprep.subr.mxu0 0.0
        %1837 = vmatpush1.msra.mxu0 0.0
        %1838 = vmatprep.subr.mxu0 0.0
        %1839 = vmatpush1.msra.mxu0 0.0
        %1840 = vmatprep.subr.mxu0 0.0
        %1841 = vmatpush1.msra.mxu0 0.0
        %1842 = vmatprep.subr.mxu0 0.0
        %1843 = vmatpush1.msra.mxu0 0.0
        %1844 = vmatprep.subr.mxu0 0.0
        %1845 = vmatpush1.msra.mxu0 0.0
        %1846 = vmatprep.subr.mxu0 0.0
        %1847 = vmatpush1.msra.mxu0 0.0
        %1848 = vmatprep.subr.mxu0 0.0
        %1849 = vmatpush1.msra.mxu0 0.0
        %1850 = vmatprep.subr.mxu0 0.0
        %1851 = vmatpush1.msra.mxu0 0.0
        %1852 = vmatprep.subr.mxu0 0.0
        %1853 = vmatpush1.msra.mxu0 0.0
        %1854 = vmatprep.subr.mxu0 0.0
        %1855 = vmatpush1.msra.mxu0 0.0
        %1856 = vmatprep.subr.mxu0 0.0
        %1857 = vmatpush1.msra.mxu0 0.0
        %1858 = vmatprep.subr.mxu0 0.0
        %1859 = vmatpush1.msra.mxu0 0.0
        %1860 = vmatprep.subr.mxu0 0.0
        %1861 = vmatpush1.msra.mxu0 0.0
        %1862 = vmatprep.subr.mxu0 0.0
        %1863 = vmatpush1.msra.mxu0 0.0
        %1864 = vmatprep.subr.mxu0 0.0
        %1865 = vmatpush1.msra.mxu0 0.0
        %1866 = vmatprep.subr.mxu0 0.0
        %1867 = vmatpush1.msra.mxu0 0.0
        %1868 = vmatprep.subr.mxu0 0.0
        %1869 = vmatpush1.msra.mxu0 0.0
        %1870 = vmatprep.subr.mxu0 0.0
        %1871 = vmatpush1.msra.mxu0 0.0
        %1872 = vmatprep.subr.mxu0 0.0
        %1873 = vmatpush1.msra.mxu0 0.0
        %1874 = vmatprep.subr.mxu0 0.0
        %1875 = vmatpush1.msra.mxu0 0.0
        %1876 = vmatprep.mubr.f32.mxu0 0.0
        %1877 = vmatmul.mubr.f32.gmra.mrb[0].mxu0 %v1577
        %v1878 = vpop.f32.mrb[0].mxu0
        %v1879 = vadd.f32 0.0, %v1878
        %v1880 = vpop.f32.mrb[0].mxu0
        %v1881 = vadd.f32 0.0, %v1880
        %1882 = vdwg.mxu0
        %1883 = vmatprep.subr.mxu0 %v1597
        %1884 = vmatpush1.msra.mxu0 %v1595
        %1885 = vmatprep.subr.mxu0 0.0
        %1886 = vmatpush1.msra.mxu0 0.0
        %1887 = vmatprep.subr.mxu0 0.0
        %1888 = vmatpush1.msra.mxu0 0.0
        %1889 = vmatprep.subr.mxu0 0.0
        %1890 = vmatpush1.msra.mxu0 0.0
        %1891 = vmatprep.subr.mxu0 0.0
        %1892 = vmatpush1.msra.mxu0 0.0
        %1893 = vmatprep.subr.mxu0 0.0
        %1894 = vmatpush1.msra.mxu0 0.0
        %1895 = vmatprep.subr.mxu0 0.0
        %1896 = vmatpush1.msra.mxu0 0.0
        %1897 = vmatprep.subr.mxu0 0.0
        %1898 = vmatpush1.msra.mxu0 0.0
        %1899 = vmatprep.subr.mxu0 0.0
        %1900 = vmatpush1.msra.mxu0 0.0
        %1901 = vmatprep.subr.mxu0 0.0
        %1902 = vmatpush1.msra.mxu0 0.0
        %1903 = vmatprep.subr.mxu0 0.0
        %1904 = vmatpush1.msra.mxu0 0.0
        %1905 = vmatprep.subr.mxu0 0.0
        %1906 = vmatpush1.msra.mxu0 0.0
        %1907 = vmatprep.subr.mxu0 0.0
        %1908 = vmatpush1.msra.mxu0 0.0
        %1909 = vmatprep.subr.mxu0 0.0
        %1910 = vmatpush1.msra.mxu0 0.0
        %1911 = vmatprep.subr.mxu0 0.0
        %1912 = vmatpush1.msra.mxu0 0.0
        %1913 = vmatprep.subr.mxu0 0.0
        %1914 = vmatpush1.msra.mxu0 0.0
        %1915 = vmatprep.subr.mxu0 0.0
        %1916 = vmatpush1.msra.mxu0 0.0
        %1917 = vmatprep.subr.mxu0 0.0
        %1918 = vmatpush1.msra.mxu0 0.0
        %1919 = vmatprep.subr.mxu0 0.0
        %1920 = vmatpush1.msra.mxu0 0.0
        %1921 = vmatprep.subr.mxu0 0.0
        %1922 = vmatpush1.msra.mxu0 0.0
        %1923 = vmatprep.subr.mxu0 0.0
        %1924 = vmatpush1.msra.mxu0 0.0
        %1925 = vmatprep.subr.mxu0 0.0
        %1926 = vmatpush1.msra.mxu0 0.0
        %1927 = vmatprep.subr.mxu0 0.0
        %1928 = vmatpush1.msra.mxu0 0.0
        %1929 = vmatprep.subr.mxu0 0.0
        %1930 = vmatpush1.msra.mxu0 0.0
        %1931 = vmatprep.subr.mxu0 0.0
        %1932 = vmatpush1.msra.mxu0 0.0
        %1933 = vmatprep.subr.mxu0 0.0
        %1934 = vmatpush1.msra.mxu0 0.0
        %1935 = vmatprep.subr.mxu0 0.0
        %1936 = vmatpush1.msra.mxu0 0.0
        %1937 = vmatprep.subr.mxu0 0.0
        %1938 = vmatpush1.msra.mxu0 0.0
        %1939 = vmatprep.subr.mxu0 0.0
        %1940 = vmatpush1.msra.mxu0 0.0
        %1941 = vmatprep.subr.mxu0 0.0
        %1942 = vmatpush1.msra.mxu0 0.0
        %1943 = vmatprep.subr.mxu0 0.0
        %1944 = vmatpush1.msra.mxu0 0.0
        %1945 = vmatprep.subr.mxu0 0.0
        %1946 = vmatpush1.msra.mxu0 0.0
        %1947 = vmatprep.mubr.f32.mxu0 0.0
        %1948 = vmatmul.mubr.f32.gmra.mrb[0].mxu0 %v1577
        %v1949 = vpop.f32.mrb[0].mxu0
        %v1950 = vadd.f32 0.0, %v1949
        %v1951 = vpop.f32.mrb[0].mxu0
        %v1952 = vadd.f32 0.0, %v1951
        %1953 = vdwg.mxu0
        %v1954 = vadd.f32 %v1519, %v1666
        %v1955 = vadd.f32 %v1520, %v1668
        %v1956 = vadd.f32 %v1521, %v1737
        %v1957 = vadd.f32 %v1522, %v1739
        %v1958 = vadd.f32 %v1523, %v1808
        %v1959 = vadd.f32 %v1524, %v1810
        %v1960 = vadd.f32 %v1525, %v1879
        %v1961 = vadd.f32 %v1526, %v1881
        %v1962 = vadd.f32 %v1527, %v1950
        %v1963 = vadd.f32 %v1528, %v1952
        %s1964 = scalar_lea.vmem %s2, 16
        %v1965 = vld [vmem:[%s1964] sm:$0xf]
        %v1966 = vld [vmem:[#allocation2] sm:$0xff]
        %v1967 = vld [vmem:[#allocation2 + $0x8] sm:$0xff]
        %v1968 = vld [vmem:[#allocation2 + $0x10] sm:$0xff]
        %v1969 = vld [vmem:[#allocation2 + $0x18] sm:$0xff]
        %v1970 = vld [vmem:[#allocation2 + $0x20] sm:$0xff]
        %v1976 = vcombine.high %v1966, %v1966
        %v1977 = vcombine.high %v1967, %v1967
        %v1978 = vcombine.high %v1968, %v1968
        %v1979 = vcombine.high %v1969, %v1969
        %v1980 = vcombine.high %v1970, %v1970
        %1981 = vrot.lane.b32.xlu0 %v1966, 93
        %v1982 = vpop.permute.xlu0 %1981
        %1983 = vrot.lane.b32.xlu0 %v1976, 93
        %v1984 = vpop.permute.xlu0 %1983
        %1985 = vrot.lane.b32.xlu0 %v1967, 93
        %v1986 = vpop.permute.xlu0 %1985
        %1987 = vrot.lane.b32.xlu0 %v1977, 93
        %v1988 = vpop.permute.xlu0 %1987
        %1989 = vrot.lane.b32.xlu0 %v1968, 93
        %v1990 = vpop.permute.xlu0 %1989
        %1991 = vrot.lane.b32.xlu0 %v1978, 93
        %v1992 = vpop.permute.xlu0 %1991
        %1993 = vrot.lane.b32.xlu0 %v1969, 93
        %v1994 = vpop.permute.xlu0 %1993
        %1995 = vrot.lane.b32.xlu0 %v1979, 93
        %v1996 = vpop.permute.xlu0 %1995
        %1997 = vrot.lane.b32.xlu0 %v1970, 93
        %v1998 = vpop.permute.xlu0 %1997
        %1999 = vrot.lane.b32.xlu0 %v1980, 93
        %v2000 = vpop.permute.xlu0 %1999
        %vm2001 = vcmask 760832
        %v2002 = vsel %vm2001, %v1982, %v1984
        %v2003 = vsel %vm2001, %v1984, %v1986
        %v2004 = vsel %vm2001, %v1986, %v1988
        %v2005 = vsel %vm2001, %v1988, %v1990
        %v2006 = vsel %vm2001, %v1990, %v1992
        %v2007 = vsel %vm2001, %v1992, %v1994
        %v2008 = vsel %vm2001, %v1994, %v1996
        %v2009 = vsel %vm2001, %v1996, %v1998
        %v2010 = vsel %vm2001, %v1998, %v2000
        %v2012 = vsel %vm337, %v1965, 0
        %v2014 = vsel %vm235, %v2002, 0
        %v2016 = vsel %vm235, %v2003, 0
        %v2018 = vsel %vm235, %v2004, 0
        %v2020 = vsel %vm235, %v2005, 0
        %v2022 = vsel %vm235, %v2006, 0
        %v2024 = vsel %vm235, %v2007, 0
        %v2026 = vsel %vm235, %v2008, 0
        %v2028 = vsel %vm235, %v2009, 0
        %v2030 = vsel %vm235, %v2010, 0
        %v2032 = vsel %vm235, %v2000, 0
        %2034 = vmatprep.subr.mxu0 %v2016
        %2035 = vmatpush1.msra.mxu0 %v2014
        %2036 = vmatprep.subr.mxu0 0.0
        %2037 = vmatpush1.msra.mxu0 0.0
        %2038 = vmatprep.subr.mxu0 0.0
        %2039 = vmatpush1.msra.mxu0 0.0
        %2040 = vmatprep.subr.mxu0 0.0
        %2041 = vmatpush1.msra.mxu0 0.0
        %2042 = vmatprep.subr.mxu0 0.0
        %2043 = vmatpush1.msra.mxu0 0.0
        %2044 = vmatprep.subr.mxu0 0.0
        %2045 = vmatpush1.msra.mxu0 0.0
        %2046 = vmatprep.subr.mxu0 0.0
        %2047 = vmatpush1.msra.mxu0 0.0
        %2048 = vmatprep.subr.mxu0 0.0
        %2049 = vmatpush1.msra.mxu0 0.0
        %2050 = vmatprep.subr.mxu0 0.0
        %2051 = vmatpush1.msra.mxu0 0.0
        %2052 = vmatprep.subr.mxu0 0.0
        %2053 = vmatpush1.msra.mxu0 0.0
        %2054 = vmatprep.subr.mxu0 0.0
        %2055 = vmatpush1.msra.mxu0 0.0
        %2056 = vmatprep.subr.mxu0 0.0
        %2057 = vmatpush1.msra.mxu0 0.0
        %2058 = vmatprep.subr.mxu0 0.0
        %2059 = vmatpush1.msra.mxu0 0.0
        %2060 = vmatprep.subr.mxu0 0.0
        %2061 = vmatpush1.msra.mxu0 0.0
        %2062 = vmatprep.subr.mxu0 0.0
        %2063 = vmatpush1.msra.mxu0 0.0
        %2064 = vmatprep.subr.mxu0 0.0
        %2065 = vmatpush1.msra.mxu0 0.0
        %2066 = vmatprep.subr.mxu0 0.0
        %2067 = vmatpush1.msra.mxu0 0.0
        %2068 = vmatprep.subr.mxu0 0.0
        %2069 = vmatpush1.msra.mxu0 0.0
        %2070 = vmatprep.subr.mxu0 0.0
        %2071 = vmatpush1.msra.mxu0 0.0
        %2072 = vmatprep.subr.mxu0 0.0
        %2073 = vmatpush1.msra.mxu0 0.0
        %2074 = vmatprep.subr.mxu0 0.0
        %2075 = vmatpush1.msra.mxu0 0.0
        %2076 = vmatprep.subr.mxu0 0.0
        %2077 = vmatpush1.msra.mxu0 0.0
        %2078 = vmatprep.subr.mxu0 0.0
        %2079 = vmatpush1.msra.mxu0 0.0
        %2080 = vmatprep.subr.mxu0 0.0
        %2081 = vmatpush1.msra.mxu0 0.0
        %2082 = vmatprep.subr.mxu0 0.0
        %2083 = vmatpush1.msra.mxu0 0.0
        %2084 = vmatprep.subr.mxu0 0.0
        %2085 = vmatpush1.msra.mxu0 0.0
        %2086 = vmatprep.subr.mxu0 0.0
        %2087 = vmatpush1.msra.mxu0 0.0
        %2088 = vmatprep.subr.mxu0 0.0
        %2089 = vmatpush1.msra.mxu0 0.0
        %2090 = vmatprep.subr.mxu0 0.0
        %2091 = vmatpush1.msra.mxu0 0.0
        %2092 = vmatprep.subr.mxu0 0.0
        %2093 = vmatpush1.msra.mxu0 0.0
        %2094 = vmatprep.subr.mxu0 0.0
        %2095 = vmatpush1.msra.mxu0 0.0
        %2096 = vmatprep.subr.mxu0 0.0
        %2097 = vmatpush1.msra.mxu0 0.0
        %2098 = vmatprep.mubr.f32.mxu0 0.0
        %2099 = vmatmul.mubr.f32.gmra.mrb[0].mxu0 %v2012
        %v2100 = vpop.f32.mrb[0].mxu0
        %v2101 = vadd.f32 0.0, %v2100
        %v2102 = vpop.f32.mrb[0].mxu0
        %v2103 = vadd.f32 0.0, %v2102
        %2104 = vdwg.mxu0
        %2105 = vmatprep.subr.mxu0 %v2020
        %2106 = vmatpush1.msra.mxu0 %v2018
        %2107 = vmatprep.subr.mxu0 0.0
        %2108 = vmatpush1.msra.mxu0 0.0
        %2109 = vmatprep.subr.mxu0 0.0
        %2110 = vmatpush1.msra.mxu0 0.0
        %2111 = vmatprep.subr.mxu0 0.0
        %2112 = vmatpush1.msra.mxu0 0.0
        %2113 = vmatprep.subr.mxu0 0.0
        %2114 = vmatpush1.msra.mxu0 0.0
        %2115 = vmatprep.subr.mxu0 0.0
        %2116 = vmatpush1.msra.mxu0 0.0
        %2117 = vmatprep.subr.mxu0 0.0
        %2118 = vmatpush1.msra.mxu0 0.0
        %2119 = vmatprep.subr.mxu0 0.0
        %2120 = vmatpush1.msra.mxu0 0.0
        %2121 = vmatprep.subr.mxu0 0.0
        %2122 = vmatpush1.msra.mxu0 0.0
        %2123 = vmatprep.subr.mxu0 0.0
        %2124 = vmatpush1.msra.mxu0 0.0
        %2125 = vmatprep.subr.mxu0 0.0
        %2126 = vmatpush1.msra.mxu0 0.0
        %2127 = vmatprep.subr.mxu0 0.0
        %2128 = vmatpush1.msra.mxu0 0.0
        %2129 = vmatprep.subr.mxu0 0.0
        %2130 = vmatpush1.msra.mxu0 0.0
        %2131 = vmatprep.subr.mxu0 0.0
        %2132 = vmatpush1.msra.mxu0 0.0
        %2133 = vmatprep.subr.mxu0 0.0
        %2134 = vmatpush1.msra.mxu0 0.0
        %2135 = vmatprep.subr.mxu0 0.0
        %2136 = vmatpush1.msra.mxu0 0.0
        %2137 = vmatprep.subr.mxu0 0.0
        %2138 = vmatpush1.msra.mxu0 0.0
        %2139 = vmatprep.subr.mxu0 0.0
        %2140 = vmatpush1.msra.mxu0 0.0
        %2141 = vmatprep.subr.mxu0 0.0
        %2142 = vmatpush1.msra.mxu0 0.0
        %2143 = vmatprep.subr.mxu0 0.0
        %2144 = vmatpush1.msra.mxu0 0.0
        %2145 = vmatprep.subr.mxu0 0.0
        %2146 = vmatpush1.msra.mxu0 0.0
        %2147 = vmatprep.subr.mxu0 0.0
        %2148 = vmatpush1.msra.mxu0 0.0
        %2149 = vmatprep.subr.mxu0 0.0
        %2150 = vmatpush1.msra.mxu0 0.0
        %2151 = vmatprep.subr.mxu0 0.0
        %2152 = vmatpush1.msra.mxu0 0.0
        %2153 = vmatprep.subr.mxu0 0.0
        %2154 = vmatpush1.msra.mxu0 0.0
        %2155 = vmatprep.subr.mxu0 0.0
        %2156 = vmatpush1.msra.mxu0 0.0
        %2157 = vmatprep.subr.mxu0 0.0
        %2158 = vmatpush1.msra.mxu0 0.0
        %2159 = vmatprep.subr.mxu0 0.0
        %2160 = vmatpush1.msra.mxu0 0.0
        %2161 = vmatprep.subr.mxu0 0.0
        %2162 = vmatpush1.msra.mxu0 0.0
        %2163 = vmatprep.subr.mxu0 0.0
        %2164 = vmatpush1.msra.mxu0 0.0
        %2165 = vmatprep.subr.mxu0 0.0
        %2166 = vmatpush1.msra.mxu0 0.0
        %2167 = vmatprep.subr.mxu0 0.0
        %2168 = vmatpush1.msra.mxu0 0.0
        %2169 = vmatprep.mubr.f32.mxu0 0.0
        %2170 = vmatmul.mubr.f32.gmra.mrb[0].mxu0 %v2012
        %v2171 = vpop.f32.mrb[0].mxu0
        %v2172 = vadd.f32 0.0, %v2171
        %v2173 = vpop.f32.mrb[0].mxu0
        %v2174 = vadd.f32 0.0, %v2173
        %2175 = vdwg.mxu0
        %2176 = vmatprep.subr.mxu0 %v2024
        %2177 = vmatpush1.msra.mxu0 %v2022
        %2178 = vmatprep.subr.mxu0 0.0
        %2179 = vmatpush1.msra.mxu0 0.0
        %2180 = vmatprep.subr.mxu0 0.0
        %2181 = vmatpush1.msra.mxu0 0.0
        %2182 = vmatprep.subr.mxu0 0.0
        %2183 = vmatpush1.msra.mxu0 0.0
        %2184 = vmatprep.subr.mxu0 0.0
        %2185 = vmatpush1.msra.mxu0 0.0
        %2186 = vmatprep.subr.mxu0 0.0
        %2187 = vmatpush1.msra.mxu0 0.0
        %2188 = vmatprep.subr.mxu0 0.0
        %2189 = vmatpush1.msra.mxu0 0.0
        %2190 = vmatprep.subr.mxu0 0.0
        %2191 = vmatpush1.msra.mxu0 0.0
        %2192 = vmatprep.subr.mxu0 0.0
        %2193 = vmatpush1.msra.mxu0 0.0
        %2194 = vmatprep.subr.mxu0 0.0
        %2195 = vmatpush1.msra.mxu0 0.0
        %2196 = vmatprep.subr.mxu0 0.0
        %2197 = vmatpush1.msra.mxu0 0.0
        %2198 = vmatprep.subr.mxu0 0.0
        %2199 = vmatpush1.msra.mxu0 0.0
        %2200 = vmatprep.subr.mxu0 0.0
        %2201 = vmatpush1.msra.mxu0 0.0
        %2202 = vmatprep.subr.mxu0 0.0
        %2203 = vmatpush1.msra.mxu0 0.0
        %2204 = vmatprep.subr.mxu0 0.0
        %2205 = vmatpush1.msra.mxu0 0.0
        %2206 = vmatprep.subr.mxu0 0.0
        %2207 = vmatpush1.msra.mxu0 0.0
        %2208 = vmatprep.subr.mxu0 0.0
        %2209 = vmatpush1.msra.mxu0 0.0
        %2210 = vmatprep.subr.mxu0 0.0
        %2211 = vmatpush1.msra.mxu0 0.0
        %2212 = vmatprep.subr.mxu0 0.0
        %2213 = vmatpush1.msra.mxu0 0.0
        %2214 = vmatprep.subr.mxu0 0.0
        %2215 = vmatpush1.msra.mxu0 0.0
        %2216 = vmatprep.subr.mxu0 0.0
        %2217 = vmatpush1.msra.mxu0 0.0
        %2218 = vmatprep.subr.mxu0 0.0
        %2219 = vmatpush1.msra.mxu0 0.0
        %2220 = vmatprep.subr.mxu0 0.0
        %2221 = vmatpush1.msra.mxu0 0.0
        %2222 = vmatprep.subr.mxu0 0.0
        %2223 = vmatpush1.msra.mxu0 0.0
        %2224 = vmatprep.subr.mxu0 0.0
        %2225 = vmatpush1.msra.mxu0 0.0
        %2226 = vmatprep.subr.mxu0 0.0
        %2227 = vmatpush1.msra.mxu0 0.0
        %2228 = vmatprep.subr.mxu0 0.0
        %2229 = vmatpush1.msra.mxu0 0.0
        %2230 = vmatprep.subr.mxu0 0.0
        %2231 = vmatpush1.msra.mxu0 0.0
        %2232 = vmatprep.subr.mxu0 0.0
        %2233 = vmatpush1.msra.mxu0 0.0
        %2234 = vmatprep.subr.mxu0 0.0
        %2235 = vmatpush1.msra.mxu0 0.0
        %2236 = vmatprep.subr.mxu0 0.0
        %2237 = vmatpush1.msra.mxu0 0.0
        %2238 = vmatprep.subr.mxu0 0.0
        %2239 = vmatpush1.msra.mxu0 0.0
        %2240 = vmatprep.mubr.f32.mxu0 0.0
        %2241 = vmatmul.mubr.f32.gmra.mrb[0].mxu0 %v2012
        %v2242 = vpop.f32.mrb[0].mxu0
        %v2243 = vadd.f32 0.0, %v2242
        %v2244 = vpop.f32.mrb[0].mxu0
        %v2245 = vadd.f32 0.0, %v2244
        %2246 = vdwg.mxu0
        %2247 = vmatprep.subr.mxu0 %v2028
        %2248 = vmatpush1.msra.mxu0 %v2026
        %2249 = vmatprep.subr.mxu0 0.0
        %2250 = vmatpush1.msra.mxu0 0.0
        %2251 = vmatprep.subr.mxu0 0.0
        %2252 = vmatpush1.msra.mxu0 0.0
        %2253 = vmatprep.subr.mxu0 0.0
        %2254 = vmatpush1.msra.mxu0 0.0
        %2255 = vmatprep.subr.mxu0 0.0
        %2256 = vmatpush1.msra.mxu0 0.0
        %2257 = vmatprep.subr.mxu0 0.0
        %2258 = vmatpush1.msra.mxu0 0.0
        %2259 = vmatprep.subr.mxu0 0.0
        %2260 = vmatpush1.msra.mxu0 0.0
        %2261 = vmatprep.subr.mxu0 0.0
        %2262 = vmatpush1.msra.mxu0 0.0
        %2263 = vmatprep.subr.mxu0 0.0
        %2264 = vmatpush1.msra.mxu0 0.0
        %2265 = vmatprep.subr.mxu0 0.0
        %2266 = vmatpush1.msra.mxu0 0.0
        %2267 = vmatprep.subr.mxu0 0.0
        %2268 = vmatpush1.msra.mxu0 0.0
        %2269 = vmatprep.subr.mxu0 0.0
        %2270 = vmatpush1.msra.mxu0 0.0
        %2271 = vmatprep.subr.mxu0 0.0
        %2272 = vmatpush1.msra.mxu0 0.0
        %2273 = vmatprep.subr.mxu0 0.0
        %2274 = vmatpush1.msra.mxu0 0.0
        %2275 = vmatprep.subr.mxu0 0.0
        %2276 = vmatpush1.msra.mxu0 0.0
        %2277 = vmatprep.subr.mxu0 0.0
        %2278 = vmatpush1.msra.mxu0 0.0
        %2279 = vmatprep.subr.mxu0 0.0
        %2280 = vmatpush1.msra.mxu0 0.0
        %2281 = vmatprep.subr.mxu0 0.0
        %2282 = vmatpush1.msra.mxu0 0.0
        %2283 = vmatprep.subr.mxu0 0.0
        %2284 = vmatpush1.msra.mxu0 0.0
        %2285 = vmatprep.subr.mxu0 0.0
        %2286 = vmatpush1.msra.mxu0 0.0
        %2287 = vmatprep.subr.mxu0 0.0
        %2288 = vmatpush1.msra.mxu0 0.0
        %2289 = vmatprep.subr.mxu0 0.0
        %2290 = vmatpush1.msra.mxu0 0.0
        %2291 = vmatprep.subr.mxu0 0.0
        %2292 = vmatpush1.msra.mxu0 0.0
        %2293 = vmatprep.subr.mxu0 0.0
        %2294 = vmatpush1.msra.mxu0 0.0
        %2295 = vmatprep.subr.mxu0 0.0
        %2296 = vmatpush1.msra.mxu0 0.0
        %2297 = vmatprep.subr.mxu0 0.0
        %2298 = vmatpush1.msra.mxu0 0.0
        %2299 = vmatprep.subr.mxu0 0.0
        %2300 = vmatpush1.msra.mxu0 0.0
        %2301 = vmatprep.subr.mxu0 0.0
        %2302 = vmatpush1.msra.mxu0 0.0
        %2303 = vmatprep.subr.mxu0 0.0
        %2304 = vmatpush1.msra.mxu0 0.0
        %2305 = vmatprep.subr.mxu0 0.0
        %2306 = vmatpush1.msra.mxu0 0.0
        %2307 = vmatprep.subr.mxu0 0.0
        %2308 = vmatpush1.msra.mxu0 0.0
        %2309 = vmatprep.subr.mxu0 0.0
        %2310 = vmatpush1.msra.mxu0 0.0
        %2311 = vmatprep.mubr.f32.mxu0 0.0
        %2312 = vmatmul.mubr.f32.gmra.mrb[0].mxu0 %v2012
        %v2313 = vpop.f32.mrb[0].mxu0
        %v2314 = vadd.f32 0.0, %v2313
        %v2315 = vpop.f32.mrb[0].mxu0
        %v2316 = vadd.f32 0.0, %v2315
        %2317 = vdwg.mxu0
        %2318 = vmatprep.subr.mxu0 %v2032
        %2319 = vmatpush1.msra.mxu0 %v2030
        %2320 = vmatprep.subr.mxu0 0.0
        %2321 = vmatpush1.msra.mxu0 0.0
        %2322 = vmatprep.subr.mxu0 0.0
        %2323 = vmatpush1.msra.mxu0 0.0
        %2324 = vmatprep.subr.mxu0 0.0
        %2325 = vmatpush1.msra.mxu0 0.0
        %2326 = vmatprep.subr.mxu0 0.0
        %2327 = vmatpush1.msra.mxu0 0.0
        %2328 = vmatprep.subr.mxu0 0.0
        %2329 = vmatpush1.msra.mxu0 0.0
        %2330 = vmatprep.subr.mxu0 0.0
        %2331 = vmatpush1.msra.mxu0 0.0
        %2332 = vmatprep.subr.mxu0 0.0
        %2333 = vmatpush1.msra.mxu0 0.0
        %2334 = vmatprep.subr.mxu0 0.0
        %2335 = vmatpush1.msra.mxu0 0.0
        %2336 = vmatprep.subr.mxu0 0.0
        %2337 = vmatpush1.msra.mxu0 0.0
        %2338 = vmatprep.subr.mxu0 0.0
        %2339 = vmatpush1.msra.mxu0 0.0
        %2340 = vmatprep.subr.mxu0 0.0
        %2341 = vmatpush1.msra.mxu0 0.0
        %2342 = vmatprep.subr.mxu0 0.0
        %2343 = vmatpush1.msra.mxu0 0.0
        %2344 = vmatprep.subr.mxu0 0.0
        %2345 = vmatpush1.msra.mxu0 0.0
        %2346 = vmatprep.subr.mxu0 0.0
        %2347 = vmatpush1.msra.mxu0 0.0
        %2348 = vmatprep.subr.mxu0 0.0
        %2349 = vmatpush1.msra.mxu0 0.0
        %2350 = vmatprep.subr.mxu0 0.0
        %2351 = vmatpush1.msra.mxu0 0.0
        %2352 = vmatprep.subr.mxu0 0.0
        %2353 = vmatpush1.msra.mxu0 0.0
        %2354 = vmatprep.subr.mxu0 0.0
        %2355 = vmatpush1.msra.mxu0 0.0
        %2356 = vmatprep.subr.mxu0 0.0
        %2357 = vmatpush1.msra.mxu0 0.0
        %2358 = vmatprep.subr.mxu0 0.0
        %2359 = vmatpush1.msra.mxu0 0.0
        %2360 = vmatprep.subr.mxu0 0.0
        %2361 = vmatpush1.msra.mxu0 0.0
        %2362 = vmatprep.subr.mxu0 0.0
        %2363 = vmatpush1.msra.mxu0 0.0
        %2364 = vmatprep.subr.mxu0 0.0
        %2365 = vmatpush1.msra.mxu0 0.0
        %2366 = vmatprep.subr.mxu0 0.0
        %2367 = vmatpush1.msra.mxu0 0.0
        %2368 = vmatprep.subr.mxu0 0.0
        %2369 = vmatpush1.msra.mxu0 0.0
        %2370 = vmatprep.subr.mxu0 0.0
        %2371 = vmatpush1.msra.mxu0 0.0
        %2372 = vmatprep.subr.mxu0 0.0
        %2373 = vmatpush1.msra.mxu0 0.0
        %2374 = vmatprep.subr.mxu0 0.0
        %2375 = vmatpush1.msra.mxu0 0.0
        %2376 = vmatprep.subr.mxu0 0.0
        %2377 = vmatpush1.msra.mxu0 0.0
        %2378 = vmatprep.subr.mxu0 0.0
        %2379 = vmatpush1.msra.mxu0 0.0
        %2380 = vmatprep.subr.mxu0 0.0
        %2381 = vmatpush1.msra.mxu0 0.0
        %2382 = vmatprep.mubr.f32.mxu0 0.0
        %2383 = vmatmul.mubr.f32.gmra.mrb[0].mxu0 %v2012
        %v2384 = vpop.f32.mrb[0].mxu0
        %v2385 = vadd.f32 0.0, %v2384
        %v2386 = vpop.f32.mrb[0].mxu0
        %v2387 = vadd.f32 0.0, %v2386
        %2388 = vdwg.mxu0
        %v2389 = vadd.f32 %v1954, %v2101
        %v2390 = vadd.f32 %v1955, %v2103
        %v2391 = vadd.f32 %v1956, %v2172
        %v2392 = vadd.f32 %v1957, %v2174
        %v2393 = vadd.f32 %v1958, %v2243
        %v2394 = vadd.f32 %v1959, %v2245
        %v2395 = vadd.f32 %v1960, %v2314
        %v2396 = vadd.f32 %v1961, %v2316
        %v2397 = vadd.f32 %v1962, %v2385
        %v2398 = vadd.f32 %v1963, %v2387
        %s2399 = scalar_lea.vmem %s2, 20
        %v2400 = vld [vmem:[%s2399] sm:$0xf]
        %v2401 = vld [vmem:[#allocation2] sm:$0xff]
        %v2402 = vld [vmem:[#allocation2 + $0x8] sm:$0xff]
        %v2403 = vld [vmem:[#allocation2 + $0x10] sm:$0xff]
        %v2404 = vld [vmem:[#allocation2 + $0x18] sm:$0xff]
        %v2405 = vld [vmem:[#allocation2 + $0x20] sm:$0xff]
        %v2411 = vcombine.high %v2401, %v2401
        %v2412 = vcombine.high %v2402, %v2402
        %v2413 = vcombine.high %v2403, %v2403
        %v2414 = vcombine.high %v2404, %v2404
        %v2415 = vcombine.high %v2405, %v2405
        %2416 = vrot.lane.b32.xlu0 %v2401, 92
        %v2417 = vpop.permute.xlu0 %2416
        %2418 = vrot.lane.b32.xlu0 %v2411, 92
        %v2419 = vpop.permute.xlu0 %2418
        %2420 = vrot.lane.b32.xlu0 %v2402, 92
        %v2421 = vpop.permute.xlu0 %2420
        %2422 = vrot.lane.b32.xlu0 %v2412, 92
        %v2423 = vpop.permute.xlu0 %2422
        %2424 = vrot.lane.b32.xlu0 %v2403, 92
        %v2425 = vpop.permute.xlu0 %2424
        %2426 = vrot.lane.b32.xlu0 %v2413, 92
        %v2427 = vpop.permute.xlu0 %2426
        %2428 = vrot.lane.b32.xlu0 %v2404, 92
        %v2429 = vpop.permute.xlu0 %2428
        %2430 = vrot.lane.b32.xlu0 %v2414, 92
        %v2431 = vpop.permute.xlu0 %2430
        %2432 = vrot.lane.b32.xlu0 %v2405, 92
        %v2433 = vpop.permute.xlu0 %2432
        %2434 = vrot.lane.b32.xlu0 %v2415, 92
        %v2435 = vpop.permute.xlu0 %2434
        %vm2436 = vcmask 752640
        %v2437 = vsel %vm2436, %v2417, %v2419
        %v2438 = vsel %vm2436, %v2419, %v2421
        %v2439 = vsel %vm2436, %v2421, %v2423
        %v2440 = vsel %vm2436, %v2423, %v2425
        %v2441 = vsel %vm2436, %v2425, %v2427
        %v2442 = vsel %vm2436, %v2427, %v2429
        %v2443 = vsel %vm2436, %v2429, %v2431
        %v2444 = vsel %vm2436, %v2431, %v2433
        %v2445 = vsel %vm2436, %v2433, %v2435
        %v2447 = vsel %vm337, %v2400, 0
        %v2449 = vsel %vm235, %v2437, 0
        %v2451 = vsel %vm235, %v2438, 0
        %v2453 = vsel %vm235, %v2439, 0
        %v2455 = vsel %vm235, %v2440, 0
        %v2457 = vsel %vm235, %v2441, 0
        %v2459 = vsel %vm235, %v2442, 0
        %v2461 = vsel %vm235, %v2443, 0
        %v2463 = vsel %vm235, %v2444, 0
        %v2465 = vsel %vm235, %v2445, 0
        %v2467 = vsel %vm235, %v2435, 0
        %2469 = vmatprep.subr.mxu0 %v2451
        %2470 = vmatpush1.msra.mxu0 %v2449
        %2471 = vmatprep.subr.mxu0 0.0
        %2472 = vmatpush1.msra.mxu0 0.0
        %2473 = vmatprep.subr.mxu0 0.0
        %2474 = vmatpush1.msra.mxu0 0.0
        %2475 = vmatprep.subr.mxu0 0.0
        %2476 = vmatpush1.msra.mxu0 0.0
        %2477 = vmatprep.subr.mxu0 0.0
        %2478 = vmatpush1.msra.mxu0 0.0
        %2479 = vmatprep.subr.mxu0 0.0
        %2480 = vmatpush1.msra.mxu0 0.0
        %2481 = vmatprep.subr.mxu0 0.0
        %2482 = vmatpush1.msra.mxu0 0.0
        %2483 = vmatprep.subr.mxu0 0.0
        %2484 = vmatpush1.msra.mxu0 0.0
        %2485 = vmatprep.subr.mxu0 0.0
        %2486 = vmatpush1.msra.mxu0 0.0
        %2487 = vmatprep.subr.mxu0 0.0
        %2488 = vmatpush1.msra.mxu0 0.0
        %2489 = vmatprep.subr.mxu0 0.0
        %2490 = vmatpush1.msra.mxu0 0.0
        %2491 = vmatprep.subr.mxu0 0.0
        %2492 = vmatpush1.msra.mxu0 0.0
        %2493 = vmatprep.subr.mxu0 0.0
        %2494 = vmatpush1.msra.mxu0 0.0
        %2495 = vmatprep.subr.mxu0 0.0
        %2496 = vmatpush1.msra.mxu0 0.0
        %2497 = vmatprep.subr.mxu0 0.0
        %2498 = vmatpush1.msra.mxu0 0.0
        %2499 = vmatprep.subr.mxu0 0.0
        %2500 = vmatpush1.msra.mxu0 0.0
        %2501 = vmatprep.subr.mxu0 0.0
        %2502 = vmatpush1.msra.mxu0 0.0
        %2503 = vmatprep.subr.mxu0 0.0
        %2504 = vmatpush1.msra.mxu0 0.0
        %2505 = vmatprep.subr.mxu0 0.0
        %2506 = vmatpush1.msra.mxu0 0.0
        %2507 = vmatprep.subr.mxu0 0.0
        %2508 = vmatpush1.msra.mxu0 0.0
        %2509 = vmatprep.subr.mxu0 0.0
        %2510 = vmatpush1.msra.mxu0 0.0
        %2511 = vmatprep.subr.mxu0 0.0
        %2512 = vmatpush1.msra.mxu0 0.0
        %2513 = vmatprep.subr.mxu0 0.0
        %2514 = vmatpush1.msra.mxu0 0.0
        %2515 = vmatprep.subr.mxu0 0.0
        %2516 = vmatpush1.msra.mxu0 0.0
        %2517 = vmatprep.subr.mxu0 0.0
        %2518 = vmatpush1.msra.mxu0 0.0
        %2519 = vmatprep.subr.mxu0 0.0
        %2520 = vmatpush1.msra.mxu0 0.0
        %2521 = vmatprep.subr.mxu0 0.0
        %2522 = vmatpush1.msra.mxu0 0.0
        %2523 = vmatprep.subr.mxu0 0.0
        %2524 = vmatpush1.msra.mxu0 0.0
        %2525 = vmatprep.subr.mxu0 0.0
        %2526 = vmatpush1.msra.mxu0 0.0
        %2527 = vmatprep.subr.mxu0 0.0
        %2528 = vmatpush1.msra.mxu0 0.0
        %2529 = vmatprep.subr.mxu0 0.0
        %2530 = vmatpush1.msra.mxu0 0.0
        %2531 = vmatprep.subr.mxu0 0.0
        %2532 = vmatpush1.msra.mxu0 0.0
        %2533 = vmatprep.mubr.f32.mxu0 0.0
        %2534 = vmatmul.mubr.f32.gmra.mrb[0].mxu0 %v2447
        %v2535 = vpop.f32.mrb[0].mxu0
        %v2536 = vadd.f32 0.0, %v2535
        %v2537 = vpop.f32.mrb[0].mxu0
        %v2538 = vadd.f32 0.0, %v2537
        %2539 = vdwg.mxu0
        %2540 = vmatprep.subr.mxu0 %v2455
        %2541 = vmatpush1.msra.mxu0 %v2453
        %2542 = vmatprep.subr.mxu0 0.0
        %2543 = vmatpush1.msra.mxu0 0.0
        %2544 = vmatprep.subr.mxu0 0.0
        %2545 = vmatpush1.msra.mxu0 0.0
        %2546 = vmatprep.subr.mxu0 0.0
        %2547 = vmatpush1.msra.mxu0 0.0
        %2548 = vmatprep.subr.mxu0 0.0
        %2549 = vmatpush1.msra.mxu0 0.0
        %2550 = vmatprep.subr.mxu0 0.0
        %2551 = vmatpush1.msra.mxu0 0.0
        %2552 = vmatprep.subr.mxu0 0.0
        %2553 = vmatpush1.msra.mxu0 0.0
        %2554 = vmatprep.subr.mxu0 0.0
        %2555 = vmatpush1.msra.mxu0 0.0
        %2556 = vmatprep.subr.mxu0 0.0
        %2557 = vmatpush1.msra.mxu0 0.0
        %2558 = vmatprep.subr.mxu0 0.0
        %2559 = vmatpush1.msra.mxu0 0.0
        %2560 = vmatprep.subr.mxu0 0.0
        %2561 = vmatpush1.msra.mxu0 0.0
        %2562 = vmatprep.subr.mxu0 0.0
        %2563 = vmatpush1.msra.mxu0 0.0
        %2564 = vmatprep.subr.mxu0 0.0
        %2565 = vmatpush1.msra.mxu0 0.0
        %2566 = vmatprep.subr.mxu0 0.0
        %2567 = vmatpush1.msra.mxu0 0.0
        %2568 = vmatprep.subr.mxu0 0.0
        %2569 = vmatpush1.msra.mxu0 0.0
        %2570 = vmatprep.subr.mxu0 0.0
        %2571 = vmatpush1.msra.mxu0 0.0
        %2572 = vmatprep.subr.mxu0 0.0
        %2573 = vmatpush1.msra.mxu0 0.0
        %2574 = vmatprep.subr.mxu0 0.0
        %2575 = vmatpush1.msra.mxu0 0.0
        %2576 = vmatprep.subr.mxu0 0.0
        %2577 = vmatpush1.msra.mxu0 0.0
        %2578 = vmatprep.subr.mxu0 0.0
        %2579 = vmatpush1.msra.mxu0 0.0
        %2580 = vmatprep.subr.mxu0 0.0
        %2581 = vmatpush1.msra.mxu0 0.0
        %2582 = vmatprep.subr.mxu0 0.0
        %2583 = vmatpush1.msra.mxu0 0.0
        %2584 = vmatprep.subr.mxu0 0.0
        %2585 = vmatpush1.msra.mxu0 0.0
        %2586 = vmatprep.subr.mxu0 0.0
        %2587 = vmatpush1.msra.mxu0 0.0
        %2588 = vmatprep.subr.mxu0 0.0
        %2589 = vmatpush1.msra.mxu0 0.0
        %2590 = vmatprep.subr.mxu0 0.0
        %2591 = vmatpush1.msra.mxu0 0.0
        %2592 = vmatprep.subr.mxu0 0.0
        %2593 = vmatpush1.msra.mxu0 0.0
        %2594 = vmatprep.subr.mxu0 0.0
        %2595 = vmatpush1.msra.mxu0 0.0
        %2596 = vmatprep.subr.mxu0 0.0
        %2597 = vmatpush1.msra.mxu0 0.0
        %2598 = vmatprep.subr.mxu0 0.0
        %2599 = vmatpush1.msra.mxu0 0.0
        %2600 = vmatprep.subr.mxu0 0.0
        %2601 = vmatpush1.msra.mxu0 0.0
        %2602 = vmatprep.subr.mxu0 0.0
        %2603 = vmatpush1.msra.mxu0 0.0
        %2604 = vmatprep.mubr.f32.mxu0 0.0
        %2605 = vmatmul.mubr.f32.gmra.mrb[0].mxu0 %v2447
        %v2606 = vpop.f32.mrb[0].mxu0
        %v2607 = vadd.f32 0.0, %v2606
        %v2608 = vpop.f32.mrb[0].mxu0
        %v2609 = vadd.f32 0.0, %v2608
        %2610 = vdwg.mxu0
        %2611 = vmatprep.subr.mxu0 %v2459
        %2612 = vmatpush1.msra.mxu0 %v2457
        %2613 = vmatprep.subr.mxu0 0.0
        %2614 = vmatpush1.msra.mxu0 0.0
        %2615 = vmatprep.subr.mxu0 0.0
        %2616 = vmatpush1.msra.mxu0 0.0
        %2617 = vmatprep.subr.mxu0 0.0
        %2618 = vmatpush1.msra.mxu0 0.0
        %2619 = vmatprep.subr.mxu0 0.0
        %2620 = vmatpush1.msra.mxu0 0.0
        %2621 = vmatprep.subr.mxu0 0.0
        %2622 = vmatpush1.msra.mxu0 0.0
        %2623 = vmatprep.subr.mxu0 0.0
        %2624 = vmatpush1.msra.mxu0 0.0
        %2625 = vmatprep.subr.mxu0 0.0
        %2626 = vmatpush1.msra.mxu0 0.0
        %2627 = vmatprep.subr.mxu0 0.0
        %2628 = vmatpush1.msra.mxu0 0.0
        %2629 = vmatprep.subr.mxu0 0.0
        %2630 = vmatpush1.msra.mxu0 0.0
        %2631 = vmatprep.subr.mxu0 0.0
        %2632 = vmatpush1.msra.mxu0 0.0
        %2633 = vmatprep.subr.mxu0 0.0
        %2634 = vmatpush1.msra.mxu0 0.0
        %2635 = vmatprep.subr.mxu0 0.0
        %2636 = vmatpush1.msra.mxu0 0.0
        %2637 = vmatprep.subr.mxu0 0.0
        %2638 = vmatpush1.msra.mxu0 0.0
        %2639 = vmatprep.subr.mxu0 0.0
        %2640 = vmatpush1.msra.mxu0 0.0
        %2641 = vmatprep.subr.mxu0 0.0
        %2642 = vmatpush1.msra.mxu0 0.0
        %2643 = vmatprep.subr.mxu0 0.0
        %2644 = vmatpush1.msra.mxu0 0.0
        %2645 = vmatprep.subr.mxu0 0.0
        %2646 = vmatpush1.msra.mxu0 0.0
        %2647 = vmatprep.subr.mxu0 0.0
        %2648 = vmatpush1.msra.mxu0 0.0
        %2649 = vmatprep.subr.mxu0 0.0
        %2650 = vmatpush1.msra.mxu0 0.0
        %2651 = vmatprep.subr.mxu0 0.0
        %2652 = vmatpush1.msra.mxu0 0.0
        %2653 = vmatprep.subr.mxu0 0.0
        %2654 = vmatpush1.msra.mxu0 0.0
        %2655 = vmatprep.subr.mxu0 0.0
        %2656 = vmatpush1.msra.mxu0 0.0
        %2657 = vmatprep.subr.mxu0 0.0
        %2658 = vmatpush1.msra.mxu0 0.0
        %2659 = vmatprep.subr.mxu0 0.0
        %2660 = vmatpush1.msra.mxu0 0.0
        %2661 = vmatprep.subr.mxu0 0.0
        %2662 = vmatpush1.msra.mxu0 0.0
        %2663 = vmatprep.subr.mxu0 0.0
        %2664 = vmatpush1.msra.mxu0 0.0
        %2665 = vmatprep.subr.mxu0 0.0
        %2666 = vmatpush1.msra.mxu0 0.0
        %2667 = vmatprep.subr.mxu0 0.0
        %2668 = vmatpush1.msra.mxu0 0.0
        %2669 = vmatprep.subr.mxu0 0.0
        %2670 = vmatpush1.msra.mxu0 0.0
        %2671 = vmatprep.subr.mxu0 0.0
        %2672 = vmatpush1.msra.mxu0 0.0
        %2673 = vmatprep.subr.mxu0 0.0
        %2674 = vmatpush1.msra.mxu0 0.0
        %2675 = vmatprep.mubr.f32.mxu0 0.0
        %2676 = vmatmul.mubr.f32.gmra.mrb[0].mxu0 %v2447
        %v2677 = vpop.f32.mrb[0].mxu0
        %v2678 = vadd.f32 0.0, %v2677
        %v2679 = vpop.f32.mrb[0].mxu0
        %v2680 = vadd.f32 0.0, %v2679
        %2681 = vdwg.mxu0
        %2682 = vmatprep.subr.mxu0 %v2463
        %2683 = vmatpush1.msra.mxu0 %v2461
        %2684 = vmatprep.subr.mxu0 0.0
        %2685 = vmatpush1.msra.mxu0 0.0
        %2686 = vmatprep.subr.mxu0 0.0
        %2687 = vmatpush1.msra.mxu0 0.0
        %2688 = vmatprep.subr.mxu0 0.0
        %2689 = vmatpush1.msra.mxu0 0.0
        %2690 = vmatprep.subr.mxu0 0.0
        %2691 = vmatpush1.msra.mxu0 0.0
        %2692 = vmatprep.subr.mxu0 0.0
        %2693 = vmatpush1.msra.mxu0 0.0
        %2694 = vmatprep.subr.mxu0 0.0
        %2695 = vmatpush1.msra.mxu0 0.0
        %2696 = vmatprep.subr.mxu0 0.0
        %2697 = vmatpush1.msra.mxu0 0.0
        %2698 = vmatprep.subr.mxu0 0.0
        %2699 = vmatpush1.msra.mxu0 0.0
        %2700 = vmatprep.subr.mxu0 0.0
        %2701 = vmatpush1.msra.mxu0 0.0
        %2702 = vmatprep.subr.mxu0 0.0
        %2703 = vmatpush1.msra.mxu0 0.0
        %2704 = vmatprep.subr.mxu0 0.0
        %2705 = vmatpush1.msra.mxu0 0.0
        %2706 = vmatprep.subr.mxu0 0.0
        %2707 = vmatpush1.msra.mxu0 0.0
        %2708 = vmatprep.subr.mxu0 0.0
        %2709 = vmatpush1.msra.mxu0 0.0
        %2710 = vmatprep.subr.mxu0 0.0
        %2711 = vmatpush1.msra.mxu0 0.0
        %2712 = vmatprep.subr.mxu0 0.0
        %2713 = vmatpush1.msra.mxu0 0.0
        %2714 = vmatprep.subr.mxu0 0.0
        %2715 = vmatpush1.msra.mxu0 0.0
        %2716 = vmatprep.subr.mxu0 0.0
        %2717 = vmatpush1.msra.mxu0 0.0
        %2718 = vmatprep.subr.mxu0 0.0
        %2719 = vmatpush1.msra.mxu0 0.0
        %2720 = vmatprep.subr.mxu0 0.0
        %2721 = vmatpush1.msra.mxu0 0.0
        %2722 = vmatprep.subr.mxu0 0.0
        %2723 = vmatpush1.msra.mxu0 0.0
        %2724 = vmatprep.subr.mxu0 0.0
        %2725 = vmatpush1.msra.mxu0 0.0
        %2726 = vmatprep.subr.mxu0 0.0
        %2727 = vmatpush1.msra.mxu0 0.0
        %2728 = vmatprep.subr.mxu0 0.0
        %2729 = vmatpush1.msra.mxu0 0.0
        %2730 = vmatprep.subr.mxu0 0.0
        %2731 = vmatpush1.msra.mxu0 0.0
        %2732 = vmatprep.subr.mxu0 0.0
        %2733 = vmatpush1.msra.mxu0 0.0
        %2734 = vmatprep.subr.mxu0 0.0
        %2735 = vmatpush1.msra.mxu0 0.0
        %2736 = vmatprep.subr.mxu0 0.0
        %2737 = vmatpush1.msra.mxu0 0.0
        %2738 = vmatprep.subr.mxu0 0.0
        %2739 = vmatpush1.msra.mxu0 0.0
        %2740 = vmatprep.subr.mxu0 0.0
        %2741 = vmatpush1.msra.mxu0 0.0
        %2742 = vmatprep.subr.mxu0 0.0
        %2743 = vmatpush1.msra.mxu0 0.0
        %2744 = vmatprep.subr.mxu0 0.0
        %2745 = vmatpush1.msra.mxu0 0.0
        %2746 = vmatprep.mubr.f32.mxu0 0.0
        %2747 = vmatmul.mubr.f32.gmra.mrb[0].mxu0 %v2447
        %v2748 = vpop.f32.mrb[0].mxu0
        %v2749 = vadd.f32 0.0, %v2748
        %v2750 = vpop.f32.mrb[0].mxu0
        %v2751 = vadd.f32 0.0, %v2750
        %2752 = vdwg.mxu0
        %2753 = vmatprep.subr.mxu0 %v2467
        %2754 = vmatpush1.msra.mxu0 %v2465
        %2755 = vmatprep.subr.mxu0 0.0
        %2756 = vmatpush1.msra.mxu0 0.0
        %2757 = vmatprep.subr.mxu0 0.0
        %2758 = vmatpush1.msra.mxu0 0.0
        %2759 = vmatprep.subr.mxu0 0.0
        %2760 = vmatpush1.msra.mxu0 0.0
        %2761 = vmatprep.subr.mxu0 0.0
        %2762 = vmatpush1.msra.mxu0 0.0
        %2763 = vmatprep.subr.mxu0 0.0
        %2764 = vmatpush1.msra.mxu0 0.0
        %2765 = vmatprep.subr.mxu0 0.0
        %2766 = vmatpush1.msra.mxu0 0.0
        %2767 = vmatprep.subr.mxu0 0.0
        %2768 = vmatpush1.msra.mxu0 0.0
        %2769 = vmatprep.subr.mxu0 0.0
        %2770 = vmatpush1.msra.mxu0 0.0
        %2771 = vmatprep.subr.mxu0 0.0
        %2772 = vmatpush1.msra.mxu0 0.0
        %2773 = vmatprep.subr.mxu0 0.0
        %2774 = vmatpush1.msra.mxu0 0.0
        %2775 = vmatprep.subr.mxu0 0.0
        %2776 = vmatpush1.msra.mxu0 0.0
        %2777 = vmatprep.subr.mxu0 0.0
        %2778 = vmatpush1.msra.mxu0 0.0
        %2779 = vmatprep.subr.mxu0 0.0
        %2780 = vmatpush1.msra.mxu0 0.0
        %2781 = vmatprep.subr.mxu0 0.0
        %2782 = vmatpush1.msra.mxu0 0.0
        %2783 = vmatprep.subr.mxu0 0.0
        %2784 = vmatpush1.msra.mxu0 0.0
        %2785 = vmatprep.subr.mxu0 0.0
        %2786 = vmatpush1.msra.mxu0 0.0
        %2787 = vmatprep.subr.mxu0 0.0
        %2788 = vmatpush1.msra.mxu0 0.0
        %2789 = vmatprep.subr.mxu0 0.0
        %2790 = vmatpush1.msra.mxu0 0.0
        %2791 = vmatprep.subr.mxu0 0.0
        %2792 = vmatpush1.msra.mxu0 0.0
        %2793 = vmatprep.subr.mxu0 0.0
        %2794 = vmatpush1.msra.mxu0 0.0
        %2795 = vmatprep.subr.mxu0 0.0
        %2796 = vmatpush1.msra.mxu0 0.0
        %2797 = vmatprep.subr.mxu0 0.0
        %2798 = vmatpush1.msra.mxu0 0.0
        %2799 = vmatprep.subr.mxu0 0.0
        %2800 = vmatpush1.msra.mxu0 0.0
        %2801 = vmatprep.subr.mxu0 0.0
        %2802 = vmatpush1.msra.mxu0 0.0
        %2803 = vmatprep.subr.mxu0 0.0
        %2804 = vmatpush1.msra.mxu0 0.0
        %2805 = vmatprep.subr.mxu0 0.0
        %2806 = vmatpush1.msra.mxu0 0.0
        %2807 = vmatprep.subr.mxu0 0.0
        %2808 = vmatpush1.msra.mxu0 0.0
        %2809 = vmatprep.subr.mxu0 0.0
        %2810 = vmatpush1.msra.mxu0 0.0
        %2811 = vmatprep.subr.mxu0 0.0
        %2812 = vmatpush1.msra.mxu0 0.0
        %2813 = vmatprep.subr.mxu0 0.0
        %2814 = vmatpush1.msra.mxu0 0.0
        %2815 = vmatprep.subr.mxu0 0.0
        %2816 = vmatpush1.msra.mxu0 0.0
        %2817 = vmatprep.mubr.f32.mxu0 0.0
        %2818 = vmatmul.mubr.f32.gmra.mrb[0].mxu0 %v2447
        %v2819 = vpop.f32.mrb[0].mxu0
        %v2820 = vadd.f32 0.0, %v2819
        %v2821 = vpop.f32.mrb[0].mxu0
        %v2822 = vadd.f32 0.0, %v2821
        %2823 = vdwg.mxu0
        %v2824 = vadd.f32 %v2389, %v2536
        %v2825 = vadd.f32 %v2390, %v2538
        %v2826 = vadd.f32 %v2391, %v2607
        %v2827 = vadd.f32 %v2392, %v2609
        %v2828 = vadd.f32 %v2393, %v2678
        %v2829 = vadd.f32 %v2394, %v2680
        %v2830 = vadd.f32 %v2395, %v2749
        %v2831 = vadd.f32 %v2396, %v2751
        %v2832 = vadd.f32 %v2397, %v2820
        %v2833 = vadd.f32 %v2398, %v2822
        %s2834 = scalar_lea.vmem %s2, 24
        %v2835 = vld [vmem:[%s2834] sm:$0xf]
        %v2836 = vld [vmem:[#allocation2] sm:$0xff]
        %v2837 = vld [vmem:[#allocation2 + $0x8] sm:$0xff]
        %v2838 = vld [vmem:[#allocation2 + $0x10] sm:$0xff]
        %v2839 = vld [vmem:[#allocation2 + $0x18] sm:$0xff]
        %v2840 = vld [vmem:[#allocation2 + $0x20] sm:$0xff]
        %v2846 = vcombine.high %v2836, %v2836
        %v2847 = vcombine.high %v2837, %v2837
        %v2848 = vcombine.high %v2838, %v2838
        %v2849 = vcombine.high %v2839, %v2839
        %v2850 = vcombine.high %v2840, %v2840
        %2851 = vrot.lane.b32.xlu0 %v2836, 60
        %v2852 = vpop.permute.xlu0 %2851
        %2853 = vrot.lane.b32.xlu0 %v2846, 60
        %v2854 = vpop.permute.xlu0 %2853
        %2855 = vrot.lane.b32.xlu0 %v2837, 60
        %v2856 = vpop.permute.xlu0 %2855
        %2857 = vrot.lane.b32.xlu0 %v2847, 60
        %v2858 = vpop.permute.xlu0 %2857
        %2859 = vrot.lane.b32.xlu0 %v2838, 60
        %v2860 = vpop.permute.xlu0 %2859
        %2861 = vrot.lane.b32.xlu0 %v2848, 60
        %v2862 = vpop.permute.xlu0 %2861
        %2863 = vrot.lane.b32.xlu0 %v2839, 60
        %v2864 = vpop.permute.xlu0 %2863
        %2865 = vrot.lane.b32.xlu0 %v2849, 60
        %v2866 = vpop.permute.xlu0 %2865
        %2867 = vrot.lane.b32.xlu0 %v2840, 60
        %v2868 = vpop.permute.xlu0 %2867
        %2869 = vrot.lane.b32.xlu0 %v2850, 60
        %v2870 = vpop.permute.xlu0 %2869
        %vm2871 = vcmask 490496
        %v2872 = vsel %vm2871, %v2852, %v2854
        %v2873 = vsel %vm2871, %v2854, %v2856
        %v2874 = vsel %vm2871, %v2856, %v2858
        %v2875 = vsel %vm2871, %v2858, %v2860
        %v2876 = vsel %vm2871, %v2860, %v2862
        %v2877 = vsel %vm2871, %v2862, %v2864
        %v2878 = vsel %vm2871, %v2864, %v2866
        %v2879 = vsel %vm2871, %v2866, %v2868
        %v2880 = vsel %vm2871, %v2868, %v2870
        %v2882 = vsel %vm337, %v2835, 0
        %v2884 = vsel %vm235, %v2872, 0
        %v2886 = vsel %vm235, %v2873, 0
        %v2888 = vsel %vm235, %v2874, 0
        %v2890 = vsel %vm235, %v2875, 0
        %v2892 = vsel %vm235, %v2876, 0
        %v2894 = vsel %vm235, %v2877, 0
        %v2896 = vsel %vm235, %v2878, 0
        %v2898 = vsel %vm235, %v2879, 0
        %v2900 = vsel %vm235, %v2880, 0
        %v2902 = vsel %vm235, %v2870, 0
        %2904 = vmatprep.subr.mxu0 %v2886
        %2905 = vmatpush1.msra.mxu0 %v2884
        %2906 = vmatprep.subr.mxu0 0.0
        %2907 = vmatpush1.msra.mxu0 0.0
        %2908 = vmatprep.subr.mxu0 0.0
        %2909 = vmatpush1.msra.mxu0 0.0
        %2910 = vmatprep.subr.mxu0 0.0
        %2911 = vmatpush1.msra.mxu0 0.0
        %2912 = vmatprep.subr.mxu0 0.0
        %2913 = vmatpush1.msra.mxu0 0.0
        %2914 = vmatprep.subr.mxu0 0.0
        %2915 = vmatpush1.msra.mxu0 0.0
        %2916 = vmatprep.subr.mxu0 0.0
        %2917 = vmatpush1.msra.mxu0 0.0
        %2918 = vmatprep.subr.mxu0 0.0
        %2919 = vmatpush1.msra.mxu0 0.0
        %2920 = vmatprep.subr.mxu0 0.0
        %2921 = vmatpush1.msra.mxu0 0.0
        %2922 = vmatprep.subr.mxu0 0.0
        %2923 = vmatpush1.msra.mxu0 0.0
        %2924 = vmatprep.subr.mxu0 0.0
        %2925 = vmatpush1.msra.mxu0 0.0
        %2926 = vmatprep.subr.mxu0 0.0
        %2927 = vmatpush1.msra.mxu0 0.0
        %2928 = vmatprep.subr.mxu0 0.0
        %2929 = vmatpush1.msra.mxu0 0.0
        %2930 = vmatprep.subr.mxu0 0.0
        %2931 = vmatpush1.msra.mxu0 0.0
        %2932 = vmatprep.subr.mxu0 0.0
        %2933 = vmatpush1.msra.mxu0 0.0
        %2934 = vmatprep.subr.mxu0 0.0
        %2935 = vmatpush1.msra.mxu0 0.0
        %2936 = vmatprep.subr.mxu0 0.0
        %2937 = vmatpush1.msra.mxu0 0.0
        %2938 = vmatprep.subr.mxu0 0.0
        %2939 = vmatpush1.msra.mxu0 0.0
        %2940 = vmatprep.subr.mxu0 0.0
        %2941 = vmatpush1.msra.mxu0 0.0
        %2942 = vmatprep.subr.mxu0 0.0
        %2943 = vmatpush1.msra.mxu0 0.0
        %2944 = vmatprep.subr.mxu0 0.0
        %2945 = vmatpush1.msra.mxu0 0.0
        %2946 = vmatprep.subr.mxu0 0.0
        %2947 = vmatpush1.msra.mxu0 0.0
        %2948 = vmatprep.subr.mxu0 0.0
        %2949 = vmatpush1.msra.mxu0 0.0
        %2950 = vmatprep.subr.mxu0 0.0
        %2951 = vmatpush1.msra.mxu0 0.0
        %2952 = vmatprep.subr.mxu0 0.0
        %2953 = vmatpush1.msra.mxu0 0.0
        %2954 = vmatprep.subr.mxu0 0.0
        %2955 = vmatpush1.msra.mxu0 0.0
        %2956 = vmatprep.subr.mxu0 0.0
        %2957 = vmatpush1.msra.mxu0 0.0
        %2958 = vmatprep.subr.mxu0 0.0
        %2959 = vmatpush1.msra.mxu0 0.0
        %2960 = vmatprep.subr.mxu0 0.0
        %2961 = vmatpush1.msra.mxu0 0.0
        %2962 = vmatprep.subr.mxu0 0.0
        %2963 = vmatpush1.msra.mxu0 0.0
        %2964 = vmatprep.subr.mxu0 0.0
        %2965 = vmatpush1.msra.mxu0 0.0
        %2966 = vmatprep.subr.mxu0 0.0
        %2967 = vmatpush1.msra.mxu0 0.0
        %2968 = vmatprep.mubr.f32.mxu0 0.0
        %2969 = vmatmul.mubr.f32.gmra.mrb[0].mxu0 %v2882
        %v2970 = vpop.f32.mrb[0].mxu0
        %v2971 = vadd.f32 0.0, %v2970
        %v2972 = vpop.f32.mrb[0].mxu0
        %v2973 = vadd.f32 0.0, %v2972
        %2974 = vdwg.mxu0
        %2975 = vmatprep.subr.mxu0 %v2890
        %2976 = vmatpush1.msra.mxu0 %v2888
        %2977 = vmatprep.subr.mxu0 0.0
        %2978 = vmatpush1.msra.mxu0 0.0
        %2979 = vmatprep.subr.mxu0 0.0
        %2980 = vmatpush1.msra.mxu0 0.0
        %2981 = vmatprep.subr.mxu0 0.0
        %2982 = vmatpush1.msra.mxu0 0.0
        %2983 = vmatprep.subr.mxu0 0.0
        %2984 = vmatpush1.msra.mxu0 0.0
        %2985 = vmatprep.subr.mxu0 0.0
        %2986 = vmatpush1.msra.mxu0 0.0
        %2987 = vmatprep.subr.mxu0 0.0
        %2988 = vmatpush1.msra.mxu0 0.0
        %2989 = vmatprep.subr.mxu0 0.0
        %2990 = vmatpush1.msra.mxu0 0.0
        %2991 = vmatprep.subr.mxu0 0.0
        %2992 = vmatpush1.msra.mxu0 0.0
        %2993 = vmatprep.subr.mxu0 0.0
        %2994 = vmatpush1.msra.mxu0 0.0
        %2995 = vmatprep.subr.mxu0 0.0
        %2996 = vmatpush1.msra.mxu0 0.0
        %2997 = vmatprep.subr.mxu0 0.0
        %2998 = vmatpush1.msra.mxu0 0.0
        %2999 = vmatprep.subr.mxu0 0.0
        %3000 = vmatpush1.msra.mxu0 0.0
        %3001 = vmatprep.subr.mxu0 0.0
        %3002 = vmatpush1.msra.mxu0 0.0
        %3003 = vmatprep.subr.mxu0 0.0
        %3004 = vmatpush1.msra.mxu0 0.0
        %3005 = vmatprep.subr.mxu0 0.0
        %3006 = vmatpush1.msra.mxu0 0.0
        %3007 = vmatprep.subr.mxu0 0.0
        %3008 = vmatpush1.msra.mxu0 0.0
        %3009 = vmatprep.subr.mxu0 0.0
        %3010 = vmatpush1.msra.mxu0 0.0
        %3011 = vmatprep.subr.mxu0 0.0
        %3012 = vmatpush1.msra.mxu0 0.0
        %3013 = vmatprep.subr.mxu0 0.0
        %3014 = vmatpush1.msra.mxu0 0.0
        %3015 = vmatprep.subr.mxu0 0.0
        %3016 = vmatpush1.msra.mxu0 0.0
        %3017 = vmatprep.subr.mxu0 0.0
        %3018 = vmatpush1.msra.mxu0 0.0
        %3019 = vmatprep.subr.mxu0 0.0
        %3020 = vmatpush1.msra.mxu0 0.0
        %3021 = vmatprep.subr.mxu0 0.0
        %3022 = vmatpush1.msra.mxu0 0.0
        %3023 = vmatprep.subr.mxu0 0.0
        %3024 = vmatpush1.msra.mxu0 0.0
        %3025 = vmatprep.subr.mxu0 0.0
        %3026 = vmatpush1.msra.mxu0 0.0
        %3027 = vmatprep.subr.mxu0 0.0
        %3028 = vmatpush1.msra.mxu0 0.0
        %3029 = vmatprep.subr.mxu0 0.0
        %3030 = vmatpush1.msra.mxu0 0.0
        %3031 = vmatprep.subr.mxu0 0.0
        %3032 = vmatpush1.msra.mxu0 0.0
        %3033 = vmatprep.subr.mxu0 0.0
        %3034 = vmatpush1.msra.mxu0 0.0
        %3035 = vmatprep.subr.mxu0 0.0
        %3036 = vmatpush1.msra.mxu0 0.0
        %3037 = vmatprep.subr.mxu0 0.0
        %3038 = vmatpush1.msra.mxu0 0.0
        %3039 = vmatprep.mubr.f32.mxu0 0.0
        %3040 = vmatmul.mubr.f32.gmra.mrb[0].mxu0 %v2882
        %v3041 = vpop.f32.mrb[0].mxu0
        %v3042 = vadd.f32 0.0, %v3041
        %v3043 = vpop.f32.mrb[0].mxu0
        %v3044 = vadd.f32 0.0, %v3043
        %3045 = vdwg.mxu0
        %3046 = vmatprep.subr.mxu0 %v2894
        %3047 = vmatpush1.msra.mxu0 %v2892
        %3048 = vmatprep.subr.mxu0 0.0
        %3049 = vmatpush1.msra.mxu0 0.0
        %3050 = vmatprep.subr.mxu0 0.0
        %3051 = vmatpush1.msra.mxu0 0.0
        %3052 = vmatprep.subr.mxu0 0.0
        %3053 = vmatpush1.msra.mxu0 0.0
        %3054 = vmatprep.subr.mxu0 0.0
        %3055 = vmatpush1.msra.mxu0 0.0
        %3056 = vmatprep.subr.mxu0 0.0
        %3057 = vmatpush1.msra.mxu0 0.0
        %3058 = vmatprep.subr.mxu0 0.0
        %3059 = vmatpush1.msra.mxu0 0.0
        %3060 = vmatprep.subr.mxu0 0.0
        %3061 = vmatpush1.msra.mxu0 0.0
        %3062 = vmatprep.subr.mxu0 0.0
        %3063 = vmatpush1.msra.mxu0 0.0
        %3064 = vmatprep.subr.mxu0 0.0
        %3065 = vmatpush1.msra.mxu0 0.0
        %3066 = vmatprep.subr.mxu0 0.0
        %3067 = vmatpush1.msra.mxu0 0.0
        %3068 = vmatprep.subr.mxu0 0.0
        %3069 = vmatpush1.msra.mxu0 0.0
        %3070 = vmatprep.subr.mxu0 0.0
        %3071 = vmatpush1.msra.mxu0 0.0
        %3072 = vmatprep.subr.mxu0 0.0
        %3073 = vmatpush1.msra.mxu0 0.0
        %3074 = vmatprep.subr.mxu0 0.0
        %3075 = vmatpush1.msra.mxu0 0.0
        %3076 = vmatprep.subr.mxu0 0.0
        %3077 = vmatpush1.msra.mxu0 0.0
        %3078 = vmatprep.subr.mxu0 0.0
        %3079 = vmatpush1.msra.mxu0 0.0
        %3080 = vmatprep.subr.mxu0 0.0
        %3081 = vmatpush1.msra.mxu0 0.0
        %3082 = vmatprep.subr.mxu0 0.0
        %3083 = vmatpush1.msra.mxu0 0.0
        %3084 = vmatprep.subr.mxu0 0.0
        %3085 = vmatpush1.msra.mxu0 0.0
        %3086 = vmatprep.subr.mxu0 0.0
        %3087 = vmatpush1.msra.mxu0 0.0
        %3088 = vmatprep.subr.mxu0 0.0
        %3089 = vmatpush1.msra.mxu0 0.0
        %3090 = vmatprep.subr.mxu0 0.0
        %3091 = vmatpush1.msra.mxu0 0.0
        %3092 = vmatprep.subr.mxu0 0.0
        %3093 = vmatpush1.msra.mxu0 0.0
        %3094 = vmatprep.subr.mxu0 0.0
        %3095 = vmatpush1.msra.mxu0 0.0
        %3096 = vmatprep.subr.mxu0 0.0
        %3097 = vmatpush1.msra.mxu0 0.0
        %3098 = vmatprep.subr.mxu0 0.0
        %3099 = vmatpush1.msra.mxu0 0.0
        %3100 = vmatprep.subr.mxu0 0.0
        %3101 = vmatpush1.msra.mxu0 0.0
        %3102 = vmatprep.subr.mxu0 0.0
        %3103 = vmatpush1.msra.mxu0 0.0
        %3104 = vmatprep.subr.mxu0 0.0
        %3105 = vmatpush1.msra.mxu0 0.0
        %3106 = vmatprep.subr.mxu0 0.0
        %3107 = vmatpush1.msra.mxu0 0.0
        %3108 = vmatprep.subr.mxu0 0.0
        %3109 = vmatpush1.msra.mxu0 0.0
        %3110 = vmatprep.mubr.f32.mxu0 0.0
        %3111 = vmatmul.mubr.f32.gmra.mrb[0].mxu0 %v2882
        %v3112 = vpop.f32.mrb[0].mxu0
        %v3113 = vadd.f32 0.0, %v3112
        %v3114 = vpop.f32.mrb[0].mxu0
        %v3115 = vadd.f32 0.0, %v3114
        %3116 = vdwg.mxu0
        %3117 = vmatprep.subr.mxu0 %v2898
        %3118 = vmatpush1.msra.mxu0 %v2896
        %3119 = vmatprep.subr.mxu0 0.0
        %3120 = vmatpush1.msra.mxu0 0.0
        %3121 = vmatprep.subr.mxu0 0.0
        %3122 = vmatpush1.msra.mxu0 0.0
        %3123 = vmatprep.subr.mxu0 0.0
        %3124 = vmatpush1.msra.mxu0 0.0
        %3125 = vmatprep.subr.mxu0 0.0
        %3126 = vmatpush1.msra.mxu0 0.0
        %3127 = vmatprep.subr.mxu0 0.0
        %3128 = vmatpush1.msra.mxu0 0.0
        %3129 = vmatprep.subr.mxu0 0.0
        %3130 = vmatpush1.msra.mxu0 0.0
        %3131 = vmatprep.subr.mxu0 0.0
        %3132 = vmatpush1.msra.mxu0 0.0
        %3133 = vmatprep.subr.mxu0 0.0
        %3134 = vmatpush1.msra.mxu0 0.0
        %3135 = vmatprep.subr.mxu0 0.0
        %3136 = vmatpush1.msra.mxu0 0.0
        %3137 = vmatprep.subr.mxu0 0.0
        %3138 = vmatpush1.msra.mxu0 0.0
        %3139 = vmatprep.subr.mxu0 0.0
        %3140 = vmatpush1.msra.mxu0 0.0
        %3141 = vmatprep.subr.mxu0 0.0
        %3142 = vmatpush1.msra.mxu0 0.0
        %3143 = vmatprep.subr.mxu0 0.0
        %3144 = vmatpush1.msra.mxu0 0.0
        %3145 = vmatprep.subr.mxu0 0.0
        %3146 = vmatpush1.msra.mxu0 0.0
        %3147 = vmatprep.subr.mxu0 0.0
        %3148 = vmatpush1.msra.mxu0 0.0
        %3149 = vmatprep.subr.mxu0 0.0
        %3150 = vmatpush1.msra.mxu0 0.0
        %3151 = vmatprep.subr.mxu0 0.0
        %3152 = vmatpush1.msra.mxu0 0.0
        %3153 = vmatprep.subr.mxu0 0.0
        %3154 = vmatpush1.msra.mxu0 0.0
        %3155 = vmatprep.subr.mxu0 0.0
        %3156 = vmatpush1.msra.mxu0 0.0
        %3157 = vmatprep.subr.mxu0 0.0
        %3158 = vmatpush1.msra.mxu0 0.0
        %3159 = vmatprep.subr.mxu0 0.0
        %3160 = vmatpush1.msra.mxu0 0.0
        %3161 = vmatprep.subr.mxu0 0.0
        %3162 = vmatpush1.msra.mxu0 0.0
        %3163 = vmatprep.subr.mxu0 0.0
        %3164 = vmatpush1.msra.mxu0 0.0
        %3165 = vmatprep.subr.mxu0 0.0
        %3166 = vmatpush1.msra.mxu0 0.0
        %3167 = vmatprep.subr.mxu0 0.0
        %3168 = vmatpush1.msra.mxu0 0.0
        %3169 = vmatprep.subr.mxu0 0.0
        %3170 = vmatpush1.msra.mxu0 0.0
        %3171 = vmatprep.subr.mxu0 0.0
        %3172 = vmatpush1.msra.mxu0 0.0
        %3173 = vmatprep.subr.mxu0 0.0
        %3174 = vmatpush1.msra.mxu0 0.0
        %3175 = vmatprep.subr.mxu0 0.0
        %3176 = vmatpush1.msra.mxu0 0.0
        %3177 = vmatprep.subr.mxu0 0.0
        %3178 = vmatpush1.msra.mxu0 0.0
        %3179 = vmatprep.subr.mxu0 0.0
        %3180 = vmatpush1.msra.mxu0 0.0
        %3181 = vmatprep.mubr.f32.mxu0 0.0
        %3182 = vmatmul.mubr.f32.gmra.mrb[0].mxu0 %v2882
        %v3183 = vpop.f32.mrb[0].mxu0
        %v3184 = vadd.f32 0.0, %v3183
        %v3185 = vpop.f32.mrb[0].mxu0
        %v3186 = vadd.f32 0.0, %v3185
        %3187 = vdwg.mxu0
        %3188 = vmatprep.subr.mxu0 %v2902
        %3189 = vmatpush1.msra.mxu0 %v2900
        %3190 = vmatprep.subr.mxu0 0.0
        %3191 = vmatpush1.msra.mxu0 0.0
        %3192 = vmatprep.subr.mxu0 0.0
        %3193 = vmatpush1.msra.mxu0 0.0
        %3194 = vmatprep.subr.mxu0 0.0
        %3195 = vmatpush1.msra.mxu0 0.0
        %3196 = vmatprep.subr.mxu0 0.0
        %3197 = vmatpush1.msra.mxu0 0.0
        %3198 = vmatprep.subr.mxu0 0.0
        %3199 = vmatpush1.msra.mxu0 0.0
        %3200 = vmatprep.subr.mxu0 0.0
        %3201 = vmatpush1.msra.mxu0 0.0
        %3202 = vmatprep.subr.mxu0 0.0
        %3203 = vmatpush1.msra.mxu0 0.0
        %3204 = vmatprep.subr.mxu0 0.0
        %3205 = vmatpush1.msra.mxu0 0.0
        %3206 = vmatprep.subr.mxu0 0.0
        %3207 = vmatpush1.msra.mxu0 0.0
        %3208 = vmatprep.subr.mxu0 0.0
        %3209 = vmatpush1.msra.mxu0 0.0
        %3210 = vmatprep.subr.mxu0 0.0
        %3211 = vmatpush1.msra.mxu0 0.0
        %3212 = vmatprep.subr.mxu0 0.0
        %3213 = vmatpush1.msra.mxu0 0.0
        %3214 = vmatprep.subr.mxu0 0.0
        %3215 = vmatpush1.msra.mxu0 0.0
        %3216 = vmatprep.subr.mxu0 0.0
        %3217 = vmatpush1.msra.mxu0 0.0
        %3218 = vmatprep.subr.mxu0 0.0
        %3219 = vmatpush1.msra.mxu0 0.0
        %3220 = vmatprep.subr.mxu0 0.0
        %3221 = vmatpush1.msra.mxu0 0.0
        %3222 = vmatprep.subr.mxu0 0.0
        %3223 = vmatpush1.msra.mxu0 0.0
        %3224 = vmatprep.subr.mxu0 0.0
        %3225 = vmatpush1.msra.mxu0 0.0
        %3226 = vmatprep.subr.mxu0 0.0
        %3227 = vmatpush1.msra.mxu0 0.0
        %3228 = vmatprep.subr.mxu0 0.0
        %3229 = vmatpush1.msra.mxu0 0.0
        %3230 = vmatprep.subr.mxu0 0.0
        %3231 = vmatpush1.msra.mxu0 0.0
        %3232 = vmatprep.subr.mxu0 0.0
        %3233 = vmatpush1.msra.mxu0 0.0
        %3234 = vmatprep.subr.mxu0 0.0
        %3235 = vmatpush1.msra.mxu0 0.0
        %3236 = vmatprep.subr.mxu0 0.0
        %3237 = vmatpush1.msra.mxu0 0.0
        %3238 = vmatprep.subr.mxu0 0.0
        %3239 = vmatpush1.msra.mxu0 0.0
        %3240 = vmatprep.subr.mxu0 0.0
        %3241 = vmatpush1.msra.mxu0 0.0
        %3242 = vmatprep.subr.mxu0 0.0
        %3243 = vmatpush1.msra.mxu0 0.0
        %3244 = vmatprep.subr.mxu0 0.0
        %3245 = vmatpush1.msra.mxu0 0.0
        %3246 = vmatprep.subr.mxu0 0.0
        %3247 = vmatpush1.msra.mxu0 0.0
        %3248 = vmatprep.subr.mxu0 0.0
        %3249 = vmatpush1.msra.mxu0 0.0
        %3250 = vmatprep.subr.mxu0 0.0
        %3251 = vmatpush1.msra.mxu0 0.0
        %3252 = vmatprep.mubr.f32.mxu0 0.0
        %3253 = vmatmul.mubr.f32.gmra.mrb[0].mxu0 %v2882
        %v3254 = vpop.f32.mrb[0].mxu0
        %v3255 = vadd.f32 0.0, %v3254
        %v3256 = vpop.f32.mrb[0].mxu0
        %v3257 = vadd.f32 0.0, %v3256
        %3258 = vdwg.mxu0
        %v3259 = vadd.f32 %v2824, %v2971
        %v3260 = vadd.f32 %v2825, %v2973
        %v3261 = vadd.f32 %v2826, %v3042
        %v3262 = vadd.f32 %v2827, %v3044
        %v3263 = vadd.f32 %v2828, %v3113
        %v3264 = vadd.f32 %v2829, %v3115
        %v3265 = vadd.f32 %v2830, %v3184
        %v3266 = vadd.f32 %v2831, %v3186
        %v3267 = vadd.f32 %v2832, %v3255
        %v3268 = vadd.f32 %v2833, %v3257
        %s3269 = scalar_lea.vmem %s2, 28
        %v3270 = vld [vmem:[%s3269] sm:$0xf]
        %v3271 = vld [vmem:[#allocation2] sm:$0xff]
        %v3272 = vld [vmem:[#allocation2 + $0x8] sm:$0xff]
        %v3273 = vld [vmem:[#allocation2 + $0x10] sm:$0xff]
        %v3274 = vld [vmem:[#allocation2 + $0x18] sm:$0xff]
        %v3275 = vld [vmem:[#allocation2 + $0x20] sm:$0xff]
        %v3281 = vcombine.high %v3271, %v3271
        %v3282 = vcombine.high %v3272, %v3272
        %v3283 = vcombine.high %v3273, %v3273
        %v3284 = vcombine.high %v3274, %v3274
        %v3285 = vcombine.high %v3275, %v3275
        %3286 = vrot.lane.b32.xlu0 %v3271, 59
        %v3287 = vpop.permute.xlu0 %3286
        %3288 = vrot.lane.b32.xlu0 %v3281, 59
        %v3289 = vpop.permute.xlu0 %3288
        %3290 = vrot.lane.b32.xlu0 %v3272, 59
        %v3291 = vpop.permute.xlu0 %3290
        %3292 = vrot.lane.b32.xlu0 %v3282, 59
        %v3293 = vpop.permute.xlu0 %3292
        %3294 = vrot.lane.b32.xlu0 %v3273, 59
        %v3295 = vpop.permute.xlu0 %3294
        %3296 = vrot.lane.b32.xlu0 %v3283, 59
        %v3297 = vpop.permute.xlu0 %3296
        %3298 = vrot.lane.b32.xlu0 %v3274, 59
        %v3299 = vpop.permute.xlu0 %3298
        %3300 = vrot.lane.b32.xlu0 %v3284, 59
        %v3301 = vpop.permute.xlu0 %3300
        %3302 = vrot.lane.b32.xlu0 %v3275, 59
        %v3303 = vpop.permute.xlu0 %3302
        %3304 = vrot.lane.b32.xlu0 %v3285, 59
        %v3305 = vpop.permute.xlu0 %3304
        %vm3306 = vcmask 482304
        %v3307 = vsel %vm3306, %v3287, %v3289
        %v3308 = vsel %vm3306, %v3289, %v3291
        %v3309 = vsel %vm3306, %v3291, %v3293
        %v3310 = vsel %vm3306, %v3293, %v3295
        %v3311 = vsel %vm3306, %v3295, %v3297
        %v3312 = vsel %vm3306, %v3297, %v3299
        %v3313 = vsel %vm3306, %v3299, %v3301
        %v3314 = vsel %vm3306, %v3301, %v3303
        %v3315 = vsel %vm3306, %v3303, %v3305
        %v3317 = vsel %vm337, %v3270, 0
        %v3319 = vsel %vm235, %v3307, 0
        %v3321 = vsel %vm235, %v3308, 0
        %v3323 = vsel %vm235, %v3309, 0
        %v3325 = vsel %vm235, %v3310, 0
        %v3327 = vsel %vm235, %v3311, 0
        %v3329 = vsel %vm235, %v3312, 0
        %v3331 = vsel %vm235, %v3313, 0
        %v3333 = vsel %vm235, %v3314, 0
        %v3335 = vsel %vm235, %v3315, 0
        %v3337 = vsel %vm235, %v3305, 0
        %3339 = vmatprep.subr.mxu0 %v3321
        %3340 = vmatpush1.msra.mxu0 %v3319
        %3341 = vmatprep.subr.mxu0 0.0
        %3342 = vmatpush1.msra.mxu0 0.0
        %3343 = vmatprep.subr.mxu0 0.0
        %3344 = vmatpush1.msra.mxu0 0.0
        %3345 = vmatprep.subr.mxu0 0.0
        %3346 = vmatpush1.msra.mxu0 0.0
        %3347 = vmatprep.subr.mxu0 0.0
        %3348 = vmatpush1.msra.mxu0 0.0
        %3349 = vmatprep.subr.mxu0 0.0
        %3350 = vmatpush1.msra.mxu0 0.0
        %3351 = vmatprep.subr.mxu0 0.0
        %3352 = vmatpush1.msra.mxu0 0.0
        %3353 = vmatprep.subr.mxu0 0.0
        %3354 = vmatpush1.msra.mxu0 0.0
        %3355 = vmatprep.subr.mxu0 0.0
        %3356 = vmatpush1.msra.mxu0 0.0
        %3357 = vmatprep.subr.mxu0 0.0
        %3358 = vmatpush1.msra.mxu0 0.0
        %3359 = vmatprep.subr.mxu0 0.0
        %3360 = vmatpush1.msra.mxu0 0.0
        %3361 = vmatprep.subr.mxu0 0.0
        %3362 = vmatpush1.msra.mxu0 0.0
        %3363 = vmatprep.subr.mxu0 0.0
        %3364 = vmatpush1.msra.mxu0 0.0
        %3365 = vmatprep.subr.mxu0 0.0
        %3366 = vmatpush1.msra.mxu0 0.0
        %3367 = vmatprep.subr.mxu0 0.0
        %3368 = vmatpush1.msra.mxu0 0.0
        %3369 = vmatprep.subr.mxu0 0.0
        %3370 = vmatpush1.msra.mxu0 0.0
        %3371 = vmatprep.subr.mxu0 0.0
        %3372 = vmatpush1.msra.mxu0 0.0
        %3373 = vmatprep.subr.mxu0 0.0
        %3374 = vmatpush1.msra.mxu0 0.0
        %3375 = vmatprep.subr.mxu0 0.0
        %3376 = vmatpush1.msra.mxu0 0.0
        %3377 = vmatprep.subr.mxu0 0.0
        %3378 = vmatpush1.msra.mxu0 0.0
        %3379 = vmatprep.subr.mxu0 0.0
        %3380 = vmatpush1.msra.mxu0 0.0
        %3381 = vmatprep.subr.mxu0 0.0
        %3382 = vmatpush1.msra.mxu0 0.0
        %3383 = vmatprep.subr.mxu0 0.0
        %3384 = vmatpush1.msra.mxu0 0.0
        %3385 = vmatprep.subr.mxu0 0.0
        %3386 = vmatpush1.msra.mxu0 0.0
        %3387 = vmatprep.subr.mxu0 0.0
        %3388 = vmatpush1.msra.mxu0 0.0
        %3389 = vmatprep.subr.mxu0 0.0
        %3390 = vmatpush1.msra.mxu0 0.0
        %3391 = vmatprep.subr.mxu0 0.0
        %3392 = vmatpush1.msra.mxu0 0.0
        %3393 = vmatprep.subr.mxu0 0.0
        %3394 = vmatpush1.msra.mxu0 0.0
        %3395 = vmatprep.subr.mxu0 0.0
        %3396 = vmatpush1.msra.mxu0 0.0
        %3397 = vmatprep.subr.mxu0 0.0
        %3398 = vmatpush1.msra.mxu0 0.0
        %3399 = vmatprep.subr.mxu0 0.0
        %3400 = vmatpush1.msra.mxu0 0.0
        %3401 = vmatprep.subr.mxu0 0.0
        %3402 = vmatpush1.msra.mxu0 0.0
        %3403 = vmatprep.mubr.f32.mxu0 0.0
        %3404 = vmatmul.mubr.f32.gmra.mrb[0].mxu0 %v3317
        %v3405 = vpop.f32.mrb[0].mxu0
        %v3406 = vadd.f32 0.0, %v3405
        %v3407 = vpop.f32.mrb[0].mxu0
        %v3408 = vadd.f32 0.0, %v3407
        %3409 = vdwg.mxu0
        %3410 = vmatprep.subr.mxu0 %v3325
        %3411 = vmatpush1.msra.mxu0 %v3323
        %3412 = vmatprep.subr.mxu0 0.0
        %3413 = vmatpush1.msra.mxu0 0.0
        %3414 = vmatprep.subr.mxu0 0.0
        %3415 = vmatpush1.msra.mxu0 0.0
        %3416 = vmatprep.subr.mxu0 0.0
        %3417 = vmatpush1.msra.mxu0 0.0
        %3418 = vmatprep.subr.mxu0 0.0
        %3419 = vmatpush1.msra.mxu0 0.0
        %3420 = vmatprep.subr.mxu0 0.0
        %3421 = vmatpush1.msra.mxu0 0.0
        %3422 = vmatprep.subr.mxu0 0.0
        %3423 = vmatpush1.msra.mxu0 0.0
        %3424 = vmatprep.subr.mxu0 0.0
        %3425 = vmatpush1.msra.mxu0 0.0
        %3426 = vmatprep.subr.mxu0 0.0
        %3427 = vmatpush1.msra.mxu0 0.0
        %3428 = vmatprep.subr.mxu0 0.0
        %3429 = vmatpush1.msra.mxu0 0.0
        %3430 = vmatprep.subr.mxu0 0.0
        %3431 = vmatpush1.msra.mxu0 0.0
        %3432 = vmatprep.subr.mxu0 0.0
        %3433 = vmatpush1.msra.mxu0 0.0
        %3434 = vmatprep.subr.mxu0 0.0
        %3435 = vmatpush1.msra.mxu0 0.0
        %3436 = vmatprep.subr.mxu0 0.0
        %3437 = vmatpush1.msra.mxu0 0.0
        %3438 = vmatprep.subr.mxu0 0.0
        %3439 = vmatpush1.msra.mxu0 0.0
        %3440 = vmatprep.subr.mxu0 0.0
        %3441 = vmatpush1.msra.mxu0 0.0
        %3442 = vmatprep.subr.mxu0 0.0
        %3443 = vmatpush1.msra.mxu0 0.0
        %3444 = vmatprep.subr.mxu0 0.0
        %3445 = vmatpush1.msra.mxu0 0.0
        %3446 = vmatprep.subr.mxu0 0.0
        %3447 = vmatpush1.msra.mxu0 0.0
        %3448 = vmatprep.subr.mxu0 0.0
        %3449 = vmatpush1.msra.mxu0 0.0
        %3450 = vmatprep.subr.mxu0 0.0
        %3451 = vmatpush1.msra.mxu0 0.0
        %3452 = vmatprep.subr.mxu0 0.0
        %3453 = vmatpush1.msra.mxu0 0.0
        %3454 = vmatprep.subr.mxu0 0.0
        %3455 = vmatpush1.msra.mxu0 0.0
        %3456 = vmatprep.subr.mxu0 0.0
        %3457 = vmatpush1.msra.mxu0 0.0
        %3458 = vmatprep.subr.mxu0 0.0
        %3459 = vmatpush1.msra.mxu0 0.0
        %3460 = vmatprep.subr.mxu0 0.0
        %3461 = vmatpush1.msra.mxu0 0.0
        %3462 = vmatprep.subr.mxu0 0.0
        %3463 = vmatpush1.msra.mxu0 0.0
        %3464 = vmatprep.subr.mxu0 0.0
        %3465 = vmatpush1.msra.mxu0 0.0
        %3466 = vmatprep.subr.mxu0 0.0
        %3467 = vmatpush1.msra.mxu0 0.0
        %3468 = vmatprep.subr.mxu0 0.0
        %3469 = vmatpush1.msra.mxu0 0.0
        %3470 = vmatprep.subr.mxu0 0.0
        %3471 = vmatpush1.msra.mxu0 0.0
        %3472 = vmatprep.subr.mxu0 0.0
        %3473 = vmatpush1.msra.mxu0 0.0
        %3474 = vmatprep.mubr.f32.mxu0 0.0
        %3475 = vmatmul.mubr.f32.gmra.mrb[0].mxu0 %v3317
        %v3476 = vpop.f32.mrb[0].mxu0
        %v3477 = vadd.f32 0.0, %v3476
        %v3478 = vpop.f32.mrb[0].mxu0
        %v3479 = vadd.f32 0.0, %v3478
        %3480 = vdwg.mxu0
        %3481 = vmatprep.subr.mxu0 %v3329
        %3482 = vmatpush1.msra.mxu0 %v3327
        %3483 = vmatprep.subr.mxu0 0.0
        %3484 = vmatpush1.msra.mxu0 0.0
        %3485 = vmatprep.subr.mxu0 0.0
        %3486 = vmatpush1.msra.mxu0 0.0
        %3487 = vmatprep.subr.mxu0 0.0
        %3488 = vmatpush1.msra.mxu0 0.0
        %3489 = vmatprep.subr.mxu0 0.0
        %3490 = vmatpush1.msra.mxu0 0.0
        %3491 = vmatprep.subr.mxu0 0.0
        %3492 = vmatpush1.msra.mxu0 0.0
        %3493 = vmatprep.subr.mxu0 0.0
        %3494 = vmatpush1.msra.mxu0 0.0
        %3495 = vmatprep.subr.mxu0 0.0
        %3496 = vmatpush1.msra.mxu0 0.0
        %3497 = vmatprep.subr.mxu0 0.0
        %3498 = vmatpush1.msra.mxu0 0.0
        %3499 = vmatprep.subr.mxu0 0.0
        %3500 = vmatpush1.msra.mxu0 0.0
        %3501 = vmatprep.subr.mxu0 0.0
        %3502 = vmatpush1.msra.mxu0 0.0
        %3503 = vmatprep.subr.mxu0 0.0
        %3504 = vmatpush1.msra.mxu0 0.0
        %3505 = vmatprep.subr.mxu0 0.0
        %3506 = vmatpush1.msra.mxu0 0.0
        %3507 = vmatprep.subr.mxu0 0.0
        %3508 = vmatpush1.msra.mxu0 0.0
        %3509 = vmatprep.subr.mxu0 0.0
        %3510 = vmatpush1.msra.mxu0 0.0
        %3511 = vmatprep.subr.mxu0 0.0
        %3512 = vmatpush1.msra.mxu0 0.0
        %3513 = vmatprep.subr.mxu0 0.0
        %3514 = vmatpush1.msra.mxu0 0.0
        %3515 = vmatprep.subr.mxu0 0.0
        %3516 = vmatpush1.msra.mxu0 0.0
        %3517 = vmatprep.subr.mxu0 0.0
        %3518 = vmatpush1.msra.mxu0 0.0
        %3519 = vmatprep.subr.mxu0 0.0
        %3520 = vmatpush1.msra.mxu0 0.0
        %3521 = vmatprep.subr.mxu0 0.0
        %3522 = vmatpush1.msra.mxu0 0.0
        %3523 = vmatprep.subr.mxu0 0.0
        %3524 = vmatpush1.msra.mxu0 0.0
        %3525 = vmatprep.subr.mxu0 0.0
        %3526 = vmatpush1.msra.mxu0 0.0
        %3527 = vmatprep.subr.mxu0 0.0
        %3528 = vmatpush1.msra.mxu0 0.0
        %3529 = vmatprep.subr.mxu0 0.0
        %3530 = vmatpush1.msra.mxu0 0.0
        %3531 = vmatprep.subr.mxu0 0.0
        %3532 = vmatpush1.msra.mxu0 0.0
        %3533 = vmatprep.subr.mxu0 0.0
        %3534 = vmatpush1.msra.mxu0 0.0
        %3535 = vmatprep.subr.mxu0 0.0
        %3536 = vmatpush1.msra.mxu0 0.0
        %3537 = vmatprep.subr.mxu0 0.0
        %3538 = vmatpush1.msra.mxu0 0.0
        %3539 = vmatprep.subr.mxu0 0.0
        %3540 = vmatpush1.msra.mxu0 0.0
        %3541 = vmatprep.subr.mxu0 0.0
        %3542 = vmatpush1.msra.mxu0 0.0
        %3543 = vmatprep.subr.mxu0 0.0
        %3544 = vmatpush1.msra.mxu0 0.0
        %3545 = vmatprep.mubr.f32.mxu0 0.0
        %3546 = vmatmul.mubr.f32.gmra.mrb[0].mxu0 %v3317
        %v3547 = vpop.f32.mrb[0].mxu0
        %v3548 = vadd.f32 0.0, %v3547
        %v3549 = vpop.f32.mrb[0].mxu0
        %v3550 = vadd.f32 0.0, %v3549
        %3551 = vdwg.mxu0
        %3552 = vmatprep.subr.mxu0 %v3333
        %3553 = vmatpush1.msra.mxu0 %v3331
        %3554 = vmatprep.subr.mxu0 0.0
        %3555 = vmatpush1.msra.mxu0 0.0
        %3556 = vmatprep.subr.mxu0 0.0
        %3557 = vmatpush1.msra.mxu0 0.0
        %3558 = vmatprep.subr.mxu0 0.0
        %3559 = vmatpush1.msra.mxu0 0.0
        %3560 = vmatprep.subr.mxu0 0.0
        %3561 = vmatpush1.msra.mxu0 0.0
        %3562 = vmatprep.subr.mxu0 0.0
        %3563 = vmatpush1.msra.mxu0 0.0
        %3564 = vmatprep.subr.mxu0 0.0
        %3565 = vmatpush1.msra.mxu0 0.0
        %3566 = vmatprep.subr.mxu0 0.0
        %3567 = vmatpush1.msra.mxu0 0.0
        %3568 = vmatprep.subr.mxu0 0.0
        %3569 = vmatpush1.msra.mxu0 0.0
        %3570 = vmatprep.subr.mxu0 0.0
        %3571 = vmatpush1.msra.mxu0 0.0
        %3572 = vmatprep.subr.mxu0 0.0
        %3573 = vmatpush1.msra.mxu0 0.0
        %3574 = vmatprep.subr.mxu0 0.0
        %3575 = vmatpush1.msra.mxu0 0.0
        %3576 = vmatprep.subr.mxu0 0.0
        %3577 = vmatpush1.msra.mxu0 0.0
        %3578 = vmatprep.subr.mxu0 0.0
        %3579 = vmatpush1.msra.mxu0 0.0
        %3580 = vmatprep.subr.mxu0 0.0
        %3581 = vmatpush1.msra.mxu0 0.0
        %3582 = vmatprep.subr.mxu0 0.0
        %3583 = vmatpush1.msra.mxu0 0.0
        %3584 = vmatprep.subr.mxu0 0.0
        %3585 = vmatpush1.msra.mxu0 0.0
        %3586 = vmatprep.subr.mxu0 0.0
        %3587 = vmatpush1.msra.mxu0 0.0
        %3588 = vmatprep.subr.mxu0 0.0
        %3589 = vmatpush1.msra.mxu0 0.0
        %3590 = vmatprep.subr.mxu0 0.0
        %3591 = vmatpush1.msra.mxu0 0.0
        %3592 = vmatprep.subr.mxu0 0.0
        %3593 = vmatpush1.msra.mxu0 0.0
        %3594 = vmatprep.subr.mxu0 0.0
        %3595 = vmatpush1.msra.mxu0 0.0
        %3596 = vmatprep.subr.mxu0 0.0
        %3597 = vmatpush1.msra.mxu0 0.0
        %3598 = vmatprep.subr.mxu0 0.0
        %3599 = vmatpush1.msra.mxu0 0.0
        %3600 = vmatprep.subr.mxu0 0.0
        %3601 = vmatpush1.msra.mxu0 0.0
        %3602 = vmatprep.subr.mxu0 0.0
        %3603 = vmatpush1.msra.mxu0 0.0
        %3604 = vmatprep.subr.mxu0 0.0
        %3605 = vmatpush1.msra.mxu0 0.0
        %3606 = vmatprep.subr.mxu0 0.0
        %3607 = vmatpush1.msra.mxu0 0.0
        %3608 = vmatprep.subr.mxu0 0.0
        %3609 = vmatpush1.msra.mxu0 0.0
        %3610 = vmatprep.subr.mxu0 0.0
        %3611 = vmatpush1.msra.mxu0 0.0
        %3612 = vmatprep.subr.mxu0 0.0
        %3613 = vmatpush1.msra.mxu0 0.0
        %3614 = vmatprep.subr.mxu0 0.0
        %3615 = vmatpush1.msra.mxu0 0.0
        %3616 = vmatprep.mubr.f32.mxu0 0.0
        %3617 = vmatmul.mubr.f32.gmra.mrb[0].mxu0 %v3317
        %v3618 = vpop.f32.mrb[0].mxu0
        %v3619 = vadd.f32 0.0, %v3618
        %v3620 = vpop.f32.mrb[0].mxu0
        %v3621 = vadd.f32 0.0, %v3620
        %3622 = vdwg.mxu0
        %3623 = vmatprep.subr.mxu0 %v3337
        %3624 = vmatpush1.msra.mxu0 %v3335
        %3625 = vmatprep.subr.mxu0 0.0
        %3626 = vmatpush1.msra.mxu0 0.0
        %3627 = vmatprep.subr.mxu0 0.0
        %3628 = vmatpush1.msra.mxu0 0.0
        %3629 = vmatprep.subr.mxu0 0.0
        %3630 = vmatpush1.msra.mxu0 0.0
        %3631 = vmatprep.subr.mxu0 0.0
        %3632 = vmatpush1.msra.mxu0 0.0
        %3633 = vmatprep.subr.mxu0 0.0
        %3634 = vmatpush1.msra.mxu0 0.0
        %3635 = vmatprep.subr.mxu0 0.0
        %3636 = vmatpush1.msra.mxu0 0.0
        %3637 = vmatprep.subr.mxu0 0.0
        %3638 = vmatpush1.msra.mxu0 0.0
        %3639 = vmatprep.subr.mxu0 0.0
        %3640 = vmatpush1.msra.mxu0 0.0
        %3641 = vmatprep.subr.mxu0 0.0
        %3642 = vmatpush1.msra.mxu0 0.0
        %3643 = vmatprep.subr.mxu0 0.0
        %3644 = vmatpush1.msra.mxu0 0.0
        %3645 = vmatprep.subr.mxu0 0.0
        %3646 = vmatpush1.msra.mxu0 0.0
        %3647 = vmatprep.subr.mxu0 0.0
        %3648 = vmatpush1.msra.mxu0 0.0
        %3649 = vmatprep.subr.mxu0 0.0
        %3650 = vmatpush1.msra.mxu0 0.0
        %3651 = vmatprep.subr.mxu0 0.0
        %3652 = vmatpush1.msra.mxu0 0.0
        %3653 = vmatprep.subr.mxu0 0.0
        %3654 = vmatpush1.msra.mxu0 0.0
        %3655 = vmatprep.subr.mxu0 0.0
        %3656 = vmatpush1.msra.mxu0 0.0
        %3657 = vmatprep.subr.mxu0 0.0
        %3658 = vmatpush1.msra.mxu0 0.0
        %3659 = vmatprep.subr.mxu0 0.0
        %3660 = vmatpush1.msra.mxu0 0.0
        %3661 = vmatprep.subr.mxu0 0.0
        %3662 = vmatpush1.msra.mxu0 0.0
        %3663 = vmatprep.subr.mxu0 0.0
        %3664 = vmatpush1.msra.mxu0 0.0
        %3665 = vmatprep.subr.mxu0 0.0
        %3666 = vmatpush1.msra.mxu0 0.0
        %3667 = vmatprep.subr.mxu0 0.0
        %3668 = vmatpush1.msra.mxu0 0.0
        %3669 = vmatprep.subr.mxu0 0.0
        %3670 = vmatpush1.msra.mxu0 0.0
        %3671 = vmatprep.subr.mxu0 0.0
        %3672 = vmatpush1.msra.mxu0 0.0
        %3673 = vmatprep.subr.mxu0 0.0
        %3674 = vmatpush1.msra.mxu0 0.0
        %3675 = vmatprep.subr.mxu0 0.0
        %3676 = vmatpush1.msra.mxu0 0.0
        %3677 = vmatprep.subr.mxu0 0.0
        %3678 = vmatpush1.msra.mxu0 0.0
        %3679 = vmatprep.subr.mxu0 0.0
        %3680 = vmatpush1.msra.mxu0 0.0
        %3681 = vmatprep.subr.mxu0 0.0
        %3682 = vmatpush1.msra.mxu0 0.0
        %3683 = vmatprep.subr.mxu0 0.0
        %3684 = vmatpush1.msra.mxu0 0.0
        %3685 = vmatprep.subr.mxu0 0.0
        %3686 = vmatpush1.msra.mxu0 0.0
        %3687 = vmatprep.mubr.f32.mxu0 0.0
        %3688 = vmatmul.mubr.f32.gmra.mrb[0].mxu0 %v3317
        %v3689 = vpop.f32.mrb[0].mxu0
        %v3690 = vadd.f32 0.0, %v3689
        %v3691 = vpop.f32.mrb[0].mxu0
        %v3692 = vadd.f32 0.0, %v3691
        %3693 = vdwg.mxu0
        %v3694 = vadd.f32 %v3259, %v3406
        %v3695 = vadd.f32 %v3260, %v3408
        %v3696 = vadd.f32 %v3261, %v3477
        %v3697 = vadd.f32 %v3262, %v3479
        %v3698 = vadd.f32 %v3263, %v3548
        %v3699 = vadd.f32 %v3264, %v3550
        %v3700 = vadd.f32 %v3265, %v3619
        %v3701 = vadd.f32 %v3266, %v3621
        %v3702 = vadd.f32 %v3267, %v3690
        %v3703 = vadd.f32 %v3268, %v3692
        %s3704 = scalar_lea.vmem %s2, 32
        %v3705 = vld [vmem:[%s3704] sm:$0xf]
        %v3706 = vld [vmem:[#allocation2] sm:$0xff]
        %v3707 = vld [vmem:[#allocation2 + $0x8] sm:$0xff]
        %v3708 = vld [vmem:[#allocation2 + $0x10] sm:$0xff]
        %v3709 = vld [vmem:[#allocation2 + $0x18] sm:$0xff]
        %v3710 = vld [vmem:[#allocation2 + $0x20] sm:$0xff]
        %v3716 = vcombine.high %v3706, %v3706
        %v3717 = vcombine.high %v3707, %v3707
        %v3718 = vcombine.high %v3708, %v3708
        %v3719 = vcombine.high %v3709, %v3709
        %v3720 = vcombine.high %v3710, %v3710
        %3721 = vrot.lane.b32.xlu0 %v3706, 58
        %v3722 = vpop.permute.xlu0 %3721
        %3723 = vrot.lane.b32.xlu0 %v3716, 58
        %v3724 = vpop.permute.xlu0 %3723
        %3725 = vrot.lane.b32.xlu0 %v3707, 58
        %v3726 = vpop.permute.xlu0 %3725
        %3727 = vrot.lane.b32.xlu0 %v3717, 58
        %v3728 = vpop.permute.xlu0 %3727
        %3729 = vrot.lane.b32.xlu0 %v3708, 58
        %v3730 = vpop.permute.xlu0 %3729
        %3731 = vrot.lane.b32.xlu0 %v3718, 58
        %v3732 = vpop.permute.xlu0 %3731
        %3733 = vrot.lane.b32.xlu0 %v3709, 58
        %v3734 = vpop.permute.xlu0 %3733
        %3735 = vrot.lane.b32.xlu0 %v3719, 58
        %v3736 = vpop.permute.xlu0 %3735
        %3737 = vrot.lane.b32.xlu0 %v3710, 58
        %v3738 = vpop.permute.xlu0 %3737
        %3739 = vrot.lane.b32.xlu0 %v3720, 58
        %v3740 = vpop.permute.xlu0 %3739
        %vm3741 = vcmask 474112
        %v3742 = vsel %vm3741, %v3722, %v3724
        %v3743 = vsel %vm3741, %v3724, %v3726
        %v3744 = vsel %vm3741, %v3726, %v3728
        %v3745 = vsel %vm3741, %v3728, %v3730
        %v3746 = vsel %vm3741, %v3730, %v3732
        %v3747 = vsel %vm3741, %v3732, %v3734
        %v3748 = vsel %vm3741, %v3734, %v3736
        %v3749 = vsel %vm3741, %v3736, %v3738
        %v3750 = vsel %vm3741, %v3738, %v3740
        %v3752 = vsel %vm337, %v3705, 0
        %v3754 = vsel %vm235, %v3742, 0
        %v3756 = vsel %vm235, %v3743, 0
        %v3758 = vsel %vm235, %v3744, 0
        %v3760 = vsel %vm235, %v3745, 0
        %v3762 = vsel %vm235, %v3746, 0
        %v3764 = vsel %vm235, %v3747, 0
        %v3766 = vsel %vm235, %v3748, 0
        %v3768 = vsel %vm235, %v3749, 0
        %v3770 = vsel %vm235, %v3750, 0
        %v3772 = vsel %vm235, %v3740, 0
        %3774 = vmatprep.subr.mxu0 %v3756
        %3775 = vmatpush1.msra.mxu0 %v3754
        %3776 = vmatprep.subr.mxu0 0.0
        %3777 = vmatpush1.msra.mxu0 0.0
        %3778 = vmatprep.subr.mxu0 0.0
        %3779 = vmatpush1.msra.mxu0 0.0
        %3780 = vmatprep.subr.mxu0 0.0
        %3781 = vmatpush1.msra.mxu0 0.0
        %3782 = vmatprep.subr.mxu0 0.0
        %3783 = vmatpush1.msra.mxu0 0.0
        %3784 = vmatprep.subr.mxu0 0.0
        %3785 = vmatpush1.msra.mxu0 0.0
        %3786 = vmatprep.subr.mxu0 0.0
        %3787 = vmatpush1.msra.mxu0 0.0
        %3788 = vmatprep.subr.mxu0 0.0
        %3789 = vmatpush1.msra.mxu0 0.0
        %3790 = vmatprep.subr.mxu0 0.0
        %3791 = vmatpush1.msra.mxu0 0.0
        %3792 = vmatprep.subr.mxu0 0.0
        %3793 = vmatpush1.msra.mxu0 0.0
        %3794 = vmatprep.subr.mxu0 0.0
        %3795 = vmatpush1.msra.mxu0 0.0
        %3796 = vmatprep.subr.mxu0 0.0
        %3797 = vmatpush1.msra.mxu0 0.0
        %3798 = vmatprep.subr.mxu0 0.0
        %3799 = vmatpush1.msra.mxu0 0.0
        %3800 = vmatprep.subr.mxu0 0.0
        %3801 = vmatpush1.msra.mxu0 0.0
        %3802 = vmatprep.subr.mxu0 0.0
        %3803 = vmatpush1.msra.mxu0 0.0
        %3804 = vmatprep.subr.mxu0 0.0
        %3805 = vmatpush1.msra.mxu0 0.0
        %3806 = vmatprep.subr.mxu0 0.0
        %3807 = vmatpush1.msra.mxu0 0.0
        %3808 = vmatprep.subr.mxu0 0.0
        %3809 = vmatpush1.msra.mxu0 0.0
        %3810 = vmatprep.subr.mxu0 0.0
        %3811 = vmatpush1.msra.mxu0 0.0
        %3812 = vmatprep.subr.mxu0 0.0
        %3813 = vmatpush1.msra.mxu0 0.0
        %3814 = vmatprep.subr.mxu0 0.0
        %3815 = vmatpush1.msra.mxu0 0.0
        %3816 = vmatprep.subr.mxu0 0.0
        %3817 = vmatpush1.msra.mxu0 0.0
        %3818 = vmatprep.subr.mxu0 0.0
        %3819 = vmatpush1.msra.mxu0 0.0
        %3820 = vmatprep.subr.mxu0 0.0
        %3821 = vmatpush1.msra.mxu0 0.0
        %3822 = vmatprep.subr.mxu0 0.0
        %3823 = vmatpush1.msra.mxu0 0.0
        %3824 = vmatprep.subr.mxu0 0.0
        %3825 = vmatpush1.msra.mxu0 0.0
        %3826 = vmatprep.subr.mxu0 0.0
        %3827 = vmatpush1.msra.mxu0 0.0
        %3828 = vmatprep.subr.mxu0 0.0
        %3829 = vmatpush1.msra.mxu0 0.0
        %3830 = vmatprep.subr.mxu0 0.0
        %3831 = vmatpush1.msra.mxu0 0.0
        %3832 = vmatprep.subr.mxu0 0.0
        %3833 = vmatpush1.msra.mxu0 0.0
        %3834 = vmatprep.subr.mxu0 0.0
        %3835 = vmatpush1.msra.mxu0 0.0
        %3836 = vmatprep.subr.mxu0 0.0
        %3837 = vmatpush1.msra.mxu0 0.0
        %3838 = vmatprep.mubr.f32.mxu0 0.0
        %3839 = vmatmul.mubr.f32.gmra.mrb[0].mxu0 %v3752
        %v3840 = vpop.f32.mrb[0].mxu0
        %v3841 = vadd.f32 0.0, %v3840
        %v3842 = vpop.f32.mrb[0].mxu0
        %v3843 = vadd.f32 0.0, %v3842
        %3844 = vdwg.mxu0
        %3845 = vmatprep.subr.mxu0 %v3760
        %3846 = vmatpush1.msra.mxu0 %v3758
        %3847 = vmatprep.subr.mxu0 0.0
        %3848 = vmatpush1.msra.mxu0 0.0
        %3849 = vmatprep.subr.mxu0 0.0
        %3850 = vmatpush1.msra.mxu0 0.0
        %3851 = vmatprep.subr.mxu0 0.0
        %3852 = vmatpush1.msra.mxu0 0.0
        %3853 = vmatprep.subr.mxu0 0.0
        %3854 = vmatpush1.msra.mxu0 0.0
        %3855 = vmatprep.subr.mxu0 0.0
        %3856 = vmatpush1.msra.mxu0 0.0
        %3857 = vmatprep.subr.mxu0 0.0
        %3858 = vmatpush1.msra.mxu0 0.0
        %3859 = vmatprep.subr.mxu0 0.0
        %3860 = vmatpush1.msra.mxu0 0.0
        %3861 = vmatprep.subr.mxu0 0.0
        %3862 = vmatpush1.msra.mxu0 0.0
        %3863 = vmatprep.subr.mxu0 0.0
        %3864 = vmatpush1.msra.mxu0 0.0
        %3865 = vmatprep.subr.mxu0 0.0
        %3866 = vmatpush1.msra.mxu0 0.0
        %3867 = vmatprep.subr.mxu0 0.0
        %3868 = vmatpush1.msra.mxu0 0.0
        %3869 = vmatprep.subr.mxu0 0.0
        %3870 = vmatpush1.msra.mxu0 0.0
        %3871 = vmatprep.subr.mxu0 0.0
        %3872 = vmatpush1.msra.mxu0 0.0
        %3873 = vmatprep.subr.mxu0 0.0
        %3874 = vmatpush1.msra.mxu0 0.0
        %3875 = vmatprep.subr.mxu0 0.0
        %3876 = vmatpush1.msra.mxu0 0.0
        %3877 = vmatprep.subr.mxu0 0.0
        %3878 = vmatpush1.msra.mxu0 0.0
        %3879 = vmatprep.subr.mxu0 0.0
        %3880 = vmatpush1.msra.mxu0 0.0
        %3881 = vmatprep.subr.mxu0 0.0
        %3882 = vmatpush1.msra.mxu0 0.0
        %3883 = vmatprep.subr.mxu0 0.0
        %3884 = vmatpush1.msra.mxu0 0.0
        %3885 = vmatprep.subr.mxu0 0.0
        %3886 = vmatpush1.msra.mxu0 0.0
        %3887 = vmatprep.subr.mxu0 0.0
        %3888 = vmatpush1.msra.mxu0 0.0
        %3889 = vmatprep.subr.mxu0 0.0
        %3890 = vmatpush1.msra.mxu0 0.0
        %3891 = vmatprep.subr.mxu0 0.0
        %3892 = vmatpush1.msra.mxu0 0.0
        %3893 = vmatprep.subr.mxu0 0.0
        %3894 = vmatpush1.msra.mxu0 0.0
        %3895 = vmatprep.subr.mxu0 0.0
        %3896 = vmatpush1.msra.mxu0 0.0
        %3897 = vmatprep.subr.mxu0 0.0
        %3898 = vmatpush1.msra.mxu0 0.0
        %3899 = vmatprep.subr.mxu0 0.0
        %3900 = vmatpush1.msra.mxu0 0.0
        %3901 = vmatprep.subr.mxu0 0.0
        %3902 = vmatpush1.msra.mxu0 0.0
        %3903 = vmatprep.subr.mxu0 0.0
        %3904 = vmatpush1.msra.mxu0 0.0
        %3905 = vmatprep.subr.mxu0 0.0
        %3906 = vmatpush1.msra.mxu0 0.0
        %3907 = vmatprep.subr.mxu0 0.0
        %3908 = vmatpush1.msra.mxu0 0.0
        %3909 = vmatprep.mubr.f32.mxu0 0.0
        %3910 = vmatmul.mubr.f32.gmra.mrb[0].mxu0 %v3752
        %v3911 = vpop.f32.mrb[0].mxu0
        %v3912 = vadd.f32 0.0, %v3911
        %v3913 = vpop.f32.mrb[0].mxu0
        %v3914 = vadd.f32 0.0, %v3913
        %3915 = vdwg.mxu0
        %3916 = vmatprep.subr.mxu0 %v3764
        %3917 = vmatpush1.msra.mxu0 %v3762
        %3918 = vmatprep.subr.mxu0 0.0
        %3919 = vmatpush1.msra.mxu0 0.0
        %3920 = vmatprep.subr.mxu0 0.0
        %3921 = vmatpush1.msra.mxu0 0.0
        %3922 = vmatprep.subr.mxu0 0.0
        %3923 = vmatpush1.msra.mxu0 0.0
        %3924 = vmatprep.subr.mxu0 0.0
        %3925 = vmatpush1.msra.mxu0 0.0
        %3926 = vmatprep.subr.mxu0 0.0
        %3927 = vmatpush1.msra.mxu0 0.0
        %3928 = vmatprep.subr.mxu0 0.0
        %3929 = vmatpush1.msra.mxu0 0.0
        %3930 = vmatprep.subr.mxu0 0.0
        %3931 = vmatpush1.msra.mxu0 0.0
        %3932 = vmatprep.subr.mxu0 0.0
        %3933 = vmatpush1.msra.mxu0 0.0
        %3934 = vmatprep.subr.mxu0 0.0
        %3935 = vmatpush1.msra.mxu0 0.0
        %3936 = vmatprep.subr.mxu0 0.0
        %3937 = vmatpush1.msra.mxu0 0.0
        %3938 = vmatprep.subr.mxu0 0.0
        %3939 = vmatpush1.msra.mxu0 0.0
        %3940 = vmatprep.subr.mxu0 0.0
        %3941 = vmatpush1.msra.mxu0 0.0
        %3942 = vmatprep.subr.mxu0 0.0
        %3943 = vmatpush1.msra.mxu0 0.0
        %3944 = vmatprep.subr.mxu0 0.0
        %3945 = vmatpush1.msra.mxu0 0.0
        %3946 = vmatprep.subr.mxu0 0.0
        %3947 = vmatpush1.msra.mxu0 0.0
        %3948 = vmatprep.subr.mxu0 0.0
        %3949 = vmatpush1.msra.mxu0 0.0
        %3950 = vmatprep.subr.mxu0 0.0
        %3951 = vmatpush1.msra.mxu0 0.0
        %3952 = vmatprep.subr.mxu0 0.0
        %3953 = vmatpush1.msra.mxu0 0.0
        %3954 = vmatprep.subr.mxu0 0.0
        %3955 = vmatpush1.msra.mxu0 0.0
        %3956 = vmatprep.subr.mxu0 0.0
        %3957 = vmatpush1.msra.mxu0 0.0
        %3958 = vmatprep.subr.mxu0 0.0
        %3959 = vmatpush1.msra.mxu0 0.0
        %3960 = vmatprep.subr.mxu0 0.0
        %3961 = vmatpush1.msra.mxu0 0.0
        %3962 = vmatprep.subr.mxu0 0.0
        %3963 = vmatpush1.msra.mxu0 0.0
        %3964 = vmatprep.subr.mxu0 0.0
        %3965 = vmatpush1.msra.mxu0 0.0
        %3966 = vmatprep.subr.mxu0 0.0
        %3967 = vmatpush1.msra.mxu0 0.0
        %3968 = vmatprep.subr.mxu0 0.0
        %3969 = vmatpush1.msra.mxu0 0.0
        %3970 = vmatprep.subr.mxu0 0.0
        %3971 = vmatpush1.msra.mxu0 0.0
        %3972 = vmatprep.subr.mxu0 0.0
        %3973 = vmatpush1.msra.mxu0 0.0
        %3974 = vmatprep.subr.mxu0 0.0
        %3975 = vmatpush1.msra.mxu0 0.0
        %3976 = vmatprep.subr.mxu0 0.0
        %3977 = vmatpush1.msra.mxu0 0.0
        %3978 = vmatprep.subr.mxu0 0.0
        %3979 = vmatpush1.msra.mxu0 0.0
        %3980 = vmatprep.mubr.f32.mxu0 0.0
        %3981 = vmatmul.mubr.f32.gmra.mrb[0].mxu0 %v3752
        %v3982 = vpop.f32.mrb[0].mxu0
        %v3983 = vadd.f32 0.0, %v3982
        %v3984 = vpop.f32.mrb[0].mxu0
        %v3985 = vadd.f32 0.0, %v3984
        %3986 = vdwg.mxu0
        %3987 = vmatprep.subr.mxu0 %v3768
        %3988 = vmatpush1.msra.mxu0 %v3766
        %3989 = vmatprep.subr.mxu0 0.0
        %3990 = vmatpush1.msra.mxu0 0.0
        %3991 = vmatprep.subr.mxu0 0.0
        %3992 = vmatpush1.msra.mxu0 0.0
        %3993 = vmatprep.subr.mxu0 0.0
        %3994 = vmatpush1.msra.mxu0 0.0
        %3995 = vmatprep.subr.mxu0 0.0
        %3996 = vmatpush1.msra.mxu0 0.0
        %3997 = vmatprep.subr.mxu0 0.0
        %3998 = vmatpush1.msra.mxu0 0.0
        %3999 = vmatprep.subr.mxu0 0.0
        %4000 = vmatpush1.msra.mxu0 0.0
        %4001 = vmatprep.subr.mxu0 0.0
        %4002 = vmatpush1.msra.mxu0 0.0
        %4003 = vmatprep.subr.mxu0 0.0
        %4004 = vmatpush1.msra.mxu0 0.0
        %4005 = vmatprep.subr.mxu0 0.0
        %4006 = vmatpush1.msra.mxu0 0.0
        %4007 = vmatprep.subr.mxu0 0.0
        %4008 = vmatpush1.msra.mxu0 0.0
        %4009 = vmatprep.subr.mxu0 0.0
        %4010 = vmatpush1.msra.mxu0 0.0
        %4011 = vmatprep.subr.mxu0 0.0
        %4012 = vmatpush1.msra.mxu0 0.0
        %4013 = vmatprep.subr.mxu0 0.0
        %4014 = vmatpush1.msra.mxu0 0.0
        %4015 = vmatprep.subr.mxu0 0.0
        %4016 = vmatpush1.msra.mxu0 0.0
        %4017 = vmatprep.subr.mxu0 0.0
        %4018 = vmatpush1.msra.mxu0 0.0
        %4019 = vmatprep.subr.mxu0 0.0
        %4020 = vmatpush1.msra.mxu0 0.0
        %4021 = vmatprep.subr.mxu0 0.0
        %4022 = vmatpush1.msra.mxu0 0.0
        %4023 = vmatprep.subr.mxu0 0.0
        %4024 = vmatpush1.msra.mxu0 0.0
        %4025 = vmatprep.subr.mxu0 0.0
        %4026 = vmatpush1.msra.mxu0 0.0
        %4027 = vmatprep.subr.mxu0 0.0
        %4028 = vmatpush1.msra.mxu0 0.0
        %4029 = vmatprep.subr.mxu0 0.0
        %4030 = vmatpush1.msra.mxu0 0.0
        %4031 = vmatprep.subr.mxu0 0.0
        %4032 = vmatpush1.msra.mxu0 0.0
        %4033 = vmatprep.subr.mxu0 0.0
        %4034 = vmatpush1.msra.mxu0 0.0
        %4035 = vmatprep.subr.mxu0 0.0
        %4036 = vmatpush1.msra.mxu0 0.0
        %4037 = vmatprep.subr.mxu0 0.0
        %4038 = vmatpush1.msra.mxu0 0.0
        %4039 = vmatprep.subr.mxu0 0.0
        %4040 = vmatpush1.msra.mxu0 0.0
        %4041 = vmatprep.subr.mxu0 0.0
        %4042 = vmatpush1.msra.mxu0 0.0
        %4043 = vmatprep.subr.mxu0 0.0
        %4044 = vmatpush1.msra.mxu0 0.0
        %4045 = vmatprep.subr.mxu0 0.0
        %4046 = vmatpush1.msra.mxu0 0.0
        %4047 = vmatprep.subr.mxu0 0.0
        %4048 = vmatpush1.msra.mxu0 0.0
        %4049 = vmatprep.subr.mxu0 0.0
        %4050 = vmatpush1.msra.mxu0 0.0
        %4051 = vmatprep.mubr.f32.mxu0 0.0
        %4052 = vmatmul.mubr.f32.gmra.mrb[0].mxu0 %v3752
        %v4053 = vpop.f32.mrb[0].mxu0
        %v4054 = vadd.f32 0.0, %v4053
        %v4055 = vpop.f32.mrb[0].mxu0
        %v4056 = vadd.f32 0.0, %v4055
        %4057 = vdwg.mxu0
        %4058 = vmatprep.subr.mxu0 %v3772
        %4059 = vmatpush1.msra.mxu0 %v3770
        %4060 = vmatprep.subr.mxu0 0.0
        %4061 = vmatpush1.msra.mxu0 0.0
        %4062 = vmatprep.subr.mxu0 0.0
        %4063 = vmatpush1.msra.mxu0 0.0
        %4064 = vmatprep.subr.mxu0 0.0
        %4065 = vmatpush1.msra.mxu0 0.0
        %4066 = vmatprep.subr.mxu0 0.0
        %4067 = vmatpush1.msra.mxu0 0.0
        %4068 = vmatprep.subr.mxu0 0.0
        %4069 = vmatpush1.msra.mxu0 0.0
        %4070 = vmatprep.subr.mxu0 0.0
        %4071 = vmatpush1.msra.mxu0 0.0
        %4072 = vmatprep.subr.mxu0 0.0
        %4073 = vmatpush1.msra.mxu0 0.0
        %4074 = vmatprep.subr.mxu0 0.0
        %4075 = vmatpush1.msra.mxu0 0.0
        %4076 = vmatprep.subr.mxu0 0.0
        %4077 = vmatpush1.msra.mxu0 0.0
        %4078 = vmatprep.subr.mxu0 0.0
        %4079 = vmatpush1.msra.mxu0 0.0
        %4080 = vmatprep.subr.mxu0 0.0
        %4081 = vmatpush1.msra.mxu0 0.0
        %4082 = vmatprep.subr.mxu0 0.0
        %4083 = vmatpush1.msra.mxu0 0.0
        %4084 = vmatprep.subr.mxu0 0.0
        %4085 = vmatpush1.msra.mxu0 0.0
        %4086 = vmatprep.subr.mxu0 0.0
        %4087 = vmatpush1.msra.mxu0 0.0
        %4088 = vmatprep.subr.mxu0 0.0
        %4089 = vmatpush1.msra.mxu0 0.0
        %4090 = vmatprep.subr.mxu0 0.0
        %4091 = vmatpush1.msra.mxu0 0.0
        %4092 = vmatprep.subr.mxu0 0.0
        %4093 = vmatpush1.msra.mxu0 0.0
        %4094 = vmatprep.subr.mxu0 0.0
        %4095 = vmatpush1.msra.mxu0 0.0
        %4096 = vmatprep.subr.mxu0 0.0
        %4097 = vmatpush1.msra.mxu0 0.0
        %4098 = vmatprep.subr.mxu0 0.0
        %4099 = vmatpush1.msra.mxu0 0.0
        %4100 = vmatprep.subr.mxu0 0.0
        %4101 = vmatpush1.msra.mxu0 0.0
        %4102 = vmatprep.subr.mxu0 0.0
        %4103 = vmatpush1.msra.mxu0 0.0
        %4104 = vmatprep.subr.mxu0 0.0
        %4105 = vmatpush1.msra.mxu0 0.0
        %4106 = vmatprep.subr.mxu0 0.0
        %4107 = vmatpush1.msra.mxu0 0.0
        %4108 = vmatprep.subr.mxu0 0.0
        %4109 = vmatpush1.msra.mxu0 0.0
        %4110 = vmatprep.subr.mxu0 0.0
        %4111 = vmatpush1.msra.mxu0 0.0
        %4112 = vmatprep.subr.mxu0 0.0
        %4113 = vmatpush1.msra.mxu0 0.0
        %4114 = vmatprep.subr.mxu0 0.0
        %4115 = vmatpush1.msra.mxu0 0.0
        %4116 = vmatprep.subr.mxu0 0.0
        %4117 = vmatpush1.msra.mxu0 0.0
        %4118 = vmatprep.subr.mxu0 0.0
        %4119 = vmatpush1.msra.mxu0 0.0
        %4120 = vmatprep.subr.mxu0 0.0
        %4121 = vmatpush1.msra.mxu0 0.0
        %4122 = vmatprep.mubr.f32.mxu0 0.0
        %4123 = vmatmul.mubr.f32.gmra.mrb[0].mxu0 %v3752
        %v4124 = vpop.f32.mrb[0].mxu0
        %v4125 = vadd.f32 0.0, %v4124
        %v4126 = vpop.f32.mrb[0].mxu0
        %v4127 = vadd.f32 0.0, %v4126
        %4128 = vdwg.mxu0
        %v4129 = vadd.f32 %v3694, %v3841
        %v4130 = vadd.f32 %v3695, %v3843
        %v4131 = vadd.f32 %v3696, %v3912
        %v4132 = vadd.f32 %v3697, %v3914
        %v4133 = vadd.f32 %v3698, %v3983
        %v4134 = vadd.f32 %v3699, %v3985
        %v4135 = vadd.f32 %v3700, %v4054
        %v4136 = vadd.f32 %v3701, %v4056
        %v4137 = vadd.f32 %v3702, %v4125
        %v4138 = vadd.f32 %v3703, %v4127
        %v4139 = vld [vmem:[%s3] sm:$0xf]
        %4141 = vset.pattern.permute.xlu0 0
        %4142 = vperm.xlu0 %4141, %v4139
        %v4143 = vpop.permute.xlu0 %4142
        %v4145 = vadd.f32 %v4129, %v4143
        %v4146 = vadd.f32 %v4130, %v4143
        %v4147 = vadd.f32 %v4131, %v4143
        %v4148 = vadd.f32 %v4132, %v4143
        %v4149 = vadd.f32 %v4133, %v4143
        %v4150 = vadd.f32 %v4134, %v4143
        %v4151 = vadd.f32 %v4135, %v4143
        %v4152 = vadd.f32 %v4136, %v4143
        %v4153 = vadd.f32 %v4137, %v4143
        %v4154 = vadd.f32 %v4138, %v4143
        %v4155 = vsub.f32 0.0, %v4145
        %v4156 = vsub.f32 0.0, %v4146
        %v4157 = vsub.f32 0.0, %v4147
        %v4158 = vsub.f32 0.0, %v4148
        %v4159 = vsub.f32 0.0, %v4149
        %v4160 = vsub.f32 0.0, %v4150
        %v4161 = vsub.f32 0.0, %v4151
        %v4162 = vsub.f32 0.0, %v4152
        %v4163 = vsub.f32 0.0, %v4153
        %v4164 = vsub.f32 0.0, %v4154
        %v4165 = vmul.f32 %v4155, 0.25
        %v4166 = vmul.f32 %v4156, 0.25
        %v4167 = vmul.f32 %v4157, 0.25
        %v4168 = vmul.f32 %v4158, 0.25
        %v4169 = vmul.f32 %v4159, 0.25
        %v4170 = vmul.f32 %v4160, 0.25
        %v4171 = vmul.f32 %v4161, 0.25
        %v4172 = vmul.f32 %v4162, 0.25
        %v4173 = vmul.f32 %v4163, 0.25
        %v4174 = vmul.f32 %v4164, 0.25
        %v4175 = vmul.f32 %v4165, 1.442695
        %v4176 = vpow.pop %v4175
        %v4177 = vmul.f32 %v4166, 1.442695
        %v4178 = vpow.pop %v4177
        %v4179 = vmul.f32 %v4167, 1.442695
        %v4180 = vpow.pop %v4179
        %v4181 = vmul.f32 %v4168, 1.442695
        %v4182 = vpow.pop %v4181
        %v4183 = vmul.f32 %v4169, 1.442695
        %v4184 = vpow.pop %v4183
        %v4185 = vmul.f32 %v4170, 1.442695
        %v4186 = vpow.pop %v4185
        %v4187 = vmul.f32 %v4171, 1.442695
        %v4188 = vpow.pop %v4187
        %v4189 = vmul.f32 %v4172, 1.442695
        %v4190 = vpow.pop %v4189
        %v4191 = vmul.f32 %v4173, 1.442695
        %v4192 = vpow.pop %v4191
        %v4193 = vmul.f32 %v4174, 1.442695
        %v4194 = vpow.pop %v4193
        %v4195 = vadd.f32 %v4176, 1.0
        %v4196 = vadd.f32 %v4178, 1.0
        %v4197 = vadd.f32 %v4180, 1.0
        %v4198 = vadd.f32 %v4182, 1.0
        %v4199 = vadd.f32 %v4184, 1.0
        %v4200 = vadd.f32 %v4186, 1.0
        %v4201 = vadd.f32 %v4188, 1.0
        %v4202 = vadd.f32 %v4190, 1.0
        %v4203 = vadd.f32 %v4192, 1.0
        %v4204 = vadd.f32 %v4194, 1.0
        %v4205 = vrcp.pop %v4195
        %v4206 = vmul.f32 1.0, %v4205
        %v4207 = vrcp.pop %v4196
        %v4208 = vmul.f32 1.0, %v4207
        %v4209 = vrcp.pop %v4197
        %v4210 = vmul.f32 1.0, %v4209
        %v4211 = vrcp.pop %v4198
        %v4212 = vmul.f32 1.0, %v4211
        %v4213 = vrcp.pop %v4199
        %v4214 = vmul.f32 1.0, %v4213
        %v4215 = vrcp.pop %v4200
        %v4216 = vmul.f32 1.0, %v4215
        %v4217 = vrcp.pop %v4201
        %v4218 = vmul.f32 1.0, %v4217
        %v4219 = vrcp.pop %v4202
        %v4220 = vmul.f32 1.0, %v4219
        %v4221 = vrcp.pop %v4203
        %v4222 = vmul.f32 1.0, %v4221
        %v4223 = vrcp.pop %v4204
        %v4224 = vmul.f32 1.0, %v4223
        %v4225 = vld [vmem:[%s230] sm:$0xff]
        %v4226 = vld [vmem:[%s230 + $0x8] sm:$0xff]
        %v4227 = vld [vmem:[%s230 + $0x10] sm:$0xff]
        %v4228 = vld [vmem:[%s230 + $0x18] sm:$0xff]
        %v4229 = vld [vmem:[%s230 + $0x20] sm:$0xff]
        %v4230 = vsub.f32 0.0, %v4225
        %v4231 = vsub.f32 0.0, %v4226
        %v4232 = vsub.f32 0.0, %v4227
        %v4233 = vsub.f32 0.0, %v4228
        %v4234 = vsub.f32 0.0, %v4229
        %v4235 = vmul.f32 %v4230, 0.25
        %v4236 = vmul.f32 %v4231, 0.25
        %v4237 = vmul.f32 %v4232, 0.25
        %v4238 = vmul.f32 %v4233, 0.25
        %v4239 = vmul.f32 %v4234, 0.25
        %v4240 = vmul.f32 %v4235, 1.442695
        %v4241 = vpow.pop %v4240
        %v4242 = vmul.f32 %v4236, 1.442695
        %v4243 = vpow.pop %v4242
        %v4244 = vmul.f32 %v4237, 1.442695
        %v4245 = vpow.pop %v4244
        %v4246 = vmul.f32 %v4238, 1.442695
        %v4247 = vpow.pop %v4246
        %v4248 = vmul.f32 %v4239, 1.442695
        %v4249 = vpow.pop %v4248
        %v4250 = vadd.f32 %v4241, 1.0
        %v4251 = vadd.f32 %v4243, 1.0
        %v4252 = vadd.f32 %v4245, 1.0
        %v4253 = vadd.f32 %v4247, 1.0
        %v4254 = vadd.f32 %v4249, 1.0
        %v4255 = vrcp.pop %v4250
        %v4256 = vmul.f32 1.0, %v4255
        %v4257 = vrcp.pop %v4251
        %v4258 = vmul.f32 1.0, %v4257
        %v4259 = vrcp.pop %v4252
        %v4260 = vmul.f32 1.0, %v4259
        %v4261 = vrcp.pop %v4253
        %v4262 = vmul.f32 1.0, %v4261
        %v4263 = vrcp.pop %v4254
        %v4264 = vmul.f32 1.0, %v4263
        %v4265 = vsub.f32 1.0, %v4256
        %v4266 = vsub.f32 1.0, %v4258
        %v4267 = vsub.f32 1.0, %v4260
        %v4268 = vsub.f32 1.0, %v4262
        %v4269 = vsub.f32 1.0, %v4264
        %v4275 = vcombine.high %v4265, %v4265
        %v4276 = vcombine.high %v4266, %v4266
        %v4277 = vcombine.high %v4267, %v4267
        %v4278 = vcombine.high %v4268, %v4268
        %v4279 = vcombine.high %v4269, %v4269
        %v4285 = vmul.f32 %v4206, %v4265
        %v4286 = vmul.f32 %v4208, %v4275
        %v4287 = vmul.f32 %v4210, %v4266
        %v4288 = vmul.f32 %v4212, %v4276
        %v4289 = vmul.f32 %v4214, %v4267
        %v4290 = vmul.f32 %v4216, %v4277
        %v4291 = vmul.f32 %v4218, %v4268
        %v4292 = vmul.f32 %v4220, %v4278
        %v4293 = vmul.f32 %v4222, %v4269
        %v4294 = vmul.f32 %v4224, %v4279
        %v4295 = vsub.f32 0.0, %v4206
        %v4296 = vsub.f32 0.0, %v4208
        %v4297 = vsub.f32 0.0, %v4210
        %v4298 = vsub.f32 0.0, %v4212
        %v4299 = vsub.f32 0.0, %v4214
        %v4300 = vsub.f32 0.0, %v4216
        %v4301 = vsub.f32 0.0, %v4218
        %v4302 = vsub.f32 0.0, %v4220
        %v4303 = vsub.f32 0.0, %v4222
        %v4304 = vsub.f32 0.0, %v4224
        %v4305 = vmul.f32 %v4295, 1.442695
        %v4306 = vpow.pop %v4305
        %v4307 = vmul.f32 %v4296, 1.442695
        %v4308 = vpow.pop %v4307
        %v4309 = vmul.f32 %v4297, 1.442695
        %v4310 = vpow.pop %v4309
        %v4311 = vmul.f32 %v4298, 1.442695
        %v4312 = vpow.pop %v4311
        %v4313 = vmul.f32 %v4299, 1.442695
        %v4314 = vpow.pop %v4313
        %v4315 = vmul.f32 %v4300, 1.442695
        %v4316 = vpow.pop %v4315
        %v4317 = vmul.f32 %v4301, 1.442695
        %v4318 = vpow.pop %v4317
        %v4319 = vmul.f32 %v4302, 1.442695
        %v4320 = vpow.pop %v4319
        %v4321 = vmul.f32 %v4303, 1.442695
        %v4322 = vpow.pop %v4321
        %v4323 = vmul.f32 %v4304, 1.442695
        %v4324 = vpow.pop %v4323
        %v4325 = vadd.f32 %v4306, 1.0
        %v4326 = vadd.f32 %v4308, 1.0
        %v4327 = vadd.f32 %v4310, 1.0
        %v4328 = vadd.f32 %v4312, 1.0
        %v4329 = vadd.f32 %v4314, 1.0
        %v4330 = vadd.f32 %v4316, 1.0
        %v4331 = vadd.f32 %v4318, 1.0
        %v4332 = vadd.f32 %v4320, 1.0
        %v4333 = vadd.f32 %v4322, 1.0
        %v4334 = vadd.f32 %v4324, 1.0
        %v4335 = vlog2.pop %v4325
        %v4336 = vmul.f32 %v4335, 0.6931472
        %v4337 = vlog2.pop %v4326
        %v4338 = vmul.f32 %v4337, 0.6931472
        %v4339 = vlog2.pop %v4327
        %v4340 = vmul.f32 %v4339, 0.6931472
        %v4341 = vlog2.pop %v4328
        %v4342 = vmul.f32 %v4341, 0.6931472
        %v4343 = vlog2.pop %v4329
        %v4344 = vmul.f32 %v4343, 0.6931472
        %v4345 = vlog2.pop %v4330
        %v4346 = vmul.f32 %v4345, 0.6931472
        %v4347 = vlog2.pop %v4331
        %v4348 = vmul.f32 %v4347, 0.6931472
        %v4349 = vlog2.pop %v4332
        %v4350 = vmul.f32 %v4349, 0.6931472
        %v4351 = vlog2.pop %v4333
        %v4352 = vmul.f32 %v4351, 0.6931472
        %v4353 = vlog2.pop %v4334
        %v4354 = vmul.f32 %v4353, 0.6931472
        %v4355 = vadd.f32 %v4285, %v4336
        %v4356 = vadd.f32 %v4286, %v4338
        %v4357 = vadd.f32 %v4287, %v4340
        %v4358 = vadd.f32 %v4288, %v4342
        %v4359 = vadd.f32 %v4289, %v4344
        %v4360 = vadd.f32 %v4290, %v4346
        %v4361 = vadd.f32 %v4291, %v4348
        %v4362 = vadd.f32 %v4292, %v4350
        %v4363 = vadd.f32 %v4293, %v4352
        %v4364 = vadd.f32 %v4294, %v4354
        %v4365 = vld [vmem:[%s4] sm:$0xff]
        %v4366 = vld [vmem:[%s4 + $0x8] sm:$0x3]
        %v4369 = vlaneseq
        %v4370 = vshrl.u32 %v4369, 7
        %v4371 = vsub.s32 0, %v4370
        %v4372 = vrot.slane %v4365, %v4371
        %v4373 = vlaneseq
        %v4374 = vshrl.u32 %v4373, 7
        %v4375 = vsub.s32 1, %v4374
        %v4376 = vrot.slane %v4365, %v4375
        %v4377 = vlaneseq
        %v4378 = vshrl.u32 %v4377, 7
        %v4379 = vsub.s32 2, %v4378
        %v4380 = vrot.slane %v4365, %v4379
        %v4381 = vlaneseq
        %v4382 = vshrl.u32 %v4381, 7
        %v4383 = vsub.s32 3, %v4382
        %v4384 = vrot.slane %v4365, %v4383
        %v4385 = vlaneseq
        %v4386 = vshrl.u32 %v4385, 7
        %v4387 = vsub.s32 4, %v4386
        %v4388 = vrot.slane %v4365, %v4387
        %v4389 = vlaneseq
        %v4390 = vshrl.u32 %v4389, 7
        %v4391 = vsub.s32 5, %v4390
        %v4392 = vrot.slane %v4365, %v4391
        %v4393 = vlaneseq
        %v4394 = vshrl.u32 %v4393, 7
        %v4395 = vsub.s32 6, %v4394
        %v4396 = vrot.slane %v4365, %v4395
        %v4397 = vlaneseq
        %v4398 = vshrl.u32 %v4397, 7
        %v4399 = vsub.s32 7, %v4398
        %v4400 = vrot.slane %v4365, %v4399
        %v4401 = vlaneseq
        %v4402 = vshrl.u32 %v4401, 7
        %v4403 = vsub.s32 0, %v4402
        %v4404 = vrot.slane %v4366, %v4403
        %v4405 = vlaneseq
        %v4406 = vshrl.u32 %v4405, 7
        %v4407 = vsub.s32 1, %v4406
        %v4408 = vrot.slane %v4366, %v4407
        %v4419 = vmul.f32 %v4355, %v4372
        %v4420 = vmul.f32 %v4356, %v4376
        %v4421 = vmul.f32 %v4357, %v4380
        %v4422 = vmul.f32 %v4358, %v4384
        %v4423 = vmul.f32 %v4359, %v4388
        %v4424 = vmul.f32 %v4360, %v4392
        %v4425 = vmul.f32 %v4361, %v4396
        %v4426 = vmul.f32 %v4362, %v4400
        %v4427 = vmul.f32 %v4363, %v4404
        %v4428 = vmul.f32 %v4364, %v4408
        %p4429 = scmp.eq.s32.totalorder %s17, 0
        // Predicated region
        $region41: #{distill_kl_ml_forward.5} parent=39 // pred_check
          %p4430 = pneg %p4429
        $region42: #{distill_kl_ml_forward.5} parent=39 // pred_check_branch
          %4432 = sbr.rel (%p4430) target = $region44
        $region43: #{distill_kl_ml_forward.5} parent=39 // pred_region
          %s4433 = scalar_lea.smem [#allocation3], 0
          %4434 = sst [smem:[%s4433]] 0.0
        $region44: #{distill_kl_ml_forward.5} parent=39 // pred_fallthru
          _
        %s4435 = sld [smem:[#allocation3]]
        %v4436 = vsel %vm235, %v4419, 0.0
        %v4437 = vsel %vm235, %v4420, 0.0
        %v4438 = vadd.f32 %v4436, %v4437
        %v4439 = vsel %vm235, %v4421, 0.0
        %v4440 = vadd.f32 %v4438, %v4439
        %v4441 = vsel %vm235, %v4422, 0.0
        %v4442 = vadd.f32 %v4440, %v4441
        %v4443 = vsel %vm235, %v4423, 0.0
        %v4444 = vadd.f32 %v4442, %v4443
        %v4445 = vsel %vm235, %v4424, 0.0
        %v4446 = vadd.f32 %v4444, %v4445
        %v4447 = vsel %vm235, %v4425, 0.0
        %v4448 = vadd.f32 %v4446, %v4447
        %v4449 = vsel %vm235, %v4426, 0.0
        %v4450 = vadd.f32 %v4448, %v4449
        %v4451 = vsel %vm235, %v4427, 0.0
        %v4452 = vadd.f32 %v4450, %v4451
        %vm4453 = vcmask 27648
        %v4454 = vsel %vm4453, %v4428, 0.0
        %v4455 = vadd.f32 %v4452, %v4454
        %4456 = vadd.xlane.f32.xlu0 %v4455
        %v4457 = vpop.xlane.xlu0 %4456
        %v4458 = vrot.slane %v4457, 4
        %v4459 = vadd.f32 %v4457, %v4458
        %v4460 = vrot.slane %v4459, 2
        %v4461 = vadd.f32 %v4459, %v4460
        %v4462 = vrot.slane %v4461, 1
        %v4463 = vadd.f32 %v4461, %v4462
        %s4464 = vtos %v4463
        %s4465 = smul.f32 %s4464, 0.00012207031
        %s4466 = sadd.f32 %s4435, %s4465
        %s4467 = scalar_lea.smem [#allocation3], 0
        %4468 = sst [smem:[%s4467]] %s4466
        %p4469 = scmp.eq.s32.totalorder %s17, 1
        // Predicated region
        $region45: #{distill_kl_ml_forward.5} parent=39 // pred_check
          %p4470 = pneg %p4469
        $region46: #{distill_kl_ml_forward.5} parent=39 // pred_check_branch
          %4472 = sbr.rel (%p4470) target = $region48
        $region47: #{distill_kl_ml_forward.5} parent=39 // pred_region
          %s4473 = sld [smem:[#allocation3]]
          %s4474 = scalar_lea.smem [#allocation4], 0
          %4475 = sst [smem:[%s4474]] %s4473
        $region48: #{distill_kl_ml_forward.5} parent=39 // pred_fallthru
          _
        // Predicated region
        $region49: #{distill_kl_ml_forward.5} parent=39 // pred_check
          %p4476 = pneg %p145
        $region50: #{distill_kl_ml_forward.5} parent=39 // pred_check_branch
          %4478 = sbr.rel (%p4476) target = $region52
        $region51: #{distill_kl_ml_forward.5} parent=39 // pred_region
          %s4480 = ssub.s32 16, 16
          %4481 = vsyncadd [#allocation5], %s4480
          %4484 = dma.smem_to_hbm [#allocation4], 16, %s5, [#allocation5]
        $region52: #{distill_kl_ml_forward.5} parent=39 // pred_fallthru
          _
        // Predicated region
        $region53: #{distill_kl_ml_forward.5} parent=39 // pred_check
          %p4485 = pneg %p145
        $region54: #{distill_kl_ml_forward.5} parent=39 // pred_check_branch
          %4487 = sbr.rel (%p4485) target = $region56
        $region55: #{distill_kl_ml_forward.5} parent=39 // pred_region
          %4488 = dma.done [#allocation5], 16
        $region56: #{distill_kl_ml_forward.5} parent=39 // pred_fallthru
          _
        %4489 = sfence
      $region40: #{distill_kl_ml_forward.5} parent=5 // pred_fallthru
        _
      %p4490 = scmp.le.s32.totalorder 2, %s12
      // Predicated region
      $region57: #{distill_kl_ml_forward.5} parent=5 // pred_check
        %p4491 = pneg %p4490
      $region58: #{distill_kl_ml_forward.5} parent=5 // pred_check_branch
        %4493 = sbr.rel (%p4491) target = $region60
      $region59: #{distill_kl_ml_forward.5} parent=5 // pred_region
        %s4494 = ssub.s32 %s12, 2
      $region60: #{distill_kl_ml_forward.5} parent=5 // pred_fallthru
        _
    $region6: #{distill_kl_ml_forward.5} parent=1 // loop_footer
      %s16 = sadd.s32 1, %s12
    $region7: #{distill_kl_ml_forward.5} parent=1 // loop_footer_branch
      %11 = sbr.rel target = $region3
    $region8: #{distill_kl_ml_forward.5} parent=1 // loop_exit
      _
    %4495 = vsyncpa [#allocation5], 1
    %s4496 = scalar_lea.sflag [#allocation5], 1
    %4497 = vsyncpa %s4496, 1

</llo_original>
